<compile_context>
chip_gen: v7x
topology: tpu7x:2x2x1
jax: 0.10.0
libtpu: 0.0.40
codegen_flags: <defaults>
</compile_context>

<pallas_src>
import functools

import jax
import jax.numpy as jnp
import numpy as np
from jax import lax
from jax.experimental import pallas as pl
from jax.experimental.pallas import tpu as pltpu

EPS = 1e-5
LANE = 128


def _ceil_to(x, m):
    return (x + m - 1) // m * m


def _dense_block_kernel(x_ref, *refs, num_convs, c0, growth):
    """Fully fused DenseBlock (single invocation, everything VMEM-resident).

    Ref layout:
      x_ref                 : (N, H, W, c0)              f32   input X (NHWC)
      refs[4*i + 0]         : (1, 1, 1, Cip_i)           f32   gamma_i (pad=1)
      refs[4*i + 1]         : (1, 1, 1, Cip_i)           f32   beta_i  (pad=0)
      refs[4*i + 2]         : (3, 3*Cip_i, growth)       bf16  conv weights,
                                                               (dx,cin) folded
                                                               dx-major, cin
                                                               zero-padded
      refs[4*i + 3]         : (1, 1, 1, growth)          f32   conv bias
      refs[4*num_convs]     : (N, H, W, Cf_pad)          f32   output / slab
      refs[4*num_convs + 1] : (N, H+2, W, 3*Cmax_pad)    bf16  dx-folded lhs
      refs[4*num_convs + 2] : (N, H, W, growth)          f32   conv accumulator
      refs[4*num_convs + 3] : (1, 1, 1, Cmax_pad)        f32   per-channel sum
      refs[4*num_convs + 4] : (1, 1, 1, Cmax_pad)        f32   per-channel sumsq
    where Cip_i = roundup(c0 + i*growth, 128) and Cmax_pad = Cip_{num_convs-1}.
    """
    out_ref = refs[4 * num_convs]
    lhs_ref = refs[4 * num_convs + 1]
    acc_ref = refs[4 * num_convs + 2]
    sum_ref = refs[4 * num_convs + 3]
    ssq_ref = refs[4 * num_convs + 4]

    N, H, W, cf_pad = out_ref.shape
    k_max = lhs_ref.shape[-1]
    inv_cnt = 1.0 / float(N * H * W)
    dn = (((3,), (0,)), ((), ()))

    # ---- one-time init -------------------------------------------------------
    # Channel slab: X occupies [0, c0); everything above is zeroed once.  Zeros
    # matter: a block's lane padding [Ci, Cip_i) must be exactly 0 so it stays
    # 0 through BN/ReLU and contributes 0 to the (zero-padded-weight) matmuls.
    x = x_ref[...]
    out_ref[:, :, :, 0:c0] = x
    out_ref[:, :, :, c0:cf_pad] = jnp.zeros((N, H, W, cf_pad - c0), jnp.float32)

    # Incremental BN stats: per-channel sum / sumsq over (N, H, W).
    sum_ref[...] = jnp.zeros(sum_ref.shape, jnp.float32)
    ssq_ref[...] = jnp.zeros(ssq_ref.shape, jnp.float32)
    sum_ref[:, :, :, 0:c0] = jnp.sum(x, axis=(0, 1, 2), keepdims=True)
    ssq_ref[:, :, :, 0:c0] = jnp.sum(x * x, axis=(0, 1, 2), keepdims=True)

    # lhs H-border rows (spatial zero padding along H): zeroed once and never
    # rewritten (per-block stores only touch rows 1..H).
    lhs_ref[:, 0:1, :, :] = jnp.zeros((N, 1, W, k_max), jnp.bfloat16)
    lhs_ref[:, H + 1:H + 2, :, :] = jnp.zeros((N, 1, W, k_max), jnp.bfloat16)

    # TODO(synk): for large num_convs, stack per-block params and move this
    # (statically unrolled) loop onto an "arbitrary" grid axis / fori_loop so
    # weights can stream from HBM instead of living in VMEM for the whole call.
    for i in range(num_convs):
        g_ref, b_ref, w_ref, bias_ref = refs[4 * i:4 * i + 4]
        ci = c0 + i * growth            # live channels feeding this block
        cip = g_ref.shape[-1]           # lane-padded (multiple of 128)

        # ---- BatchNorm2d (training-mode stats from cached sums) + ReLU -------
        mean = sum_ref[:, :, :, 0:cip] * inv_cnt
        var = jnp.maximum(ssq_ref[:, :, :, 0:cip] * inv_cnt - mean * mean, 0.0)
        scale = g_ref[...] * lax.rsqrt(var + EPS)
        shift = b_ref[...] - mean * scale
        a = jnp.maximum(out_ref[:, :, :, 0:cip] * scale + shift, 0.0)
        ab = a.astype(jnp.bfloat16)     # single bf16 cast at the lhs store

        # ---- dx-folded lhs: lhs[n,h,w, dx*cip + c] = padded_a[n,h,w+dx,c] ----
        zcol = jnp.zeros((N, H, 1, cip), jnp.bfloat16)
        lhs_ref[:, 1:H + 1, 0:1, 0:cip] = zcol                           # dx=0 W-border
        lhs_ref[:, 1:H + 1, 1:W, 0:cip] = ab[:, :, 0:W - 1, :]           # dx=0
        lhs_ref[:, 1:H + 1, :, cip:2 * cip] = ab                         # dx=1 (center)
        lhs_ref[:, 1:H + 1, 0:W - 1, 2 * cip:3 * cip] = ab[:, :, 1:W, :]  # dx=2
        lhs_ref[:, 1:H + 1, W - 1:W, 2 * cip:3 * cip] = zcol             # dx=2 W-border

        # ---- 3x3 conv = 3 accumulating bf16 MXU matmuls (one per dy) ---------
        # MXU is not the binding unit here (output columns = growth); the dy
        # shift along H is layout-free.
        k = 3 * cip
        acc_ref[...] = bias_ref[...] + lax.dot_general(
            lhs_ref[:, 0:H, :, 0:k], w_ref[0], dn,
            preferred_element_type=jnp.float32)
        acc_ref[...] += lax.dot_general(
            lhs_ref[:, 1:H + 1, :, 0:k], w_ref[1], dn,
            preferred_element_type=jnp.float32)
        acc_ref[...] += lax.dot_general(
            lhs_ref[:, 2:H + 2, :, 0:k], w_ref[2], dn,
            preferred_element_type=jnp.float32)

        # ---- dense concatenation + incremental stats update ------------------
        y = acc_ref[...]
        out_ref[:, :, :, ci:ci + growth] = y
        if i + 1 < num_convs:           # last block's output is never re-normed
            sum_ref[:, :, :, ci:ci + growth] = jnp.sum(
                y, axis=(0, 1, 2), keepdims=True)
            ssq_ref[:, :, :, ci:ci + growth] = jnp.sum(
                y * y, axis=(0, 1, 2), keepdims=True)


def _prep_block_params(params):
    """Pad per-block BN/conv params to that block's lane-padded channel count
    (multiple of 128) and fold the 3 dx taps into the contraction dim."""
    flat = []
    for (gamma, beta, w, bias) in params:
        ci, cout = w.shape[2], w.shape[3]
        cip = _ceil_to(ci, LANE)
        g = jnp.ones((cip,), jnp.float32).at[:ci].set(gamma)
        b = jnp.zeros((cip,), jnp.float32).at[:ci].set(beta)
        w_pad = jnp.zeros((3, 3, cip, cout), jnp.float32).at[:, :, :ci, :].set(w)
        # (dy, dx, cin, cout) -> (dy, dx*cip + cin, cout), bf16 for the MXU.
        w3 = w_pad.reshape(3, 3 * cip, cout).astype(jnp.bfloat16)
        flat += [g.reshape(1, 1, 1, cip),
                 b.reshape(1, 1, 1, cip),
                 w3,
                 bias.astype(jnp.float32).reshape(1, 1, 1, cout)]
    return flat


@jax.jit
def dense_block_forward(x_nchw, params):
    """DenseBlock.forward: for each block, Y = blk(X); X = concat([X, Y], C)."""
    num_convs = len(params)
    growth = params[0][2].shape[-1]
    N, c0, H, W = x_nchw.shape
    c_true = c0 + num_convs * growth
    cf_pad = _ceil_to(c_true, LANE)                          # lane-dense out slab
    c_stat = _ceil_to(c0 + (num_convs - 1) * growth, LANE)   # widest BN input

    # TODO(synk): the NCHW<->NHWC transposes exist only to match the PyTorch
    # interface; keep the surrounding model NHWC end-to-end to drop them.
    x = jnp.transpose(x_nchw, (0, 2, 3, 1)).astype(jnp.float32)
    flat = _prep_block_params(params)

    # VMEM footprint of the fused, all-resident path -> scoped-VMEM limit.
    out_bytes = N * H * W * cf_pad * 4
    lhs_bytes = N * (H + 2) * W * 3 * c_stat * 2
    acc_bytes = N * H * W * growth * 4
    x_bytes = N * H * W * c0 * 4
    par_bytes = 0
    for (gamma, beta, w, bias) in params:
        cip = _ceil_to(w.shape[2], LANE)
        par_bytes += cip * 4 * 2 + 3 * 3 * cip * growth * 2 + growth * 4
    needed = out_bytes + lhs_bytes + acc_bytes + x_bytes + par_bytes + 8 * c_stat
    vmem_limit = int(max(32 * 1024 * 1024, min(2 * needed, 112 * 1024 * 1024)))
    # TODO(synk): if `needed` approaches physical VMEM (64 MiB on v7x, 128 MiB
    # on v5e/v6e), fall back to per-conv pallas_calls with an H-tiled
    # "parallel" grid plus a separate BN-stats pass.
    # TODO(synk): on v7x, split N across the two TensorCores (pl.core_map +
    # partial-stats exchange) instead of leaving one core idle.

    kernel = functools.partial(_dense_block_kernel,
                               num_convs=num_convs, c0=c0, growth=growth)
    out = pl.pallas_call(
        kernel,
        out_shape=jax.ShapeDtypeStruct((N, H, W, cf_pad), jnp.float32),
        in_specs=[pl.BlockSpec(memory_space=pltpu.MemorySpace.VMEM)]
                 * (1 + 4 * num_convs),
        out_specs=pl.BlockSpec(memory_space=pltpu.MemorySpace.VMEM),
        scratch_shapes=[
            pltpu.VMEM((N, H + 2, W, 3 * c_stat), jnp.bfloat16),  # dx-folded lhs
            pltpu.VMEM((N, H, W, growth), jnp.float32),           # conv accumulator
            pltpu.VMEM((1, 1, 1, c_stat), jnp.float32),           # channel sums
            pltpu.VMEM((1, 1, 1, c_stat), jnp.float32),           # channel sumsqs
        ],
        compiler_params=pltpu.CompilerParams(vmem_limit_bytes=vmem_limit),
    )(x, *flat)

    out = out[:, :, :, :c_true]                      # drop lane padding
    return jnp.transpose(out, (0, 3, 1, 2))          # NHWC -> NCHW (once)


def init_dense_block_params(key, num_convs, input_channels, num_channels):
    """Deterministic parameter init mirroring DenseBlock.__init__ shapes."""
    params = []
    for i in range(num_convs):
        cin = num_channels * i + input_channels
        cout = num_channels
        key, kw, kb = jax.random.split(key, 3)
        bound = 1.0 / np.sqrt(cin * 9)
        # Conv weight stored as HWIO (3,3,Cin,Cout); PyTorch stores OIHW.
        w = jax.random.uniform(kw, (3, 3, cin, cout), jnp.float32, -bound, bound)
        b = jax.random.uniform(kb, (cout,), jnp.float32, -bound, bound)
        gamma = jnp.ones((cin,), jnp.float32)          # BatchNorm2d default init
        beta = jnp.zeros((cin,), jnp.float32)
        params.append((gamma, beta, w, b))
    return params


# ---- pure-JAX reference (mirrors the kernel's bf16 MXU path) -----------------
# TODO(synk): BatchNorm here is training-mode batch statistics only (biased
# variance, no running-mean/var eval path), matching nn.BatchNorm2d in train().
def _ref_conv_block(x_nhwc, gamma, beta, w_hwio, bias):
    mean = jnp.mean(x_nhwc, axis=(0, 1, 2), keepdims=True)
    var = jnp.mean(jnp.square(x_nhwc - mean), axis=(0, 1, 2), keepdims=True)
    a = jnp.maximum((x_nhwc - mean) * jax.lax.rsqrt(var + EPS) * gamma + beta, 0.0)
    y = jax.lax.conv_general_dilated(
        a.astype(jnp.bfloat16), w_hwio.astype(jnp.bfloat16),
        window_strides=(1, 1), padding="SAME",
        dimension_numbers=("NHWC", "HWIO", "NHWC"),
        preferred_element_type=jnp.float32)
    return y + bias


def _ref_dense_block(x_nchw, params):
    x = jnp.transpose(x_nchw, (0, 2, 3, 1))
    for (gamma, beta, w, bias) in params:
        y = _ref_conv_block(x, gamma, beta, w, bias)
        x = jnp.concatenate([x, y], axis=-1)
    return jnp.transpose(x, (0, 3, 1, 2))


if __name__ == "__main__":
    # Small shapes consistent with DenseBlock(num_convs=2, input_channels=4,
    # num_channels=8) applied to an NCHW input of (2, 4, 16, 16).
    num_convs = 2
    input_channels = 4
    num_channels = 8
    N, H, W = 2, 16, 16

    key = jax.random.PRNGKey(0)
    key, kx = jax.random.split(key)
    x = jax.random.normal(kx, (N, input_channels, H, W), jnp.float32)  # NCHW

    params = init_dense_block_params(key, num_convs, input_channels, num_channels)

    out = dense_block_forward(x, params)
    out = jax.block_until_ready(out)

    expected_c = input_channels + num_convs * num_channels
    assert out.shape == (N, expected_c, H, W), out.shape

    ref = jax.block_until_ready(_ref_dense_block(x, params))
    np.testing.assert_allclose(np.asarray(out), np.asarray(ref),
                               rtol=5e-3, atol=5e-3)

    print("KERNEL_OK")
</pallas_src>

<mosaic_0001>
module attributes {stable_mosaic.version = 11 : i64} {
  func.func @_dense_block_kernel(%arg0: memref<2x16x16x4xf32, #tpu.memory_space<vmem>>, %arg1: memref<1x1x1x128xf32, #tpu.memory_space<vmem>>, %arg2: memref<1x1x1x128xf32, #tpu.memory_space<vmem>>, %arg3: memref<3x384x8xbf16, #tpu.memory_space<vmem>>, %arg4: memref<1x1x1x8xf32, #tpu.memory_space<vmem>>, %arg5: memref<1x1x1x128xf32, #tpu.memory_space<vmem>>, %arg6: memref<1x1x1x128xf32, #tpu.memory_space<vmem>>, %arg7: memref<3x384x8xbf16, #tpu.memory_space<vmem>>, %arg8: memref<1x1x1x8xf32, #tpu.memory_space<vmem>>, %arg9: memref<2x16x16x128xf32, #tpu.memory_space<vmem>>, %arg10: memref<2x18x16x384xbf16, #tpu.memory_space<vmem>>, %arg11: memref<2x16x16x8xf32, #tpu.memory_space<vmem>>, %arg12: memref<1x1x1x128xf32, #tpu.memory_space<vmem>>, %arg13: memref<1x1x1x128xf32, #tpu.memory_space<vmem>>) attributes {dimension_semantics = [], scalar_prefetch = 0 : i64, scratch_operands = 4 : i64, tpu.core_type = #tpu.core_type<tc>} {
    %c0 = arith.constant 0 : index
    %c0_0 = arith.constant 0 : index
    %c0_1 = arith.constant 0 : index
    %c0_2 = arith.constant 0 : index
    %0 = vector.load %arg0[%c0, %c0_0, %c0_1, %c0_2] : memref<2x16x16x4xf32, #tpu.memory_space<vmem>>, vector<2x16x16x4xf32>
    %c0_3 = arith.constant 0 : index
    %c0_4 = arith.constant 0 : index
    %c0_5 = arith.constant 0 : index
    %c0_6 = arith.constant 0 : index
    %1 = vector.load %arg9[%c0_3, %c0_4, %c0_5, %c0_6] : memref<2x16x16x128xf32, #tpu.memory_space<vmem>>, vector<2x16x16x4xf32>
    tpu.vector_store %arg9[%c0_3, %c0_4, %c0_5, %c0_6], %0 {strides = array<i32>} : memref<2x16x16x128xf32, #tpu.memory_space<vmem>>, vector<2x16x16x4xf32>,
    %cst = arith.constant 0.000000e+00 : f32
    %2 = vector.broadcast %cst : f32 to vector<2x16x16x124xf32>
    %c0_7 = arith.constant 0 : index
    %c0_8 = arith.constant 0 : index
    %c0_9 = arith.constant 0 : index
    %c4 = arith.constant 4 : index
    %3 = vector.load %arg9[%c0_7, %c0_8, %c0_9, %c4] : memref<2x16x16x128xf32, #tpu.memory_space<vmem>>, vector<2x16x16x124xf32>
    tpu.vector_store %arg9[%c0_7, %c0_8, %c0_9, %c4], %2 {strides = array<i32>} : memref<2x16x16x128xf32, #tpu.memory_space<vmem>>, vector<2x16x16x124xf32>,
    %cst_10 = arith.constant 0.000000e+00 : f32
    %4 = vector.broadcast %cst_10 : f32 to vector<1x1x1x128xf32>
    %c0_11 = arith.constant 0 : index
    %c0_12 = arith.constant 0 : index
    %c0_13 = arith.constant 0 : index
    %c0_14 = arith.constant 0 : index
    %5 = vector.load %arg12[%c0_11, %c0_12, %c0_13, %c0_14] : memref<1x1x1x128xf32, #tpu.memory_space<vmem>>, vector<1x1x1x128xf32>
    tpu.vector_store %arg12[%c0_11, %c0_12, %c0_13, %c0_14], %4 {strides = array<i32>} : memref<1x1x1x128xf32, #tpu.memory_space<vmem>>, vector<1x1x1x128xf32>,
    %cst_15 = arith.constant 0.000000e+00 : f32
    %6 = vector.broadcast %cst_15 : f32 to vector<1x1x1x128xf32>
    %c0_16 = arith.constant 0 : index
    %c0_17 = arith.constant 0 : index
    %c0_18 = arith.constant 0 : index
    %c0_19 = arith.constant 0 : index
    %7 = vector.load %arg13[%c0_16, %c0_17, %c0_18, %c0_19] : memref<1x1x1x128xf32, #tpu.memory_space<vmem>>, vector<1x1x1x128xf32>
    tpu.vector_store %arg13[%c0_16, %c0_17, %c0_18, %c0_19], %6 {strides = array<i32>} : memref<1x1x1x128xf32, #tpu.memory_space<vmem>>, vector<1x1x1x128xf32>,
    %cst_20 = arith.constant dense<0.000000e+00> : vector<4xf32>
    %8 = vector.multi_reduction <add>, %0, %cst_20 [0, 1, 2] : vector<2x16x16x4xf32> to vector<4xf32>
    %9 = vector.shape_cast %8 : vector<4xf32> to vector<1x1x1x4xf32>
    %c0_21 = arith.constant 0 : index
    %c0_22 = arith.constant 0 : index
    %c0_23 = arith.constant 0 : index
    %c0_24 = arith.constant 0 : index
    %10 = vector.load %arg12[%c0_21, %c0_22, %c0_23, %c0_24] : memref<1x1x1x128xf32, #tpu.memory_space<vmem>>, vector<1x1x1x4xf32>
    tpu.vector_store %arg12[%c0_21, %c0_22, %c0_23, %c0_24], %9 {strides = array<i32>} : memref<1x1x1x128xf32, #tpu.memory_space<vmem>>, vector<1x1x1x4xf32>,
    %11 = arith.mulf %0, %0 : vector<2x16x16x4xf32>
    %cst_25 = arith.constant dense<0.000000e+00> : vector<4xf32>
    %12 = vector.multi_reduction <add>, %11, %cst_25 [0, 1, 2] : vector<2x16x16x4xf32> to vector<4xf32>
    %13 = vector.shape_cast %12 : vector<4xf32> to vector<1x1x1x4xf32>
    %c0_26 = arith.constant 0 : index
    %c0_27 = arith.constant 0 : index
    %c0_28 = arith.constant 0 : index
    %c0_29 = arith.constant 0 : index
    %14 = vector.load %arg13[%c0_26, %c0_27, %c0_28, %c0_29] : memref<1x1x1x128xf32, #tpu.memory_space<vmem>>, vector<1x1x1x4xf32>
    tpu.vector_store %arg13[%c0_26, %c0_27, %c0_28, %c0_29], %13 {strides = array<i32>} : memref<1x1x1x128xf32, #tpu.memory_space<vmem>>, vector<1x1x1x4xf32>,
    %cst_30 = arith.constant 0.000000e+00 : bf16
    %15 = vector.broadcast %cst_30 : bf16 to vector<2x1x16x384xbf16>
    %c0_31 = arith.constant 0 : index
    %c0_32 = arith.constant 0 : index
    %c0_33 = arith.constant 0 : index
    %c0_34 = arith.constant 0 : index
    %16 = vector.load %arg10[%c0_31, %c0_32, %c0_33, %c0_34] : memref<2x18x16x384xbf16, #tpu.memory_space<vmem>>, vector<2x1x16x384xbf16>
    tpu.vector_store %arg10[%c0_31, %c0_32, %c0_33, %c0_34], %15 {strides = array<i32>} : memref<2x18x16x384xbf16, #tpu.memory_space<vmem>>, vector<2x1x16x384xbf16>,
    %cst_35 = arith.constant 0.000000e+00 : bf16
    %17 = vector.broadcast %cst_35 : bf16 to vector<2x1x16x384xbf16>
    %c0_36 = arith.constant 0 : index
    %c17 = arith.constant 17 : index
    %c0_37 = arith.constant 0 : index
    %c0_38 = arith.constant 0 : index
    %18 = vector.load %arg10[%c0_36, %c17, %c0_37, %c0_38] : memref<2x18x16x384xbf16, #tpu.memory_space<vmem>>, vector<2x1x16x384xbf16>
    tpu.vector_store %arg10[%c0_36, %c17, %c0_37, %c0_38], %17 {strides = array<i32>} : memref<2x18x16x384xbf16, #tpu.memory_space<vmem>>, vector<2x1x16x384xbf16>,
    %c0_39 = arith.constant 0 : index
    %c0_40 = arith.constant 0 : index
    %c0_41 = arith.constant 0 : index
    %c0_42 = arith.constant 0 : index
    %19 = vector.load %arg12[%c0_39, %c0_40, %c0_41, %c0_42] : memref<1x1x1x128xf32, #tpu.memory_space<vmem>>, vector<1x1x1x128xf32>
    %cst_43 = arith.constant 0.001953125 : f32
    %20 = vector.broadcast %cst_43 : f32 to vector<1x1x1x128xf32>
    %21 = arith.mulf %19, %20 : vector<1x1x1x128xf32>
    %c0_44 = arith.constant 0 : index
    %c0_45 = arith.constant 0 : index
    %c0_46 = arith.constant 0 : index
    %c0_47 = arith.constant 0 : index
    %22 = vector.load %arg13[%c0_44, %c0_45, %c0_46, %c0_47] : memref<1x1x1x128xf32, #tpu.memory_space<vmem>>, vector<1x1x1x128xf32>
    %cst_48 = arith.constant 0.001953125 : f32
    %23 = vector.broadcast %cst_48 : f32 to vector<1x1x1x128xf32>
    %24 = arith.mulf %22, %23 : vector<1x1x1x128xf32>
    %25 = arith.mulf %21, %21 : vector<1x1x1x128xf32>
    %26 = arith.subf %24, %25 : vector<1x1x1x128xf32>
    %cst_49 = arith.constant 0.000000e+00 : f32
    %27 = vector.broadcast %cst_49 : f32 to vector<1x1x1x128xf32>
    %28 = arith.maximumf %26, %27 : vector<1x1x1x128xf32>
    %c0_50 = arith.constant 0 : index
    %c0_51 = arith.constant 0 : index
    %c0_52 = arith.constant 0 : index
    %c0_53 = arith.constant 0 : index
    %29 = vector.load %arg1[%c0_50, %c0_51, %c0_52, %c0_53] : memref<1x1x1x128xf32, #tpu.memory_space<vmem>>, vector<1x1x1x128xf32>
    %cst_54 = arith.constant 9.99999974E-6 : f32
    %30 = vector.broadcast %cst_54 : f32 to vector<1x1x1x128xf32>
    %31 = arith.addf %28, %30 : vector<1x1x1x128xf32>
    %32 = math.rsqrt %31 : vector<1x1x1x128xf32>
    %33 = arith.mulf %29, %32 : vector<1x1x1x128xf32>
    %c0_55 = arith.constant 0 : index
    %c0_56 = arith.constant 0 : index
    %c0_57 = arith.constant 0 : index
    %c0_58 = arith.constant 0 : index
    %34 = vector.load %arg2[%c0_55, %c0_56, %c0_57, %c0_58] : memref<1x1x1x128xf32, #tpu.memory_space<vmem>>, vector<1x1x1x128xf32>
    %35 = arith.mulf %21, %33 : vector<1x1x1x128xf32>
    %36 = arith.subf %34, %35 : vector<1x1x1x128xf32>
    %c0_59 = arith.constant 0 : index
    %c0_60 = arith.constant 0 : index
    %c0_61 = arith.constant 0 : index
    %c0_62 = arith.constant 0 : index
    %37 = vector.load %arg9[%c0_59, %c0_60, %c0_61, %c0_62] : memref<2x16x16x128xf32, #tpu.memory_space<vmem>>, vector<2x16x16x128xf32>
    %38 = vector.broadcast %33 : vector<1x1x1x128xf32> to vector<2x16x16x128xf32>
    %39 = arith.mulf %37, %38 : vector<2x16x16x128xf32>
    %40 = vector.broadcast %36 : vector<1x1x1x128xf32> to vector<2x16x16x128xf32>
    %41 = arith.addf %39, %40 : vector<2x16x16x128xf32>
    %cst_63 = arith.constant 0.000000e+00 : f32
    %42 = vector.broadcast %cst_63 : f32 to vector<2x16x16x128xf32>
    %43 = arith.maximumf %41, %42 : vector<2x16x16x128xf32>
    %44 = arith.truncf %43 : vector<2x16x16x128xf32> to vector<2x16x16x128xbf16>
    %cst_64 = arith.constant 0.000000e+00 : bf16
    %45 = vector.broadcast %cst_64 : bf16 to vector<2x16x1x128xbf16>
    %c0_65 = arith.constant 0 : index
    %c1 = arith.constant 1 : index
    %c0_66 = arith.constant 0 : index
    %c0_67 = arith.constant 0 : index
    %46 = vector.load %arg10[%c0_65, %c1, %c0_66, %c0_67] : memref<2x18x16x384xbf16, #tpu.memory_space<vmem>>, vector<2x16x1x128xbf16>
    tpu.vector_store %arg10[%c0_65, %c1, %c0_66, %c0_67], %45 {strides = array<i32>} : memref<2x18x16x384xbf16, #tpu.memory_space<vmem>>, vector<2x16x1x128xbf16>,
    %47 = vector.extract_strided_slice %44 {offsets = [0, 0, 0, 0], sizes = [2, 16, 15, 128], strides = [1, 1, 1, 1]} : vector<2x16x16x128xbf16> to vector<2x16x15x128xbf16>
    %c0_68 = arith.constant 0 : index
    %c1_69 = arith.constant 1 : index
    %c1_70 = arith.constant 1 : index
    %c0_71 = arith.constant 0 : index
    %48 = vector.load %arg10[%c0_68, %c1_69, %c1_70, %c0_71] : memref<2x18x16x384xbf16, #tpu.memory_space<vmem>>, vector<2x16x15x128xbf16>
    tpu.vector_store %arg10[%c0_68, %c1_69, %c1_70, %c0_71], %47 {strides = array<i32>} : memref<2x18x16x384xbf16, #tpu.memory_space<vmem>>, vector<2x16x15x128xbf16>,
    %c0_72 = arith.constant 0 : index
    %c1_73 = arith.constant 1 : index
    %c0_74 = arith.constant 0 : index
    %c128 = arith.constant 128 : index
    %49 = vector.load %arg10[%c0_72, %c1_73, %c0_74, %c128] : memref<2x18x16x384xbf16, #tpu.memory_space<vmem>>, vector<2x16x16x128xbf16>
    tpu.vector_store %arg10[%c0_72, %c1_73, %c0_74, %c128], %44 {strides = array<i32>} : memref<2x18x16x384xbf16, #tpu.memory_space<vmem>>, vector<2x16x16x128xbf16>,
    %50 = vector.extract_strided_slice %44 {offsets = [0, 0, 1, 0], sizes = [2, 16, 15, 128], strides = [1, 1, 1, 1]} : vector<2x16x16x128xbf16> to vector<2x16x15x128xbf16>
    %c0_75 = arith.constant 0 : index
    %c1_76 = arith.constant 1 : index
    %c0_77 = arith.constant 0 : index
    %c256 = arith.constant 256 : index
    %51 = vector.load %arg10[%c0_75, %c1_76, %c0_77, %c256] : memref<2x18x16x384xbf16, #tpu.memory_space<vmem>>, vector<2x16x15x128xbf16>
    tpu.vector_store %arg10[%c0_75, %c1_76, %c0_77, %c256], %50 {strides = array<i32>} : memref<2x18x16x384xbf16, #tpu.memory_space<vmem>>, vector<2x16x15x128xbf16>,
    %c0_78 = arith.constant 0 : index
    %c1_79 = arith.constant 1 : index
    %c15 = arith.constant 15 : index
    %c256_80 = arith.constant 256 : index
    %52 = vector.load %arg10[%c0_78, %c1_79, %c15, %c256_80] : memref<2x18x16x384xbf16, #tpu.memory_space<vmem>>, vector<2x16x1x128xbf16>
    tpu.vector_store %arg10[%c0_78, %c1_79, %c15, %c256_80], %45 {strides = array<i32>} : memref<2x18x16x384xbf16, #tpu.memory_space<vmem>>, vector<2x16x1x128xbf16>,
    %c0_81 = arith.constant 0 : index
    %c0_82 = arith.constant 0 : index
    %c0_83 = arith.constant 0 : index
    %c0_84 = arith.constant 0 : index
    %53 = vector.load %arg4[%c0_81, %c0_82, %c0_83, %c0_84] : memref<1x1x1x8xf32, #tpu.memory_space<vmem>>, vector<1x1x1x8xf32>
    %c0_85 = arith.constant 0 : index
    %c0_86 = arith.constant 0 : index
    %c0_87 = arith.constant 0 : index
    %c0_88 = arith.constant 0 : index
    %54 = vector.load %arg10[%c0_85, %c0_86, %c0_87, %c0_88] : memref<2x18x16x384xbf16, #tpu.memory_space<vmem>>, vector<2x16x16x384xbf16>
    %c0_89 = arith.constant 0 : index
    %c0_90 = arith.constant 0 : index
    %c0_91 = arith.constant 0 : index
    %55 = vector.load %arg3[%c0_89, %c0_90, %c0_91] : memref<3x384x8xbf16, #tpu.memory_space<vmem>>, vector<1x384x8xbf16>
    %56 = vector.shape_cast %55 : vector<1x384x8xbf16> to vector<384x8xbf16>
    %cst_92 = arith.constant dense<0.000000e+00> : vector<2x16x16x8xf32>
    %57 = tpu.matmul %54, %56, %cst_92 {dimension_numbers = #tpu.dot_dimension_numbers<[3], [0], [0, 1, 2], [1], [0, 0, 0, 1, 0, 2, 1, 1], [], []>} : vector<2x16x16x384xbf16>, vector<384x8xbf16>, vector<2x16x16x8xf32> -> vector<2x16x16x8xf32>
    %58 = vector.broadcast %53 : vector<1x1x1x8xf32> to vector<2x16x16x8xf32>
    %59 = arith.addf %58, %57 : vector<2x16x16x8xf32>
    %c0_93 = arith.constant 0 : index
    %c0_94 = arith.constant 0 : index
    %c0_95 = arith.constant 0 : index
    %c0_96 = arith.constant 0 : index
    %60 = vector.load %arg11[%c0_93, %c0_94, %c0_95, %c0_96] : memref<2x16x16x8xf32, #tpu.memory_space<vmem>>, vector<2x16x16x8xf32>
    tpu.vector_store %arg11[%c0_93, %c0_94, %c0_95, %c0_96], %59 {strides = array<i32>} : memref<2x16x16x8xf32, #tpu.memory_space<vmem>>, vector<2x16x16x8xf32>,
    %c0_97 = arith.constant 0 : index
    %c0_98 = arith.constant 0 : index
    %c0_99 = arith.constant 0 : index
    %c0_100 = arith.constant 0 : index
    %61 = vector.load %arg11[%c0_97, %c0_98, %c0_99, %c0_100] : memref<2x16x16x8xf32, #tpu.memory_space<vmem>>, vector<2x16x16x8xf32>
    %c0_101 = arith.constant 0 : index
    %c1_102 = arith.constant 1 : index
    %c0_103 = arith.constant 0 : index
    %c0_104 = arith.constant 0 : index
    %62 = vector.load %arg10[%c0_101, %c1_102, %c0_103, %c0_104] : memref<2x18x16x384xbf16, #tpu.memory_space<vmem>>, vector<2x16x16x384xbf16>
    %c1_105 = arith.constant 1 : index
    %c0_106 = arith.constant 0 : index
    %c0_107 = arith.constant 0 : index
    %63 = vector.load %arg3[%c1_105, %c0_106, %c0_107] : memref<3x384x8xbf16, #tpu.memory_space<vmem>>, vector<1x384x8xbf16>
    %64 = vector.shape_cast %63 : vector<1x384x8xbf16> to vector<384x8xbf16>
    %cst_108 = arith.constant dense<0.000000e+00> : vector<2x16x16x8xf32>
    %65 = tpu.matmul %62, %64, %cst_108 {dimension_numbers = #tpu.dot_dimension_numbers<[3], [0], [0, 1, 2], [1], [0, 0, 0, 1, 0, 2, 1, 1], [], []>} : vector<2x16x16x384xbf16>, vector<384x8xbf16>, vector<2x16x16x8xf32> -> vector<2x16x16x8xf32>
    %66 = arith.addf %61, %65 : vector<2x16x16x8xf32>
    %c0_109 = arith.constant 0 : index
    %c0_110 = arith.constant 0 : index
    %c0_111 = arith.constant 0 : index
    %c0_112 = arith.constant 0 : index
    %67 = vector.load %arg11[%c0_109, %c0_110, %c0_111, %c0_112] : memref<2x16x16x8xf32, #tpu.memory_space<vmem>>, vector<2x16x16x8xf32>
    tpu.vector_store %arg11[%c0_109, %c0_110, %c0_111, %c0_112], %66 {strides = array<i32>} : memref<2x16x16x8xf32, #tpu.memory_space<vmem>>, vector<2x16x16x8xf32>,
    %c0_113 = arith.constant 0 : index
    %c0_114 = arith.constant 0 : index
    %c0_115 = arith.constant 0 : index
    %c0_116 = arith.constant 0 : index
    %68 = vector.load %arg11[%c0_113, %c0_114, %c0_115, %c0_116] : memref<2x16x16x8xf32, #tpu.memory_space<vmem>>, vector<2x16x16x8xf32>
    %c0_117 = arith.constant 0 : index
    %c2 = arith.constant 2 : index
    %c0_118 = arith.constant 0 : index
    %c0_119 = arith.constant 0 : index
    %69 = vector.load %arg10[%c0_117, %c2, %c0_118, %c0_119] : memref<2x18x16x384xbf16, #tpu.memory_space<vmem>>, vector<2x16x16x384xbf16>
    %c2_120 = arith.constant 2 : index
    %c0_121 = arith.constant 0 : index
    %c0_122 = arith.constant 0 : index
    %70 = vector.load %arg3[%c2_120, %c0_121, %c0_122] : memref<3x384x8xbf16, #tpu.memory_space<vmem>>, vector<1x384x8xbf16>
    %71 = vector.shape_cast %70 : vector<1x384x8xbf16> to vector<384x8xbf16>
    %cst_123 = arith.constant dense<0.000000e+00> : vector<2x16x16x8xf32>
    %72 = tpu.matmul %69, %71, %cst_123 {dimension_numbers = #tpu.dot_dimension_numbers<[3], [0], [0, 1, 2], [1], [0, 0, 0, 1, 0, 2, 1, 1], [], []>} : vector<2x16x16x384xbf16>, vector<384x8xbf16>, vector<2x16x16x8xf32> -> vector<2x16x16x8xf32>
    %73 = arith.addf %68, %72 : vector<2x16x16x8xf32>
    %c0_124 = arith.constant 0 : index
    %c0_125 = arith.constant 0 : index
    %c0_126 = arith.constant 0 : index
    %c0_127 = arith.constant 0 : index
    %74 = vector.load %arg11[%c0_124, %c0_125, %c0_126, %c0_127] : memref<2x16x16x8xf32, #tpu.memory_space<vmem>>, vector<2x16x16x8xf32>
    tpu.vector_store %arg11[%c0_124, %c0_125, %c0_126, %c0_127], %73 {strides = array<i32>} : memref<2x16x16x8xf32, #tpu.memory_space<vmem>>, vector<2x16x16x8xf32>,
    %c0_128 = arith.constant 0 : index
    %c0_129 = arith.constant 0 : index
    %c0_130 = arith.constant 0 : index
    %c0_131 = arith.constant 0 : index
    %75 = vector.load %arg11[%c0_128, %c0_129, %c0_130, %c0_131] : memref<2x16x16x8xf32, #tpu.memory_space<vmem>>, vector<2x16x16x8xf32>
    %c0_132 = arith.constant 0 : index
    %c0_133 = arith.constant 0 : index
    %c0_134 = arith.constant 0 : index
    %c4_135 = arith.constant 4 : index
    %76 = vector.load %arg9[%c0_132, %c0_133, %c0_134, %c4_135] : memref<2x16x16x128xf32, #tpu.memory_space<vmem>>, vector<2x16x16x8xf32>
    tpu.vector_store %arg9[%c0_132, %c0_133, %c0_134, %c4_135], %75 {strides = array<i32>} : memref<2x16x16x128xf32, #tpu.memory_space<vmem>>, vector<2x16x16x8xf32>,
    %cst_136 = arith.constant dense<0.000000e+00> : vector<8xf32>
    %77 = vector.multi_reduction <add>, %75, %cst_136 [0, 1, 2] : vector<2x16x16x8xf32> to vector<8xf32>
    %78 = vector.shape_cast %77 : vector<8xf32> to vector<1x1x1x8xf32>
    %c0_137 = arith.constant 0 : index
    %c0_138 = arith.constant 0 : index
    %c0_139 = arith.constant 0 : index
    %c4_140 = arith.constant 4 : index
    %79 = vector.load %arg12[%c0_137, %c0_138, %c0_139, %c4_140] : memref<1x1x1x128xf32, #tpu.memory_space<vmem>>, vector<1x1x1x8xf32>
    tpu.vector_store %arg12[%c0_137, %c0_138, %c0_139, %c4_140], %78 {strides = array<i32>} : memref<1x1x1x128xf32, #tpu.memory_space<vmem>>, vector<1x1x1x8xf32>,
    %80 = arith.mulf %75, %75 : vector<2x16x16x8xf32>
    %cst_141 = arith.constant dense<0.000000e+00> : vector<8xf32>
    %81 = vector.multi_reduction <add>, %80, %cst_141 [0, 1, 2] : vector<2x16x16x8xf32> to vector<8xf32>
    %82 = vector.shape_cast %81 : vector<8xf32> to vector<1x1x1x8xf32>
    %c0_142 = arith.constant 0 : index
    %c0_143 = arith.constant 0 : index
    %c0_144 = arith.constant 0 : index
    %c4_145 = arith.constant 4 : index
    %83 = vector.load %arg13[%c0_142, %c0_143, %c0_144, %c4_145] : memref<1x1x1x128xf32, #tpu.memory_space<vmem>>, vector<1x1x1x8xf32>
    tpu.vector_store %arg13[%c0_142, %c0_143, %c0_144, %c4_145], %82 {strides = array<i32>} : memref<1x1x1x128xf32, #tpu.memory_space<vmem>>, vector<1x1x1x8xf32>,
    %c0_146 = arith.constant 0 : index
    %c0_147 = arith.constant 0 : index
    %c0_148 = arith.constant 0 : index
    %c0_149 = arith.constant 0 : index
    %84 = vector.load %arg12[%c0_146, %c0_147, %c0_148, %c0_149] : memref<1x1x1x128xf32, #tpu.memory_space<vmem>>, vector<1x1x1x128xf32>
    %cst_150 = arith.constant 0.001953125 : f32
    %85 = vector.broadcast %cst_150 : f32 to vector<1x1x1x128xf32>
    %86 = arith.mulf %84, %85 : vector<1x1x1x128xf32>
    %c0_151 = arith.constant 0 : index
    %c0_152 = arith.constant 0 : index
    %c0_153 = arith.constant 0 : index
    %c0_154 = arith.constant 0 : index
    %87 = vector.load %arg13[%c0_151, %c0_152, %c0_153, %c0_154] : memref<1x1x1x128xf32, #tpu.memory_space<vmem>>, vector<1x1x1x128xf32>
    %cst_155 = arith.constant 0.001953125 : f32
    %88 = vector.broadcast %cst_155 : f32 to vector<1x1x1x128xf32>
    %89 = arith.mulf %87, %88 : vector<1x1x1x128xf32>
    %90 = arith.mulf %86, %86 : vector<1x1x1x128xf32>
    %91 = arith.subf %89, %90 : vector<1x1x1x128xf32>
    %cst_156 = arith.constant 0.000000e+00 : f32
    %92 = vector.broadcast %cst_156 : f32 to vector<1x1x1x128xf32>
    %93 = arith.maximumf %91, %92 : vector<1x1x1x128xf32>
    %c0_157 = arith.constant 0 : index
    %c0_158 = arith.constant 0 : index
    %c0_159 = arith.constant 0 : index
    %c0_160 = arith.constant 0 : index
    %94 = vector.load %arg5[%c0_157, %c0_158, %c0_159, %c0_160] : memref<1x1x1x128xf32, #tpu.memory_space<vmem>>, vector<1x1x1x128xf32>
    %cst_161 = arith.constant 9.99999974E-6 : f32
    %95 = vector.broadcast %cst_161 : f32 to vector<1x1x1x128xf32>
    %96 = arith.addf %93, %95 : vector<1x1x1x128xf32>
    %97 = math.rsqrt %96 : vector<1x1x1x128xf32>
    %98 = arith.mulf %94, %97 : vector<1x1x1x128xf32>
    %c0_162 = arith.constant 0 : index
    %c0_163 = arith.constant 0 : index
    %c0_164 = arith.constant 0 : index
    %c0_165 = arith.constant 0 : index
    %99 = vector.load %arg6[%c0_162, %c0_163, %c0_164, %c0_165] : memref<1x1x1x128xf32, #tpu.memory_space<vmem>>, vector<1x1x1x128xf32>
    %100 = arith.mulf %86, %98 : vector<1x1x1x128xf32>
    %101 = arith.subf %99, %100 : vector<1x1x1x128xf32>
    %c0_166 = arith.constant 0 : index
    %c0_167 = arith.constant 0 : index
    %c0_168 = arith.constant 0 : index
    %c0_169 = arith.constant 0 : index
    %102 = vector.load %arg9[%c0_166, %c0_167, %c0_168, %c0_169] : memref<2x16x16x128xf32, #tpu.memory_space<vmem>>, vector<2x16x16x128xf32>
    %103 = vector.broadcast %98 : vector<1x1x1x128xf32> to vector<2x16x16x128xf32>
    %104 = arith.mulf %102, %103 : vector<2x16x16x128xf32>
    %105 = vector.broadcast %101 : vector<1x1x1x128xf32> to vector<2x16x16x128xf32>
    %106 = arith.addf %104, %105 : vector<2x16x16x128xf32>
    %cst_170 = arith.constant 0.000000e+00 : f32
    %107 = vector.broadcast %cst_170 : f32 to vector<2x16x16x128xf32>
    %108 = arith.maximumf %106, %107 : vector<2x16x16x128xf32>
    %109 = arith.truncf %108 : vector<2x16x16x128xf32> to vector<2x16x16x128xbf16>
    %cst_171 = arith.constant 0.000000e+00 : bf16
    %110 = vector.broadcast %cst_171 : bf16 to vector<2x16x1x128xbf16>
    %c0_172 = arith.constant 0 : index
    %c1_173 = arith.constant 1 : index
    %c0_174 = arith.constant 0 : index
    %c0_175 = arith.constant 0 : index
    %111 = vector.load %arg10[%c0_172, %c1_173, %c0_174, %c0_175] : memref<2x18x16x384xbf16, #tpu.memory_space<vmem>>, vector<2x16x1x128xbf16>
    tpu.vector_store %arg10[%c0_172, %c1_173, %c0_174, %c0_175], %110 {strides = array<i32>} : memref<2x18x16x384xbf16, #tpu.memory_space<vmem>>, vector<2x16x1x128xbf16>,
    %112 = vector.extract_strided_slice %109 {offsets = [0, 0, 0, 0], sizes = [2, 16, 15, 128], strides = [1, 1, 1, 1]} : vector<2x16x16x128xbf16> to vector<2x16x15x128xbf16>
    %c0_176 = arith.constant 0 : index
    %c1_177 = arith.constant 1 : index
    %c1_178 = arith.constant 1 : index
    %c0_179 = arith.constant 0 : index
    %113 = vector.load %arg10[%c0_176, %c1_177, %c1_178, %c0_179] : memref<2x18x16x384xbf16, #tpu.memory_space<vmem>>, vector<2x16x15x128xbf16>
    tpu.vector_store %arg10[%c0_176, %c1_177, %c1_178, %c0_179], %112 {strides = array<i32>} : memref<2x18x16x384xbf16, #tpu.memory_space<vmem>>, vector<2x16x15x128xbf16>,
    %c0_180 = arith.constant 0 : index
    %c1_181 = arith.constant 1 : index
    %c0_182 = arith.constant 0 : index
    %c128_183 = arith.constant 128 : index
    %114 = vector.load %arg10[%c0_180, %c1_181, %c0_182, %c128_183] : memref<2x18x16x384xbf16, #tpu.memory_space<vmem>>, vector<2x16x16x128xbf16>
    tpu.vector_store %arg10[%c0_180, %c1_181, %c0_182, %c128_183], %109 {strides = array<i32>} : memref<2x18x16x384xbf16, #tpu.memory_space<vmem>>, vector<2x16x16x128xbf16>,
    %115 = vector.extract_strided_slice %109 {offsets = [0, 0, 1, 0], sizes = [2, 16, 15, 128], strides = [1, 1, 1, 1]} : vector<2x16x16x128xbf16> to vector<2x16x15x128xbf16>
    %c0_184 = arith.constant 0 : index
    %c1_185 = arith.constant 1 : index
    %c0_186 = arith.constant 0 : index
    %c256_187 = arith.constant 256 : index
    %116 = vector.load %arg10[%c0_184, %c1_185, %c0_186, %c256_187] : memref<2x18x16x384xbf16, #tpu.memory_space<vmem>>, vector<2x16x15x128xbf16>
    tpu.vector_store %arg10[%c0_184, %c1_185, %c0_186, %c256_187], %115 {strides = array<i32>} : memref<2x18x16x384xbf16, #tpu.memory_space<vmem>>, vector<2x16x15x128xbf16>,
    %c0_188 = arith.constant 0 : index
    %c1_189 = arith.constant 1 : index
    %c15_190 = arith.constant 15 : index
    %c256_191 = arith.constant 256 : index
    %117 = vector.load %arg10[%c0_188, %c1_189, %c15_190, %c256_191] : memref<2x18x16x384xbf16, #tpu.memory_space<vmem>>, vector<2x16x1x128xbf16>
    tpu.vector_store %arg10[%c0_188, %c1_189, %c15_190, %c256_191], %110 {strides = array<i32>} : memref<2x18x16x384xbf16, #tpu.memory_space<vmem>>, vector<2x16x1x128xbf16>,
    %c0_192 = arith.constant 0 : index
    %c0_193 = arith.constant 0 : index
    %c0_194 = arith.constant 0 : index
    %c0_195 = arith.constant 0 : index
    %118 = vector.load %arg8[%c0_192, %c0_193, %c0_194, %c0_195] : memref<1x1x1x8xf32, #tpu.memory_space<vmem>>, vector<1x1x1x8xf32>
    %c0_196 = arith.constant 0 : index
    %c0_197 = arith.constant 0 : index
    %c0_198 = arith.constant 0 : index
    %c0_199 = arith.constant 0 : index
    %119 = vector.load %arg10[%c0_196, %c0_197, %c0_198, %c0_199] : memref<2x18x16x384xbf16, #tpu.memory_space<vmem>>, vector<2x16x16x384xbf16>
    %c0_200 = arith.constant 0 : index
    %c0_201 = arith.constant 0 : index
    %c0_202 = arith.constant 0 : index
    %120 = vector.load %arg7[%c0_200, %c0_201, %c0_202] : memref<3x384x8xbf16, #tpu.memory_space<vmem>>, vector<1x384x8xbf16>
    %121 = vector.shape_cast %120 : vector<1x384x8xbf16> to vector<384x8xbf16>
    %cst_203 = arith.constant dense<0.000000e+00> : vector<2x16x16x8xf32>
    %122 = tpu.matmul %119, %121, %cst_203 {dimension_numbers = #tpu.dot_dimension_numbers<[3], [0], [0, 1, 2], [1], [0, 0, 0, 1, 0, 2, 1, 1], [], []>} : vector<2x16x16x384xbf16>, vector<384x8xbf16>, vector<2x16x16x8xf32> -> vector<2x16x16x8xf32>
    %123 = vector.broadcast %118 : vector<1x1x1x8xf32> to vector<2x16x16x8xf32>
    %124 = arith.addf %123, %122 : vector<2x16x16x8xf32>
    %c0_204 = arith.constant 0 : index
    %c0_205 = arith.constant 0 : index
    %c0_206 = arith.constant 0 : index
    %c0_207 = arith.constant 0 : index
    %125 = vector.load %arg11[%c0_204, %c0_205, %c0_206, %c0_207] : memref<2x16x16x8xf32, #tpu.memory_space<vmem>>, vector<2x16x16x8xf32>
    tpu.vector_store %arg11[%c0_204, %c0_205, %c0_206, %c0_207], %124 {strides = array<i32>} : memref<2x16x16x8xf32, #tpu.memory_space<vmem>>, vector<2x16x16x8xf32>,
    %c0_208 = arith.constant 0 : index
    %c0_209 = arith.constant 0 : index
    %c0_210 = arith.constant 0 : index
    %c0_211 = arith.constant 0 : index
    %126 = vector.load %arg11[%c0_208, %c0_209, %c0_210, %c0_211] : memref<2x16x16x8xf32, #tpu.memory_space<vmem>>, vector<2x16x16x8xf32>
    %c0_212 = arith.constant 0 : index
    %c1_213 = arith.constant 1 : index
    %c0_214 = arith.constant 0 : index
    %c0_215 = arith.constant 0 : index
    %127 = vector.load %arg10[%c0_212, %c1_213, %c0_214, %c0_215] : memref<2x18x16x384xbf16, #tpu.memory_space<vmem>>, vector<2x16x16x384xbf16>
    %c1_216 = arith.constant 1 : index
    %c0_217 = arith.constant 0 : index
    %c0_218 = arith.constant 0 : index
    %128 = vector.load %arg7[%c1_216, %c0_217, %c0_218] : memref<3x384x8xbf16, #tpu.memory_space<vmem>>, vector<1x384x8xbf16>
    %129 = vector.shape_cast %128 : vector<1x384x8xbf16> to vector<384x8xbf16>
    %cst_219 = arith.constant dense<0.000000e+00> : vector<2x16x16x8xf32>
    %130 = tpu.matmul %127, %129, %cst_219 {dimension_numbers = #tpu.dot_dimension_numbers<[3], [0], [0, 1, 2], [1], [0, 0, 0, 1, 0, 2, 1, 1], [], []>} : vector<2x16x16x384xbf16>, vector<384x8xbf16>, vector<2x16x16x8xf32> -> vector<2x16x16x8xf32>
    %131 = arith.addf %126, %130 : vector<2x16x16x8xf32>
    %c0_220 = arith.constant 0 : index
    %c0_221 = arith.constant 0 : index
    %c0_222 = arith.constant 0 : index
    %c0_223 = arith.constant 0 : index
    %132 = vector.load %arg11[%c0_220, %c0_221, %c0_222, %c0_223] : memref<2x16x16x8xf32, #tpu.memory_space<vmem>>, vector<2x16x16x8xf32>
    tpu.vector_store %arg11[%c0_220, %c0_221, %c0_222, %c0_223], %131 {strides = array<i32>} : memref<2x16x16x8xf32, #tpu.memory_space<vmem>>, vector<2x16x16x8xf32>,
    %c0_224 = arith.constant 0 : index
    %c0_225 = arith.constant 0 : index
    %c0_226 = arith.constant 0 : index
    %c0_227 = arith.constant 0 : index
    %133 = vector.load %arg11[%c0_224, %c0_225, %c0_226, %c0_227] : memref<2x16x16x8xf32, #tpu.memory_space<vmem>>, vector<2x16x16x8xf32>
    %c0_228 = arith.constant 0 : index
    %c2_229 = arith.constant 2 : index
    %c0_230 = arith.constant 0 : index
    %c0_231 = arith.constant 0 : index
    %134 = vector.load %arg10[%c0_228, %c2_229, %c0_230, %c0_231] : memref<2x18x16x384xbf16, #tpu.memory_space<vmem>>, vector<2x16x16x384xbf16>
    %c2_232 = arith.constant 2 : index
    %c0_233 = arith.constant 0 : index
    %c0_234 = arith.constant 0 : index
    %135 = vector.load %arg7[%c2_232, %c0_233, %c0_234] : memref<3x384x8xbf16, #tpu.memory_space<vmem>>, vector<1x384x8xbf16>
    %136 = vector.shape_cast %135 : vector<1x384x8xbf16> to vector<384x8xbf16>
    %cst_235 = arith.constant dense<0.000000e+00> : vector<2x16x16x8xf32>
    %137 = tpu.matmul %134, %136, %cst_235 {dimension_numbers = #tpu.dot_dimension_numbers<[3], [0], [0, 1, 2], [1], [0, 0, 0, 1, 0, 2, 1, 1], [], []>} : vector<2x16x16x384xbf16>, vector<384x8xbf16>, vector<2x16x16x8xf32> -> vector<2x16x16x8xf32>
    %138 = arith.addf %133, %137 : vector<2x16x16x8xf32>
    %c0_236 = arith.constant 0 : index
    %c0_237 = arith.constant 0 : index
    %c0_238 = arith.constant 0 : index
    %c0_239 = arith.constant 0 : index
    %139 = vector.load %arg11[%c0_236, %c0_237, %c0_238, %c0_239] : memref<2x16x16x8xf32, #tpu.memory_space<vmem>>, vector<2x16x16x8xf32>
    tpu.vector_store %arg11[%c0_236, %c0_237, %c0_238, %c0_239], %138 {strides = array<i32>} : memref<2x16x16x8xf32, #tpu.memory_space<vmem>>, vector<2x16x16x8xf32>,
    %c0_240 = arith.constant 0 : index
    %c0_241 = arith.constant 0 : index
    %c0_242 = arith.constant 0 : index
    %c0_243 = arith.constant 0 : index
    %140 = vector.load %arg11[%c0_240, %c0_241, %c0_242, %c0_243] : memref<2x16x16x8xf32, #tpu.memory_space<vmem>>, vector<2x16x16x8xf32>
    %c0_244 = arith.constant 0 : index
    %c0_245 = arith.constant 0 : index
    %c0_246 = arith.constant 0 : index
    %c12 = arith.constant 12 : index
    %141 = vector.load %arg9[%c0_244, %c0_245, %c0_246, %c12] : memref<2x16x16x128xf32, #tpu.memory_space<vmem>>, vector<2x16x16x8xf32>
    tpu.vector_store %arg9[%c0_244, %c0_245, %c0_246, %c12], %140 {strides = array<i32>} : memref<2x16x16x128xf32, #tpu.memory_space<vmem>>, vector<2x16x16x8xf32>,
    return
  }
}

</mosaic_0001>

<llo_original>
// kernel: dense_block_forward.1
$region0: #{dense_block_forward.1}
  #allocation0 [shape = 'u32[]', space=smem, size = 0x4, offset = 0x4, fixed_abs, tag = 'smem constant byte address 0x4 - core index']
  #allocation1 [shape = 'u32[144,128]{1,0:T(1,128)}', space=vmem, size = 0x12000, scoped, tag = 'internal scratch']
  #allocation2 [shape = 'bf16[2,18,16,384]{3,2,1,0:T(16,128)(2,1)}', space=vmem, size = 0x6c000, scoped, tag = 'scratch operand']
  #allocation3 [shape = 'f32[2,16,16,8]{3,2,1,0:T(8,128)}', space=vmem, size = 0x40000, scoped, tag = 'scratch operand']
  #allocation4 [shape = 'f32[1,1,1,128]{3,2,1,0:T(1,128)}', space=vmem, size = 0x200, scoped, tag = 'scratch operand']
  #allocation5 [shape = 'f32[1,1,1,128]{3,2,1,0:T(1,128)}', space=vmem, size = 0x200, scoped, tag = 'scratch operand']
  %s0 = inlined_call_operand.vmem [shape: f32[2,16,16,4], index: 0, kind: input, shape index: {}]
  %s1 = inlined_call_operand.vmem [shape: f32[1,1,1,128], index: 1, kind: input, shape index: {}]
  %s2 = inlined_call_operand.vmem [shape: f32[1,1,1,128], index: 2, kind: input, shape index: {}]
  %s3 = inlined_call_operand.vmem [shape: bf16[3,384,8], index: 3, kind: input, shape index: {}]
  %s4 = inlined_call_operand.vmem [shape: f32[1,1,1,8], index: 4, kind: input, shape index: {}]
  %s5 = inlined_call_operand.vmem [shape: f32[1,1,1,128], index: 5, kind: input, shape index: {}]
  %s6 = inlined_call_operand.vmem [shape: f32[1,1,1,128], index: 6, kind: input, shape index: {}]
  %s7 = inlined_call_operand.vmem [shape: bf16[3,384,8], index: 7, kind: input, shape index: {}]
  %s8 = inlined_call_operand.vmem [shape: f32[1,1,1,8], index: 8, kind: input, shape index: {}]
  %s9 = inlined_call_operand.vmem [shape: f32[2,16,16,128], index: 9, kind: output, shape index: {}]
  %s10 = sld [smem:[#allocation0]]
  $region46: #{dense_block_forward.1} parent=0
    _
  %s12 = ssub.s32 1, %s10
  %s13 = scalar_select 0, %s12, %s10
  // Predicated region
  $region2: #{dense_block_forward.1} parent=0 // pred_check
    _
  $region3: #{dense_block_forward.1} parent=0 // pred_check_branch
    %15 = sbr.rel (0) target = $region5
  $region4: #{dense_block_forward.1} parent=0 // pred_region
    _
  $region5: #{dense_block_forward.1} parent=0 // pred_fallthru
    _
  // Predicated region
  $region6: #{dense_block_forward.1} parent=0 // pred_check
    _
  $region7: #{dense_block_forward.1} parent=0 // pred_check_branch
    %17 = sbr.rel (0) target = $region9
  $region8: #{dense_block_forward.1} parent=0 // pred_region
    _
  $region9: #{dense_block_forward.1} parent=0 // pred_fallthru
    _
  // Predicated region
  $region10: #{dense_block_forward.1} parent=0 // pred_check
    _
  $region11: #{dense_block_forward.1} parent=0 // pred_check_branch
    %19 = sbr.rel (0) target = $region13
  $region12: #{dense_block_forward.1} parent=0 // pred_region
    _
  $region13: #{dense_block_forward.1} parent=0 // pred_fallthru
    _
  // Predicated region
  $region14: #{dense_block_forward.1} parent=0 // pred_check
    _
  $region15: #{dense_block_forward.1} parent=0 // pred_check_branch
    %21 = sbr.rel (0) target = $region17
  $region16: #{dense_block_forward.1} parent=0 // pred_region
    _
  $region17: #{dense_block_forward.1} parent=0 // pred_fallthru
    _
  // Predicated region
  $region18: #{dense_block_forward.1} parent=0 // pred_check
    _
  $region19: #{dense_block_forward.1} parent=0 // pred_check_branch
    %23 = sbr.rel (0) target = $region21
  $region20: #{dense_block_forward.1} parent=0 // pred_region
    _
  $region21: #{dense_block_forward.1} parent=0 // pred_fallthru
    _
  // Predicated region
  $region22: #{dense_block_forward.1} parent=0 // pred_check
    _
  $region23: #{dense_block_forward.1} parent=0 // pred_check_branch
    %25 = sbr.rel (0) target = $region25
  $region24: #{dense_block_forward.1} parent=0 // pred_region
    _
  $region25: #{dense_block_forward.1} parent=0 // pred_fallthru
    _
  // Predicated region
  $region26: #{dense_block_forward.1} parent=0 // pred_check
    _
  $region27: #{dense_block_forward.1} parent=0 // pred_check_branch
    %27 = sbr.rel (0) target = $region29
  $region28: #{dense_block_forward.1} parent=0 // pred_region
    _
  $region29: #{dense_block_forward.1} parent=0 // pred_fallthru
    _
  // Predicated region
  $region30: #{dense_block_forward.1} parent=0 // pred_check
    _
  $region31: #{dense_block_forward.1} parent=0 // pred_check_branch
    %29 = sbr.rel (0) target = $region33
  $region32: #{dense_block_forward.1} parent=0 // pred_region
    _
  $region33: #{dense_block_forward.1} parent=0 // pred_fallthru
    _
  // Predicated region
  $region34: #{dense_block_forward.1} parent=0 // pred_check
    _
  $region35: #{dense_block_forward.1} parent=0 // pred_check_branch
    %31 = sbr.rel (0) target = $region37
  $region36: #{dense_block_forward.1} parent=0 // pred_region
    _
  $region37: #{dense_block_forward.1} parent=0 // pred_fallthru
    _
  %v33 = vld [vmem:[%s0] sm:$0xff]
  %v34 = vld [vmem:[%s0 + $0x8] sm:$0xff]
  %v35 = vld [vmem:[%s0 + $0x10] sm:$0xff]
  %v36 = vld [vmem:[%s0 + $0x18] sm:$0xff]
  %v37 = vld [vmem:[%s0 + $0x20] sm:$0xff]
  %v38 = vld [vmem:[%s0 + $0x28] sm:$0xff]
  %v39 = vld [vmem:[%s0 + $0x30] sm:$0xff]
  %v40 = vld [vmem:[%s0 + $0x38] sm:$0xff]
  %v41 = vld [vmem:[%s0 + $0x40] sm:$0xff]
  %v42 = vld [vmem:[%s0 + $0x48] sm:$0xff]
  %v43 = vld [vmem:[%s0 + $0x50] sm:$0xff]
  %v44 = vld [vmem:[%s0 + $0x58] sm:$0xff]
  %v45 = vld [vmem:[%s0 + $0x60] sm:$0xff]
  %v46 = vld [vmem:[%s0 + $0x68] sm:$0xff]
  %v47 = vld [vmem:[%s0 + $0x70] sm:$0xff]
  %v48 = vld [vmem:[%s0 + $0x78] sm:$0xff]
  %v49 = vld [vmem:[%s0 + $0x80] sm:$0xff]
  %v50 = vld [vmem:[%s0 + $0x88] sm:$0xff]
  %v51 = vld [vmem:[%s0 + $0x90] sm:$0xff]
  %v52 = vld [vmem:[%s0 + $0x98] sm:$0xff]
  %v53 = vld [vmem:[%s0 + $0xa0] sm:$0xff]
  %v54 = vld [vmem:[%s0 + $0xa8] sm:$0xff]
  %v55 = vld [vmem:[%s0 + $0xb0] sm:$0xff]
  %v56 = vld [vmem:[%s0 + $0xb8] sm:$0xff]
  %v57 = vld [vmem:[%s0 + $0xc0] sm:$0xff]
  %v58 = vld [vmem:[%s0 + $0xc8] sm:$0xff]
  %v59 = vld [vmem:[%s0 + $0xd0] sm:$0xff]
  %v60 = vld [vmem:[%s0 + $0xd8] sm:$0xff]
  %v61 = vld [vmem:[%s0 + $0xe0] sm:$0xff]
  %v62 = vld [vmem:[%s0 + $0xe8] sm:$0xff]
  %v63 = vld [vmem:[%s0 + $0xf0] sm:$0xff]
  %v64 = vld [vmem:[%s0 + $0xf8] sm:$0xff]
  %v65 = vld [vmem:[%s0 + $0x100] sm:$0xff]
  %v66 = vld [vmem:[%s0 + $0x108] sm:$0xff]
  %v67 = vld [vmem:[%s0 + $0x110] sm:$0xff]
  %v68 = vld [vmem:[%s0 + $0x118] sm:$0xff]
  %v69 = vld [vmem:[%s0 + $0x120] sm:$0xff]
  %v70 = vld [vmem:[%s0 + $0x128] sm:$0xff]
  %v71 = vld [vmem:[%s0 + $0x130] sm:$0xff]
  %v72 = vld [vmem:[%s0 + $0x138] sm:$0xff]
  %v73 = vld [vmem:[%s0 + $0x140] sm:$0xff]
  %v74 = vld [vmem:[%s0 + $0x148] sm:$0xff]
  %v75 = vld [vmem:[%s0 + $0x150] sm:$0xff]
  %v76 = vld [vmem:[%s0 + $0x158] sm:$0xff]
  %v77 = vld [vmem:[%s0 + $0x160] sm:$0xff]
  %v78 = vld [vmem:[%s0 + $0x168] sm:$0xff]
  %v79 = vld [vmem:[%s0 + $0x170] sm:$0xff]
  %v80 = vld [vmem:[%s0 + $0x178] sm:$0xff]
  %v81 = vld [vmem:[%s0 + $0x180] sm:$0xff]
  %v82 = vld [vmem:[%s0 + $0x188] sm:$0xff]
  %v83 = vld [vmem:[%s0 + $0x190] sm:$0xff]
  %v84 = vld [vmem:[%s0 + $0x198] sm:$0xff]
  %v85 = vld [vmem:[%s0 + $0x1a0] sm:$0xff]
  %v86 = vld [vmem:[%s0 + $0x1a8] sm:$0xff]
  %v87 = vld [vmem:[%s0 + $0x1b0] sm:$0xff]
  %v88 = vld [vmem:[%s0 + $0x1b8] sm:$0xff]
  %v89 = vld [vmem:[%s0 + $0x1c0] sm:$0xff]
  %v90 = vld [vmem:[%s0 + $0x1c8] sm:$0xff]
  %v91 = vld [vmem:[%s0 + $0x1d0] sm:$0xff]
  %v92 = vld [vmem:[%s0 + $0x1d8] sm:$0xff]
  %v93 = vld [vmem:[%s0 + $0x1e0] sm:$0xff]
  %v94 = vld [vmem:[%s0 + $0x1e8] sm:$0xff]
  %v95 = vld [vmem:[%s0 + $0x1f0] sm:$0xff]
  %v96 = vld [vmem:[%s0 + $0x1f8] sm:$0xff]
  %vm97 = vcmask 31744
  %98 = vst.msk [vmem:[%s9] sm:$0xff] %vm97, %v33
  %99 = vst.msk [vmem:[%s9 + $0x8] sm:$0xff] %vm97, %v34
  %100 = vst.msk [vmem:[%s9 + $0x10] sm:$0xff] %vm97, %v35
  %101 = vst.msk [vmem:[%s9 + $0x18] sm:$0xff] %vm97, %v36
  %102 = vst.msk [vmem:[%s9 + $0x20] sm:$0xff] %vm97, %v37
  %103 = vst.msk [vmem:[%s9 + $0x28] sm:$0xff] %vm97, %v38
  %104 = vst.msk [vmem:[%s9 + $0x30] sm:$0xff] %vm97, %v39
  %105 = vst.msk [vmem:[%s9 + $0x38] sm:$0xff] %vm97, %v40
  %106 = vst.msk [vmem:[%s9 + $0x40] sm:$0xff] %vm97, %v41
  %107 = vst.msk [vmem:[%s9 + $0x48] sm:$0xff] %vm97, %v42
  %108 = vst.msk [vmem:[%s9 + $0x50] sm:$0xff] %vm97, %v43
  %109 = vst.msk [vmem:[%s9 + $0x58] sm:$0xff] %vm97, %v44
  %110 = vst.msk [vmem:[%s9 + $0x60] sm:$0xff] %vm97, %v45
  %111 = vst.msk [vmem:[%s9 + $0x68] sm:$0xff] %vm97, %v46
  %112 = vst.msk [vmem:[%s9 + $0x70] sm:$0xff] %vm97, %v47
  %113 = vst.msk [vmem:[%s9 + $0x78] sm:$0xff] %vm97, %v48
  %114 = vst.msk [vmem:[%s9 + $0x80] sm:$0xff] %vm97, %v49
  %115 = vst.msk [vmem:[%s9 + $0x88] sm:$0xff] %vm97, %v50
  %116 = vst.msk [vmem:[%s9 + $0x90] sm:$0xff] %vm97, %v51
  %117 = vst.msk [vmem:[%s9 + $0x98] sm:$0xff] %vm97, %v52
  %118 = vst.msk [vmem:[%s9 + $0xa0] sm:$0xff] %vm97, %v53
  %119 = vst.msk [vmem:[%s9 + $0xa8] sm:$0xff] %vm97, %v54
  %120 = vst.msk [vmem:[%s9 + $0xb0] sm:$0xff] %vm97, %v55
  %121 = vst.msk [vmem:[%s9 + $0xb8] sm:$0xff] %vm97, %v56
  %122 = vst.msk [vmem:[%s9 + $0xc0] sm:$0xff] %vm97, %v57
  %123 = vst.msk [vmem:[%s9 + $0xc8] sm:$0xff] %vm97, %v58
  %124 = vst.msk [vmem:[%s9 + $0xd0] sm:$0xff] %vm97, %v59
  %125 = vst.msk [vmem:[%s9 + $0xd8] sm:$0xff] %vm97, %v60
  %126 = vst.msk [vmem:[%s9 + $0xe0] sm:$0xff] %vm97, %v61
  %127 = vst.msk [vmem:[%s9 + $0xe8] sm:$0xff] %vm97, %v62
  %128 = vst.msk [vmem:[%s9 + $0xf0] sm:$0xff] %vm97, %v63
  %129 = vst.msk [vmem:[%s9 + $0xf8] sm:$0xff] %vm97, %v64
  %130 = vst.msk [vmem:[%s9 + $0x100] sm:$0xff] %vm97, %v65
  %131 = vst.msk [vmem:[%s9 + $0x108] sm:$0xff] %vm97, %v66
  %132 = vst.msk [vmem:[%s9 + $0x110] sm:$0xff] %vm97, %v67
  %133 = vst.msk [vmem:[%s9 + $0x118] sm:$0xff] %vm97, %v68
  %134 = vst.msk [vmem:[%s9 + $0x120] sm:$0xff] %vm97, %v69
  %135 = vst.msk [vmem:[%s9 + $0x128] sm:$0xff] %vm97, %v70
  %136 = vst.msk [vmem:[%s9 + $0x130] sm:$0xff] %vm97, %v71
  %137 = vst.msk [vmem:[%s9 + $0x138] sm:$0xff] %vm97, %v72
  %138 = vst.msk [vmem:[%s9 + $0x140] sm:$0xff] %vm97, %v73
  %139 = vst.msk [vmem:[%s9 + $0x148] sm:$0xff] %vm97, %v74
  %140 = vst.msk [vmem:[%s9 + $0x150] sm:$0xff] %vm97, %v75
  %141 = vst.msk [vmem:[%s9 + $0x158] sm:$0xff] %vm97, %v76
  %142 = vst.msk [vmem:[%s9 + $0x160] sm:$0xff] %vm97, %v77
  %143 = vst.msk [vmem:[%s9 + $0x168] sm:$0xff] %vm97, %v78
  %144 = vst.msk [vmem:[%s9 + $0x170] sm:$0xff] %vm97, %v79
  %145 = vst.msk [vmem:[%s9 + $0x178] sm:$0xff] %vm97, %v80
  %146 = vst.msk [vmem:[%s9 + $0x180] sm:$0xff] %vm97, %v81
  %147 = vst.msk [vmem:[%s9 + $0x188] sm:$0xff] %vm97, %v82
  %148 = vst.msk [vmem:[%s9 + $0x190] sm:$0xff] %vm97, %v83
  %149 = vst.msk [vmem:[%s9 + $0x198] sm:$0xff] %vm97, %v84
  %150 = vst.msk [vmem:[%s9 + $0x1a0] sm:$0xff] %vm97, %v85
  %151 = vst.msk [vmem:[%s9 + $0x1a8] sm:$0xff] %vm97, %v86
  %152 = vst.msk [vmem:[%s9 + $0x1b0] sm:$0xff] %vm97, %v87
  %153 = vst.msk [vmem:[%s9 + $0x1b8] sm:$0xff] %vm97, %v88
  %154 = vst.msk [vmem:[%s9 + $0x1c0] sm:$0xff] %vm97, %v89
  %155 = vst.msk [vmem:[%s9 + $0x1c8] sm:$0xff] %vm97, %v90
  %156 = vst.msk [vmem:[%s9 + $0x1d0] sm:$0xff] %vm97, %v91
  %157 = vst.msk [vmem:[%s9 + $0x1d8] sm:$0xff] %vm97, %v92
  %158 = vst.msk [vmem:[%s9 + $0x1e0] sm:$0xff] %vm97, %v93
  %159 = vst.msk [vmem:[%s9 + $0x1e8] sm:$0xff] %vm97, %v94
  %160 = vst.msk [vmem:[%s9 + $0x1f0] sm:$0xff] %vm97, %v95
  %161 = vst.msk [vmem:[%s9 + $0x1f8] sm:$0xff] %vm97, %v96
  %vm162 = vcmask 1047584
  %163 = vst.msk [vmem:[%s9] sm:$0xff] %vm162, 0.0
  %164 = vst.msk [vmem:[%s9 + $0x8] sm:$0xff] %vm162, 0.0
  %165 = vst.msk [vmem:[%s9 + $0x10] sm:$0xff] %vm162, 0.0
  %166 = vst.msk [vmem:[%s9 + $0x18] sm:$0xff] %vm162, 0.0
  %167 = vst.msk [vmem:[%s9 + $0x20] sm:$0xff] %vm162, 0.0
  %168 = vst.msk [vmem:[%s9 + $0x28] sm:$0xff] %vm162, 0.0
  %169 = vst.msk [vmem:[%s9 + $0x30] sm:$0xff] %vm162, 0.0
  %170 = vst.msk [vmem:[%s9 + $0x38] sm:$0xff] %vm162, 0.0
  %171 = vst.msk [vmem:[%s9 + $0x40] sm:$0xff] %vm162, 0.0
  %172 = vst.msk [vmem:[%s9 + $0x48] sm:$0xff] %vm162, 0.0
  %173 = vst.msk [vmem:[%s9 + $0x50] sm:$0xff] %vm162, 0.0
  %174 = vst.msk [vmem:[%s9 + $0x58] sm:$0xff] %vm162, 0.0
  %175 = vst.msk [vmem:[%s9 + $0x60] sm:$0xff] %vm162, 0.0
  %176 = vst.msk [vmem:[%s9 + $0x68] sm:$0xff] %vm162, 0.0
  %177 = vst.msk [vmem:[%s9 + $0x70] sm:$0xff] %vm162, 0.0
  %178 = vst.msk [vmem:[%s9 + $0x78] sm:$0xff] %vm162, 0.0
  %179 = vst.msk [vmem:[%s9 + $0x80] sm:$0xff] %vm162, 0.0
  %180 = vst.msk [vmem:[%s9 + $0x88] sm:$0xff] %vm162, 0.0
  %181 = vst.msk [vmem:[%s9 + $0x90] sm:$0xff] %vm162, 0.0
  %182 = vst.msk [vmem:[%s9 + $0x98] sm:$0xff] %vm162, 0.0
  %183 = vst.msk [vmem:[%s9 + $0xa0] sm:$0xff] %vm162, 0.0
  %184 = vst.msk [vmem:[%s9 + $0xa8] sm:$0xff] %vm162, 0.0
  %185 = vst.msk [vmem:[%s9 + $0xb0] sm:$0xff] %vm162, 0.0
  %186 = vst.msk [vmem:[%s9 + $0xb8] sm:$0xff] %vm162, 0.0
  %187 = vst.msk [vmem:[%s9 + $0xc0] sm:$0xff] %vm162, 0.0
  %188 = vst.msk [vmem:[%s9 + $0xc8] sm:$0xff] %vm162, 0.0
  %189 = vst.msk [vmem:[%s9 + $0xd0] sm:$0xff] %vm162, 0.0
  %190 = vst.msk [vmem:[%s9 + $0xd8] sm:$0xff] %vm162, 0.0
  %191 = vst.msk [vmem:[%s9 + $0xe0] sm:$0xff] %vm162, 0.0
  %192 = vst.msk [vmem:[%s9 + $0xe8] sm:$0xff] %vm162, 0.0
  %193 = vst.msk [vmem:[%s9 + $0xf0] sm:$0xff] %vm162, 0.0
  %194 = vst.msk [vmem:[%s9 + $0xf8] sm:$0xff] %vm162, 0.0
  %195 = vst.msk [vmem:[%s9 + $0x100] sm:$0xff] %vm162, 0.0
  %196 = vst.msk [vmem:[%s9 + $0x108] sm:$0xff] %vm162, 0.0
  %197 = vst.msk [vmem:[%s9 + $0x110] sm:$0xff] %vm162, 0.0
  %198 = vst.msk [vmem:[%s9 + $0x118] sm:$0xff] %vm162, 0.0
  %199 = vst.msk [vmem:[%s9 + $0x120] sm:$0xff] %vm162, 0.0
  %200 = vst.msk [vmem:[%s9 + $0x128] sm:$0xff] %vm162, 0.0
  %201 = vst.msk [vmem:[%s9 + $0x130] sm:$0xff] %vm162, 0.0
  %202 = vst.msk [vmem:[%s9 + $0x138] sm:$0xff] %vm162, 0.0
  %203 = vst.msk [vmem:[%s9 + $0x140] sm:$0xff] %vm162, 0.0
  %204 = vst.msk [vmem:[%s9 + $0x148] sm:$0xff] %vm162, 0.0
  %205 = vst.msk [vmem:[%s9 + $0x150] sm:$0xff] %vm162, 0.0
  %206 = vst.msk [vmem:[%s9 + $0x158] sm:$0xff] %vm162, 0.0
  %207 = vst.msk [vmem:[%s9 + $0x160] sm:$0xff] %vm162, 0.0
  %208 = vst.msk [vmem:[%s9 + $0x168] sm:$0xff] %vm162, 0.0
  %209 = vst.msk [vmem:[%s9 + $0x170] sm:$0xff] %vm162, 0.0
  %210 = vst.msk [vmem:[%s9 + $0x178] sm:$0xff] %vm162, 0.0
  %211 = vst.msk [vmem:[%s9 + $0x180] sm:$0xff] %vm162, 0.0
  %212 = vst.msk [vmem:[%s9 + $0x188] sm:$0xff] %vm162, 0.0
  %213 = vst.msk [vmem:[%s9 + $0x190] sm:$0xff] %vm162, 0.0
  %214 = vst.msk [vmem:[%s9 + $0x198] sm:$0xff] %vm162, 0.0
  %215 = vst.msk [vmem:[%s9 + $0x1a0] sm:$0xff] %vm162, 0.0
  %216 = vst.msk [vmem:[%s9 + $0x1a8] sm:$0xff] %vm162, 0.0
  %217 = vst.msk [vmem:[%s9 + $0x1b0] sm:$0xff] %vm162, 0.0
  %218 = vst.msk [vmem:[%s9 + $0x1b8] sm:$0xff] %vm162, 0.0
  %219 = vst.msk [vmem:[%s9 + $0x1c0] sm:$0xff] %vm162, 0.0
  %220 = vst.msk [vmem:[%s9 + $0x1c8] sm:$0xff] %vm162, 0.0
  %221 = vst.msk [vmem:[%s9 + $0x1d0] sm:$0xff] %vm162, 0.0
  %222 = vst.msk [vmem:[%s9 + $0x1d8] sm:$0xff] %vm162, 0.0
  %223 = vst.msk [vmem:[%s9 + $0x1e0] sm:$0xff] %vm162, 0.0
  %224 = vst.msk [vmem:[%s9 + $0x1e8] sm:$0xff] %vm162, 0.0
  %225 = vst.msk [vmem:[%s9 + $0x1f0] sm:$0xff] %vm162, 0.0
  %226 = vst.msk [vmem:[%s9 + $0x1f8] sm:$0xff] %vm162, 0.0
  %227 = vst [vmem:[#allocation4] sm:$0x1] 0.0
  %228 = vst [vmem:[#allocation5] sm:$0x1] 0.0
  %v229 = vsel %vm97, %v33, 0.0
  %v230 = vsel %vm97, %v34, 0.0
  %v231 = vadd.f32 %v229, %v230
  %v232 = vsel %vm97, %v35, 0.0
  %v233 = vadd.f32 %v231, %v232
  %v234 = vsel %vm97, %v36, 0.0
  %v235 = vadd.f32 %v233, %v234
  %v236 = vsel %vm97, %v37, 0.0
  %v237 = vadd.f32 %v235, %v236
  %v238 = vsel %vm97, %v38, 0.0
  %v239 = vadd.f32 %v237, %v238
  %v240 = vsel %vm97, %v39, 0.0
  %v241 = vadd.f32 %v239, %v240
  %v242 = vsel %vm97, %v40, 0.0
  %v243 = vadd.f32 %v241, %v242
  %v244 = vsel %vm97, %v41, 0.0
  %v245 = vadd.f32 %v243, %v244
  %v246 = vsel %vm97, %v42, 0.0
  %v247 = vadd.f32 %v245, %v246
  %v248 = vsel %vm97, %v43, 0.0
  %v249 = vadd.f32 %v247, %v248
  %v250 = vsel %vm97, %v44, 0.0
  %v251 = vadd.f32 %v249, %v250
  %v252 = vsel %vm97, %v45, 0.0
  %v253 = vadd.f32 %v251, %v252
  %v254 = vsel %vm97, %v46, 0.0
  %v255 = vadd.f32 %v253, %v254
  %v256 = vsel %vm97, %v47, 0.0
  %v257 = vadd.f32 %v255, %v256
  %v258 = vsel %vm97, %v48, 0.0
  %v259 = vadd.f32 %v257, %v258
  %v260 = vsel %vm97, %v49, 0.0
  %v261 = vadd.f32 %v259, %v260
  %v262 = vsel %vm97, %v50, 0.0
  %v263 = vadd.f32 %v261, %v262
  %v264 = vsel %vm97, %v51, 0.0
  %v265 = vadd.f32 %v263, %v264
  %v266 = vsel %vm97, %v52, 0.0
  %v267 = vadd.f32 %v265, %v266
  %v268 = vsel %vm97, %v53, 0.0
  %v269 = vadd.f32 %v267, %v268
  %v270 = vsel %vm97, %v54, 0.0
  %v271 = vadd.f32 %v269, %v270
  %v272 = vsel %vm97, %v55, 0.0
  %v273 = vadd.f32 %v271, %v272
  %v274 = vsel %vm97, %v56, 0.0
  %v275 = vadd.f32 %v273, %v274
  %v276 = vsel %vm97, %v57, 0.0
  %v277 = vadd.f32 %v275, %v276
  %v278 = vsel %vm97, %v58, 0.0
  %v279 = vadd.f32 %v277, %v278
  %v280 = vsel %vm97, %v59, 0.0
  %v281 = vadd.f32 %v279, %v280
  %v282 = vsel %vm97, %v60, 0.0
  %v283 = vadd.f32 %v281, %v282
  %v284 = vsel %vm97, %v61, 0.0
  %v285 = vadd.f32 %v283, %v284
  %v286 = vsel %vm97, %v62, 0.0
  %v287 = vadd.f32 %v285, %v286
  %v288 = vsel %vm97, %v63, 0.0
  %v289 = vadd.f32 %v287, %v288
  %v290 = vsel %vm97, %v64, 0.0
  %v291 = vadd.f32 %v289, %v290
  %v292 = vsel %vm97, %v65, 0.0
  %v293 = vadd.f32 %v291, %v292
  %v294 = vsel %vm97, %v66, 0.0
  %v295 = vadd.f32 %v293, %v294
  %v296 = vsel %vm97, %v67, 0.0
  %v297 = vadd.f32 %v295, %v296
  %v298 = vsel %vm97, %v68, 0.0
  %v299 = vadd.f32 %v297, %v298
  %v300 = vsel %vm97, %v69, 0.0
  %v301 = vadd.f32 %v299, %v300
  %v302 = vsel %vm97, %v70, 0.0
  %v303 = vadd.f32 %v301, %v302
  %v304 = vsel %vm97, %v71, 0.0
  %v305 = vadd.f32 %v303, %v304
  %v306 = vsel %vm97, %v72, 0.0
  %v307 = vadd.f32 %v305, %v306
  %v308 = vsel %vm97, %v73, 0.0
  %v309 = vadd.f32 %v307, %v308
  %v310 = vsel %vm97, %v74, 0.0
  %v311 = vadd.f32 %v309, %v310
  %v312 = vsel %vm97, %v75, 0.0
  %v313 = vadd.f32 %v311, %v312
  %v314 = vsel %vm97, %v76, 0.0
  %v315 = vadd.f32 %v313, %v314
  %v316 = vsel %vm97, %v77, 0.0
  %v317 = vadd.f32 %v315, %v316
  %v318 = vsel %vm97, %v78, 0.0
  %v319 = vadd.f32 %v317, %v318
  %v320 = vsel %vm97, %v79, 0.0
  %v321 = vadd.f32 %v319, %v320
  %v322 = vsel %vm97, %v80, 0.0
  %v323 = vadd.f32 %v321, %v322
  %v324 = vsel %vm97, %v81, 0.0
  %v325 = vadd.f32 %v323, %v324
  %v326 = vsel %vm97, %v82, 0.0
  %v327 = vadd.f32 %v325, %v326
  %v328 = vsel %vm97, %v83, 0.0
  %v329 = vadd.f32 %v327, %v328
  %v330 = vsel %vm97, %v84, 0.0
  %v331 = vadd.f32 %v329, %v330
  %v332 = vsel %vm97, %v85, 0.0
  %v333 = vadd.f32 %v331, %v332
  %v334 = vsel %vm97, %v86, 0.0
  %v335 = vadd.f32 %v333, %v334
  %v336 = vsel %vm97, %v87, 0.0
  %v337 = vadd.f32 %v335, %v336
  %v338 = vsel %vm97, %v88, 0.0
  %v339 = vadd.f32 %v337, %v338
  %v340 = vsel %vm97, %v89, 0.0
  %v341 = vadd.f32 %v339, %v340
  %v342 = vsel %vm97, %v90, 0.0
  %v343 = vadd.f32 %v341, %v342
  %v344 = vsel %vm97, %v91, 0.0
  %v345 = vadd.f32 %v343, %v344
  %v346 = vsel %vm97, %v92, 0.0
  %v347 = vadd.f32 %v345, %v346
  %v348 = vsel %vm97, %v93, 0.0
  %v349 = vadd.f32 %v347, %v348
  %v350 = vsel %vm97, %v94, 0.0
  %v351 = vadd.f32 %v349, %v350
  %v352 = vsel %vm97, %v95, 0.0
  %v353 = vadd.f32 %v351, %v352
  %v354 = vsel %vm97, %v96, 0.0
  %v355 = vadd.f32 %v353, %v354
  %v356 = vrot.slane %v355, 4
  %v357 = vadd.f32 %v355, %v356
  %v358 = vrot.slane %v357, 2
  %v359 = vadd.f32 %v357, %v358
  %v360 = vrot.slane %v359, 1
  %v361 = vadd.f32 %v359, %v360
  %vm362 = vcmask 24576
  %363 = vst.msk [vmem:[#allocation4] sm:$0x1] %vm362, %v361
  %v364 = vmul.f32 %v33, %v33
  %v365 = vmul.f32 %v34, %v34
  %v366 = vmul.f32 %v35, %v35
  %v367 = vmul.f32 %v36, %v36
  %v368 = vmul.f32 %v37, %v37
  %v369 = vmul.f32 %v38, %v38
  %v370 = vmul.f32 %v39, %v39
  %v371 = vmul.f32 %v40, %v40
  %v372 = vmul.f32 %v41, %v41
  %v373 = vmul.f32 %v42, %v42
  %v374 = vmul.f32 %v43, %v43
  %v375 = vmul.f32 %v44, %v44
  %v376 = vmul.f32 %v45, %v45
  %v377 = vmul.f32 %v46, %v46
  %v378 = vmul.f32 %v47, %v47
  %v379 = vmul.f32 %v48, %v48
  %v380 = vmul.f32 %v49, %v49
  %v381 = vmul.f32 %v50, %v50
  %v382 = vmul.f32 %v51, %v51
  %v383 = vmul.f32 %v52, %v52
  %v384 = vmul.f32 %v53, %v53
  %v385 = vmul.f32 %v54, %v54
  %v386 = vmul.f32 %v55, %v55
  %v387 = vmul.f32 %v56, %v56
  %v388 = vmul.f32 %v57, %v57
  %v389 = vmul.f32 %v58, %v58
  %v390 = vmul.f32 %v59, %v59
  %v391 = vmul.f32 %v60, %v60
  %v392 = vmul.f32 %v61, %v61
  %v393 = vmul.f32 %v62, %v62
  %v394 = vmul.f32 %v63, %v63
  %v395 = vmul.f32 %v64, %v64
  %v396 = vmul.f32 %v65, %v65
  %v397 = vmul.f32 %v66, %v66
  %v398 = vmul.f32 %v67, %v67
  %v399 = vmul.f32 %v68, %v68
  %v400 = vmul.f32 %v69, %v69
  %v401 = vmul.f32 %v70, %v70
  %v402 = vmul.f32 %v71, %v71
  %v403 = vmul.f32 %v72, %v72
  %v404 = vmul.f32 %v73, %v73
  %v405 = vmul.f32 %v74, %v74
  %v406 = vmul.f32 %v75, %v75
  %v407 = vmul.f32 %v76, %v76
  %v408 = vmul.f32 %v77, %v77
  %v409 = vmul.f32 %v78, %v78
  %v410 = vmul.f32 %v79, %v79
  %v411 = vmul.f32 %v80, %v80
  %v412 = vmul.f32 %v81, %v81
  %v413 = vmul.f32 %v82, %v82
  %v414 = vmul.f32 %v83, %v83
  %v415 = vmul.f32 %v84, %v84
  %v416 = vmul.f32 %v85, %v85
  %v417 = vmul.f32 %v86, %v86
  %v418 = vmul.f32 %v87, %v87
  %v419 = vmul.f32 %v88, %v88
  %v420 = vmul.f32 %v89, %v89
  %v421 = vmul.f32 %v90, %v90
  %v422 = vmul.f32 %v91, %v91
  %v423 = vmul.f32 %v92, %v92
  %v424 = vmul.f32 %v93, %v93
  %v425 = vmul.f32 %v94, %v94
  %v426 = vmul.f32 %v95, %v95
  %v427 = vmul.f32 %v96, %v96
  %v428 = vsel %vm97, %v364, 0.0
  %v429 = vsel %vm97, %v365, 0.0
  %v430 = vadd.f32 %v428, %v429
  %v431 = vsel %vm97, %v366, 0.0
  %v432 = vadd.f32 %v430, %v431
  %v433 = vsel %vm97, %v367, 0.0
  %v434 = vadd.f32 %v432, %v433
  %v435 = vsel %vm97, %v368, 0.0
  %v436 = vadd.f32 %v434, %v435
  %v437 = vsel %vm97, %v369, 0.0
  %v438 = vadd.f32 %v436, %v437
  %v439 = vsel %vm97, %v370, 0.0
  %v440 = vadd.f32 %v438, %v439
  %v441 = vsel %vm97, %v371, 0.0
  %v442 = vadd.f32 %v440, %v441
  %v443 = vsel %vm97, %v372, 0.0
  %v444 = vadd.f32 %v442, %v443
  %v445 = vsel %vm97, %v373, 0.0
  %v446 = vadd.f32 %v444, %v445
  %v447 = vsel %vm97, %v374, 0.0
  %v448 = vadd.f32 %v446, %v447
  %v449 = vsel %vm97, %v375, 0.0
  %v450 = vadd.f32 %v448, %v449
  %v451 = vsel %vm97, %v376, 0.0
  %v452 = vadd.f32 %v450, %v451
  %v453 = vsel %vm97, %v377, 0.0
  %v454 = vadd.f32 %v452, %v453
  %v455 = vsel %vm97, %v378, 0.0
  %v456 = vadd.f32 %v454, %v455
  %v457 = vsel %vm97, %v379, 0.0
  %v458 = vadd.f32 %v456, %v457
  %v459 = vsel %vm97, %v380, 0.0
  %v460 = vadd.f32 %v458, %v459
  %v461 = vsel %vm97, %v381, 0.0
  %v462 = vadd.f32 %v460, %v461
  %v463 = vsel %vm97, %v382, 0.0
  %v464 = vadd.f32 %v462, %v463
  %v465 = vsel %vm97, %v383, 0.0
  %v466 = vadd.f32 %v464, %v465
  %v467 = vsel %vm97, %v384, 0.0
  %v468 = vadd.f32 %v466, %v467
  %v469 = vsel %vm97, %v385, 0.0
  %v470 = vadd.f32 %v468, %v469
  %v471 = vsel %vm97, %v386, 0.0
  %v472 = vadd.f32 %v470, %v471
  %v473 = vsel %vm97, %v387, 0.0
  %v474 = vadd.f32 %v472, %v473
  %v475 = vsel %vm97, %v388, 0.0
  %v476 = vadd.f32 %v474, %v475
  %v477 = vsel %vm97, %v389, 0.0
  %v478 = vadd.f32 %v476, %v477
  %v479 = vsel %vm97, %v390, 0.0
  %v480 = vadd.f32 %v478, %v479
  %v481 = vsel %vm97, %v391, 0.0
  %v482 = vadd.f32 %v480, %v481
  %v483 = vsel %vm97, %v392, 0.0
  %v484 = vadd.f32 %v482, %v483
  %v485 = vsel %vm97, %v393, 0.0
  %v486 = vadd.f32 %v484, %v485
  %v487 = vsel %vm97, %v394, 0.0
  %v488 = vadd.f32 %v486, %v487
  %v489 = vsel %vm97, %v395, 0.0
  %v490 = vadd.f32 %v488, %v489
  %v491 = vsel %vm97, %v396, 0.0
  %v492 = vadd.f32 %v490, %v491
  %v493 = vsel %vm97, %v397, 0.0
  %v494 = vadd.f32 %v492, %v493
  %v495 = vsel %vm97, %v398, 0.0
  %v496 = vadd.f32 %v494, %v495
  %v497 = vsel %vm97, %v399, 0.0
  %v498 = vadd.f32 %v496, %v497
  %v499 = vsel %vm97, %v400, 0.0
  %v500 = vadd.f32 %v498, %v499
  %v501 = vsel %vm97, %v401, 0.0
  %v502 = vadd.f32 %v500, %v501
  %v503 = vsel %vm97, %v402, 0.0
  %v504 = vadd.f32 %v502, %v503
  %v505 = vsel %vm97, %v403, 0.0
  %v506 = vadd.f32 %v504, %v505
  %v507 = vsel %vm97, %v404, 0.0
  %v508 = vadd.f32 %v506, %v507
  %v509 = vsel %vm97, %v405, 0.0
  %v510 = vadd.f32 %v508, %v509
  %v511 = vsel %vm97, %v406, 0.0
  %v512 = vadd.f32 %v510, %v511
  %v513 = vsel %vm97, %v407, 0.0
  %v514 = vadd.f32 %v512, %v513
  %v515 = vsel %vm97, %v408, 0.0
  %v516 = vadd.f32 %v514, %v515
  %v517 = vsel %vm97, %v409, 0.0
  %v518 = vadd.f32 %v516, %v517
  %v519 = vsel %vm97, %v410, 0.0
  %v520 = vadd.f32 %v518, %v519
  %v521 = vsel %vm97, %v411, 0.0
  %v522 = vadd.f32 %v520, %v521
  %v523 = vsel %vm97, %v412, 0.0
  %v524 = vadd.f32 %v522, %v523
  %v525 = vsel %vm97, %v413, 0.0
  %v526 = vadd.f32 %v524, %v525
  %v527 = vsel %vm97, %v414, 0.0
  %v528 = vadd.f32 %v526, %v527
  %v529 = vsel %vm97, %v415, 0.0
  %v530 = vadd.f32 %v528, %v529
  %v531 = vsel %vm97, %v416, 0.0
  %v532 = vadd.f32 %v530, %v531
  %v533 = vsel %vm97, %v417, 0.0
  %v534 = vadd.f32 %v532, %v533
  %v535 = vsel %vm97, %v418, 0.0
  %v536 = vadd.f32 %v534, %v535
  %v537 = vsel %vm97, %v419, 0.0
  %v538 = vadd.f32 %v536, %v537
  %v539 = vsel %vm97, %v420, 0.0
  %v540 = vadd.f32 %v538, %v539
  %v541 = vsel %vm97, %v421, 0.0
  %v542 = vadd.f32 %v540, %v541
  %v543 = vsel %vm97, %v422, 0.0
  %v544 = vadd.f32 %v542, %v543
  %v545 = vsel %vm97, %v423, 0.0
  %v546 = vadd.f32 %v544, %v545
  %v547 = vsel %vm97, %v424, 0.0
  %v548 = vadd.f32 %v546, %v547
  %v549 = vsel %vm97, %v425, 0.0
  %v550 = vadd.f32 %v548, %v549
  %v551 = vsel %vm97, %v426, 0.0
  %v552 = vadd.f32 %v550, %v551
  %v553 = vsel %vm97, %v427, 0.0
  %v554 = vadd.f32 %v552, %v553
  %v555 = vrot.slane %v554, 4
  %v556 = vadd.f32 %v554, %v555
  %v557 = vrot.slane %v556, 2
  %v558 = vadd.f32 %v556, %v557
  %v559 = vrot.slane %v558, 1
  %v560 = vadd.f32 %v558, %v559
  %561 = vst.msk [vmem:[#allocation5] sm:$0x1] %vm362, %v560
  %562 = vst [vmem:[#allocation2] sm:$0xff] 0
  %563 = vst [vmem:[#allocation2 + $0x8] sm:$0xff] 0
  %564 = vst [vmem:[#allocation2 + $0x10] sm:$0xff] 0
  %565 = vst [vmem:[#allocation2 + $0x1b0] sm:$0xff] 0
  %566 = vst [vmem:[#allocation2 + $0x1b8] sm:$0xff] 0
  %567 = vst [vmem:[#allocation2 + $0x1c0] sm:$0xff] 0
  %s568 = scalar_lea.vmem [#allocation2], 408
  %569 = vst [vmem:[%s568] sm:$0xff] 0
  %570 = vst [vmem:[%s568 + $0x8] sm:$0xff] 0
  %571 = vst [vmem:[%s568 + $0x10] sm:$0xff] 0
  %572 = vst [vmem:[%s568 + $0x1b0] sm:$0xff] 0
  %573 = vst [vmem:[%s568 + $0x1b8] sm:$0xff] 0
  %574 = vst [vmem:[%s568 + $0x1c0] sm:$0xff] 0
  %v575 = vld [vmem:[#allocation4] sm:$0x1]
  %v576 = vmul.f32 %v575, 0.001953125
  %v577 = vld [vmem:[#allocation5] sm:$0x1]
  %v578 = vmul.f32 %v577, 0.001953125
  %v579 = vmul.f32 %v576, %v576
  %v580 = vsub.f32 %v578, %v579
  %v581 = vmax.f32 %v580, 0.0
  %v582 = vld [vmem:[%s1] sm:$0x1]
  %v583 = vadd.f32 %v581, 1e-05
  %v584 = vrsqrt.pop %v583
  %v585 = vmul.f32 %v582, %v584
  %v586 = vld [vmem:[%s2] sm:$0x1]
  %v587 = vmul.f32 %v576, %v585
  %v588 = vsub.f32 %v586, %v587
  %v589 = vld [vmem:[%s9] sm:$0xff]
  %v590 = vld [vmem:[%s9 + $0x8] sm:$0xff]
  %v591 = vld [vmem:[%s9 + $0x10] sm:$0xff]
  %v592 = vld [vmem:[%s9 + $0x18] sm:$0xff]
  %v593 = vld [vmem:[%s9 + $0x20] sm:$0xff]
  %v594 = vld [vmem:[%s9 + $0x28] sm:$0xff]
  %v595 = vld [vmem:[%s9 + $0x30] sm:$0xff]
  %v596 = vld [vmem:[%s9 + $0x38] sm:$0xff]
  %v597 = vld [vmem:[%s9 + $0x40] sm:$0xff]
  %v598 = vld [vmem:[%s9 + $0x48] sm:$0xff]
  %v599 = vld [vmem:[%s9 + $0x50] sm:$0xff]
  %v600 = vld [vmem:[%s9 + $0x58] sm:$0xff]
  %v601 = vld [vmem:[%s9 + $0x60] sm:$0xff]
  %v602 = vld [vmem:[%s9 + $0x68] sm:$0xff]
  %v603 = vld [vmem:[%s9 + $0x70] sm:$0xff]
  %v604 = vld [vmem:[%s9 + $0x78] sm:$0xff]
  %v605 = vld [vmem:[%s9 + $0x80] sm:$0xff]
  %v606 = vld [vmem:[%s9 + $0x88] sm:$0xff]
  %v607 = vld [vmem:[%s9 + $0x90] sm:$0xff]
  %v608 = vld [vmem:[%s9 + $0x98] sm:$0xff]
  %v609 = vld [vmem:[%s9 + $0xa0] sm:$0xff]
  %v610 = vld [vmem:[%s9 + $0xa8] sm:$0xff]
  %v611 = vld [vmem:[%s9 + $0xb0] sm:$0xff]
  %v612 = vld [vmem:[%s9 + $0xb8] sm:$0xff]
  %v613 = vld [vmem:[%s9 + $0xc0] sm:$0xff]
  %v614 = vld [vmem:[%s9 + $0xc8] sm:$0xff]
  %v615 = vld [vmem:[%s9 + $0xd0] sm:$0xff]
  %v616 = vld [vmem:[%s9 + $0xd8] sm:$0xff]
  %v617 = vld [vmem:[%s9 + $0xe0] sm:$0xff]
  %v618 = vld [vmem:[%s9 + $0xe8] sm:$0xff]
  %v619 = vld [vmem:[%s9 + $0xf0] sm:$0xff]
  %v620 = vld [vmem:[%s9 + $0xf8] sm:$0xff]
  %v621 = vld [vmem:[%s9 + $0x100] sm:$0xff]
  %v622 = vld [vmem:[%s9 + $0x108] sm:$0xff]
  %v623 = vld [vmem:[%s9 + $0x110] sm:$0xff]
  %v624 = vld [vmem:[%s9 + $0x118] sm:$0xff]
  %v625 = vld [vmem:[%s9 + $0x120] sm:$0xff]
  %v626 = vld [vmem:[%s9 + $0x128] sm:$0xff]
  %v627 = vld [vmem:[%s9 + $0x130] sm:$0xff]
  %v628 = vld [vmem:[%s9 + $0x138] sm:$0xff]
  %v629 = vld [vmem:[%s9 + $0x140] sm:$0xff]
  %v630 = vld [vmem:[%s9 + $0x148] sm:$0xff]
  %v631 = vld [vmem:[%s9 + $0x150] sm:$0xff]
  %v632 = vld [vmem:[%s9 + $0x158] sm:$0xff]
  %v633 = vld [vmem:[%s9 + $0x160] sm:$0xff]
  %v634 = vld [vmem:[%s9 + $0x168] sm:$0xff]
  %v635 = vld [vmem:[%s9 + $0x170] sm:$0xff]
  %v636 = vld [vmem:[%s9 + $0x178] sm:$0xff]
  %v637 = vld [vmem:[%s9 + $0x180] sm:$0xff]
  %v638 = vld [vmem:[%s9 + $0x188] sm:$0xff]
  %v639 = vld [vmem:[%s9 + $0x190] sm:$0xff]
  %v640 = vld [vmem:[%s9 + $0x198] sm:$0xff]
  %v641 = vld [vmem:[%s9 + $0x1a0] sm:$0xff]
  %v642 = vld [vmem:[%s9 + $0x1a8] sm:$0xff]
  %v643 = vld [vmem:[%s9 + $0x1b0] sm:$0xff]
  %v644 = vld [vmem:[%s9 + $0x1b8] sm:$0xff]
  %v645 = vld [vmem:[%s9 + $0x1c0] sm:$0xff]
  %v646 = vld [vmem:[%s9 + $0x1c8] sm:$0xff]
  %v647 = vld [vmem:[%s9 + $0x1d0] sm:$0xff]
  %v648 = vld [vmem:[%s9 + $0x1d8] sm:$0xff]
  %v649 = vld [vmem:[%s9 + $0x1e0] sm:$0xff]
  %v650 = vld [vmem:[%s9 + $0x1e8] sm:$0xff]
  %v651 = vld [vmem:[%s9 + $0x1f0] sm:$0xff]
  %v652 = vld [vmem:[%s9 + $0x1f8] sm:$0xff]
  %v654 = vlaneseq
  %v655 = vshrl.u32 %v654, 7
  %v656 = vsub.s32 0, %v655
  %v657 = vrot.slane %v585, %v656
  %v659 = vmul.f32 %v589, %v657
  %v660 = vmul.f32 %v590, %v657
  %v661 = vmul.f32 %v591, %v657
  %v662 = vmul.f32 %v592, %v657
  %v663 = vmul.f32 %v593, %v657
  %v664 = vmul.f32 %v594, %v657
  %v665 = vmul.f32 %v595, %v657
  %v666 = vmul.f32 %v596, %v657
  %v667 = vmul.f32 %v597, %v657
  %v668 = vmul.f32 %v598, %v657
  %v669 = vmul.f32 %v599, %v657
  %v670 = vmul.f32 %v600, %v657
  %v671 = vmul.f32 %v601, %v657
  %v672 = vmul.f32 %v602, %v657
  %v673 = vmul.f32 %v603, %v657
  %v674 = vmul.f32 %v604, %v657
  %v675 = vmul.f32 %v605, %v657
  %v676 = vmul.f32 %v606, %v657
  %v677 = vmul.f32 %v607, %v657
  %v678 = vmul.f32 %v608, %v657
  %v679 = vmul.f32 %v609, %v657
  %v680 = vmul.f32 %v610, %v657
  %v681 = vmul.f32 %v611, %v657
  %v682 = vmul.f32 %v612, %v657
  %v683 = vmul.f32 %v613, %v657
  %v684 = vmul.f32 %v614, %v657
  %v685 = vmul.f32 %v615, %v657
  %v686 = vmul.f32 %v616, %v657
  %v687 = vmul.f32 %v617, %v657
  %v688 = vmul.f32 %v618, %v657
  %v689 = vmul.f32 %v619, %v657
  %v690 = vmul.f32 %v620, %v657
  %v691 = vmul.f32 %v621, %v657
  %v692 = vmul.f32 %v622, %v657
  %v693 = vmul.f32 %v623, %v657
  %v694 = vmul.f32 %v624, %v657
  %v695 = vmul.f32 %v625, %v657
  %v696 = vmul.f32 %v626, %v657
  %v697 = vmul.f32 %v627, %v657
  %v698 = vmul.f32 %v628, %v657
  %v699 = vmul.f32 %v629, %v657
  %v700 = vmul.f32 %v630, %v657
  %v701 = vmul.f32 %v631, %v657
  %v702 = vmul.f32 %v632, %v657
  %v703 = vmul.f32 %v633, %v657
  %v704 = vmul.f32 %v634, %v657
  %v705 = vmul.f32 %v635, %v657
  %v706 = vmul.f32 %v636, %v657
  %v707 = vmul.f32 %v637, %v657
  %v708 = vmul.f32 %v638, %v657
  %v709 = vmul.f32 %v639, %v657
  %v710 = vmul.f32 %v640, %v657
  %v711 = vmul.f32 %v641, %v657
  %v712 = vmul.f32 %v642, %v657
  %v713 = vmul.f32 %v643, %v657
  %v714 = vmul.f32 %v644, %v657
  %v715 = vmul.f32 %v645, %v657
  %v716 = vmul.f32 %v646, %v657
  %v717 = vmul.f32 %v647, %v657
  %v718 = vmul.f32 %v648, %v657
  %v719 = vmul.f32 %v649, %v657
  %v720 = vmul.f32 %v650, %v657
  %v721 = vmul.f32 %v651, %v657
  %v722 = vmul.f32 %v652, %v657
  %v724 = vlaneseq
  %v725 = vshrl.u32 %v724, 7
  %v726 = vsub.s32 0, %v725
  %v727 = vrot.slane %v588, %v726
  %v729 = vadd.f32 %v659, %v727
  %v730 = vadd.f32 %v660, %v727
  %v731 = vadd.f32 %v661, %v727
  %v732 = vadd.f32 %v662, %v727
  %v733 = vadd.f32 %v663, %v727
  %v734 = vadd.f32 %v664, %v727
  %v735 = vadd.f32 %v665, %v727
  %v736 = vadd.f32 %v666, %v727
  %v737 = vadd.f32 %v667, %v727
  %v738 = vadd.f32 %v668, %v727
  %v739 = vadd.f32 %v669, %v727
  %v740 = vadd.f32 %v670, %v727
  %v741 = vadd.f32 %v671, %v727
  %v742 = vadd.f32 %v672, %v727
  %v743 = vadd.f32 %v673, %v727
  %v744 = vadd.f32 %v674, %v727
  %v745 = vadd.f32 %v675, %v727
  %v746 = vadd.f32 %v676, %v727
  %v747 = vadd.f32 %v677, %v727
  %v748 = vadd.f32 %v678, %v727
  %v749 = vadd.f32 %v679, %v727
  %v750 = vadd.f32 %v680, %v727
  %v751 = vadd.f32 %v681, %v727
  %v752 = vadd.f32 %v682, %v727
  %v753 = vadd.f32 %v683, %v727
  %v754 = vadd.f32 %v684, %v727
  %v755 = vadd.f32 %v685, %v727
  %v756 = vadd.f32 %v686, %v727
  %v757 = vadd.f32 %v687, %v727
  %v758 = vadd.f32 %v688, %v727
  %v759 = vadd.f32 %v689, %v727
  %v760 = vadd.f32 %v690, %v727
  %v761 = vadd.f32 %v691, %v727
  %v762 = vadd.f32 %v692, %v727
  %v763 = vadd.f32 %v693, %v727
  %v764 = vadd.f32 %v694, %v727
  %v765 = vadd.f32 %v695, %v727
  %v766 = vadd.f32 %v696, %v727
  %v767 = vadd.f32 %v697, %v727
  %v768 = vadd.f32 %v698, %v727
  %v769 = vadd.f32 %v699, %v727
  %v770 = vadd.f32 %v700, %v727
  %v771 = vadd.f32 %v701, %v727
  %v772 = vadd.f32 %v702, %v727
  %v773 = vadd.f32 %v703, %v727
  %v774 = vadd.f32 %v704, %v727
  %v775 = vadd.f32 %v705, %v727
  %v776 = vadd.f32 %v706, %v727
  %v777 = vadd.f32 %v707, %v727
  %v778 = vadd.f32 %v708, %v727
  %v779 = vadd.f32 %v709, %v727
  %v780 = vadd.f32 %v710, %v727
  %v781 = vadd.f32 %v711, %v727
  %v782 = vadd.f32 %v712, %v727
  %v783 = vadd.f32 %v713, %v727
  %v784 = vadd.f32 %v714, %v727
  %v785 = vadd.f32 %v715, %v727
  %v786 = vadd.f32 %v716, %v727
  %v787 = vadd.f32 %v717, %v727
  %v788 = vadd.f32 %v718, %v727
  %v789 = vadd.f32 %v719, %v727
  %v790 = vadd.f32 %v720, %v727
  %v791 = vadd.f32 %v721, %v727
  %v792 = vadd.f32 %v722, %v727
  %v793 = vmax.f32 %v729, 0.0
  %v794 = vmax.f32 %v730, 0.0
  %v795 = vmax.f32 %v731, 0.0
  %v796 = vmax.f32 %v732, 0.0
  %v797 = vmax.f32 %v733, 0.0
  %v798 = vmax.f32 %v734, 0.0
  %v799 = vmax.f32 %v735, 0.0
  %v800 = vmax.f32 %v736, 0.0
  %v801 = vmax.f32 %v737, 0.0
  %v802 = vmax.f32 %v738, 0.0
  %v803 = vmax.f32 %v739, 0.0
  %v804 = vmax.f32 %v740, 0.0
  %v805 = vmax.f32 %v741, 0.0
  %v806 = vmax.f32 %v742, 0.0
  %v807 = vmax.f32 %v743, 0.0
  %v808 = vmax.f32 %v744, 0.0
  %v809 = vmax.f32 %v745, 0.0
  %v810 = vmax.f32 %v746, 0.0
  %v811 = vmax.f32 %v747, 0.0
  %v812 = vmax.f32 %v748, 0.0
  %v813 = vmax.f32 %v749, 0.0
  %v814 = vmax.f32 %v750, 0.0
  %v815 = vmax.f32 %v751, 0.0
  %v816 = vmax.f32 %v752, 0.0
  %v817 = vmax.f32 %v753, 0.0
  %v818 = vmax.f32 %v754, 0.0
  %v819 = vmax.f32 %v755, 0.0
  %v820 = vmax.f32 %v756, 0.0
  %v821 = vmax.f32 %v757, 0.0
  %v822 = vmax.f32 %v758, 0.0
  %v823 = vmax.f32 %v759, 0.0
  %v824 = vmax.f32 %v760, 0.0
  %v825 = vmax.f32 %v761, 0.0
  %v826 = vmax.f32 %v762, 0.0
  %v827 = vmax.f32 %v763, 0.0
  %v828 = vmax.f32 %v764, 0.0
  %v829 = vmax.f32 %v765, 0.0
  %v830 = vmax.f32 %v766, 0.0
  %v831 = vmax.f32 %v767, 0.0
  %v832 = vmax.f32 %v768, 0.0
  %v833 = vmax.f32 %v769, 0.0
  %v834 = vmax.f32 %v770, 0.0
  %v835 = vmax.f32 %v771, 0.0
  %v836 = vmax.f32 %v772, 0.0
  %v837 = vmax.f32 %v773, 0.0
  %v838 = vmax.f32 %v774, 0.0
  %v839 = vmax.f32 %v775, 0.0
  %v840 = vmax.f32 %v776, 0.0
  %v841 = vmax.f32 %v777, 0.0
  %v842 = vmax.f32 %v778, 0.0
  %v843 = vmax.f32 %v779, 0.0
  %v844 = vmax.f32 %v780, 0.0
  %v845 = vmax.f32 %v781, 0.0
  %v846 = vmax.f32 %v782, 0.0
  %v847 = vmax.f32 %v783, 0.0
  %v848 = vmax.f32 %v784, 0.0
  %v849 = vmax.f32 %v785, 0.0
  %v850 = vmax.f32 %v786, 0.0
  %v851 = vmax.f32 %v787, 0.0
  %v852 = vmax.f32 %v788, 0.0
  %v853 = vmax.f32 %v789, 0.0
  %v854 = vmax.f32 %v790, 0.0
  %v855 = vmax.f32 %v791, 0.0
  %v856 = vmax.f32 %v792, 0.0
  %v857 = vpack.c.bf16 %v794, %v793
  %v858 = vpack.c.bf16 %v796, %v795
  %v859 = vpack.c.bf16 %v798, %v797
  %v860 = vpack.c.bf16 %v800, %v799
  %v861 = vpack.c.bf16 %v802, %v801
  %v862 = vpack.c.bf16 %v804, %v803
  %v863 = vpack.c.bf16 %v806, %v805
  %v864 = vpack.c.bf16 %v808, %v807
  %v865 = vpack.c.bf16 %v810, %v809
  %v866 = vpack.c.bf16 %v812, %v811
  %v867 = vpack.c.bf16 %v814, %v813
  %v868 = vpack.c.bf16 %v816, %v815
  %v869 = vpack.c.bf16 %v818, %v817
  %v870 = vpack.c.bf16 %v820, %v819
  %v871 = vpack.c.bf16 %v822, %v821
  %v872 = vpack.c.bf16 %v824, %v823
  %v873 = vpack.c.bf16 %v826, %v825
  %v874 = vpack.c.bf16 %v828, %v827
  %v875 = vpack.c.bf16 %v830, %v829
  %v876 = vpack.c.bf16 %v832, %v831
  %v877 = vpack.c.bf16 %v834, %v833
  %v878 = vpack.c.bf16 %v836, %v835
  %v879 = vpack.c.bf16 %v838, %v837
  %v880 = vpack.c.bf16 %v840, %v839
  %v881 = vpack.c.bf16 %v842, %v841
  %v882 = vpack.c.bf16 %v844, %v843
  %v883 = vpack.c.bf16 %v846, %v845
  %v884 = vpack.c.bf16 %v848, %v847
  %v885 = vpack.c.bf16 %v850, %v849
  %v886 = vpack.c.bf16 %v852, %v851
  %v887 = vpack.c.bf16 %v854, %v853
  %v888 = vpack.c.bf16 %v856, %v855
  %s889 = scalar_lea.vmem [#allocation2], 24
  %vm890 = vcmask 1040384
  %vm891 = vsmask.f32 256
  %vm892 = vmand %vm890, %vm891
  %v893 = vld [vmem:[%s889] sm:$0x1]
  %v894 = vsel %vm892, 0, %v893
  %895 = vst [vmem:[%s889] sm:$0x1] %v894
  %v896 = vld [vmem:[%s889 + $0x18] sm:$0x1]
  %v897 = vsel %vm892, 0, %v896
  %898 = vst [vmem:[%s889 + $0x18] sm:$0x1] %v897
  %v899 = vld [vmem:[%s889 + $0x30] sm:$0x1]
  %v900 = vsel %vm892, 0, %v899
  %901 = vst [vmem:[%s889 + $0x30] sm:$0x1] %v900
  %v902 = vld [vmem:[%s889 + $0x48] sm:$0x1]
  %v903 = vsel %vm892, 0, %v902
  %904 = vst [vmem:[%s889 + $0x48] sm:$0x1] %v903
  %v905 = vld [vmem:[%s889 + $0x60] sm:$0x1]
  %v906 = vsel %vm892, 0, %v905
  %907 = vst [vmem:[%s889 + $0x60] sm:$0x1] %v906
  %v908 = vld [vmem:[%s889 + $0x78] sm:$0x1]
  %v909 = vsel %vm892, 0, %v908
  %910 = vst [vmem:[%s889 + $0x78] sm:$0x1] %v909
  %v911 = vld [vmem:[%s889 + $0x90] sm:$0x1]
  %v912 = vsel %vm892, 0, %v911
  %913 = vst [vmem:[%s889 + $0x90] sm:$0x1] %v912
  %v914 = vld [vmem:[%s889 + $0xa8] sm:$0x1]
  %v915 = vsel %vm892, 0, %v914
  %916 = vst [vmem:[%s889 + $0xa8] sm:$0x1] %v915
  %v917 = vld [vmem:[%s889 + $0xc0] sm:$0x1]
  %v918 = vsel %vm892, 0, %v917
  %919 = vst [vmem:[%s889 + $0xc0] sm:$0x1] %v918
  %v920 = vld [vmem:[%s889 + $0xd8] sm:$0x1]
  %v921 = vsel %vm892, 0, %v920
  %922 = vst [vmem:[%s889 + $0xd8] sm:$0x1] %v921
  %v923 = vld [vmem:[%s889 + $0xf0] sm:$0x1]
  %v924 = vsel %vm892, 0, %v923
  %925 = vst [vmem:[%s889 + $0xf0] sm:$0x1] %v924
  %v926 = vld [vmem:[%s889 + $0x108] sm:$0x1]
  %v927 = vsel %vm892, 0, %v926
  %928 = vst [vmem:[%s889 + $0x108] sm:$0x1] %v927
  %v929 = vld [vmem:[%s889 + $0x120] sm:$0x1]
  %v930 = vsel %vm892, 0, %v929
  %931 = vst [vmem:[%s889 + $0x120] sm:$0x1] %v930
  %v932 = vld [vmem:[%s889 + $0x138] sm:$0x1]
  %v933 = vsel %vm892, 0, %v932
  %934 = vst [vmem:[%s889 + $0x138] sm:$0x1] %v933
  %v935 = vld [vmem:[%s889 + $0x150] sm:$0x1]
  %v936 = vsel %vm892, 0, %v935
  %937 = vst [vmem:[%s889 + $0x150] sm:$0x1] %v936
  %v938 = vld [vmem:[%s889 + $0x168] sm:$0x1]
  %v939 = vsel %vm892, 0, %v938
  %940 = vst [vmem:[%s889 + $0x168] sm:$0x1] %v939
  %v941 = vld [vmem:[%s889 + $0x1b0] sm:$0x1]
  %v942 = vsel %vm892, 0, %v941
  %943 = vst [vmem:[%s889 + $0x1b0] sm:$0x1] %v942
  %v944 = vld [vmem:[%s889 + $0x1c8] sm:$0x1]
  %v945 = vsel %vm892, 0, %v944
  %946 = vst [vmem:[%s889 + $0x1c8] sm:$0x1] %v945
  %v947 = vld [vmem:[%s889 + $0x1e0] sm:$0x1]
  %v948 = vsel %vm892, 0, %v947
  %949 = vst [vmem:[%s889 + $0x1e0] sm:$0x1] %v948
  %v950 = vld [vmem:[%s889 + $0x1f8] sm:$0x1]
  %v951 = vsel %vm892, 0, %v950
  %952 = vst [vmem:[%s889 + $0x1f8] sm:$0x1] %v951
  %v953 = vld [vmem:[%s889 + $0x210] sm:$0x1]
  %v954 = vsel %vm892, 0, %v953
  %955 = vst [vmem:[%s889 + $0x210] sm:$0x1] %v954
  %v956 = vld [vmem:[%s889 + $0x228] sm:$0x1]
  %v957 = vsel %vm892, 0, %v956
  %958 = vst [vmem:[%s889 + $0x228] sm:$0x1] %v957
  %v959 = vld [vmem:[%s889 + $0x240] sm:$0x1]
  %v960 = vsel %vm892, 0, %v959
  %961 = vst [vmem:[%s889 + $0x240] sm:$0x1] %v960
  %v962 = vld [vmem:[%s889 + $0x258] sm:$0x1]
  %v963 = vsel %vm892, 0, %v962
  %964 = vst [vmem:[%s889 + $0x258] sm:$0x1] %v963
  %v965 = vld [vmem:[%s889 + $0x270] sm:$0x1]
  %v966 = vsel %vm892, 0, %v965
  %967 = vst [vmem:[%s889 + $0x270] sm:$0x1] %v966
  %v968 = vld [vmem:[%s889 + $0x288] sm:$0x1]
  %v969 = vsel %vm892, 0, %v968
  %970 = vst [vmem:[%s889 + $0x288] sm:$0x1] %v969
  %v971 = vld [vmem:[%s889 + $0x2a0] sm:$0x1]
  %v972 = vsel %vm892, 0, %v971
  %973 = vst [vmem:[%s889 + $0x2a0] sm:$0x1] %v972
  %v974 = vld [vmem:[%s889 + $0x2b8] sm:$0x1]
  %v975 = vsel %vm892, 0, %v974
  %976 = vst [vmem:[%s889 + $0x2b8] sm:$0x1] %v975
  %v977 = vld [vmem:[%s889 + $0x2d0] sm:$0x1]
  %v978 = vsel %vm892, 0, %v977
  %979 = vst [vmem:[%s889 + $0x2d0] sm:$0x1] %v978
  %v980 = vld [vmem:[%s889 + $0x2e8] sm:$0x1]
  %v981 = vsel %vm892, 0, %v980
  %982 = vst [vmem:[%s889 + $0x2e8] sm:$0x1] %v981
  %v983 = vld [vmem:[%s889 + $0x300] sm:$0x1]
  %v984 = vsel %vm892, 0, %v983
  %985 = vst [vmem:[%s889 + $0x300] sm:$0x1] %v984
  %v986 = vld [vmem:[%s889 + $0x318] sm:$0x1]
  %v987 = vsel %vm892, 0, %v986
  %988 = vst [vmem:[%s889 + $0x318] sm:$0x1] %v987
  %v990 = vshrl.u32 %v857, 16
  %v992 = vrot.slane %v990, 7
  %v993 = vshll.u32 %v857, 16
  %v995 = vor.u32 %v992, %v993
  %v997 = vshrl.u32 %v858, 16
  %v999 = vrot.slane %v997, 7
  %v1000 = vshll.u32 %v858, 16
  %v1002 = vor.u32 %v999, %v1000
  %v1004 = vshrl.u32 %v859, 16
  %v1006 = vrot.slane %v1004, 7
  %v1007 = vshll.u32 %v859, 16
  %v1009 = vor.u32 %v1006, %v1007
  %v1011 = vshrl.u32 %v860, 16
  %v1013 = vrot.slane %v1011, 7
  %v1014 = vshll.u32 %v860, 16
  %v1016 = vor.u32 %v1013, %v1014
  %v1018 = vshrl.u32 %v861, 16
  %v1020 = vrot.slane %v1018, 7
  %v1021 = vshll.u32 %v861, 16
  %v1023 = vor.u32 %v1020, %v1021
  %v1025 = vshrl.u32 %v862, 16
  %v1027 = vrot.slane %v1025, 7
  %v1028 = vshll.u32 %v862, 16
  %v1030 = vor.u32 %v1027, %v1028
  %v1032 = vshrl.u32 %v863, 16
  %v1034 = vrot.slane %v1032, 7
  %v1035 = vshll.u32 %v863, 16
  %v1037 = vor.u32 %v1034, %v1035
  %v1039 = vshrl.u32 %v864, 16
  %v1041 = vrot.slane %v1039, 7
  %v1042 = vshll.u32 %v864, 16
  %v1044 = vor.u32 %v1041, %v1042
  %v1046 = vshrl.u32 %v865, 16
  %v1048 = vrot.slane %v1046, 7
  %v1049 = vshll.u32 %v865, 16
  %v1051 = vor.u32 %v1048, %v1049
  %v1053 = vshrl.u32 %v866, 16
  %v1055 = vrot.slane %v1053, 7
  %v1056 = vshll.u32 %v866, 16
  %v1058 = vor.u32 %v1055, %v1056
  %v1060 = vshrl.u32 %v867, 16
  %v1062 = vrot.slane %v1060, 7
  %v1063 = vshll.u32 %v867, 16
  %v1065 = vor.u32 %v1062, %v1063
  %v1067 = vshrl.u32 %v868, 16
  %v1069 = vrot.slane %v1067, 7
  %v1070 = vshll.u32 %v868, 16
  %v1072 = vor.u32 %v1069, %v1070
  %v1074 = vshrl.u32 %v869, 16
  %v1076 = vrot.slane %v1074, 7
  %v1077 = vshll.u32 %v869, 16
  %v1079 = vor.u32 %v1076, %v1077
  %v1081 = vshrl.u32 %v870, 16
  %v1083 = vrot.slane %v1081, 7
  %v1084 = vshll.u32 %v870, 16
  %v1086 = vor.u32 %v1083, %v1084
  %v1088 = vshrl.u32 %v871, 16
  %v1090 = vrot.slane %v1088, 7
  %v1091 = vshll.u32 %v871, 16
  %v1093 = vor.u32 %v1090, %v1091
  %v1095 = vshrl.u32 %v872, 16
  %v1097 = vrot.slane %v1095, 7
  %v1098 = vshll.u32 %v872, 16
  %v1100 = vor.u32 %v1097, %v1098
  %v1102 = vshrl.u32 %v873, 16
  %v1104 = vrot.slane %v1102, 7
  %v1105 = vshll.u32 %v873, 16
  %v1107 = vor.u32 %v1104, %v1105
  %v1109 = vshrl.u32 %v874, 16
  %v1111 = vrot.slane %v1109, 7
  %v1112 = vshll.u32 %v874, 16
  %v1114 = vor.u32 %v1111, %v1112
  %v1116 = vshrl.u32 %v875, 16
  %v1118 = vrot.slane %v1116, 7
  %v1119 = vshll.u32 %v875, 16
  %v1121 = vor.u32 %v1118, %v1119
  %v1123 = vshrl.u32 %v876, 16
  %v1125 = vrot.slane %v1123, 7
  %v1126 = vshll.u32 %v876, 16
  %v1128 = vor.u32 %v1125, %v1126
  %v1130 = vshrl.u32 %v877, 16
  %v1132 = vrot.slane %v1130, 7
  %v1133 = vshll.u32 %v877, 16
  %v1135 = vor.u32 %v1132, %v1133
  %v1137 = vshrl.u32 %v878, 16
  %v1139 = vrot.slane %v1137, 7
  %v1140 = vshll.u32 %v878, 16
  %v1142 = vor.u32 %v1139, %v1140
  %v1144 = vshrl.u32 %v879, 16
  %v1146 = vrot.slane %v1144, 7
  %v1147 = vshll.u32 %v879, 16
  %v1149 = vor.u32 %v1146, %v1147
  %v1151 = vshrl.u32 %v880, 16
  %v1153 = vrot.slane %v1151, 7
  %v1154 = vshll.u32 %v880, 16
  %v1156 = vor.u32 %v1153, %v1154
  %v1158 = vshrl.u32 %v881, 16
  %v1160 = vrot.slane %v1158, 7
  %v1161 = vshll.u32 %v881, 16
  %v1163 = vor.u32 %v1160, %v1161
  %v1165 = vshrl.u32 %v882, 16
  %v1167 = vrot.slane %v1165, 7
  %v1168 = vshll.u32 %v882, 16
  %v1170 = vor.u32 %v1167, %v1168
  %v1172 = vshrl.u32 %v883, 16
  %v1174 = vrot.slane %v1172, 7
  %v1175 = vshll.u32 %v883, 16
  %v1177 = vor.u32 %v1174, %v1175
  %v1179 = vshrl.u32 %v884, 16
  %v1181 = vrot.slane %v1179, 7
  %v1182 = vshll.u32 %v884, 16
  %v1184 = vor.u32 %v1181, %v1182
  %v1186 = vshrl.u32 %v885, 16
  %v1188 = vrot.slane %v1186, 7
  %v1189 = vshll.u32 %v885, 16
  %v1191 = vor.u32 %v1188, %v1189
  %v1193 = vshrl.u32 %v886, 16
  %v1195 = vrot.slane %v1193, 7
  %v1196 = vshll.u32 %v886, 16
  %v1198 = vor.u32 %v1195, %v1196
  %v1200 = vshrl.u32 %v887, 16
  %v1202 = vrot.slane %v1200, 7
  %v1203 = vshll.u32 %v887, 16
  %v1205 = vor.u32 %v1202, %v1203
  %v1207 = vshrl.u32 %v888, 16
  %v1209 = vrot.slane %v1207, 7
  %v1210 = vshll.u32 %v888, 16
  %v1212 = vor.u32 %v1209, %v1210
  %vm1245 = vcmask 1047552
  %vm1246 = vsmask.f32 7938
  %vm1247 = vmand %vm1245, %vm1246
  %v1248 = vld [vmem:[%s889] sm:$0xff]
  %v1249 = vsel %vm1247, %v995, %v1248
  %1250 = vst [vmem:[%s889] sm:$0xff] %v1249
  %v1251 = vld [vmem:[%s889 + $0x18] sm:$0xff]
  %v1252 = vsel %vm1247, %v1002, %v1251
  %1253 = vst [vmem:[%s889 + $0x18] sm:$0xff] %v1252
  %v1254 = vld [vmem:[%s889 + $0x30] sm:$0xff]
  %v1255 = vsel %vm1247, %v1009, %v1254
  %1256 = vst [vmem:[%s889 + $0x30] sm:$0xff] %v1255
  %v1257 = vld [vmem:[%s889 + $0x48] sm:$0xff]
  %v1258 = vsel %vm1247, %v1016, %v1257
  %1259 = vst [vmem:[%s889 + $0x48] sm:$0xff] %v1258
  %v1260 = vld [vmem:[%s889 + $0x60] sm:$0xff]
  %v1261 = vsel %vm1247, %v1023, %v1260
  %1262 = vst [vmem:[%s889 + $0x60] sm:$0xff] %v1261
  %v1263 = vld [vmem:[%s889 + $0x78] sm:$0xff]
  %v1264 = vsel %vm1247, %v1030, %v1263
  %1265 = vst [vmem:[%s889 + $0x78] sm:$0xff] %v1264
  %v1266 = vld [vmem:[%s889 + $0x90] sm:$0xff]
  %v1267 = vsel %vm1247, %v1037, %v1266
  %1268 = vst [vmem:[%s889 + $0x90] sm:$0xff] %v1267
  %v1269 = vld [vmem:[%s889 + $0xa8] sm:$0xff]
  %v1270 = vsel %vm1247, %v1044, %v1269
  %1271 = vst [vmem:[%s889 + $0xa8] sm:$0xff] %v1270
  %v1272 = vld [vmem:[%s889 + $0xc0] sm:$0xff]
  %v1273 = vsel %vm1247, %v1051, %v1272
  %1274 = vst [vmem:[%s889 + $0xc0] sm:$0xff] %v1273
  %v1275 = vld [vmem:[%s889 + $0xd8] sm:$0xff]
  %v1276 = vsel %vm1247, %v1058, %v1275
  %1277 = vst [vmem:[%s889 + $0xd8] sm:$0xff] %v1276
  %v1278 = vld [vmem:[%s889 + $0xf0] sm:$0xff]
  %v1279 = vsel %vm1247, %v1065, %v1278
  %1280 = vst [vmem:[%s889 + $0xf0] sm:$0xff] %v1279
  %v1281 = vld [vmem:[%s889 + $0x108] sm:$0xff]
  %v1282 = vsel %vm1247, %v1072, %v1281
  %1283 = vst [vmem:[%s889 + $0x108] sm:$0xff] %v1282
  %v1284 = vld [vmem:[%s889 + $0x120] sm:$0xff]
  %v1285 = vsel %vm1247, %v1079, %v1284
  %1286 = vst [vmem:[%s889 + $0x120] sm:$0xff] %v1285
  %v1287 = vld [vmem:[%s889 + $0x138] sm:$0xff]
  %v1288 = vsel %vm1247, %v1086, %v1287
  %1289 = vst [vmem:[%s889 + $0x138] sm:$0xff] %v1288
  %v1290 = vld [vmem:[%s889 + $0x150] sm:$0xff]
  %v1291 = vsel %vm1247, %v1093, %v1290
  %1292 = vst [vmem:[%s889 + $0x150] sm:$0xff] %v1291
  %v1293 = vld [vmem:[%s889 + $0x168] sm:$0xff]
  %v1294 = vsel %vm1247, %v1100, %v1293
  %1295 = vst [vmem:[%s889 + $0x168] sm:$0xff] %v1294
  %v1296 = vld [vmem:[%s889 + $0x1b0] sm:$0xff]
  %v1297 = vsel %vm1247, %v1107, %v1296
  %1298 = vst [vmem:[%s889 + $0x1b0] sm:$0xff] %v1297
  %v1299 = vld [vmem:[%s889 + $0x1c8] sm:$0xff]
  %v1300 = vsel %vm1247, %v1114, %v1299
  %1301 = vst [vmem:[%s889 + $0x1c8] sm:$0xff] %v1300
  %v1302 = vld [vmem:[%s889 + $0x1e0] sm:$0xff]
  %v1303 = vsel %vm1247, %v1121, %v1302
  %1304 = vst [vmem:[%s889 + $0x1e0] sm:$0xff] %v1303
  %v1305 = vld [vmem:[%s889 + $0x1f8] sm:$0xff]
  %v1306 = vsel %vm1247, %v1128, %v1305
  %1307 = vst [vmem:[%s889 + $0x1f8] sm:$0xff] %v1306
  %v1308 = vld [vmem:[%s889 + $0x210] sm:$0xff]
  %v1309 = vsel %vm1247, %v1135, %v1308
  %1310 = vst [vmem:[%s889 + $0x210] sm:$0xff] %v1309
  %v1311 = vld [vmem:[%s889 + $0x228] sm:$0xff]
  %v1312 = vsel %vm1247, %v1142, %v1311
  %1313 = vst [vmem:[%s889 + $0x228] sm:$0xff] %v1312
  %v1314 = vld [vmem:[%s889 + $0x240] sm:$0xff]
  %v1315 = vsel %vm1247, %v1149, %v1314
  %1316 = vst [vmem:[%s889 + $0x240] sm:$0xff] %v1315
  %v1317 = vld [vmem:[%s889 + $0x258] sm:$0xff]
  %v1318 = vsel %vm1247, %v1156, %v1317
  %1319 = vst [vmem:[%s889 + $0x258] sm:$0xff] %v1318
  %v1320 = vld [vmem:[%s889 + $0x270] sm:$0xff]
  %v1321 = vsel %vm1247, %v1163, %v1320
  %1322 = vst [vmem:[%s889 + $0x270] sm:$0xff] %v1321
  %v1323 = vld [vmem:[%s889 + $0x288] sm:$0xff]
  %v1324 = vsel %vm1247, %v1170, %v1323
  %1325 = vst [vmem:[%s889 + $0x288] sm:$0xff] %v1324
  %v1326 = vld [vmem:[%s889 + $0x2a0] sm:$0xff]
  %v1327 = vsel %vm1247, %v1177, %v1326
  %1328 = vst [vmem:[%s889 + $0x2a0] sm:$0xff] %v1327
  %v1329 = vld [vmem:[%s889 + $0x2b8] sm:$0xff]
  %v1330 = vsel %vm1247, %v1184, %v1329
  %1331 = vst [vmem:[%s889 + $0x2b8] sm:$0xff] %v1330
  %v1332 = vld [vmem:[%s889 + $0x2d0] sm:$0xff]
  %v1333 = vsel %vm1247, %v1191, %v1332
  %1334 = vst [vmem:[%s889 + $0x2d0] sm:$0xff] %v1333
  %v1335 = vld [vmem:[%s889 + $0x2e8] sm:$0xff]
  %v1336 = vsel %vm1247, %v1198, %v1335
  %1337 = vst [vmem:[%s889 + $0x2e8] sm:$0xff] %v1336
  %v1338 = vld [vmem:[%s889 + $0x300] sm:$0xff]
  %v1339 = vsel %vm1247, %v1205, %v1338
  %1340 = vst [vmem:[%s889 + $0x300] sm:$0xff] %v1339
  %v1341 = vld [vmem:[%s889 + $0x318] sm:$0xff]
  %v1342 = vsel %vm1247, %v1212, %v1341
  %1343 = vst [vmem:[%s889 + $0x318] sm:$0xff] %v1342
  %1344 = vst [vmem:[%s889 + $0x8] sm:$0xff] %v857
  %1345 = vst [vmem:[%s889 + $0x20] sm:$0xff] %v858
  %1346 = vst [vmem:[%s889 + $0x38] sm:$0xff] %v859
  %1347 = vst [vmem:[%s889 + $0x50] sm:$0xff] %v860
  %1348 = vst [vmem:[%s889 + $0x68] sm:$0xff] %v861
  %1349 = vst [vmem:[%s889 + $0x80] sm:$0xff] %v862
  %1350 = vst [vmem:[%s889 + $0x98] sm:$0xff] %v863
  %1351 = vst [vmem:[%s889 + $0xb0] sm:$0xff] %v864
  %1352 = vst [vmem:[%s889 + $0xc8] sm:$0xff] %v865
  %1353 = vst [vmem:[%s889 + $0xe0] sm:$0xff] %v866
  %1354 = vst [vmem:[%s889 + $0xf8] sm:$0xff] %v867
  %1355 = vst [vmem:[%s889 + $0x110] sm:$0xff] %v868
  %1356 = vst [vmem:[%s889 + $0x128] sm:$0xff] %v869
  %1357 = vst [vmem:[%s889 + $0x140] sm:$0xff] %v870
  %1358 = vst [vmem:[%s889 + $0x158] sm:$0xff] %v871
  %1359 = vst [vmem:[%s889 + $0x170] sm:$0xff] %v872
  %1360 = vst [vmem:[%s889 + $0x1b8] sm:$0xff] %v873
  %1361 = vst [vmem:[%s889 + $0x1d0] sm:$0xff] %v874
  %1362 = vst [vmem:[%s889 + $0x1e8] sm:$0xff] %v875
  %1363 = vst [vmem:[%s889 + $0x200] sm:$0xff] %v876
  %1364 = vst [vmem:[%s889 + $0x218] sm:$0xff] %v877
  %1365 = vst [vmem:[%s889 + $0x230] sm:$0xff] %v878
  %1366 = vst [vmem:[%s889 + $0x248] sm:$0xff] %v879
  %1367 = vst [vmem:[%s889 + $0x260] sm:$0xff] %v880
  %1368 = vst [vmem:[%s889 + $0x278] sm:$0xff] %v881
  %1369 = vst [vmem:[%s889 + $0x290] sm:$0xff] %v882
  %1370 = vst [vmem:[%s889 + $0x2a8] sm:$0xff] %v883
  %1371 = vst [vmem:[%s889 + $0x2c0] sm:$0xff] %v884
  %1372 = vst [vmem:[%s889 + $0x2d8] sm:$0xff] %v885
  %1373 = vst [vmem:[%s889 + $0x2f0] sm:$0xff] %v886
  %1374 = vst [vmem:[%s889 + $0x308] sm:$0xff] %v887
  %1375 = vst [vmem:[%s889 + $0x320] sm:$0xff] %v888
  %v1376 = vrot.slane %v993, 1
  %v1377 = vor.u32 %v990, %v1376
  %v1378 = vrot.slane %v1000, 1
  %v1379 = vor.u32 %v997, %v1378
  %v1380 = vrot.slane %v1007, 1
  %v1381 = vor.u32 %v1004, %v1380
  %v1382 = vrot.slane %v1014, 1
  %v1383 = vor.u32 %v1011, %v1382
  %v1384 = vrot.slane %v1021, 1
  %v1385 = vor.u32 %v1018, %v1384
  %v1386 = vrot.slane %v1028, 1
  %v1387 = vor.u32 %v1025, %v1386
  %v1388 = vrot.slane %v1035, 1
  %v1389 = vor.u32 %v1032, %v1388
  %v1390 = vrot.slane %v1042, 1
  %v1391 = vor.u32 %v1039, %v1390
  %v1392 = vrot.slane %v1049, 1
  %v1393 = vor.u32 %v1046, %v1392
  %v1394 = vrot.slane %v1056, 1
  %v1395 = vor.u32 %v1053, %v1394
  %v1396 = vrot.slane %v1063, 1
  %v1397 = vor.u32 %v1060, %v1396
  %v1398 = vrot.slane %v1070, 1
  %v1399 = vor.u32 %v1067, %v1398
  %v1400 = vrot.slane %v1077, 1
  %v1401 = vor.u32 %v1074, %v1400
  %v1402 = vrot.slane %v1084, 1
  %v1403 = vor.u32 %v1081, %v1402
  %v1404 = vrot.slane %v1091, 1
  %v1405 = vor.u32 %v1088, %v1404
  %v1406 = vrot.slane %v1098, 1
  %v1407 = vor.u32 %v1095, %v1406
  %v1408 = vrot.slane %v1105, 1
  %v1409 = vor.u32 %v1102, %v1408
  %v1410 = vrot.slane %v1112, 1
  %v1411 = vor.u32 %v1109, %v1410
  %v1412 = vrot.slane %v1119, 1
  %v1413 = vor.u32 %v1116, %v1412
  %v1414 = vrot.slane %v1126, 1
  %v1415 = vor.u32 %v1123, %v1414
  %v1416 = vrot.slane %v1133, 1
  %v1417 = vor.u32 %v1130, %v1416
  %v1418 = vrot.slane %v1140, 1
  %v1419 = vor.u32 %v1137, %v1418
  %v1420 = vrot.slane %v1147, 1
  %v1421 = vor.u32 %v1144, %v1420
  %v1422 = vrot.slane %v1154, 1
  %v1423 = vor.u32 %v1151, %v1422
  %v1424 = vrot.slane %v1161, 1
  %v1425 = vor.u32 %v1158, %v1424
  %v1426 = vrot.slane %v1168, 1
  %v1427 = vor.u32 %v1165, %v1426
  %v1428 = vrot.slane %v1175, 1
  %v1429 = vor.u32 %v1172, %v1428
  %v1430 = vrot.slane %v1182, 1
  %v1431 = vor.u32 %v1179, %v1430
  %v1432 = vrot.slane %v1189, 1
  %v1433 = vor.u32 %v1186, %v1432
  %v1434 = vrot.slane %v1196, 1
  %v1435 = vor.u32 %v1193, %v1434
  %v1436 = vrot.slane %v1203, 1
  %v1437 = vor.u32 %v1200, %v1436
  %v1438 = vrot.slane %v1210, 1
  %v1439 = vor.u32 %v1207, %v1438
  %vm1472 = vsmask.f32 7424
  %vm1473 = vmand %vm1245, %vm1472
  %v1474 = vld [vmem:[%s889 + $0x10] sm:$0xff]
  %v1475 = vsel %vm1473, %v1377, %v1474
  %1476 = vst [vmem:[%s889 + $0x10] sm:$0xff] %v1475
  %v1477 = vld [vmem:[%s889 + $0x28] sm:$0xff]
  %v1478 = vsel %vm1473, %v1379, %v1477
  %1479 = vst [vmem:[%s889 + $0x28] sm:$0xff] %v1478
  %v1480 = vld [vmem:[%s889 + $0x40] sm:$0xff]
  %v1481 = vsel %vm1473, %v1381, %v1480
  %1482 = vst [vmem:[%s889 + $0x40] sm:$0xff] %v1481
  %v1483 = vld [vmem:[%s889 + $0x58] sm:$0xff]
  %v1484 = vsel %vm1473, %v1383, %v1483
  %1485 = vst [vmem:[%s889 + $0x58] sm:$0xff] %v1484
  %v1486 = vld [vmem:[%s889 + $0x70] sm:$0xff]
  %v1487 = vsel %vm1473, %v1385, %v1486
  %1488 = vst [vmem:[%s889 + $0x70] sm:$0xff] %v1487
  %v1489 = vld [vmem:[%s889 + $0x88] sm:$0xff]
  %v1490 = vsel %vm1473, %v1387, %v1489
  %1491 = vst [vmem:[%s889 + $0x88] sm:$0xff] %v1490
  %v1492 = vld [vmem:[%s889 + $0xa0] sm:$0xff]
  %v1493 = vsel %vm1473, %v1389, %v1492
  %1494 = vst [vmem:[%s889 + $0xa0] sm:$0xff] %v1493
  %v1495 = vld [vmem:[%s889 + $0xb8] sm:$0xff]
  %v1496 = vsel %vm1473, %v1391, %v1495
  %1497 = vst [vmem:[%s889 + $0xb8] sm:$0xff] %v1496
  %v1498 = vld [vmem:[%s889 + $0xd0] sm:$0xff]
  %v1499 = vsel %vm1473, %v1393, %v1498
  %1500 = vst [vmem:[%s889 + $0xd0] sm:$0xff] %v1499
  %v1501 = vld [vmem:[%s889 + $0xe8] sm:$0xff]
  %v1502 = vsel %vm1473, %v1395, %v1501
  %1503 = vst [vmem:[%s889 + $0xe8] sm:$0xff] %v1502
  %v1504 = vld [vmem:[%s889 + $0x100] sm:$0xff]
  %v1505 = vsel %vm1473, %v1397, %v1504
  %1506 = vst [vmem:[%s889 + $0x100] sm:$0xff] %v1505
  %v1507 = vld [vmem:[%s889 + $0x118] sm:$0xff]
  %v1508 = vsel %vm1473, %v1399, %v1507
  %1509 = vst [vmem:[%s889 + $0x118] sm:$0xff] %v1508
  %v1510 = vld [vmem:[%s889 + $0x130] sm:$0xff]
  %v1511 = vsel %vm1473, %v1401, %v1510
  %1512 = vst [vmem:[%s889 + $0x130] sm:$0xff] %v1511
  %v1513 = vld [vmem:[%s889 + $0x148] sm:$0xff]
  %v1514 = vsel %vm1473, %v1403, %v1513
  %1515 = vst [vmem:[%s889 + $0x148] sm:$0xff] %v1514
  %v1516 = vld [vmem:[%s889 + $0x160] sm:$0xff]
  %v1517 = vsel %vm1473, %v1405, %v1516
  %1518 = vst [vmem:[%s889 + $0x160] sm:$0xff] %v1517
  %v1519 = vld [vmem:[%s889 + $0x178] sm:$0xff]
  %v1520 = vsel %vm1473, %v1407, %v1519
  %1521 = vst [vmem:[%s889 + $0x178] sm:$0xff] %v1520
  %v1522 = vld [vmem:[%s889 + $0x1c0] sm:$0xff]
  %v1523 = vsel %vm1473, %v1409, %v1522
  %1524 = vst [vmem:[%s889 + $0x1c0] sm:$0xff] %v1523
  %v1525 = vld [vmem:[%s889 + $0x1d8] sm:$0xff]
  %v1526 = vsel %vm1473, %v1411, %v1525
  %1527 = vst [vmem:[%s889 + $0x1d8] sm:$0xff] %v1526
  %v1528 = vld [vmem:[%s889 + $0x1f0] sm:$0xff]
  %v1529 = vsel %vm1473, %v1413, %v1528
  %1530 = vst [vmem:[%s889 + $0x1f0] sm:$0xff] %v1529
  %v1531 = vld [vmem:[%s889 + $0x208] sm:$0xff]
  %v1532 = vsel %vm1473, %v1415, %v1531
  %1533 = vst [vmem:[%s889 + $0x208] sm:$0xff] %v1532
  %v1534 = vld [vmem:[%s889 + $0x220] sm:$0xff]
  %v1535 = vsel %vm1473, %v1417, %v1534
  %1536 = vst [vmem:[%s889 + $0x220] sm:$0xff] %v1535
  %v1537 = vld [vmem:[%s889 + $0x238] sm:$0xff]
  %v1538 = vsel %vm1473, %v1419, %v1537
  %1539 = vst [vmem:[%s889 + $0x238] sm:$0xff] %v1538
  %v1540 = vld [vmem:[%s889 + $0x250] sm:$0xff]
  %v1541 = vsel %vm1473, %v1421, %v1540
  %1542 = vst [vmem:[%s889 + $0x250] sm:$0xff] %v1541
  %v1543 = vld [vmem:[%s889 + $0x268] sm:$0xff]
  %v1544 = vsel %vm1473, %v1423, %v1543
  %1545 = vst [vmem:[%s889 + $0x268] sm:$0xff] %v1544
  %v1546 = vld [vmem:[%s889 + $0x280] sm:$0xff]
  %v1547 = vsel %vm1473, %v1425, %v1546
  %1548 = vst [vmem:[%s889 + $0x280] sm:$0xff] %v1547
  %v1549 = vld [vmem:[%s889 + $0x298] sm:$0xff]
  %v1550 = vsel %vm1473, %v1427, %v1549
  %1551 = vst [vmem:[%s889 + $0x298] sm:$0xff] %v1550
  %v1552 = vld [vmem:[%s889 + $0x2b0] sm:$0xff]
  %v1553 = vsel %vm1473, %v1429, %v1552
  %1554 = vst [vmem:[%s889 + $0x2b0] sm:$0xff] %v1553
  %v1555 = vld [vmem:[%s889 + $0x2c8] sm:$0xff]
  %v1556 = vsel %vm1473, %v1431, %v1555
  %1557 = vst [vmem:[%s889 + $0x2c8] sm:$0xff] %v1556
  %v1558 = vld [vmem:[%s889 + $0x2e0] sm:$0xff]
  %v1559 = vsel %vm1473, %v1433, %v1558
  %1560 = vst [vmem:[%s889 + $0x2e0] sm:$0xff] %v1559
  %v1561 = vld [vmem:[%s889 + $0x2f8] sm:$0xff]
  %v1562 = vsel %vm1473, %v1435, %v1561
  %1563 = vst [vmem:[%s889 + $0x2f8] sm:$0xff] %v1562
  %v1564 = vld [vmem:[%s889 + $0x310] sm:$0xff]
  %v1565 = vsel %vm1473, %v1437, %v1564
  %1566 = vst [vmem:[%s889 + $0x310] sm:$0xff] %v1565
  %v1567 = vld [vmem:[%s889 + $0x328] sm:$0xff]
  %v1568 = vsel %vm1473, %v1439, %v1567
  %1569 = vst [vmem:[%s889 + $0x328] sm:$0xff] %v1568
  %vm1570 = vcmask 1047559
  %vm1571 = vsmask.f32 7966
  %vm1572 = vmand %vm1570, %vm1571
  %v1573 = vld [vmem:[%s889 + $0x10] sm:$0x80]
  %v1574 = vsel %vm1572, 0, %v1573
  %1575 = vst [vmem:[%s889 + $0x10] sm:$0x80] %v1574
  %v1576 = vld [vmem:[%s889 + $0x28] sm:$0x80]
  %v1577 = vsel %vm1572, 0, %v1576
  %1578 = vst [vmem:[%s889 + $0x28] sm:$0x80] %v1577
  %v1579 = vld [vmem:[%s889 + $0x40] sm:$0x80]
  %v1580 = vsel %vm1572, 0, %v1579
  %1581 = vst [vmem:[%s889 + $0x40] sm:$0x80] %v1580
  %v1582 = vld [vmem:[%s889 + $0x58] sm:$0x80]
  %v1583 = vsel %vm1572, 0, %v1582
  %1584 = vst [vmem:[%s889 + $0x58] sm:$0x80] %v1583
  %v1585 = vld [vmem:[%s889 + $0x70] sm:$0x80]
  %v1586 = vsel %vm1572, 0, %v1585
  %1587 = vst [vmem:[%s889 + $0x70] sm:$0x80] %v1586
  %v1588 = vld [vmem:[%s889 + $0x88] sm:$0x80]
  %v1589 = vsel %vm1572, 0, %v1588
  %1590 = vst [vmem:[%s889 + $0x88] sm:$0x80] %v1589
  %v1591 = vld [vmem:[%s889 + $0xa0] sm:$0x80]
  %v1592 = vsel %vm1572, 0, %v1591
  %1593 = vst [vmem:[%s889 + $0xa0] sm:$0x80] %v1592
  %v1594 = vld [vmem:[%s889 + $0xb8] sm:$0x80]
  %v1595 = vsel %vm1572, 0, %v1594
  %1596 = vst [vmem:[%s889 + $0xb8] sm:$0x80] %v1595
  %v1597 = vld [vmem:[%s889 + $0xd0] sm:$0x80]
  %v1598 = vsel %vm1572, 0, %v1597
  %1599 = vst [vmem:[%s889 + $0xd0] sm:$0x80] %v1598
  %v1600 = vld [vmem:[%s889 + $0xe8] sm:$0x80]
  %v1601 = vsel %vm1572, 0, %v1600
  %1602 = vst [vmem:[%s889 + $0xe8] sm:$0x80] %v1601
  %v1603 = vld [vmem:[%s889 + $0x100] sm:$0x80]
  %v1604 = vsel %vm1572, 0, %v1603
  %1605 = vst [vmem:[%s889 + $0x100] sm:$0x80] %v1604
  %v1606 = vld [vmem:[%s889 + $0x118] sm:$0x80]
  %v1607 = vsel %vm1572, 0, %v1606
  %1608 = vst [vmem:[%s889 + $0x118] sm:$0x80] %v1607
  %v1609 = vld [vmem:[%s889 + $0x130] sm:$0x80]
  %v1610 = vsel %vm1572, 0, %v1609
  %1611 = vst [vmem:[%s889 + $0x130] sm:$0x80] %v1610
  %v1612 = vld [vmem:[%s889 + $0x148] sm:$0x80]
  %v1613 = vsel %vm1572, 0, %v1612
  %1614 = vst [vmem:[%s889 + $0x148] sm:$0x80] %v1613
  %v1615 = vld [vmem:[%s889 + $0x160] sm:$0x80]
  %v1616 = vsel %vm1572, 0, %v1615
  %1617 = vst [vmem:[%s889 + $0x160] sm:$0x80] %v1616
  %v1618 = vld [vmem:[%s889 + $0x178] sm:$0x80]
  %v1619 = vsel %vm1572, 0, %v1618
  %1620 = vst [vmem:[%s889 + $0x178] sm:$0x80] %v1619
  %v1621 = vld [vmem:[%s889 + $0x1c0] sm:$0x80]
  %v1622 = vsel %vm1572, 0, %v1621
  %1623 = vst [vmem:[%s889 + $0x1c0] sm:$0x80] %v1622
  %v1624 = vld [vmem:[%s889 + $0x1d8] sm:$0x80]
  %v1625 = vsel %vm1572, 0, %v1624
  %1626 = vst [vmem:[%s889 + $0x1d8] sm:$0x80] %v1625
  %v1627 = vld [vmem:[%s889 + $0x1f0] sm:$0x80]
  %v1628 = vsel %vm1572, 0, %v1627
  %1629 = vst [vmem:[%s889 + $0x1f0] sm:$0x80] %v1628
  %v1630 = vld [vmem:[%s889 + $0x208] sm:$0x80]
  %v1631 = vsel %vm1572, 0, %v1630
  %1632 = vst [vmem:[%s889 + $0x208] sm:$0x80] %v1631
  %v1633 = vld [vmem:[%s889 + $0x220] sm:$0x80]
  %v1634 = vsel %vm1572, 0, %v1633
  %1635 = vst [vmem:[%s889 + $0x220] sm:$0x80] %v1634
  %v1636 = vld [vmem:[%s889 + $0x238] sm:$0x80]
  %v1637 = vsel %vm1572, 0, %v1636
  %1638 = vst [vmem:[%s889 + $0x238] sm:$0x80] %v1637
  %v1639 = vld [vmem:[%s889 + $0x250] sm:$0x80]
  %v1640 = vsel %vm1572, 0, %v1639
  %1641 = vst [vmem:[%s889 + $0x250] sm:$0x80] %v1640
  %v1642 = vld [vmem:[%s889 + $0x268] sm:$0x80]
  %v1643 = vsel %vm1572, 0, %v1642
  %1644 = vst [vmem:[%s889 + $0x268] sm:$0x80] %v1643
  %v1645 = vld [vmem:[%s889 + $0x280] sm:$0x80]
  %v1646 = vsel %vm1572, 0, %v1645
  %1647 = vst [vmem:[%s889 + $0x280] sm:$0x80] %v1646
  %v1648 = vld [vmem:[%s889 + $0x298] sm:$0x80]
  %v1649 = vsel %vm1572, 0, %v1648
  %1650 = vst [vmem:[%s889 + $0x298] sm:$0x80] %v1649
  %v1651 = vld [vmem:[%s889 + $0x2b0] sm:$0x80]
  %v1652 = vsel %vm1572, 0, %v1651
  %1653 = vst [vmem:[%s889 + $0x2b0] sm:$0x80] %v1652
  %v1654 = vld [vmem:[%s889 + $0x2c8] sm:$0x80]
  %v1655 = vsel %vm1572, 0, %v1654
  %1656 = vst [vmem:[%s889 + $0x2c8] sm:$0x80] %v1655
  %v1657 = vld [vmem:[%s889 + $0x2e0] sm:$0x80]
  %v1658 = vsel %vm1572, 0, %v1657
  %1659 = vst [vmem:[%s889 + $0x2e0] sm:$0x80] %v1658
  %v1660 = vld [vmem:[%s889 + $0x2f8] sm:$0x80]
  %v1661 = vsel %vm1572, 0, %v1660
  %1662 = vst [vmem:[%s889 + $0x2f8] sm:$0x80] %v1661
  %v1663 = vld [vmem:[%s889 + $0x310] sm:$0x80]
  %v1664 = vsel %vm1572, 0, %v1663
  %1665 = vst [vmem:[%s889 + $0x310] sm:$0x80] %v1664
  %v1666 = vld [vmem:[%s889 + $0x328] sm:$0x80]
  %v1667 = vsel %vm1572, 0, %v1666
  %1668 = vst [vmem:[%s889 + $0x328] sm:$0x80] %v1667
  %v1669 = vld [vmem:[%s4] sm:$0x1]
  %v1670 = vld [vmem:[#allocation2] sm:$0xff]
  %v1671 = vld [vmem:[#allocation2 + $0x8] sm:$0xff]
  %v1672 = vld [vmem:[#allocation2 + $0x10] sm:$0xff]
  %v1673 = vld [vmem:[#allocation2 + $0x18] sm:$0xff]
  %v1674 = vld [vmem:[#allocation2 + $0x20] sm:$0xff]
  %v1675 = vld [vmem:[#allocation2 + $0x28] sm:$0xff]
  %v1676 = vld [vmem:[#allocation2 + $0x30] sm:$0xff]
  %v1677 = vld [vmem:[#allocation2 + $0x38] sm:$0xff]
  %v1678 = vld [vmem:[#allocation2 + $0x40] sm:$0xff]
  %v1679 = vld [vmem:[#allocation2 + $0x48] sm:$0xff]
  %v1680 = vld [vmem:[#allocation2 + $0x50] sm:$0xff]
  %v1681 = vld [vmem:[#allocation2 + $0x58] sm:$0xff]
  %v1682 = vld [vmem:[#allocation2 + $0x60] sm:$0xff]
  %v1683 = vld [vmem:[#allocation2 + $0x68] sm:$0xff]
  %v1684 = vld [vmem:[#allocation2 + $0x70] sm:$0xff]
  %v1685 = vld [vmem:[#allocation2 + $0x78] sm:$0xff]
  %v1686 = vld [vmem:[#allocation2 + $0x80] sm:$0xff]
  %v1687 = vld [vmem:[#allocation2 + $0x88] sm:$0xff]
  %v1688 = vld [vmem:[#allocation2 + $0x90] sm:$0xff]
  %v1689 = vld [vmem:[#allocation2 + $0x98] sm:$0xff]
  %v1690 = vld [vmem:[#allocation2 + $0xa0] sm:$0xff]
  %v1691 = vld [vmem:[#allocation2 + $0xa8] sm:$0xff]
  %v1692 = vld [vmem:[#allocation2 + $0xb0] sm:$0xff]
  %v1693 = vld [vmem:[#allocation2 + $0xb8] sm:$0xff]
  %v1694 = vld [vmem:[#allocation2 + $0xc0] sm:$0xff]
  %v1695 = vld [vmem:[#allocation2 + $0xc8] sm:$0xff]
  %v1696 = vld [vmem:[#allocation2 + $0xd0] sm:$0xff]
  %v1697 = vld [vmem:[#allocation2 + $0xd8] sm:$0xff]
  %v1698 = vld [vmem:[#allocation2 + $0xe0] sm:$0xff]
  %v1699 = vld [vmem:[#allocation2 + $0xe8] sm:$0xff]
  %v1700 = vld [vmem:[#allocation2 + $0xf0] sm:$0xff]
  %v1701 = vld [vmem:[#allocation2 + $0xf8] sm:$0xff]
  %v1702 = vld [vmem:[#allocation2 + $0x100] sm:$0xff]
  %v1703 = vld [vmem:[#allocation2 + $0x108] sm:$0xff]
  %v1704 = vld [vmem:[#allocation2 + $0x110] sm:$0xff]
  %v1705 = vld [vmem:[#allocation2 + $0x118] sm:$0xff]
  %v1706 = vld [vmem:[#allocation2 + $0x120] sm:$0xff]
  %v1707 = vld [vmem:[#allocation2 + $0x128] sm:$0xff]
  %v1708 = vld [vmem:[#allocation2 + $0x130] sm:$0xff]
  %v1709 = vld [vmem:[#allocation2 + $0x138] sm:$0xff]
  %v1710 = vld [vmem:[#allocation2 + $0x140] sm:$0xff]
  %v1711 = vld [vmem:[#allocation2 + $0x148] sm:$0xff]
  %v1712 = vld [vmem:[#allocation2 + $0x150] sm:$0xff]
  %v1713 = vld [vmem:[#allocation2 + $0x158] sm:$0xff]
  %v1714 = vld [vmem:[#allocation2 + $0x160] sm:$0xff]
  %v1715 = vld [vmem:[#allocation2 + $0x168] sm:$0xff]
  %v1716 = vld [vmem:[#allocation2 + $0x170] sm:$0xff]
  %v1717 = vld [vmem:[#allocation2 + $0x178] sm:$0xff]
  %v1718 = vld [vmem:[#allocation2 + $0x1b0] sm:$0xff]
  %v1719 = vld [vmem:[#allocation2 + $0x1b8] sm:$0xff]
  %v1720 = vld [vmem:[#allocation2 + $0x1c0] sm:$0xff]
  %v1721 = vld [vmem:[#allocation2 + $0x1c8] sm:$0xff]
  %v1722 = vld [vmem:[#allocation2 + $0x1d0] sm:$0xff]
  %v1723 = vld [vmem:[#allocation2 + $0x1d8] sm:$0xff]
  %v1724 = vld [vmem:[#allocation2 + $0x1e0] sm:$0xff]
  %v1725 = vld [vmem:[#allocation2 + $0x1e8] sm:$0xff]
  %v1726 = vld [vmem:[#allocation2 + $0x1f0] sm:$0xff]
  %v1727 = vld [vmem:[#allocation2 + $0x1f8] sm:$0xff]
  %v1728 = vld [vmem:[#allocation2 + $0x200] sm:$0xff]
  %v1729 = vld [vmem:[#allocation2 + $0x208] sm:$0xff]
  %v1730 = vld [vmem:[#allocation2 + $0x210] sm:$0xff]
  %v1731 = vld [vmem:[#allocation2 + $0x218] sm:$0xff]
  %v1732 = vld [vmem:[#allocation2 + $0x220] sm:$0xff]
  %v1733 = vld [vmem:[#allocation2 + $0x228] sm:$0xff]
  %v1734 = vld [vmem:[#allocation2 + $0x230] sm:$0xff]
  %v1735 = vld [vmem:[#allocation2 + $0x238] sm:$0xff]
  %v1736 = vld [vmem:[#allocation2 + $0x240] sm:$0xff]
  %v1737 = vld [vmem:[#allocation2 + $0x248] sm:$0xff]
  %v1738 = vld [vmem:[#allocation2 + $0x250] sm:$0xff]
  %v1739 = vld [vmem:[#allocation2 + $0x258] sm:$0xff]
  %v1740 = vld [vmem:[#allocation2 + $0x260] sm:$0xff]
  %v1741 = vld [vmem:[#allocation2 + $0x268] sm:$0xff]
  %v1742 = vld [vmem:[#allocation2 + $0x270] sm:$0xff]
  %v1743 = vld [vmem:[#allocation2 + $0x278] sm:$0xff]
  %v1744 = vld [vmem:[#allocation2 + $0x280] sm:$0xff]
  %v1745 = vld [vmem:[#allocation2 + $0x288] sm:$0xff]
  %v1746 = vld [vmem:[#allocation2 + $0x290] sm:$0xff]
  %v1747 = vld [vmem:[#allocation2 + $0x298] sm:$0xff]
  %v1748 = vld [vmem:[#allocation2 + $0x2a0] sm:$0xff]
  %v1749 = vld [vmem:[#allocation2 + $0x2a8] sm:$0xff]
  %v1750 = vld [vmem:[#allocation2 + $0x2b0] sm:$0xff]
  %v1751 = vld [vmem:[#allocation2 + $0x2b8] sm:$0xff]
  %v1752 = vld [vmem:[#allocation2 + $0x2c0] sm:$0xff]
  %v1753 = vld [vmem:[#allocation2 + $0x2c8] sm:$0xff]
  %v1754 = vld [vmem:[#allocation2 + $0x2d0] sm:$0xff]
  %v1755 = vld [vmem:[#allocation2 + $0x2d8] sm:$0xff]
  %v1756 = vld [vmem:[#allocation2 + $0x2e0] sm:$0xff]
  %v1757 = vld [vmem:[#allocation2 + $0x2e8] sm:$0xff]
  %v1758 = vld [vmem:[#allocation2 + $0x2f0] sm:$0xff]
  %v1759 = vld [vmem:[#allocation2 + $0x2f8] sm:$0xff]
  %v1760 = vld [vmem:[#allocation2 + $0x300] sm:$0xff]
  %v1761 = vld [vmem:[#allocation2 + $0x308] sm:$0xff]
  %v1762 = vld [vmem:[#allocation2 + $0x310] sm:$0xff]
  %v1763 = vld [vmem:[#allocation2 + $0x318] sm:$0xff]
  %v1764 = vld [vmem:[#allocation2 + $0x320] sm:$0xff]
  %v1765 = vld [vmem:[#allocation2 + $0x328] sm:$0xff]
  %v1766 = vld [vmem:[%s3] sm:$0xf]
  %v1767 = vld [vmem:[%s3 + $0x4] sm:$0xf]
  %v1768 = vld [vmem:[%s3 + $0x8] sm:$0xf]
  %v1769 = vld [vmem:[%s3 + $0xc] sm:$0xf]
  %v1770 = vld [vmem:[%s3 + $0x10] sm:$0xf]
  %v1771 = vld [vmem:[%s3 + $0x14] sm:$0xf]
  %v1772 = vld [vmem:[%s3 + $0x18] sm:$0xf]
  %v1773 = vld [vmem:[%s3 + $0x1c] sm:$0xf]
  %v1774 = vld [vmem:[%s3 + $0x20] sm:$0xf]
  %v1775 = vld [vmem:[%s3 + $0x24] sm:$0xf]
  %v1776 = vld [vmem:[%s3 + $0x28] sm:$0xf]
  %v1777 = vld [vmem:[%s3 + $0x2c] sm:$0xf]
  %v1778 = vld [vmem:[%s3 + $0x30] sm:$0xf]
  %v1779 = vld [vmem:[%s3 + $0x34] sm:$0xf]
  %v1780 = vld [vmem:[%s3 + $0x38] sm:$0xf]
  %v1781 = vld [vmem:[%s3 + $0x3c] sm:$0xf]
  %v1782 = vld [vmem:[%s3 + $0x40] sm:$0xf]
  %v1783 = vld [vmem:[%s3 + $0x44] sm:$0xf]
  %v1784 = vld [vmem:[%s3 + $0x48] sm:$0xf]
  %v1785 = vld [vmem:[%s3 + $0x4c] sm:$0xf]
  %v1786 = vld [vmem:[%s3 + $0x50] sm:$0xf]
  %v1787 = vld [vmem:[%s3 + $0x54] sm:$0xf]
  %v1788 = vld [vmem:[%s3 + $0x58] sm:$0xf]
  %v1789 = vld [vmem:[%s3 + $0x5c] sm:$0xf]
  %v1790 = vld [vmem:[%s3 + $0x60] sm:$0xf]
  %v1791 = vld [vmem:[%s3 + $0x64] sm:$0xf]
  %v1792 = vld [vmem:[%s3 + $0x68] sm:$0xf]
  %v1793 = vld [vmem:[%s3 + $0x6c] sm:$0xf]
  %v1794 = vld [vmem:[%s3 + $0x70] sm:$0xf]
  %v1795 = vld [vmem:[%s3 + $0x74] sm:$0xf]
  %v1796 = vld [vmem:[%s3 + $0x78] sm:$0xf]
  %v1797 = vld [vmem:[%s3 + $0x7c] sm:$0xf]
  %v1798 = vld [vmem:[%s3 + $0x80] sm:$0xf]
  %v1799 = vld [vmem:[%s3 + $0x84] sm:$0xf]
  %v1800 = vld [vmem:[%s3 + $0x88] sm:$0xf]
  %v1801 = vld [vmem:[%s3 + $0x8c] sm:$0xf]
  %v1802 = vld [vmem:[%s3 + $0x90] sm:$0xf]
  %v1803 = vld [vmem:[%s3 + $0x94] sm:$0xf]
  %v1804 = vld [vmem:[%s3 + $0x98] sm:$0xf]
  %v1805 = vld [vmem:[%s3 + $0x9c] sm:$0xf]
  %v1806 = vld [vmem:[%s3 + $0xa0] sm:$0xf]
  %v1807 = vld [vmem:[%s3 + $0xa4] sm:$0xf]
  %v1808 = vld [vmem:[%s3 + $0xa8] sm:$0xf]
  %v1809 = vld [vmem:[%s3 + $0xac] sm:$0xf]
  %v1810 = vld [vmem:[%s3 + $0xb0] sm:$0xf]
  %v1811 = vld [vmem:[%s3 + $0xb4] sm:$0xf]
  %v1812 = vld [vmem:[%s3 + $0xb8] sm:$0xf]
  %v1813 = vld [vmem:[%s3 + $0xbc] sm:$0xf]
  %v1862 = vunpack.c.l.b16 %v1766
  %v1863 = vunpack.c.l.b16 %v1767
  %v1864 = vunpack.c.l.b16 %v1768
  %v1865 = vunpack.c.l.b16 %v1769
  %v1866 = vunpack.c.l.b16 %v1770
  %v1867 = vunpack.c.l.b16 %v1771
  %v1868 = vunpack.c.l.b16 %v1772
  %v1869 = vunpack.c.l.b16 %v1773
  %v1870 = vunpack.c.l.b16 %v1774
  %v1871 = vunpack.c.l.b16 %v1775
  %v1872 = vunpack.c.l.b16 %v1776
  %v1873 = vunpack.c.l.b16 %v1777
  %v1874 = vunpack.c.l.b16 %v1778
  %v1875 = vunpack.c.l.b16 %v1779
  %v1876 = vunpack.c.l.b16 %v1780
  %v1877 = vunpack.c.l.b16 %v1781
  %v1878 = vunpack.c.l.b16 %v1782
  %v1879 = vunpack.c.l.b16 %v1783
  %v1880 = vunpack.c.l.b16 %v1784
  %v1881 = vunpack.c.l.b16 %v1785
  %v1882 = vunpack.c.l.b16 %v1786
  %v1883 = vunpack.c.l.b16 %v1787
  %v1884 = vunpack.c.l.b16 %v1788
  %v1885 = vunpack.c.l.b16 %v1789
  %v1886 = vunpack.c.l.b16 %v1790
  %v1887 = vunpack.c.l.b16 %v1791
  %v1888 = vunpack.c.l.b16 %v1792
  %v1889 = vunpack.c.l.b16 %v1793
  %v1890 = vunpack.c.l.b16 %v1794
  %v1891 = vunpack.c.l.b16 %v1795
  %v1892 = vunpack.c.l.b16 %v1796
  %v1893 = vunpack.c.l.b16 %v1797
  %v1894 = vunpack.c.l.b16 %v1798
  %v1895 = vunpack.c.l.b16 %v1799
  %v1896 = vunpack.c.l.b16 %v1800
  %v1897 = vunpack.c.l.b16 %v1801
  %v1898 = vunpack.c.l.b16 %v1802
  %v1899 = vunpack.c.l.b16 %v1803
  %v1900 = vunpack.c.l.b16 %v1804
  %v1901 = vunpack.c.l.b16 %v1805
  %v1902 = vunpack.c.l.b16 %v1806
  %v1903 = vunpack.c.l.b16 %v1807
  %v1904 = vunpack.c.l.b16 %v1808
  %v1905 = vunpack.c.l.b16 %v1809
  %v1906 = vunpack.c.l.b16 %v1810
  %v1907 = vunpack.c.l.b16 %v1811
  %v1908 = vunpack.c.l.b16 %v1812
  %v1909 = vunpack.c.l.b16 %v1813
  %v1910 = vpack.c.b16 %v1863, %v1862
  %v1911 = vpack.c.b16 %v1865, %v1864
  %v1912 = vpack.c.b16 %v1867, %v1866
  %v1913 = vpack.c.b16 %v1869, %v1868
  %v1914 = vpack.c.b16 %v1871, %v1870
  %v1915 = vpack.c.b16 %v1873, %v1872
  %v1916 = vpack.c.b16 %v1875, %v1874
  %v1917 = vpack.c.b16 %v1877, %v1876
  %v1918 = vpack.c.b16 %v1879, %v1878
  %v1919 = vpack.c.b16 %v1881, %v1880
  %v1920 = vpack.c.b16 %v1883, %v1882
  %v1921 = vpack.c.b16 %v1885, %v1884
  %v1922 = vpack.c.b16 %v1887, %v1886
  %v1923 = vpack.c.b16 %v1889, %v1888
  %v1924 = vpack.c.b16 %v1891, %v1890
  %v1925 = vpack.c.b16 %v1893, %v1892
  %v1926 = vpack.c.b16 %v1895, %v1894
  %v1927 = vpack.c.b16 %v1897, %v1896
  %v1928 = vpack.c.b16 %v1899, %v1898
  %v1929 = vpack.c.b16 %v1901, %v1900
  %v1930 = vpack.c.b16 %v1903, %v1902
  %v1931 = vpack.c.b16 %v1905, %v1904
  %v1932 = vpack.c.b16 %v1907, %v1906
  %v1933 = vpack.c.b16 %v1909, %v1908
  %1958 = vmatprep.subr.bf16.mxu0 0
  %1959 = vmatpush1.bf16.msra.mxu0 %v1910
  %1960 = vmatprep.subr.bf16.mxu0 0
  %1961 = vmatpush1.bf16.msra.mxu0 %v1911
  %1962 = vmatprep.subr.bf16.mxu0 0
  %1963 = vmatpush1.bf16.msra.mxu0 %v1912
  %1964 = vmatprep.subr.bf16.mxu0 0
  %1965 = vmatpush1.bf16.msra.mxu0 %v1913
  %1966 = vmatprep.subr.bf16.mxu0 0
  %1967 = vmatpush1.bf16.msra.mxu0 %v1914
  %1968 = vmatprep.subr.bf16.mxu0 0
  %1969 = vmatpush1.bf16.msra.mxu0 %v1915
  %1970 = vmatprep.subr.bf16.mxu0 0
  %1971 = vmatpush1.bf16.msra.mxu0 %v1916
  %1972 = vmatprep.subr.bf16.mxu0 0
  %1973 = vmatpush1.bf16.msra.mxu0 %v1917
  %1974 = vmatprep.subr.bf16.mxu0 0
  %1975 = vmatpush1.bf16.msra.mxu0 %v1918
  %1976 = vmatprep.subr.bf16.mxu0 0
  %1977 = vmatpush1.bf16.msra.mxu0 %v1919
  %1978 = vmatprep.subr.bf16.mxu0 0
  %1979 = vmatpush1.bf16.msra.mxu0 %v1920
  %1980 = vmatprep.subr.bf16.mxu0 0
  %1981 = vmatpush1.bf16.msra.mxu0 %v1921
  %1982 = vmatprep.subr.bf16.mxu0 0
  %1983 = vmatpush1.bf16.msra.mxu0 %v1922
  %1984 = vmatprep.subr.bf16.mxu0 0
  %1985 = vmatpush1.bf16.msra.mxu0 %v1923
  %1986 = vmatprep.subr.bf16.mxu0 0
  %1987 = vmatpush1.bf16.msra.mxu0 %v1924
  %1988 = vmatprep.subr.bf16.mxu0 0
  %1989 = vmatpush1.bf16.msra.mxu0 %v1925
  %1990 = vmatprep.mubr.bf16.mxu0 %v1671
  %1991 = vmatmul.mubr.bf16.gmra.mrb[0].mxu0 %v1670
  %v1992 = vpop.f32.mrb[0].mxu0
  %v1993 = vadd.f32 0.0, %v1992
  %v1994 = vpop.f32.mrb[0].mxu0
  %v1995 = vpop.f32.mrb[0].mxu0
  %v1996 = vadd.f32 0.0, %v1995
  %v1997 = vpop.f32.mrb[0].mxu0
  %1998 = vmatprep.mubr.bf16.mxu0 %v1674
  %1999 = vmatmul.mubr.bf16.gmra.mrb[0].mxu0 %v1673
  %v2000 = vpop.f32.mrb[0].mxu0
  %v2001 = vadd.f32 0.0, %v2000
  %v2002 = vpop.f32.mrb[0].mxu0
  %v2003 = vpop.f32.mrb[0].mxu0
  %v2004 = vadd.f32 0.0, %v2003
  %v2005 = vpop.f32.mrb[0].mxu0
  %2006 = vmatprep.mubr.bf16.mxu0 %v1677
  %2007 = vmatmul.mubr.bf16.gmra.mrb[0].mxu0 %v1676
  %v2008 = vpop.f32.mrb[0].mxu0
  %v2009 = vadd.f32 0.0, %v2008
  %v2010 = vpop.f32.mrb[0].mxu0
  %v2011 = vpop.f32.mrb[0].mxu0
  %v2012 = vadd.f32 0.0, %v2011
  %v2013 = vpop.f32.mrb[0].mxu0
  %2014 = vmatprep.mubr.bf16.mxu0 %v1680
  %2015 = vmatmul.mubr.bf16.gmra.mrb[0].mxu0 %v1679
  %v2016 = vpop.f32.mrb[0].mxu0
  %v2017 = vadd.f32 0.0, %v2016
  %v2018 = vpop.f32.mrb[0].mxu0
  %v2019 = vpop.f32.mrb[0].mxu0
  %v2020 = vadd.f32 0.0, %v2019
  %v2021 = vpop.f32.mrb[0].mxu0
  %2022 = vmatprep.mubr.bf16.mxu0 %v1683
  %2023 = vmatmul.mubr.bf16.gmra.mrb[0].mxu0 %v1682
  %v2024 = vpop.f32.mrb[0].mxu0
  %v2025 = vadd.f32 0.0, %v2024
  %v2026 = vpop.f32.mrb[0].mxu0
  %v2027 = vpop.f32.mrb[0].mxu0
  %v2028 = vadd.f32 0.0, %v2027
  %v2029 = vpop.f32.mrb[0].mxu0
  %2030 = vmatprep.mubr.bf16.mxu0 %v1686
  %2031 = vmatmul.mubr.bf16.gmra.mrb[0].mxu0 %v1685
  %v2032 = vpop.f32.mrb[0].mxu0
  %v2033 = vadd.f32 0.0, %v2032
  %v2034 = vpop.f32.mrb[0].mxu0
  %v2035 = vpop.f32.mrb[0].mxu0
  %v2036 = vadd.f32 0.0, %v2035
  %v2037 = vpop.f32.mrb[0].mxu0
  %2038 = vmatprep.mubr.bf16.mxu0 %v1689
  %2039 = vmatmul.mubr.bf16.gmra.mrb[0].mxu0 %v1688
  %v2040 = vpop.f32.mrb[0].mxu0
  %v2041 = vadd.f32 0.0, %v2040
  %v2042 = vpop.f32.mrb[0].mxu0
  %v2043 = vpop.f32.mrb[0].mxu0
  %v2044 = vadd.f32 0.0, %v2043
  %v2045 = vpop.f32.mrb[0].mxu0
  %2046 = vmatprep.mubr.bf16.mxu0 %v1692
  %2047 = vmatmul.mubr.bf16.gmra.mrb[0].mxu0 %v1691
  %v2048 = vpop.f32.mrb[0].mxu0
  %v2049 = vadd.f32 0.0, %v2048
  %v2050 = vpop.f32.mrb[0].mxu0
  %v2051 = vpop.f32.mrb[0].mxu0
  %v2052 = vadd.f32 0.0, %v2051
  %v2053 = vpop.f32.mrb[0].mxu0
  %2054 = vmatprep.mubr.bf16.mxu0 %v1695
  %2055 = vmatmul.mubr.bf16.gmra.mrb[0].mxu0 %v1694
  %v2056 = vpop.f32.mrb[0].mxu0
  %v2057 = vadd.f32 0.0, %v2056
  %v2058 = vpop.f32.mrb[0].mxu0
  %v2059 = vpop.f32.mrb[0].mxu0
  %v2060 = vadd.f32 0.0, %v2059
  %v2061 = vpop.f32.mrb[0].mxu0
  %2062 = vmatprep.mubr.bf16.mxu0 %v1698
  %2063 = vmatmul.mubr.bf16.gmra.mrb[0].mxu0 %v1697
  %v2064 = vpop.f32.mrb[0].mxu0
  %v2065 = vadd.f32 0.0, %v2064
  %v2066 = vpop.f32.mrb[0].mxu0
  %v2067 = vpop.f32.mrb[0].mxu0
  %v2068 = vadd.f32 0.0, %v2067
  %v2069 = vpop.f32.mrb[0].mxu0
  %2070 = vmatprep.mubr.bf16.mxu0 %v1701
  %2071 = vmatmul.mubr.bf16.gmra.mrb[0].mxu0 %v1700
  %v2072 = vpop.f32.mrb[0].mxu0
  %v2073 = vadd.f32 0.0, %v2072
  %v2074 = vpop.f32.mrb[0].mxu0
  %v2075 = vpop.f32.mrb[0].mxu0
  %v2076 = vadd.f32 0.0, %v2075
  %v2077 = vpop.f32.mrb[0].mxu0
  %2078 = vmatprep.mubr.bf16.mxu0 %v1704
  %2079 = vmatmul.mubr.bf16.gmra.mrb[0].mxu0 %v1703
  %v2080 = vpop.f32.mrb[0].mxu0
  %v2081 = vadd.f32 0.0, %v2080
  %v2082 = vpop.f32.mrb[0].mxu0
  %v2083 = vpop.f32.mrb[0].mxu0
  %v2084 = vadd.f32 0.0, %v2083
  %v2085 = vpop.f32.mrb[0].mxu0
  %2086 = vmatprep.mubr.bf16.mxu0 %v1707
  %2087 = vmatmul.mubr.bf16.gmra.mrb[0].mxu0 %v1706
  %v2088 = vpop.f32.mrb[0].mxu0
  %v2089 = vadd.f32 0.0, %v2088
  %v2090 = vpop.f32.mrb[0].mxu0
  %v2091 = vpop.f32.mrb[0].mxu0
  %v2092 = vadd.f32 0.0, %v2091
  %v2093 = vpop.f32.mrb[0].mxu0
  %2094 = vmatprep.mubr.bf16.mxu0 %v1710
  %2095 = vmatmul.mubr.bf16.gmra.mrb[0].mxu0 %v1709
  %v2096 = vpop.f32.mrb[0].mxu0
  %v2097 = vadd.f32 0.0, %v2096
  %v2098 = vpop.f32.mrb[0].mxu0
  %v2099 = vpop.f32.mrb[0].mxu0
  %v2100 = vadd.f32 0.0, %v2099
  %v2101 = vpop.f32.mrb[0].mxu0
  %2102 = vmatprep.mubr.bf16.mxu0 %v1713
  %2103 = vmatmul.mubr.bf16.gmra.mrb[0].mxu0 %v1712
  %v2104 = vpop.f32.mrb[0].mxu0
  %v2105 = vadd.f32 0.0, %v2104
  %v2106 = vpop.f32.mrb[0].mxu0
  %v2107 = vpop.f32.mrb[0].mxu0
  %v2108 = vadd.f32 0.0, %v2107
  %v2109 = vpop.f32.mrb[0].mxu0
  %2110 = vmatprep.mubr.bf16.mxu0 %v1716
  %2111 = vmatmul.mubr.bf16.gmra.mrb[0].mxu0 %v1715
  %v2112 = vpop.f32.mrb[0].mxu0
  %v2113 = vadd.f32 0.0, %v2112
  %v2114 = vpop.f32.mrb[0].mxu0
  %v2115 = vpop.f32.mrb[0].mxu0
  %v2116 = vadd.f32 0.0, %v2115
  %v2117 = vpop.f32.mrb[0].mxu0
  %2118 = vmatprep.mubr.bf16.mxu0 %v1719
  %2119 = vmatmul.mubr.bf16.gmra.mrb[0].mxu0 %v1718
  %v2120 = vpop.f32.mrb[0].mxu0
  %v2121 = vadd.f32 0.0, %v2120
  %v2122 = vpop.f32.mrb[0].mxu0
  %v2123 = vpop.f32.mrb[0].mxu0
  %v2124 = vadd.f32 0.0, %v2123
  %v2125 = vpop.f32.mrb[0].mxu0
  %2126 = vmatprep.mubr.bf16.mxu0 %v1722
  %2127 = vmatmul.mubr.bf16.gmra.mrb[0].mxu0 %v1721
  %v2128 = vpop.f32.mrb[0].mxu0
  %v2129 = vadd.f32 0.0, %v2128
  %v2130 = vpop.f32.mrb[0].mxu0
  %v2131 = vpop.f32.mrb[0].mxu0
  %v2132 = vadd.f32 0.0, %v2131
  %v2133 = vpop.f32.mrb[0].mxu0
  %2134 = vmatprep.mubr.bf16.mxu0 %v1725
  %2135 = vmatmul.mubr.bf16.gmra.mrb[0].mxu0 %v1724
  %v2136 = vpop.f32.mrb[0].mxu0
  %v2137 = vadd.f32 0.0, %v2136
  %v2138 = vpop.f32.mrb[0].mxu0
  %v2139 = vpop.f32.mrb[0].mxu0
  %v2140 = vadd.f32 0.0, %v2139
  %v2141 = vpop.f32.mrb[0].mxu0
  %2142 = vmatprep.mubr.bf16.mxu0 %v1728
  %2143 = vmatmul.mubr.bf16.gmra.mrb[0].mxu0 %v1727
  %v2144 = vpop.f32.mrb[0].mxu0
  %v2145 = vadd.f32 0.0, %v2144
  %v2146 = vpop.f32.mrb[0].mxu0
  %v2147 = vpop.f32.mrb[0].mxu0
  %v2148 = vadd.f32 0.0, %v2147
  %v2149 = vpop.f32.mrb[0].mxu0
  %2150 = vmatprep.mubr.bf16.mxu0 %v1731
  %2151 = vmatmul.mubr.bf16.gmra.mrb[0].mxu0 %v1730
  %v2152 = vpop.f32.mrb[0].mxu0
  %v2153 = vadd.f32 0.0, %v2152
  %v2154 = vpop.f32.mrb[0].mxu0
  %v2155 = vpop.f32.mrb[0].mxu0
  %v2156 = vadd.f32 0.0, %v2155
  %v2157 = vpop.f32.mrb[0].mxu0
  %2158 = vmatprep.mubr.bf16.mxu0 %v1734
  %2159 = vmatmul.mubr.bf16.gmra.mrb[0].mxu0 %v1733
  %v2160 = vpop.f32.mrb[0].mxu0
  %v2161 = vadd.f32 0.0, %v2160
  %v2162 = vpop.f32.mrb[0].mxu0
  %v2163 = vpop.f32.mrb[0].mxu0
  %v2164 = vadd.f32 0.0, %v2163
  %v2165 = vpop.f32.mrb[0].mxu0
  %2166 = vmatprep.mubr.bf16.mxu0 %v1737
  %2167 = vmatmul.mubr.bf16.gmra.mrb[0].mxu0 %v1736
  %v2168 = vpop.f32.mrb[0].mxu0
  %v2169 = vadd.f32 0.0, %v2168
  %v2170 = vpop.f32.mrb[0].mxu0
  %v2171 = vpop.f32.mrb[0].mxu0
  %v2172 = vadd.f32 0.0, %v2171
  %v2173 = vpop.f32.mrb[0].mxu0
  %2174 = vmatprep.mubr.bf16.mxu0 %v1740
  %2175 = vmatmul.mubr.bf16.gmra.mrb[0].mxu0 %v1739
  %v2176 = vpop.f32.mrb[0].mxu0
  %v2177 = vadd.f32 0.0, %v2176
  %v2178 = vpop.f32.mrb[0].mxu0
  %v2179 = vpop.f32.mrb[0].mxu0
  %v2180 = vadd.f32 0.0, %v2179
  %v2181 = vpop.f32.mrb[0].mxu0
  %2182 = vmatprep.mubr.bf16.mxu0 %v1743
  %2183 = vmatmul.mubr.bf16.gmra.mrb[0].mxu0 %v1742
  %v2184 = vpop.f32.mrb[0].mxu0
  %v2185 = vadd.f32 0.0, %v2184
  %v2186 = vpop.f32.mrb[0].mxu0
  %v2187 = vpop.f32.mrb[0].mxu0
  %v2188 = vadd.f32 0.0, %v2187
  %v2189 = vpop.f32.mrb[0].mxu0
  %2190 = vmatprep.mubr.bf16.mxu0 %v1746
  %2191 = vmatmul.mubr.bf16.gmra.mrb[0].mxu0 %v1745
  %v2192 = vpop.f32.mrb[0].mxu0
  %v2193 = vadd.f32 0.0, %v2192
  %v2194 = vpop.f32.mrb[0].mxu0
  %v2195 = vpop.f32.mrb[0].mxu0
  %v2196 = vadd.f32 0.0, %v2195
  %v2197 = vpop.f32.mrb[0].mxu0
  %2198 = vmatprep.mubr.bf16.mxu0 %v1749
  %2199 = vmatmul.mubr.bf16.gmra.mrb[0].mxu0 %v1748
  %v2200 = vpop.f32.mrb[0].mxu0
  %v2201 = vadd.f32 0.0, %v2200
  %v2202 = vpop.f32.mrb[0].mxu0
  %v2203 = vpop.f32.mrb[0].mxu0
  %v2204 = vadd.f32 0.0, %v2203
  %v2205 = vpop.f32.mrb[0].mxu0
  %2206 = vmatprep.mubr.bf16.mxu0 %v1752
  %2207 = vmatmul.mubr.bf16.gmra.mrb[0].mxu0 %v1751
  %v2208 = vpop.f32.mrb[0].mxu0
  %v2209 = vadd.f32 0.0, %v2208
  %v2210 = vpop.f32.mrb[0].mxu0
  %v2211 = vpop.f32.mrb[0].mxu0
  %v2212 = vadd.f32 0.0, %v2211
  %v2213 = vpop.f32.mrb[0].mxu0
  %2214 = vmatprep.mubr.bf16.mxu0 %v1755
  %2215 = vmatmul.mubr.bf16.gmra.mrb[0].mxu0 %v1754
  %v2216 = vpop.f32.mrb[0].mxu0
  %v2217 = vadd.f32 0.0, %v2216
  %v2218 = vpop.f32.mrb[0].mxu0
  %v2219 = vpop.f32.mrb[0].mxu0
  %v2220 = vadd.f32 0.0, %v2219
  %v2221 = vpop.f32.mrb[0].mxu0
  %2222 = vmatprep.mubr.bf16.mxu0 %v1758
  %2223 = vmatmul.mubr.bf16.gmra.mrb[0].mxu0 %v1757
  %v2224 = vpop.f32.mrb[0].mxu0
  %v2225 = vadd.f32 0.0, %v2224
  %v2226 = vpop.f32.mrb[0].mxu0
  %v2227 = vpop.f32.mrb[0].mxu0
  %v2228 = vadd.f32 0.0, %v2227
  %v2229 = vpop.f32.mrb[0].mxu0
  %2230 = vmatprep.mubr.bf16.mxu0 %v1761
  %2231 = vmatmul.mubr.bf16.gmra.mrb[0].mxu0 %v1760
  %v2232 = vpop.f32.mrb[0].mxu0
  %v2233 = vadd.f32 0.0, %v2232
  %v2234 = vpop.f32.mrb[0].mxu0
  %v2235 = vpop.f32.mrb[0].mxu0
  %v2236 = vadd.f32 0.0, %v2235
  %v2237 = vpop.f32.mrb[0].mxu0
  %2238 = vmatprep.mubr.bf16.mxu0 %v1764
  %2239 = vmatmul.mubr.bf16.gmra.mrb[0].mxu0 %v1763
  %v2240 = vpop.f32.mrb[0].mxu0
  %v2241 = vadd.f32 0.0, %v2240
  %v2242 = vpop.f32.mrb[0].mxu0
  %v2243 = vpop.f32.mrb[0].mxu0
  %v2244 = vadd.f32 0.0, %v2243
  %v2245 = vpop.f32.mrb[0].mxu0
  %2246 = vdwg.mxu0
  %2247 = vmatprep.subr.bf16.mxu0 0
  %2248 = vmatpush1.bf16.msra.mxu0 %v1926
  %2249 = vmatprep.subr.bf16.mxu0 0
  %2250 = vmatpush1.bf16.msra.mxu0 %v1927
  %2251 = vmatprep.subr.bf16.mxu0 0
  %2252 = vmatpush1.bf16.msra.mxu0 %v1928
  %2253 = vmatprep.subr.bf16.mxu0 0
  %2254 = vmatpush1.bf16.msra.mxu0 %v1929
  %2255 = vmatprep.subr.bf16.mxu0 0
  %2256 = vmatpush1.bf16.msra.mxu0 %v1930
  %2257 = vmatprep.subr.bf16.mxu0 0
  %2258 = vmatpush1.bf16.msra.mxu0 %v1931
  %2259 = vmatprep.subr.bf16.mxu0 0
  %2260 = vmatpush1.bf16.msra.mxu0 %v1932
  %2261 = vmatprep.subr.bf16.mxu0 0
  %2262 = vmatpush1.bf16.msra.mxu0 %v1933
  %2263 = vmatprep.subr.bf16.mxu0 0
  %2264 = vmatpush1.bf16.msra.mxu0 0
  %2265 = vmatprep.subr.bf16.mxu0 0
  %2266 = vmatpush1.bf16.msra.mxu0 0
  %2267 = vmatprep.subr.bf16.mxu0 0
  %2268 = vmatpush1.bf16.msra.mxu0 0
  %2269 = vmatprep.subr.bf16.mxu0 0
  %2270 = vmatpush1.bf16.msra.mxu0 0
  %2271 = vmatprep.subr.bf16.mxu0 0
  %2272 = vmatpush1.bf16.msra.mxu0 0
  %2273 = vmatprep.subr.bf16.mxu0 0
  %2274 = vmatpush1.bf16.msra.mxu0 0
  %2275 = vmatprep.subr.bf16.mxu0 0
  %2276 = vmatpush1.bf16.msra.mxu0 0
  %2277 = vmatprep.subr.bf16.mxu0 0
  %2278 = vmatpush1.bf16.msra.mxu0 0
  %2279 = vmatprep.mubr.bf16.mxu0 0
  %2280 = vmatmul.mubr.bf16.gmra.mrb[0].mxu0 %v1672
  %v2281 = vpop.f32.mrb[0].mxu0
  %v2282 = vadd.f32 %v1993, %v2281
  %v2283 = vpop.f32.mrb[0].mxu0
  %v2284 = vpop.f32.mrb[0].mxu0
  %v2285 = vadd.f32 %v1996, %v2284
  %v2286 = vpop.f32.mrb[0].mxu0
  %2287 = vmatprep.mubr.bf16.mxu0 0
  %2288 = vmatmul.mubr.bf16.gmra.mrb[0].mxu0 %v1675
  %v2289 = vpop.f32.mrb[0].mxu0
  %v2290 = vadd.f32 %v2001, %v2289
  %v2291 = vpop.f32.mrb[0].mxu0
  %v2292 = vpop.f32.mrb[0].mxu0
  %v2293 = vadd.f32 %v2004, %v2292
  %v2294 = vpop.f32.mrb[0].mxu0
  %2295 = vmatprep.mubr.bf16.mxu0 0
  %2296 = vmatmul.mubr.bf16.gmra.mrb[0].mxu0 %v1678
  %v2297 = vpop.f32.mrb[0].mxu0
  %v2298 = vadd.f32 %v2009, %v2297
  %v2299 = vpop.f32.mrb[0].mxu0
  %v2300 = vpop.f32.mrb[0].mxu0
  %v2301 = vadd.f32 %v2012, %v2300
  %v2302 = vpop.f32.mrb[0].mxu0
  %2303 = vmatprep.mubr.bf16.mxu0 0
  %2304 = vmatmul.mubr.bf16.gmra.mrb[0].mxu0 %v1681
  %v2305 = vpop.f32.mrb[0].mxu0
  %v2306 = vadd.f32 %v2017, %v2305
  %v2307 = vpop.f32.mrb[0].mxu0
  %v2308 = vpop.f32.mrb[0].mxu0
  %v2309 = vadd.f32 %v2020, %v2308
  %v2310 = vpop.f32.mrb[0].mxu0
  %2311 = vmatprep.mubr.bf16.mxu0 0
  %2312 = vmatmul.mubr.bf16.gmra.mrb[0].mxu0 %v1684
  %v2313 = vpop.f32.mrb[0].mxu0
  %v2314 = vadd.f32 %v2025, %v2313
  %v2315 = vpop.f32.mrb[0].mxu0
  %v2316 = vpop.f32.mrb[0].mxu0
  %v2317 = vadd.f32 %v2028, %v2316
  %v2318 = vpop.f32.mrb[0].mxu0
  %2319 = vmatprep.mubr.bf16.mxu0 0
  %2320 = vmatmul.mubr.bf16.gmra.mrb[0].mxu0 %v1687
  %v2321 = vpop.f32.mrb[0].mxu0
  %v2322 = vadd.f32 %v2033, %v2321
  %v2323 = vpop.f32.mrb[0].mxu0
  %v2324 = vpop.f32.mrb[0].mxu0
  %v2325 = vadd.f32 %v2036, %v2324
  %v2326 = vpop.f32.mrb[0].mxu0
  %2327 = vmatprep.mubr.bf16.mxu0 0
  %2328 = vmatmul.mubr.bf16.gmra.mrb[0].mxu0 %v1690
  %v2329 = vpop.f32.mrb[0].mxu0
  %v2330 = vadd.f32 %v2041, %v2329
  %v2331 = vpop.f32.mrb[0].mxu0
  %v2332 = vpop.f32.mrb[0].mxu0
  %v2333 = vadd.f32 %v2044, %v2332
  %v2334 = vpop.f32.mrb[0].mxu0
  %2335 = vmatprep.mubr.bf16.mxu0 0
  %2336 = vmatmul.mubr.bf16.gmra.mrb[0].mxu0 %v1693
  %v2337 = vpop.f32.mrb[0].mxu0
  %v2338 = vadd.f32 %v2049, %v2337
  %v2339 = vpop.f32.mrb[0].mxu0
  %v2340 = vpop.f32.mrb[0].mxu0
  %v2341 = vadd.f32 %v2052, %v2340
  %v2342 = vpop.f32.mrb[0].mxu0
  %2343 = vmatprep.mubr.bf16.mxu0 0
  %2344 = vmatmul.mubr.bf16.gmra.mrb[0].mxu0 %v1696
  %v2345 = vpop.f32.mrb[0].mxu0
  %v2346 = vadd.f32 %v2057, %v2345
  %v2347 = vpop.f32.mrb[0].mxu0
  %v2348 = vpop.f32.mrb[0].mxu0
  %v2349 = vadd.f32 %v2060, %v2348
  %v2350 = vpop.f32.mrb[0].mxu0
  %2351 = vmatprep.mubr.bf16.mxu0 0
  %2352 = vmatmul.mubr.bf16.gmra.mrb[0].mxu0 %v1699
  %v2353 = vpop.f32.mrb[0].mxu0
  %v2354 = vadd.f32 %v2065, %v2353
  %v2355 = vpop.f32.mrb[0].mxu0
  %v2356 = vpop.f32.mrb[0].mxu0
  %v2357 = vadd.f32 %v2068, %v2356
  %v2358 = vpop.f32.mrb[0].mxu0
  %2359 = vmatprep.mubr.bf16.mxu0 0
  %2360 = vmatmul.mubr.bf16.gmra.mrb[0].mxu0 %v1702
  %v2361 = vpop.f32.mrb[0].mxu0
  %v2362 = vadd.f32 %v2073, %v2361
  %v2363 = vpop.f32.mrb[0].mxu0
  %v2364 = vpop.f32.mrb[0].mxu0
  %v2365 = vadd.f32 %v2076, %v2364
  %v2366 = vpop.f32.mrb[0].mxu0
  %2367 = vmatprep.mubr.bf16.mxu0 0
  %2368 = vmatmul.mubr.bf16.gmra.mrb[0].mxu0 %v1705
  %v2369 = vpop.f32.mrb[0].mxu0
  %v2370 = vadd.f32 %v2081, %v2369
  %v2371 = vpop.f32.mrb[0].mxu0
  %v2372 = vpop.f32.mrb[0].mxu0
  %v2373 = vadd.f32 %v2084, %v2372
  %v2374 = vpop.f32.mrb[0].mxu0
  %2375 = vmatprep.mubr.bf16.mxu0 0
  %2376 = vmatmul.mubr.bf16.gmra.mrb[0].mxu0 %v1708
  %v2377 = vpop.f32.mrb[0].mxu0
  %v2378 = vadd.f32 %v2089, %v2377
  %v2379 = vpop.f32.mrb[0].mxu0
  %v2380 = vpop.f32.mrb[0].mxu0
  %v2381 = vadd.f32 %v2092, %v2380
  %v2382 = vpop.f32.mrb[0].mxu0
  %2383 = vmatprep.mubr.bf16.mxu0 0
  %2384 = vmatmul.mubr.bf16.gmra.mrb[0].mxu0 %v1711
  %v2385 = vpop.f32.mrb[0].mxu0
  %v2386 = vadd.f32 %v2097, %v2385
  %v2387 = vpop.f32.mrb[0].mxu0
  %v2388 = vpop.f32.mrb[0].mxu0
  %v2389 = vadd.f32 %v2100, %v2388
  %v2390 = vpop.f32.mrb[0].mxu0
  %2391 = vmatprep.mubr.bf16.mxu0 0
  %2392 = vmatmul.mubr.bf16.gmra.mrb[0].mxu0 %v1714
  %v2393 = vpop.f32.mrb[0].mxu0
  %v2394 = vadd.f32 %v2105, %v2393
  %v2395 = vpop.f32.mrb[0].mxu0
  %v2396 = vpop.f32.mrb[0].mxu0
  %v2397 = vadd.f32 %v2108, %v2396
  %v2398 = vpop.f32.mrb[0].mxu0
  %2399 = vmatprep.mubr.bf16.mxu0 0
  %2400 = vmatmul.mubr.bf16.gmra.mrb[0].mxu0 %v1717
  %v2401 = vpop.f32.mrb[0].mxu0
  %v2402 = vadd.f32 %v2113, %v2401
  %v2403 = vpop.f32.mrb[0].mxu0
  %v2404 = vpop.f32.mrb[0].mxu0
  %v2405 = vadd.f32 %v2116, %v2404
  %v2406 = vpop.f32.mrb[0].mxu0
  %2407 = vmatprep.mubr.bf16.mxu0 0
  %2408 = vmatmul.mubr.bf16.gmra.mrb[0].mxu0 %v1720
  %v2409 = vpop.f32.mrb[0].mxu0
  %v2410 = vadd.f32 %v2121, %v2409
  %v2411 = vpop.f32.mrb[0].mxu0
  %v2412 = vpop.f32.mrb[0].mxu0
  %v2413 = vadd.f32 %v2124, %v2412
  %v2414 = vpop.f32.mrb[0].mxu0
  %2415 = vmatprep.mubr.bf16.mxu0 0
  %2416 = vmatmul.mubr.bf16.gmra.mrb[0].mxu0 %v1723
  %v2417 = vpop.f32.mrb[0].mxu0
  %v2418 = vadd.f32 %v2129, %v2417
  %v2419 = vpop.f32.mrb[0].mxu0
  %v2420 = vpop.f32.mrb[0].mxu0
  %v2421 = vadd.f32 %v2132, %v2420
  %v2422 = vpop.f32.mrb[0].mxu0
  %2423 = vmatprep.mubr.bf16.mxu0 0
  %2424 = vmatmul.mubr.bf16.gmra.mrb[0].mxu0 %v1726
  %v2425 = vpop.f32.mrb[0].mxu0
  %v2426 = vadd.f32 %v2137, %v2425
  %v2427 = vpop.f32.mrb[0].mxu0
  %v2428 = vpop.f32.mrb[0].mxu0
  %v2429 = vadd.f32 %v2140, %v2428
  %v2430 = vpop.f32.mrb[0].mxu0
  %2431 = vmatprep.mubr.bf16.mxu0 0
  %2432 = vmatmul.mubr.bf16.gmra.mrb[0].mxu0 %v1729
  %v2433 = vpop.f32.mrb[0].mxu0
  %v2434 = vadd.f32 %v2145, %v2433
  %v2435 = vpop.f32.mrb[0].mxu0
  %v2436 = vpop.f32.mrb[0].mxu0
  %v2437 = vadd.f32 %v2148, %v2436
  %v2438 = vpop.f32.mrb[0].mxu0
  %2439 = vmatprep.mubr.bf16.mxu0 0
  %2440 = vmatmul.mubr.bf16.gmra.mrb[0].mxu0 %v1732
  %v2441 = vpop.f32.mrb[0].mxu0
  %v2442 = vadd.f32 %v2153, %v2441
  %v2443 = vpop.f32.mrb[0].mxu0
  %v2444 = vpop.f32.mrb[0].mxu0
  %v2445 = vadd.f32 %v2156, %v2444
  %v2446 = vpop.f32.mrb[0].mxu0
  %2447 = vmatprep.mubr.bf16.mxu0 0
  %2448 = vmatmul.mubr.bf16.gmra.mrb[0].mxu0 %v1735
  %v2449 = vpop.f32.mrb[0].mxu0
  %v2450 = vadd.f32 %v2161, %v2449
  %v2451 = vpop.f32.mrb[0].mxu0
  %v2452 = vpop.f32.mrb[0].mxu0
  %v2453 = vadd.f32 %v2164, %v2452
  %v2454 = vpop.f32.mrb[0].mxu0
  %2455 = vmatprep.mubr.bf16.mxu0 0
  %2456 = vmatmul.mubr.bf16.gmra.mrb[0].mxu0 %v1738
  %v2457 = vpop.f32.mrb[0].mxu0
  %v2458 = vadd.f32 %v2169, %v2457
  %v2459 = vpop.f32.mrb[0].mxu0
  %v2460 = vpop.f32.mrb[0].mxu0
  %v2461 = vadd.f32 %v2172, %v2460
  %v2462 = vpop.f32.mrb[0].mxu0
  %2463 = vmatprep.mubr.bf16.mxu0 0
  %2464 = vmatmul.mubr.bf16.gmra.mrb[0].mxu0 %v1741
  %v2465 = vpop.f32.mrb[0].mxu0
  %v2466 = vadd.f32 %v2177, %v2465
  %v2467 = vpop.f32.mrb[0].mxu0
  %v2468 = vpop.f32.mrb[0].mxu0
  %v2469 = vadd.f32 %v2180, %v2468
  %v2470 = vpop.f32.mrb[0].mxu0
  %2471 = vmatprep.mubr.bf16.mxu0 0
  %2472 = vmatmul.mubr.bf16.gmra.mrb[0].mxu0 %v1744
  %v2473 = vpop.f32.mrb[0].mxu0
  %v2474 = vadd.f32 %v2185, %v2473
  %v2475 = vpop.f32.mrb[0].mxu0
  %v2476 = vpop.f32.mrb[0].mxu0
  %v2477 = vadd.f32 %v2188, %v2476
  %v2478 = vpop.f32.mrb[0].mxu0
  %2479 = vmatprep.mubr.bf16.mxu0 0
  %2480 = vmatmul.mubr.bf16.gmra.mrb[0].mxu0 %v1747
  %v2481 = vpop.f32.mrb[0].mxu0
  %v2482 = vadd.f32 %v2193, %v2481
  %v2483 = vpop.f32.mrb[0].mxu0
  %v2484 = vpop.f32.mrb[0].mxu0
  %v2485 = vadd.f32 %v2196, %v2484
  %v2486 = vpop.f32.mrb[0].mxu0
  %2487 = vmatprep.mubr.bf16.mxu0 0
  %2488 = vmatmul.mubr.bf16.gmra.mrb[0].mxu0 %v1750
  %v2489 = vpop.f32.mrb[0].mxu0
  %v2490 = vadd.f32 %v2201, %v2489
  %v2491 = vpop.f32.mrb[0].mxu0
  %v2492 = vpop.f32.mrb[0].mxu0
  %v2493 = vadd.f32 %v2204, %v2492
  %v2494 = vpop.f32.mrb[0].mxu0
  %2495 = vmatprep.mubr.bf16.mxu0 0
  %2496 = vmatmul.mubr.bf16.gmra.mrb[0].mxu0 %v1753
  %v2497 = vpop.f32.mrb[0].mxu0
  %v2498 = vadd.f32 %v2209, %v2497
  %v2499 = vpop.f32.mrb[0].mxu0
  %v2500 = vpop.f32.mrb[0].mxu0
  %v2501 = vadd.f32 %v2212, %v2500
  %v2502 = vpop.f32.mrb[0].mxu0
  %2503 = vmatprep.mubr.bf16.mxu0 0
  %2504 = vmatmul.mubr.bf16.gmra.mrb[0].mxu0 %v1756
  %v2505 = vpop.f32.mrb[0].mxu0
  %v2506 = vadd.f32 %v2217, %v2505
  %v2507 = vpop.f32.mrb[0].mxu0
  %v2508 = vpop.f32.mrb[0].mxu0
  %v2509 = vadd.f32 %v2220, %v2508
  %v2510 = vpop.f32.mrb[0].mxu0
  %2511 = vmatprep.mubr.bf16.mxu0 0
  %2512 = vmatmul.mubr.bf16.gmra.mrb[0].mxu0 %v1759
  %v2513 = vpop.f32.mrb[0].mxu0
  %v2514 = vadd.f32 %v2225, %v2513
  %v2515 = vpop.f32.mrb[0].mxu0
  %v2516 = vpop.f32.mrb[0].mxu0
  %v2517 = vadd.f32 %v2228, %v2516
  %v2518 = vpop.f32.mrb[0].mxu0
  %2519 = vmatprep.mubr.bf16.mxu0 0
  %2520 = vmatmul.mubr.bf16.gmra.mrb[0].mxu0 %v1762
  %v2521 = vpop.f32.mrb[0].mxu0
  %v2522 = vadd.f32 %v2233, %v2521
  %v2523 = vpop.f32.mrb[0].mxu0
  %v2524 = vpop.f32.mrb[0].mxu0
  %v2525 = vadd.f32 %v2236, %v2524
  %v2526 = vpop.f32.mrb[0].mxu0
  %2527 = vmatprep.mubr.bf16.mxu0 0
  %2528 = vmatmul.mubr.bf16.gmra.mrb[0].mxu0 %v1765
  %v2529 = vpop.f32.mrb[0].mxu0
  %v2530 = vadd.f32 %v2241, %v2529
  %v2531 = vpop.f32.mrb[0].mxu0
  %v2532 = vpop.f32.mrb[0].mxu0
  %v2533 = vadd.f32 %v2244, %v2532
  %v2534 = vpop.f32.mrb[0].mxu0
  %2535 = vdwg.mxu0
  %v2537 = vlaneseq
  %v2538 = vshrl.u32 %v2537, 7
  %v2539 = vsub.s32 0, %v2538
  %v2540 = vrot.slane %v1669, %v2539
  %v2542 = vadd.f32 %v2540, %v2282
  %v2543 = vadd.f32 %v2540, %v2285
  %v2544 = vadd.f32 %v2540, %v2290
  %v2545 = vadd.f32 %v2540, %v2293
  %v2546 = vadd.f32 %v2540, %v2298
  %v2547 = vadd.f32 %v2540, %v2301
  %v2548 = vadd.f32 %v2540, %v2306
  %v2549 = vadd.f32 %v2540, %v2309
  %v2550 = vadd.f32 %v2540, %v2314
  %v2551 = vadd.f32 %v2540, %v2317
  %v2552 = vadd.f32 %v2540, %v2322
  %v2553 = vadd.f32 %v2540, %v2325
  %v2554 = vadd.f32 %v2540, %v2330
  %v2555 = vadd.f32 %v2540, %v2333
  %v2556 = vadd.f32 %v2540, %v2338
  %v2557 = vadd.f32 %v2540, %v2341
  %v2558 = vadd.f32 %v2540, %v2346
  %v2559 = vadd.f32 %v2540, %v2349
  %v2560 = vadd.f32 %v2540, %v2354
  %v2561 = vadd.f32 %v2540, %v2357
  %v2562 = vadd.f32 %v2540, %v2362
  %v2563 = vadd.f32 %v2540, %v2365
  %v2564 = vadd.f32 %v2540, %v2370
  %v2565 = vadd.f32 %v2540, %v2373
  %v2566 = vadd.f32 %v2540, %v2378
  %v2567 = vadd.f32 %v2540, %v2381
  %v2568 = vadd.f32 %v2540, %v2386
  %v2569 = vadd.f32 %v2540, %v2389
  %v2570 = vadd.f32 %v2540, %v2394
  %v2571 = vadd.f32 %v2540, %v2397
  %v2572 = vadd.f32 %v2540, %v2402
  %v2573 = vadd.f32 %v2540, %v2405
  %v2574 = vadd.f32 %v2540, %v2410
  %v2575 = vadd.f32 %v2540, %v2413
  %v2576 = vadd.f32 %v2540, %v2418
  %v2577 = vadd.f32 %v2540, %v2421
  %v2578 = vadd.f32 %v2540, %v2426
  %v2579 = vadd.f32 %v2540, %v2429
  %v2580 = vadd.f32 %v2540, %v2434
  %v2581 = vadd.f32 %v2540, %v2437
  %v2582 = vadd.f32 %v2540, %v2442
  %v2583 = vadd.f32 %v2540, %v2445
  %v2584 = vadd.f32 %v2540, %v2450
  %v2585 = vadd.f32 %v2540, %v2453
  %v2586 = vadd.f32 %v2540, %v2458
  %v2587 = vadd.f32 %v2540, %v2461
  %v2588 = vadd.f32 %v2540, %v2466
  %v2589 = vadd.f32 %v2540, %v2469
  %v2590 = vadd.f32 %v2540, %v2474
  %v2591 = vadd.f32 %v2540, %v2477
  %v2592 = vadd.f32 %v2540, %v2482
  %v2593 = vadd.f32 %v2540, %v2485
  %v2594 = vadd.f32 %v2540, %v2490
  %v2595 = vadd.f32 %v2540, %v2493
  %v2596 = vadd.f32 %v2540, %v2498
  %v2597 = vadd.f32 %v2540, %v2501
  %v2598 = vadd.f32 %v2540, %v2506
  %v2599 = vadd.f32 %v2540, %v2509
  %v2600 = vadd.f32 %v2540, %v2514
  %v2601 = vadd.f32 %v2540, %v2517
  %v2602 = vadd.f32 %v2540, %v2522
  %v2603 = vadd.f32 %v2540, %v2525
  %v2604 = vadd.f32 %v2540, %v2530
  %v2605 = vadd.f32 %v2540, %v2533
  %vm2606 = vcmask 64512
  %2607 = vst.msk [vmem:[#allocation3] sm:$0xff] %vm2606, %v2542
  %2608 = vst.msk [vmem:[#allocation3 + $0x8] sm:$0xff] %vm2606, %v2543
  %2609 = vst.msk [vmem:[#allocation3 + $0x10] sm:$0xff] %vm2606, %v2544
  %2610 = vst.msk [vmem:[#allocation3 + $0x18] sm:$0xff] %vm2606, %v2545
  %2611 = vst.msk [vmem:[#allocation3 + $0x20] sm:$0xff] %vm2606, %v2546
  %2612 = vst.msk [vmem:[#allocation3 + $0x28] sm:$0xff] %vm2606, %v2547
  %2613 = vst.msk [vmem:[#allocation3 + $0x30] sm:$0xff] %vm2606, %v2548
  %2614 = vst.msk [vmem:[#allocation3 + $0x38] sm:$0xff] %vm2606, %v2549
  %2615 = vst.msk [vmem:[#allocation3 + $0x40] sm:$0xff] %vm2606, %v2550
  %2616 = vst.msk [vmem:[#allocation3 + $0x48] sm:$0xff] %vm2606, %v2551
  %2617 = vst.msk [vmem:[#allocation3 + $0x50] sm:$0xff] %vm2606, %v2552
  %2618 = vst.msk [vmem:[#allocation3 + $0x58] sm:$0xff] %vm2606, %v2553
  %2619 = vst.msk [vmem:[#allocation3 + $0x60] sm:$0xff] %vm2606, %v2554
  %2620 = vst.msk [vmem:[#allocation3 + $0x68] sm:$0xff] %vm2606, %v2555
  %2621 = vst.msk [vmem:[#allocation3 + $0x70] sm:$0xff] %vm2606, %v2556
  %2622 = vst.msk [vmem:[#allocation3 + $0x78] sm:$0xff] %vm2606, %v2557
  %2623 = vst.msk [vmem:[#allocation3 + $0x80] sm:$0xff] %vm2606, %v2558
  %2624 = vst.msk [vmem:[#allocation3 + $0x88] sm:$0xff] %vm2606, %v2559
  %2625 = vst.msk [vmem:[#allocation3 + $0x90] sm:$0xff] %vm2606, %v2560
  %2626 = vst.msk [vmem:[#allocation3 + $0x98] sm:$0xff] %vm2606, %v2561
  %2627 = vst.msk [vmem:[#allocation3 + $0xa0] sm:$0xff] %vm2606, %v2562
  %2628 = vst.msk [vmem:[#allocation3 + $0xa8] sm:$0xff] %vm2606, %v2563
  %2629 = vst.msk [vmem:[#allocation3 + $0xb0] sm:$0xff] %vm2606, %v2564
  %2630 = vst.msk [vmem:[#allocation3 + $0xb8] sm:$0xff] %vm2606, %v2565
  %2631 = vst.msk [vmem:[#allocation3 + $0xc0] sm:$0xff] %vm2606, %v2566
  %2632 = vst.msk [vmem:[#allocation3 + $0xc8] sm:$0xff] %vm2606, %v2567
  %2633 = vst.msk [vmem:[#allocation3 + $0xd0] sm:$0xff] %vm2606, %v2568
  %2634 = vst.msk [vmem:[#allocation3 + $0xd8] sm:$0xff] %vm2606, %v2569
  %2635 = vst.msk [vmem:[#allocation3 + $0xe0] sm:$0xff] %vm2606, %v2570
  %2636 = vst.msk [vmem:[#allocation3 + $0xe8] sm:$0xff] %vm2606, %v2571
  %2637 = vst.msk [vmem:[#allocation3 + $0xf0] sm:$0xff] %vm2606, %v2572
  %2638 = vst.msk [vmem:[#allocation3 + $0xf8] sm:$0xff] %vm2606, %v2573
  %2639 = vst.msk [vmem:[#allocation3 + $0x100] sm:$0xff] %vm2606, %v2574
  %2640 = vst.msk [vmem:[#allocation3 + $0x108] sm:$0xff] %vm2606, %v2575
  %2641 = vst.msk [vmem:[#allocation3 + $0x110] sm:$0xff] %vm2606, %v2576
  %2642 = vst.msk [vmem:[#allocation3 + $0x118] sm:$0xff] %vm2606, %v2577
  %2643 = vst.msk [vmem:[#allocation3 + $0x120] sm:$0xff] %vm2606, %v2578
  %2644 = vst.msk [vmem:[#allocation3 + $0x128] sm:$0xff] %vm2606, %v2579
  %2645 = vst.msk [vmem:[#allocation3 + $0x130] sm:$0xff] %vm2606, %v2580
  %2646 = vst.msk [vmem:[#allocation3 + $0x138] sm:$0xff] %vm2606, %v2581
  %2647 = vst.msk [vmem:[#allocation3 + $0x140] sm:$0xff] %vm2606, %v2582
  %2648 = vst.msk [vmem:[#allocation3 + $0x148] sm:$0xff] %vm2606, %v2583
  %2649 = vst.msk [vmem:[#allocation3 + $0x150] sm:$0xff] %vm2606, %v2584
  %2650 = vst.msk [vmem:[#allocation3 + $0x158] sm:$0xff] %vm2606, %v2585
  %2651 = vst.msk [vmem:[#allocation3 + $0x160] sm:$0xff] %vm2606, %v2586
  %2652 = vst.msk [vmem:[#allocation3 + $0x168] sm:$0xff] %vm2606, %v2587
  %2653 = vst.msk [vmem:[#allocation3 + $0x170] sm:$0xff] %vm2606, %v2588
  %2654 = vst.msk [vmem:[#allocation3 + $0x178] sm:$0xff] %vm2606, %v2589
  %2655 = vst.msk [vmem:[#allocation3 + $0x180] sm:$0xff] %vm2606, %v2590
  %2656 = vst.msk [vmem:[#allocation3 + $0x188] sm:$0xff] %vm2606, %v2591
  %2657 = vst.msk [vmem:[#allocation3 + $0x190] sm:$0xff] %vm2606, %v2592
  %2658 = vst.msk [vmem:[#allocation3 + $0x198] sm:$0xff] %vm2606, %v2593
  %2659 = vst.msk [vmem:[#allocation3 + $0x1a0] sm:$0xff] %vm2606, %v2594
  %2660 = vst.msk [vmem:[#allocation3 + $0x1a8] sm:$0xff] %vm2606, %v2595
  %2661 = vst.msk [vmem:[#allocation3 + $0x1b0] sm:$0xff] %vm2606, %v2596
  %2662 = vst.msk [vmem:[#allocation3 + $0x1b8] sm:$0xff] %vm2606, %v2597
  %2663 = vst.msk [vmem:[#allocation3 + $0x1c0] sm:$0xff] %vm2606, %v2598
  %2664 = vst.msk [vmem:[#allocation3 + $0x1c8] sm:$0xff] %vm2606, %v2599
  %2665 = vst.msk [vmem:[#allocation3 + $0x1d0] sm:$0xff] %vm2606, %v2600
  %2666 = vst.msk [vmem:[#allocation3 + $0x1d8] sm:$0xff] %vm2606, %v2601
  %2667 = vst.msk [vmem:[#allocation3 + $0x1e0] sm:$0xff] %vm2606, %v2602
  %2668 = vst.msk [vmem:[#allocation3 + $0x1e8] sm:$0xff] %vm2606, %v2603
  %2669 = vst.msk [vmem:[#allocation3 + $0x1f0] sm:$0xff] %vm2606, %v2604
  %2670 = vst.msk [vmem:[#allocation3 + $0x1f8] sm:$0xff] %vm2606, %v2605
  %v2671 = vld [vmem:[#allocation3] sm:$0xff]
  %v2672 = vld [vmem:[#allocation3 + $0x8] sm:$0xff]
  %v2673 = vld [vmem:[#allocation3 + $0x10] sm:$0xff]
  %v2674 = vld [vmem:[#allocation3 + $0x18] sm:$0xff]
  %v2675 = vld [vmem:[#allocation3 + $0x20] sm:$0xff]
  %v2676 = vld [vmem:[#allocation3 + $0x28] sm:$0xff]
  %v2677 = vld [vmem:[#allocation3 + $0x30] sm:$0xff]
  %v2678 = vld [vmem:[#allocation3 + $0x38] sm:$0xff]
  %v2679 = vld [vmem:[#allocation3 + $0x40] sm:$0xff]
  %v2680 = vld [vmem:[#allocation3 + $0x48] sm:$0xff]
  %v2681 = vld [vmem:[#allocation3 + $0x50] sm:$0xff]
  %v2682 = vld [vmem:[#allocation3 + $0x58] sm:$0xff]
  %v2683 = vld [vmem:[#allocation3 + $0x60] sm:$0xff]
  %v2684 = vld [vmem:[#allocation3 + $0x68] sm:$0xff]
  %v2685 = vld [vmem:[#allocation3 + $0x70] sm:$0xff]
  %v2686 = vld [vmem:[#allocation3 + $0x78] sm:$0xff]
  %v2687 = vld [vmem:[#allocation3 + $0x80] sm:$0xff]
  %v2688 = vld [vmem:[#allocation3 + $0x88] sm:$0xff]
  %v2689 = vld [vmem:[#allocation3 + $0x90] sm:$0xff]
  %v2690 = vld [vmem:[#allocation3 + $0x98] sm:$0xff]
  %v2691 = vld [vmem:[#allocation3 + $0xa0] sm:$0xff]
  %v2692 = vld [vmem:[#allocation3 + $0xa8] sm:$0xff]
  %v2693 = vld [vmem:[#allocation3 + $0xb0] sm:$0xff]
  %v2694 = vld [vmem:[#allocation3 + $0xb8] sm:$0xff]
  %v2695 = vld [vmem:[#allocation3 + $0xc0] sm:$0xff]
  %v2696 = vld [vmem:[#allocation3 + $0xc8] sm:$0xff]
  %v2697 = vld [vmem:[#allocation3 + $0xd0] sm:$0xff]
  %v2698 = vld [vmem:[#allocation3 + $0xd8] sm:$0xff]
  %v2699 = vld [vmem:[#allocation3 + $0xe0] sm:$0xff]
  %v2700 = vld [vmem:[#allocation3 + $0xe8] sm:$0xff]
  %v2701 = vld [vmem:[#allocation3 + $0xf0] sm:$0xff]
  %v2702 = vld [vmem:[#allocation3 + $0xf8] sm:$0xff]
  %v2703 = vld [vmem:[#allocation3 + $0x100] sm:$0xff]
  %v2704 = vld [vmem:[#allocation3 + $0x108] sm:$0xff]
  %v2705 = vld [vmem:[#allocation3 + $0x110] sm:$0xff]
  %v2706 = vld [vmem:[#allocation3 + $0x118] sm:$0xff]
  %v2707 = vld [vmem:[#allocation3 + $0x120] sm:$0xff]
  %v2708 = vld [vmem:[#allocation3 + $0x128] sm:$0xff]
  %v2709 = vld [vmem:[#allocation3 + $0x130] sm:$0xff]
  %v2710 = vld [vmem:[#allocation3 + $0x138] sm:$0xff]
  %v2711 = vld [vmem:[#allocation3 + $0x140] sm:$0xff]
  %v2712 = vld [vmem:[#allocation3 + $0x148] sm:$0xff]
  %v2713 = vld [vmem:[#allocation3 + $0x150] sm:$0xff]
  %v2714 = vld [vmem:[#allocation3 + $0x158] sm:$0xff]
  %v2715 = vld [vmem:[#allocation3 + $0x160] sm:$0xff]
  %v2716 = vld [vmem:[#allocation3 + $0x168] sm:$0xff]
  %v2717 = vld [vmem:[#allocation3 + $0x170] sm:$0xff]
  %v2718 = vld [vmem:[#allocation3 + $0x178] sm:$0xff]
  %v2719 = vld [vmem:[#allocation3 + $0x180] sm:$0xff]
  %v2720 = vld [vmem:[#allocation3 + $0x188] sm:$0xff]
  %v2721 = vld [vmem:[#allocation3 + $0x190] sm:$0xff]
  %v2722 = vld [vmem:[#allocation3 + $0x198] sm:$0xff]
  %v2723 = vld [vmem:[#allocation3 + $0x1a0] sm:$0xff]
  %v2724 = vld [vmem:[#allocation3 + $0x1a8] sm:$0xff]
  %v2725 = vld [vmem:[#allocation3 + $0x1b0] sm:$0xff]
  %v2726 = vld [vmem:[#allocation3 + $0x1b8] sm:$0xff]
  %v2727 = vld [vmem:[#allocation3 + $0x1c0] sm:$0xff]
  %v2728 = vld [vmem:[#allocation3 + $0x1c8] sm:$0xff]
  %v2729 = vld [vmem:[#allocation3 + $0x1d0] sm:$0xff]
  %v2730 = vld [vmem:[#allocation3 + $0x1d8] sm:$0xff]
  %v2731 = vld [vmem:[#allocation3 + $0x1e0] sm:$0xff]
  %v2732 = vld [vmem:[#allocation3 + $0x1e8] sm:$0xff]
  %v2733 = vld [vmem:[#allocation3 + $0x1f0] sm:$0xff]
  %v2734 = vld [vmem:[#allocation3 + $0x1f8] sm:$0xff]
  %v2735 = vld [vmem:[%s889] sm:$0xff]
  %v2736 = vld [vmem:[%s889 + $0x8] sm:$0xff]
  %v2737 = vld [vmem:[%s889 + $0x10] sm:$0xff]
  %v2738 = vld [vmem:[%s889 + $0x18] sm:$0xff]
  %v2739 = vld [vmem:[%s889 + $0x20] sm:$0xff]
  %v2740 = vld [vmem:[%s889 + $0x28] sm:$0xff]
  %v2741 = vld [vmem:[%s889 + $0x30] sm:$0xff]
  %v2742 = vld [vmem:[%s889 + $0x38] sm:$0xff]
  %v2743 = vld [vmem:[%s889 + $0x40] sm:$0xff]
  %v2744 = vld [vmem:[%s889 + $0x48] sm:$0xff]
  %v2745 = vld [vmem:[%s889 + $0x50] sm:$0xff]
  %v2746 = vld [vmem:[%s889 + $0x58] sm:$0xff]
  %v2747 = vld [vmem:[%s889 + $0x60] sm:$0xff]
  %v2748 = vld [vmem:[%s889 + $0x68] sm:$0xff]
  %v2749 = vld [vmem:[%s889 + $0x70] sm:$0xff]
  %v2750 = vld [vmem:[%s889 + $0x78] sm:$0xff]
  %v2751 = vld [vmem:[%s889 + $0x80] sm:$0xff]
  %v2752 = vld [vmem:[%s889 + $0x88] sm:$0xff]
  %v2753 = vld [vmem:[%s889 + $0x90] sm:$0xff]
  %v2754 = vld [vmem:[%s889 + $0x98] sm:$0xff]
  %v2755 = vld [vmem:[%s889 + $0xa0] sm:$0xff]
  %v2756 = vld [vmem:[%s889 + $0xa8] sm:$0xff]
  %v2757 = vld [vmem:[%s889 + $0xb0] sm:$0xff]
  %v2758 = vld [vmem:[%s889 + $0xb8] sm:$0xff]
  %v2759 = vld [vmem:[%s889 + $0xc0] sm:$0xff]
  %v2760 = vld [vmem:[%s889 + $0xc8] sm:$0xff]
  %v2761 = vld [vmem:[%s889 + $0xd0] sm:$0xff]
  %v2762 = vld [vmem:[%s889 + $0xd8] sm:$0xff]
  %v2763 = vld [vmem:[%s889 + $0xe0] sm:$0xff]
  %v2764 = vld [vmem:[%s889 + $0xe8] sm:$0xff]
  %v2765 = vld [vmem:[%s889 + $0xf0] sm:$0xff]
  %v2766 = vld [vmem:[%s889 + $0xf8] sm:$0xff]
  %v2767 = vld [vmem:[%s889 + $0x100] sm:$0xff]
  %v2768 = vld [vmem:[%s889 + $0x108] sm:$0xff]
  %v2769 = vld [vmem:[%s889 + $0x110] sm:$0xff]
  %v2770 = vld [vmem:[%s889 + $0x118] sm:$0xff]
  %v2771 = vld [vmem:[%s889 + $0x120] sm:$0xff]
  %v2772 = vld [vmem:[%s889 + $0x128] sm:$0xff]
  %v2773 = vld [vmem:[%s889 + $0x130] sm:$0xff]
  %v2774 = vld [vmem:[%s889 + $0x138] sm:$0xff]
  %v2775 = vld [vmem:[%s889 + $0x140] sm:$0xff]
  %v2776 = vld [vmem:[%s889 + $0x148] sm:$0xff]
  %v2777 = vld [vmem:[%s889 + $0x150] sm:$0xff]
  %v2778 = vld [vmem:[%s889 + $0x158] sm:$0xff]
  %v2779 = vld [vmem:[%s889 + $0x160] sm:$0xff]
  %v2780 = vld [vmem:[%s889 + $0x168] sm:$0xff]
  %v2781 = vld [vmem:[%s889 + $0x170] sm:$0xff]
  %v2782 = vld [vmem:[%s889 + $0x178] sm:$0xff]
  %v2783 = vld [vmem:[%s889 + $0x1b0] sm:$0xff]
  %v2784 = vld [vmem:[%s889 + $0x1b8] sm:$0xff]
  %v2785 = vld [vmem:[%s889 + $0x1c0] sm:$0xff]
  %v2786 = vld [vmem:[%s889 + $0x1c8] sm:$0xff]
  %v2787 = vld [vmem:[%s889 + $0x1d0] sm:$0xff]
  %v2788 = vld [vmem:[%s889 + $0x1d8] sm:$0xff]
  %v2789 = vld [vmem:[%s889 + $0x1e0] sm:$0xff]
  %v2790 = vld [vmem:[%s889 + $0x1e8] sm:$0xff]
  %v2791 = vld [vmem:[%s889 + $0x1f0] sm:$0xff]
  %v2792 = vld [vmem:[%s889 + $0x1f8] sm:$0xff]
  %v2793 = vld [vmem:[%s889 + $0x200] sm:$0xff]
  %v2794 = vld [vmem:[%s889 + $0x208] sm:$0xff]
  %v2795 = vld [vmem:[%s889 + $0x210] sm:$0xff]
  %v2796 = vld [vmem:[%s889 + $0x218] sm:$0xff]
  %v2797 = vld [vmem:[%s889 + $0x220] sm:$0xff]
  %v2798 = vld [vmem:[%s889 + $0x228] sm:$0xff]
  %v2799 = vld [vmem:[%s889 + $0x230] sm:$0xff]
  %v2800 = vld [vmem:[%s889 + $0x238] sm:$0xff]
  %v2801 = vld [vmem:[%s889 + $0x240] sm:$0xff]
  %v2802 = vld [vmem:[%s889 + $0x248] sm:$0xff]
  %v2803 = vld [vmem:[%s889 + $0x250] sm:$0xff]
  %v2804 = vld [vmem:[%s889 + $0x258] sm:$0xff]
  %v2805 = vld [vmem:[%s889 + $0x260] sm:$0xff]
  %v2806 = vld [vmem:[%s889 + $0x268] sm:$0xff]
  %v2807 = vld [vmem:[%s889 + $0x270] sm:$0xff]
  %v2808 = vld [vmem:[%s889 + $0x278] sm:$0xff]
  %v2809 = vld [vmem:[%s889 + $0x280] sm:$0xff]
  %v2810 = vld [vmem:[%s889 + $0x288] sm:$0xff]
  %v2811 = vld [vmem:[%s889 + $0x290] sm:$0xff]
  %v2812 = vld [vmem:[%s889 + $0x298] sm:$0xff]
  %v2813 = vld [vmem:[%s889 + $0x2a0] sm:$0xff]
  %v2814 = vld [vmem:[%s889 + $0x2a8] sm:$0xff]
  %v2815 = vld [vmem:[%s889 + $0x2b0] sm:$0xff]
  %v2816 = vld [vmem:[%s889 + $0x2b8] sm:$0xff]
  %v2817 = vld [vmem:[%s889 + $0x2c0] sm:$0xff]
  %v2818 = vld [vmem:[%s889 + $0x2c8] sm:$0xff]
  %v2819 = vld [vmem:[%s889 + $0x2d0] sm:$0xff]
  %v2820 = vld [vmem:[%s889 + $0x2d8] sm:$0xff]
  %v2821 = vld [vmem:[%s889 + $0x2e0] sm:$0xff]
  %v2822 = vld [vmem:[%s889 + $0x2e8] sm:$0xff]
  %v2823 = vld [vmem:[%s889 + $0x2f0] sm:$0xff]
  %v2824 = vld [vmem:[%s889 + $0x2f8] sm:$0xff]
  %v2825 = vld [vmem:[%s889 + $0x300] sm:$0xff]
  %v2826 = vld [vmem:[%s889 + $0x308] sm:$0xff]
  %v2827 = vld [vmem:[%s889 + $0x310] sm:$0xff]
  %v2828 = vld [vmem:[%s889 + $0x318] sm:$0xff]
  %v2829 = vld [vmem:[%s889 + $0x320] sm:$0xff]
  %v2830 = vld [vmem:[%s889 + $0x328] sm:$0xff]
  %s2831 = scalar_lea.vmem %s3, 192
  %v2832 = vld [vmem:[%s2831] sm:$0xf]
  %v2833 = vld [vmem:[%s2831 + $0x4] sm:$0xf]
  %v2834 = vld [vmem:[%s2831 + $0x8] sm:$0xf]
  %v2835 = vld [vmem:[%s2831 + $0xc] sm:$0xf]
  %v2836 = vld [vmem:[%s2831 + $0x10] sm:$0xf]
  %v2837 = vld [vmem:[%s2831 + $0x14] sm:$0xf]
  %v2838 = vld [vmem:[%s2831 + $0x18] sm:$0xf]
  %v2839 = vld [vmem:[%s2831 + $0x1c] sm:$0xf]
  %v2840 = vld [vmem:[%s2831 + $0x20] sm:$0xf]
  %v2841 = vld [vmem:[%s2831 + $0x24] sm:$0xf]
  %v2842 = vld [vmem:[%s2831 + $0x28] sm:$0xf]
  %v2843 = vld [vmem:[%s2831 + $0x2c] sm:$0xf]
  %v2844 = vld [vmem:[%s2831 + $0x30] sm:$0xf]
  %v2845 = vld [vmem:[%s2831 + $0x34] sm:$0xf]
  %v2846 = vld [vmem:[%s2831 + $0x38] sm:$0xf]
  %v2847 = vld [vmem:[%s2831 + $0x3c] sm:$0xf]
  %v2848 = vld [vmem:[%s2831 + $0x40] sm:$0xf]
  %v2849 = vld [vmem:[%s2831 + $0x44] sm:$0xf]
  %v2850 = vld [vmem:[%s2831 + $0x48] sm:$0xf]
  %v2851 = vld [vmem:[%s2831 + $0x4c] sm:$0xf]
  %v2852 = vld [vmem:[%s2831 + $0x50] sm:$0xf]
  %v2853 = vld [vmem:[%s2831 + $0x54] sm:$0xf]
  %v2854 = vld [vmem:[%s2831 + $0x58] sm:$0xf]
  %v2855 = vld [vmem:[%s2831 + $0x5c] sm:$0xf]
  %v2856 = vld [vmem:[%s2831 + $0x60] sm:$0xf]
  %v2857 = vld [vmem:[%s2831 + $0x64] sm:$0xf]
  %v2858 = vld [vmem:[%s2831 + $0x68] sm:$0xf]
  %v2859 = vld [vmem:[%s2831 + $0x6c] sm:$0xf]
  %v2860 = vld [vmem:[%s2831 + $0x70] sm:$0xf]
  %v2861 = vld [vmem:[%s2831 + $0x74] sm:$0xf]
  %v2862 = vld [vmem:[%s2831 + $0x78] sm:$0xf]
  %v2863 = vld [vmem:[%s2831 + $0x7c] sm:$0xf]
  %v2864 = vld [vmem:[%s2831 + $0x80] sm:$0xf]
  %v2865 = vld [vmem:[%s2831 + $0x84] sm:$0xf]
  %v2866 = vld [vmem:[%s2831 + $0x88] sm:$0xf]
  %v2867 = vld [vmem:[%s2831 + $0x8c] sm:$0xf]
  %v2868 = vld [vmem:[%s2831 + $0x90] sm:$0xf]
  %v2869 = vld [vmem:[%s2831 + $0x94] sm:$0xf]
  %v2870 = vld [vmem:[%s2831 + $0x98] sm:$0xf]
  %v2871 = vld [vmem:[%s2831 + $0x9c] sm:$0xf]
  %v2872 = vld [vmem:[%s2831 + $0xa0] sm:$0xf]
  %v2873 = vld [vmem:[%s2831 + $0xa4] sm:$0xf]
  %v2874 = vld [vmem:[%s2831 + $0xa8] sm:$0xf]
  %v2875 = vld [vmem:[%s2831 + $0xac] sm:$0xf]
  %v2876 = vld [vmem:[%s2831 + $0xb0] sm:$0xf]
  %v2877 = vld [vmem:[%s2831 + $0xb4] sm:$0xf]
  %v2878 = vld [vmem:[%s2831 + $0xb8] sm:$0xf]
  %v2879 = vld [vmem:[%s2831 + $0xbc] sm:$0xf]
  %v2928 = vunpack.c.l.b16 %v2832
  %v2929 = vunpack.c.l.b16 %v2833
  %v2930 = vunpack.c.l.b16 %v2834
  %v2931 = vunpack.c.l.b16 %v2835
  %v2932 = vunpack.c.l.b16 %v2836
  %v2933 = vunpack.c.l.b16 %v2837
  %v2934 = vunpack.c.l.b16 %v2838
  %v2935 = vunpack.c.l.b16 %v2839
  %v2936 = vunpack.c.l.b16 %v2840
  %v2937 = vunpack.c.l.b16 %v2841
  %v2938 = vunpack.c.l.b16 %v2842
  %v2939 = vunpack.c.l.b16 %v2843
  %v2940 = vunpack.c.l.b16 %v2844
  %v2941 = vunpack.c.l.b16 %v2845
  %v2942 = vunpack.c.l.b16 %v2846
  %v2943 = vunpack.c.l.b16 %v2847
  %v2944 = vunpack.c.l.b16 %v2848
  %v2945 = vunpack.c.l.b16 %v2849
  %v2946 = vunpack.c.l.b16 %v2850
  %v2947 = vunpack.c.l.b16 %v2851
  %v2948 = vunpack.c.l.b16 %v2852
  %v2949 = vunpack.c.l.b16 %v2853
  %v2950 = vunpack.c.l.b16 %v2854
  %v2951 = vunpack.c.l.b16 %v2855
  %v2952 = vunpack.c.l.b16 %v2856
  %v2953 = vunpack.c.l.b16 %v2857
  %v2954 = vunpack.c.l.b16 %v2858
  %v2955 = vunpack.c.l.b16 %v2859
  %v2956 = vunpack.c.l.b16 %v2860
  %v2957 = vunpack.c.l.b16 %v2861
  %v2958 = vunpack.c.l.b16 %v2862
  %v2959 = vunpack.c.l.b16 %v2863
  %v2960 = vunpack.c.l.b16 %v2864
  %v2961 = vunpack.c.l.b16 %v2865
  %v2962 = vunpack.c.l.b16 %v2866
  %v2963 = vunpack.c.l.b16 %v2867
  %v2964 = vunpack.c.l.b16 %v2868
  %v2965 = vunpack.c.l.b16 %v2869
  %v2966 = vunpack.c.l.b16 %v2870
  %v2967 = vunpack.c.l.b16 %v2871
  %v2968 = vunpack.c.l.b16 %v2872
  %v2969 = vunpack.c.l.b16 %v2873
  %v2970 = vunpack.c.l.b16 %v2874
  %v2971 = vunpack.c.l.b16 %v2875
  %v2972 = vunpack.c.l.b16 %v2876
  %v2973 = vunpack.c.l.b16 %v2877
  %v2974 = vunpack.c.l.b16 %v2878
  %v2975 = vunpack.c.l.b16 %v2879
  %v2976 = vpack.c.b16 %v2929, %v2928
  %v2977 = vpack.c.b16 %v2931, %v2930
  %v2978 = vpack.c.b16 %v2933, %v2932
  %v2979 = vpack.c.b16 %v2935, %v2934
  %v2980 = vpack.c.b16 %v2937, %v2936
  %v2981 = vpack.c.b16 %v2939, %v2938
  %v2982 = vpack.c.b16 %v2941, %v2940
  %v2983 = vpack.c.b16 %v2943, %v2942
  %v2984 = vpack.c.b16 %v2945, %v2944
  %v2985 = vpack.c.b16 %v2947, %v2946
  %v2986 = vpack.c.b16 %v2949, %v2948
  %v2987 = vpack.c.b16 %v2951, %v2950
  %v2988 = vpack.c.b16 %v2953, %v2952
  %v2989 = vpack.c.b16 %v2955, %v2954
  %v2990 = vpack.c.b16 %v2957, %v2956
  %v2991 = vpack.c.b16 %v2959, %v2958
  %v2992 = vpack.c.b16 %v2961, %v2960
  %v2993 = vpack.c.b16 %v2963, %v2962
  %v2994 = vpack.c.b16 %v2965, %v2964
  %v2995 = vpack.c.b16 %v2967, %v2966
  %v2996 = vpack.c.b16 %v2969, %v2968
  %v2997 = vpack.c.b16 %v2971, %v2970
  %v2998 = vpack.c.b16 %v2973, %v2972
  %v2999 = vpack.c.b16 %v2975, %v2974
  %3024 = vmatprep.subr.bf16.mxu0 0
  %3025 = vmatpush1.bf16.msra.mxu0 %v2976
  %3026 = vmatprep.subr.bf16.mxu0 0
  %3027 = vmatpush1.bf16.msra.mxu0 %v2977
  %3028 = vmatprep.subr.bf16.mxu0 0
  %3029 = vmatpush1.bf16.msra.mxu0 %v2978
  %3030 = vmatprep.subr.bf16.mxu0 0
  %3031 = vmatpush1.bf16.msra.mxu0 %v2979
  %3032 = vmatprep.subr.bf16.mxu0 0
  %3033 = vmatpush1.bf16.msra.mxu0 %v2980
  %3034 = vmatprep.subr.bf16.mxu0 0
  %3035 = vmatpush1.bf16.msra.mxu0 %v2981
  %3036 = vmatprep.subr.bf16.mxu0 0
  %3037 = vmatpush1.bf16.msra.mxu0 %v2982
  %3038 = vmatprep.subr.bf16.mxu0 0
  %3039 = vmatpush1.bf16.msra.mxu0 %v2983
  %3040 = vmatprep.subr.bf16.mxu0 0
  %3041 = vmatpush1.bf16.msra.mxu0 %v2984
  %3042 = vmatprep.subr.bf16.mxu0 0
  %3043 = vmatpush1.bf16.msra.mxu0 %v2985
  %3044 = vmatprep.subr.bf16.mxu0 0
  %3045 = vmatpush1.bf16.msra.mxu0 %v2986
  %3046 = vmatprep.subr.bf16.mxu0 0
  %3047 = vmatpush1.bf16.msra.mxu0 %v2987
  %3048 = vmatprep.subr.bf16.mxu0 0
  %3049 = vmatpush1.bf16.msra.mxu0 %v2988
  %3050 = vmatprep.subr.bf16.mxu0 0
  %3051 = vmatpush1.bf16.msra.mxu0 %v2989
  %3052 = vmatprep.subr.bf16.mxu0 0
  %3053 = vmatpush1.bf16.msra.mxu0 %v2990
  %3054 = vmatprep.subr.bf16.mxu0 0
  %3055 = vmatpush1.bf16.msra.mxu0 %v2991
  %3056 = vmatprep.mubr.bf16.mxu0 %v2736
  %3057 = vmatmul.mubr.bf16.gmra.mrb[0].mxu0 %v2735
  %v3058 = vpop.f32.mrb[0].mxu0
  %v3059 = vadd.f32 0.0, %v3058
  %v3060 = vpop.f32.mrb[0].mxu0
  %v3061 = vpop.f32.mrb[0].mxu0
  %v3062 = vadd.f32 0.0, %v3061
  %v3063 = vpop.f32.mrb[0].mxu0
  %3064 = vmatprep.mubr.bf16.mxu0 %v2739
  %3065 = vmatmul.mubr.bf16.gmra.mrb[0].mxu0 %v2738
  %v3066 = vpop.f32.mrb[0].mxu0
  %v3067 = vadd.f32 0.0, %v3066
  %v3068 = vpop.f32.mrb[0].mxu0
  %v3069 = vpop.f32.mrb[0].mxu0
  %v3070 = vadd.f32 0.0, %v3069
  %v3071 = vpop.f32.mrb[0].mxu0
  %3072 = vmatprep.mubr.bf16.mxu0 %v2742
  %3073 = vmatmul.mubr.bf16.gmra.mrb[0].mxu0 %v2741
  %v3074 = vpop.f32.mrb[0].mxu0
  %v3075 = vadd.f32 0.0, %v3074
  %v3076 = vpop.f32.mrb[0].mxu0
  %v3077 = vpop.f32.mrb[0].mxu0
  %v3078 = vadd.f32 0.0, %v3077
  %v3079 = vpop.f32.mrb[0].mxu0
  %3080 = vmatprep.mubr.bf16.mxu0 %v2745
  %3081 = vmatmul.mubr.bf16.gmra.mrb[0].mxu0 %v2744
  %v3082 = vpop.f32.mrb[0].mxu0
  %v3083 = vadd.f32 0.0, %v3082
  %v3084 = vpop.f32.mrb[0].mxu0
  %v3085 = vpop.f32.mrb[0].mxu0
  %v3086 = vadd.f32 0.0, %v3085
  %v3087 = vpop.f32.mrb[0].mxu0
  %3088 = vmatprep.mubr.bf16.mxu0 %v2748
  %3089 = vmatmul.mubr.bf16.gmra.mrb[0].mxu0 %v2747
  %v3090 = vpop.f32.mrb[0].mxu0
  %v3091 = vadd.f32 0.0, %v3090
  %v3092 = vpop.f32.mrb[0].mxu0
  %v3093 = vpop.f32.mrb[0].mxu0
  %v3094 = vadd.f32 0.0, %v3093
  %v3095 = vpop.f32.mrb[0].mxu0
  %3096 = vmatprep.mubr.bf16.mxu0 %v2751
  %3097 = vmatmul.mubr.bf16.gmra.mrb[0].mxu0 %v2750
  %v3098 = vpop.f32.mrb[0].mxu0
  %v3099 = vadd.f32 0.0, %v3098
  %v3100 = vpop.f32.mrb[0].mxu0
  %v3101 = vpop.f32.mrb[0].mxu0
  %v3102 = vadd.f32 0.0, %v3101
  %v3103 = vpop.f32.mrb[0].mxu0
  %3104 = vmatprep.mubr.bf16.mxu0 %v2754
  %3105 = vmatmul.mubr.bf16.gmra.mrb[0].mxu0 %v2753
  %v3106 = vpop.f32.mrb[0].mxu0
  %v3107 = vadd.f32 0.0, %v3106
  %v3108 = vpop.f32.mrb[0].mxu0
  %v3109 = vpop.f32.mrb[0].mxu0
  %v3110 = vadd.f32 0.0, %v3109
  %v3111 = vpop.f32.mrb[0].mxu0
  %3112 = vmatprep.mubr.bf16.mxu0 %v2757
  %3113 = vmatmul.mubr.bf16.gmra.mrb[0].mxu0 %v2756
  %v3114 = vpop.f32.mrb[0].mxu0
  %v3115 = vadd.f32 0.0, %v3114
  %v3116 = vpop.f32.mrb[0].mxu0
  %v3117 = vpop.f32.mrb[0].mxu0
  %v3118 = vadd.f32 0.0, %v3117
  %v3119 = vpop.f32.mrb[0].mxu0
  %3120 = vmatprep.mubr.bf16.mxu0 %v2760
  %3121 = vmatmul.mubr.bf16.gmra.mrb[0].mxu0 %v2759
  %v3122 = vpop.f32.mrb[0].mxu0
  %v3123 = vadd.f32 0.0, %v3122
  %v3124 = vpop.f32.mrb[0].mxu0
  %v3125 = vpop.f32.mrb[0].mxu0
  %v3126 = vadd.f32 0.0, %v3125
  %v3127 = vpop.f32.mrb[0].mxu0
  %3128 = vmatprep.mubr.bf16.mxu0 %v2763
  %3129 = vmatmul.mubr.bf16.gmra.mrb[0].mxu0 %v2762
  %v3130 = vpop.f32.mrb[0].mxu0
  %v3131 = vadd.f32 0.0, %v3130
  %v3132 = vpop.f32.mrb[0].mxu0
  %v3133 = vpop.f32.mrb[0].mxu0
  %v3134 = vadd.f32 0.0, %v3133
  %v3135 = vpop.f32.mrb[0].mxu0
  %3136 = vmatprep.mubr.bf16.mxu0 %v2766
  %3137 = vmatmul.mubr.bf16.gmra.mrb[0].mxu0 %v2765
  %v3138 = vpop.f32.mrb[0].mxu0
  %v3139 = vadd.f32 0.0, %v3138
  %v3140 = vpop.f32.mrb[0].mxu0
  %v3141 = vpop.f32.mrb[0].mxu0
  %v3142 = vadd.f32 0.0, %v3141
  %v3143 = vpop.f32.mrb[0].mxu0
  %3144 = vmatprep.mubr.bf16.mxu0 %v2769
  %3145 = vmatmul.mubr.bf16.gmra.mrb[0].mxu0 %v2768
  %v3146 = vpop.f32.mrb[0].mxu0
  %v3147 = vadd.f32 0.0, %v3146
  %v3148 = vpop.f32.mrb[0].mxu0
  %v3149 = vpop.f32.mrb[0].mxu0
  %v3150 = vadd.f32 0.0, %v3149
  %v3151 = vpop.f32.mrb[0].mxu0
  %3152 = vmatprep.mubr.bf16.mxu0 %v2772
  %3153 = vmatmul.mubr.bf16.gmra.mrb[0].mxu0 %v2771
  %v3154 = vpop.f32.mrb[0].mxu0
  %v3155 = vadd.f32 0.0, %v3154
  %v3156 = vpop.f32.mrb[0].mxu0
  %v3157 = vpop.f32.mrb[0].mxu0
  %v3158 = vadd.f32 0.0, %v3157
  %v3159 = vpop.f32.mrb[0].mxu0
  %3160 = vmatprep.mubr.bf16.mxu0 %v2775
  %3161 = vmatmul.mubr.bf16.gmra.mrb[0].mxu0 %v2774
  %v3162 = vpop.f32.mrb[0].mxu0
  %v3163 = vadd.f32 0.0, %v3162
  %v3164 = vpop.f32.mrb[0].mxu0
  %v3165 = vpop.f32.mrb[0].mxu0
  %v3166 = vadd.f32 0.0, %v3165
  %v3167 = vpop.f32.mrb[0].mxu0
  %3168 = vmatprep.mubr.bf16.mxu0 %v2778
  %3169 = vmatmul.mubr.bf16.gmra.mrb[0].mxu0 %v2777
  %v3170 = vpop.f32.mrb[0].mxu0
  %v3171 = vadd.f32 0.0, %v3170
  %v3172 = vpop.f32.mrb[0].mxu0
  %v3173 = vpop.f32.mrb[0].mxu0
  %v3174 = vadd.f32 0.0, %v3173
  %v3175 = vpop.f32.mrb[0].mxu0
  %3176 = vmatprep.mubr.bf16.mxu0 %v2781
  %3177 = vmatmul.mubr.bf16.gmra.mrb[0].mxu0 %v2780
  %v3178 = vpop.f32.mrb[0].mxu0
  %v3179 = vadd.f32 0.0, %v3178
  %v3180 = vpop.f32.mrb[0].mxu0
  %v3181 = vpop.f32.mrb[0].mxu0
  %v3182 = vadd.f32 0.0, %v3181
  %v3183 = vpop.f32.mrb[0].mxu0
  %3184 = vmatprep.mubr.bf16.mxu0 %v2784
  %3185 = vmatmul.mubr.bf16.gmra.mrb[0].mxu0 %v2783
  %v3186 = vpop.f32.mrb[0].mxu0
  %v3187 = vadd.f32 0.0, %v3186
  %v3188 = vpop.f32.mrb[0].mxu0
  %v3189 = vpop.f32.mrb[0].mxu0
  %v3190 = vadd.f32 0.0, %v3189
  %v3191 = vpop.f32.mrb[0].mxu0
  %3192 = vmatprep.mubr.bf16.mxu0 %v2787
  %3193 = vmatmul.mubr.bf16.gmra.mrb[0].mxu0 %v2786
  %v3194 = vpop.f32.mrb[0].mxu0
  %v3195 = vadd.f32 0.0, %v3194
  %v3196 = vpop.f32.mrb[0].mxu0
  %v3197 = vpop.f32.mrb[0].mxu0
  %v3198 = vadd.f32 0.0, %v3197
  %v3199 = vpop.f32.mrb[0].mxu0
  %3200 = vmatprep.mubr.bf16.mxu0 %v2790
  %3201 = vmatmul.mubr.bf16.gmra.mrb[0].mxu0 %v2789
  %v3202 = vpop.f32.mrb[0].mxu0
  %v3203 = vadd.f32 0.0, %v3202
  %v3204 = vpop.f32.mrb[0].mxu0
  %v3205 = vpop.f32.mrb[0].mxu0
  %v3206 = vadd.f32 0.0, %v3205
  %v3207 = vpop.f32.mrb[0].mxu0
  %3208 = vmatprep.mubr.bf16.mxu0 %v2793
  %3209 = vmatmul.mubr.bf16.gmra.mrb[0].mxu0 %v2792
  %v3210 = vpop.f32.mrb[0].mxu0
  %v3211 = vadd.f32 0.0, %v3210
  %v3212 = vpop.f32.mrb[0].mxu0
  %v3213 = vpop.f32.mrb[0].mxu0
  %v3214 = vadd.f32 0.0, %v3213
  %v3215 = vpop.f32.mrb[0].mxu0
  %3216 = vmatprep.mubr.bf16.mxu0 %v2796
  %3217 = vmatmul.mubr.bf16.gmra.mrb[0].mxu0 %v2795
  %v3218 = vpop.f32.mrb[0].mxu0
  %v3219 = vadd.f32 0.0, %v3218
  %v3220 = vpop.f32.mrb[0].mxu0
  %v3221 = vpop.f32.mrb[0].mxu0
  %v3222 = vadd.f32 0.0, %v3221
  %v3223 = vpop.f32.mrb[0].mxu0
  %3224 = vmatprep.mubr.bf16.mxu0 %v2799
  %3225 = vmatmul.mubr.bf16.gmra.mrb[0].mxu0 %v2798
  %v3226 = vpop.f32.mrb[0].mxu0
  %v3227 = vadd.f32 0.0, %v3226
  %v3228 = vpop.f32.mrb[0].mxu0
  %v3229 = vpop.f32.mrb[0].mxu0
  %v3230 = vadd.f32 0.0, %v3229
  %v3231 = vpop.f32.mrb[0].mxu0
  %3232 = vmatprep.mubr.bf16.mxu0 %v2802
  %3233 = vmatmul.mubr.bf16.gmra.mrb[0].mxu0 %v2801
  %v3234 = vpop.f32.mrb[0].mxu0
  %v3235 = vadd.f32 0.0, %v3234
  %v3236 = vpop.f32.mrb[0].mxu0
  %v3237 = vpop.f32.mrb[0].mxu0
  %v3238 = vadd.f32 0.0, %v3237
  %v3239 = vpop.f32.mrb[0].mxu0
  %3240 = vmatprep.mubr.bf16.mxu0 %v2805
  %3241 = vmatmul.mubr.bf16.gmra.mrb[0].mxu0 %v2804
  %v3242 = vpop.f32.mrb[0].mxu0
  %v3243 = vadd.f32 0.0, %v3242
  %v3244 = vpop.f32.mrb[0].mxu0
  %v3245 = vpop.f32.mrb[0].mxu0
  %v3246 = vadd.f32 0.0, %v3245
  %v3247 = vpop.f32.mrb[0].mxu0
  %3248 = vmatprep.mubr.bf16.mxu0 %v2808
  %3249 = vmatmul.mubr.bf16.gmra.mrb[0].mxu0 %v2807
  %v3250 = vpop.f32.mrb[0].mxu0
  %v3251 = vadd.f32 0.0, %v3250
  %v3252 = vpop.f32.mrb[0].mxu0
  %v3253 = vpop.f32.mrb[0].mxu0
  %v3254 = vadd.f32 0.0, %v3253
  %v3255 = vpop.f32.mrb[0].mxu0
  %3256 = vmatprep.mubr.bf16.mxu0 %v2811
  %3257 = vmatmul.mubr.bf16.gmra.mrb[0].mxu0 %v2810
  %v3258 = vpop.f32.mrb[0].mxu0
  %v3259 = vadd.f32 0.0, %v3258
  %v3260 = vpop.f32.mrb[0].mxu0
  %v3261 = vpop.f32.mrb[0].mxu0
  %v3262 = vadd.f32 0.0, %v3261
  %v3263 = vpop.f32.mrb[0].mxu0
  %3264 = vmatprep.mubr.bf16.mxu0 %v2814
  %3265 = vmatmul.mubr.bf16.gmra.mrb[0].mxu0 %v2813
  %v3266 = vpop.f32.mrb[0].mxu0
  %v3267 = vadd.f32 0.0, %v3266
  %v3268 = vpop.f32.mrb[0].mxu0
  %v3269 = vpop.f32.mrb[0].mxu0
  %v3270 = vadd.f32 0.0, %v3269
  %v3271 = vpop.f32.mrb[0].mxu0
  %3272 = vmatprep.mubr.bf16.mxu0 %v2817
  %3273 = vmatmul.mubr.bf16.gmra.mrb[0].mxu0 %v2816
  %v3274 = vpop.f32.mrb[0].mxu0
  %v3275 = vadd.f32 0.0, %v3274
  %v3276 = vpop.f32.mrb[0].mxu0
  %v3277 = vpop.f32.mrb[0].mxu0
  %v3278 = vadd.f32 0.0, %v3277
  %v3279 = vpop.f32.mrb[0].mxu0
  %3280 = vmatprep.mubr.bf16.mxu0 %v2820
  %3281 = vmatmul.mubr.bf16.gmra.mrb[0].mxu0 %v2819
  %v3282 = vpop.f32.mrb[0].mxu0
  %v3283 = vadd.f32 0.0, %v3282
  %v3284 = vpop.f32.mrb[0].mxu0
  %v3285 = vpop.f32.mrb[0].mxu0
  %v3286 = vadd.f32 0.0, %v3285
  %v3287 = vpop.f32.mrb[0].mxu0
  %3288 = vmatprep.mubr.bf16.mxu0 %v2823
  %3289 = vmatmul.mubr.bf16.gmra.mrb[0].mxu0 %v2822
  %v3290 = vpop.f32.mrb[0].mxu0
  %v3291 = vadd.f32 0.0, %v3290
  %v3292 = vpop.f32.mrb[0].mxu0
  %v3293 = vpop.f32.mrb[0].mxu0
  %v3294 = vadd.f32 0.0, %v3293
  %v3295 = vpop.f32.mrb[0].mxu0
  %3296 = vmatprep.mubr.bf16.mxu0 %v2826
  %3297 = vmatmul.mubr.bf16.gmra.mrb[0].mxu0 %v2825
  %v3298 = vpop.f32.mrb[0].mxu0
  %v3299 = vadd.f32 0.0, %v3298
  %v3300 = vpop.f32.mrb[0].mxu0
  %v3301 = vpop.f32.mrb[0].mxu0
  %v3302 = vadd.f32 0.0, %v3301
  %v3303 = vpop.f32.mrb[0].mxu0
  %3304 = vmatprep.mubr.bf16.mxu0 %v2829
  %3305 = vmatmul.mubr.bf16.gmra.mrb[0].mxu0 %v2828
  %v3306 = vpop.f32.mrb[0].mxu0
  %v3307 = vadd.f32 0.0, %v3306
  %v3308 = vpop.f32.mrb[0].mxu0
  %v3309 = vpop.f32.mrb[0].mxu0
  %v3310 = vadd.f32 0.0, %v3309
  %v3311 = vpop.f32.mrb[0].mxu0
  %3312 = vdwg.mxu0
  %3313 = vmatprep.subr.bf16.mxu0 0
  %3314 = vmatpush1.bf16.msra.mxu0 %v2992
  %3315 = vmatprep.subr.bf16.mxu0 0
  %3316 = vmatpush1.bf16.msra.mxu0 %v2993
  %3317 = vmatprep.subr.bf16.mxu0 0
  %3318 = vmatpush1.bf16.msra.mxu0 %v2994
  %3319 = vmatprep.subr.bf16.mxu0 0
  %3320 = vmatpush1.bf16.msra.mxu0 %v2995
  %3321 = vmatprep.subr.bf16.mxu0 0
  %3322 = vmatpush1.bf16.msra.mxu0 %v2996
  %3323 = vmatprep.subr.bf16.mxu0 0
  %3324 = vmatpush1.bf16.msra.mxu0 %v2997
  %3325 = vmatprep.subr.bf16.mxu0 0
  %3326 = vmatpush1.bf16.msra.mxu0 %v2998
  %3327 = vmatprep.subr.bf16.mxu0 0
  %3328 = vmatpush1.bf16.msra.mxu0 %v2999
  %3329 = vmatprep.subr.bf16.mxu0 0
  %3330 = vmatpush1.bf16.msra.mxu0 0
  %3331 = vmatprep.subr.bf16.mxu0 0
  %3332 = vmatpush1.bf16.msra.mxu0 0
  %3333 = vmatprep.subr.bf16.mxu0 0
  %3334 = vmatpush1.bf16.msra.mxu0 0
  %3335 = vmatprep.subr.bf16.mxu0 0
  %3336 = vmatpush1.bf16.msra.mxu0 0
  %3337 = vmatprep.subr.bf16.mxu0 0
  %3338 = vmatpush1.bf16.msra.mxu0 0
  %3339 = vmatprep.subr.bf16.mxu0 0
  %3340 = vmatpush1.bf16.msra.mxu0 0
  %3341 = vmatprep.subr.bf16.mxu0 0
  %3342 = vmatpush1.bf16.msra.mxu0 0
  %3343 = vmatprep.subr.bf16.mxu0 0
  %3344 = vmatpush1.bf16.msra.mxu0 0
  %3345 = vmatprep.mubr.bf16.mxu0 0
  %3346 = vmatmul.mubr.bf16.gmra.mrb[0].mxu0 %v2737
  %v3347 = vpop.f32.mrb[0].mxu0
  %v3348 = vadd.f32 %v3059, %v3347
  %v3349 = vpop.f32.mrb[0].mxu0
  %v3350 = vpop.f32.mrb[0].mxu0
  %v3351 = vadd.f32 %v3062, %v3350
  %v3352 = vpop.f32.mrb[0].mxu0
  %3353 = vmatprep.mubr.bf16.mxu0 0
  %3354 = vmatmul.mubr.bf16.gmra.mrb[0].mxu0 %v2740
  %v3355 = vpop.f32.mrb[0].mxu0
  %v3356 = vadd.f32 %v3067, %v3355
  %v3357 = vpop.f32.mrb[0].mxu0
  %v3358 = vpop.f32.mrb[0].mxu0
  %v3359 = vadd.f32 %v3070, %v3358
  %v3360 = vpop.f32.mrb[0].mxu0
  %3361 = vmatprep.mubr.bf16.mxu0 0
  %3362 = vmatmul.mubr.bf16.gmra.mrb[0].mxu0 %v2743
  %v3363 = vpop.f32.mrb[0].mxu0
  %v3364 = vadd.f32 %v3075, %v3363
  %v3365 = vpop.f32.mrb[0].mxu0
  %v3366 = vpop.f32.mrb[0].mxu0
  %v3367 = vadd.f32 %v3078, %v3366
  %v3368 = vpop.f32.mrb[0].mxu0
  %3369 = vmatprep.mubr.bf16.mxu0 0
  %3370 = vmatmul.mubr.bf16.gmra.mrb[0].mxu0 %v2746
  %v3371 = vpop.f32.mrb[0].mxu0
  %v3372 = vadd.f32 %v3083, %v3371
  %v3373 = vpop.f32.mrb[0].mxu0
  %v3374 = vpop.f32.mrb[0].mxu0
  %v3375 = vadd.f32 %v3086, %v3374
  %v3376 = vpop.f32.mrb[0].mxu0
  %3377 = vmatprep.mubr.bf16.mxu0 0
  %3378 = vmatmul.mubr.bf16.gmra.mrb[0].mxu0 %v2749
  %v3379 = vpop.f32.mrb[0].mxu0
  %v3380 = vadd.f32 %v3091, %v3379
  %v3381 = vpop.f32.mrb[0].mxu0
  %v3382 = vpop.f32.mrb[0].mxu0
  %v3383 = vadd.f32 %v3094, %v3382
  %v3384 = vpop.f32.mrb[0].mxu0
  %3385 = vmatprep.mubr.bf16.mxu0 0
  %3386 = vmatmul.mubr.bf16.gmra.mrb[0].mxu0 %v2752
  %v3387 = vpop.f32.mrb[0].mxu0
  %v3388 = vadd.f32 %v3099, %v3387
  %v3389 = vpop.f32.mrb[0].mxu0
  %v3390 = vpop.f32.mrb[0].mxu0
  %v3391 = vadd.f32 %v3102, %v3390
  %v3392 = vpop.f32.mrb[0].mxu0
  %3393 = vmatprep.mubr.bf16.mxu0 0
  %3394 = vmatmul.mubr.bf16.gmra.mrb[0].mxu0 %v2755
  %v3395 = vpop.f32.mrb[0].mxu0
  %v3396 = vadd.f32 %v3107, %v3395
  %v3397 = vpop.f32.mrb[0].mxu0
  %v3398 = vpop.f32.mrb[0].mxu0
  %v3399 = vadd.f32 %v3110, %v3398
  %v3400 = vpop.f32.mrb[0].mxu0
  %3401 = vmatprep.mubr.bf16.mxu0 0
  %3402 = vmatmul.mubr.bf16.gmra.mrb[0].mxu0 %v2758
  %v3403 = vpop.f32.mrb[0].mxu0
  %v3404 = vadd.f32 %v3115, %v3403
  %v3405 = vpop.f32.mrb[0].mxu0
  %v3406 = vpop.f32.mrb[0].mxu0
  %v3407 = vadd.f32 %v3118, %v3406
  %v3408 = vpop.f32.mrb[0].mxu0
  %3409 = vmatprep.mubr.bf16.mxu0 0
  %3410 = vmatmul.mubr.bf16.gmra.mrb[0].mxu0 %v2761
  %v3411 = vpop.f32.mrb[0].mxu0
  %v3412 = vadd.f32 %v3123, %v3411
  %v3413 = vpop.f32.mrb[0].mxu0
  %v3414 = vpop.f32.mrb[0].mxu0
  %v3415 = vadd.f32 %v3126, %v3414
  %v3416 = vpop.f32.mrb[0].mxu0
  %3417 = vmatprep.mubr.bf16.mxu0 0
  %3418 = vmatmul.mubr.bf16.gmra.mrb[0].mxu0 %v2764
  %v3419 = vpop.f32.mrb[0].mxu0
  %v3420 = vadd.f32 %v3131, %v3419
  %v3421 = vpop.f32.mrb[0].mxu0
  %v3422 = vpop.f32.mrb[0].mxu0
  %v3423 = vadd.f32 %v3134, %v3422
  %v3424 = vpop.f32.mrb[0].mxu0
  %3425 = vmatprep.mubr.bf16.mxu0 0
  %3426 = vmatmul.mubr.bf16.gmra.mrb[0].mxu0 %v2767
  %v3427 = vpop.f32.mrb[0].mxu0
  %v3428 = vadd.f32 %v3139, %v3427
  %v3429 = vpop.f32.mrb[0].mxu0
  %v3430 = vpop.f32.mrb[0].mxu0
  %v3431 = vadd.f32 %v3142, %v3430
  %v3432 = vpop.f32.mrb[0].mxu0
  %3433 = vmatprep.mubr.bf16.mxu0 0
  %3434 = vmatmul.mubr.bf16.gmra.mrb[0].mxu0 %v2770
  %v3435 = vpop.f32.mrb[0].mxu0
  %v3436 = vadd.f32 %v3147, %v3435
  %v3437 = vpop.f32.mrb[0].mxu0
  %v3438 = vpop.f32.mrb[0].mxu0
  %v3439 = vadd.f32 %v3150, %v3438
  %v3440 = vpop.f32.mrb[0].mxu0
  %3441 = vmatprep.mubr.bf16.mxu0 0
  %3442 = vmatmul.mubr.bf16.gmra.mrb[0].mxu0 %v2773
  %v3443 = vpop.f32.mrb[0].mxu0
  %v3444 = vadd.f32 %v3155, %v3443
  %v3445 = vpop.f32.mrb[0].mxu0
  %v3446 = vpop.f32.mrb[0].mxu0
  %v3447 = vadd.f32 %v3158, %v3446
  %v3448 = vpop.f32.mrb[0].mxu0
  %3449 = vmatprep.mubr.bf16.mxu0 0
  %3450 = vmatmul.mubr.bf16.gmra.mrb[0].mxu0 %v2776
  %v3451 = vpop.f32.mrb[0].mxu0
  %v3452 = vadd.f32 %v3163, %v3451
  %v3453 = vpop.f32.mrb[0].mxu0
  %v3454 = vpop.f32.mrb[0].mxu0
  %v3455 = vadd.f32 %v3166, %v3454
  %v3456 = vpop.f32.mrb[0].mxu0
  %3457 = vmatprep.mubr.bf16.mxu0 0
  %3458 = vmatmul.mubr.bf16.gmra.mrb[0].mxu0 %v2779
  %v3459 = vpop.f32.mrb[0].mxu0
  %v3460 = vadd.f32 %v3171, %v3459
  %v3461 = vpop.f32.mrb[0].mxu0
  %v3462 = vpop.f32.mrb[0].mxu0
  %v3463 = vadd.f32 %v3174, %v3462
  %v3464 = vpop.f32.mrb[0].mxu0
  %3465 = vmatprep.mubr.bf16.mxu0 0
  %3466 = vmatmul.mubr.bf16.gmra.mrb[0].mxu0 %v2782
  %v3467 = vpop.f32.mrb[0].mxu0
  %v3468 = vadd.f32 %v3179, %v3467
  %v3469 = vpop.f32.mrb[0].mxu0
  %v3470 = vpop.f32.mrb[0].mxu0
  %v3471 = vadd.f32 %v3182, %v3470
  %v3472 = vpop.f32.mrb[0].mxu0
  %3473 = vmatprep.mubr.bf16.mxu0 0
  %3474 = vmatmul.mubr.bf16.gmra.mrb[0].mxu0 %v2785
  %v3475 = vpop.f32.mrb[0].mxu0
  %v3476 = vadd.f32 %v3187, %v3475
  %v3477 = vpop.f32.mrb[0].mxu0
  %v3478 = vpop.f32.mrb[0].mxu0
  %v3479 = vadd.f32 %v3190, %v3478
  %v3480 = vpop.f32.mrb[0].mxu0
  %3481 = vmatprep.mubr.bf16.mxu0 0
  %3482 = vmatmul.mubr.bf16.gmra.mrb[0].mxu0 %v2788
  %v3483 = vpop.f32.mrb[0].mxu0
  %v3484 = vadd.f32 %v3195, %v3483
  %v3485 = vpop.f32.mrb[0].mxu0
  %v3486 = vpop.f32.mrb[0].mxu0
  %v3487 = vadd.f32 %v3198, %v3486
  %v3488 = vpop.f32.mrb[0].mxu0
  %3489 = vmatprep.mubr.bf16.mxu0 0
  %3490 = vmatmul.mubr.bf16.gmra.mrb[0].mxu0 %v2791
  %v3491 = vpop.f32.mrb[0].mxu0
  %v3492 = vadd.f32 %v3203, %v3491
  %v3493 = vpop.f32.mrb[0].mxu0
  %v3494 = vpop.f32.mrb[0].mxu0
  %v3495 = vadd.f32 %v3206, %v3494
  %v3496 = vpop.f32.mrb[0].mxu0
  %3497 = vmatprep.mubr.bf16.mxu0 0
  %3498 = vmatmul.mubr.bf16.gmra.mrb[0].mxu0 %v2794
  %v3499 = vpop.f32.mrb[0].mxu0
  %v3500 = vadd.f32 %v3211, %v3499
  %v3501 = vpop.f32.mrb[0].mxu0
  %v3502 = vpop.f32.mrb[0].mxu0
  %v3503 = vadd.f32 %v3214, %v3502
  %v3504 = vpop.f32.mrb[0].mxu0
  %3505 = vmatprep.mubr.bf16.mxu0 0
  %3506 = vmatmul.mubr.bf16.gmra.mrb[0].mxu0 %v2797
  %v3507 = vpop.f32.mrb[0].mxu0
  %v3508 = vadd.f32 %v3219, %v3507
  %v3509 = vpop.f32.mrb[0].mxu0
  %v3510 = vpop.f32.mrb[0].mxu0
  %v3511 = vadd.f32 %v3222, %v3510
  %v3512 = vpop.f32.mrb[0].mxu0
  %3513 = vmatprep.mubr.bf16.mxu0 0
  %3514 = vmatmul.mubr.bf16.gmra.mrb[0].mxu0 %v2800
  %v3515 = vpop.f32.mrb[0].mxu0
  %v3516 = vadd.f32 %v3227, %v3515
  %v3517 = vpop.f32.mrb[0].mxu0
  %v3518 = vpop.f32.mrb[0].mxu0
  %v3519 = vadd.f32 %v3230, %v3518
  %v3520 = vpop.f32.mrb[0].mxu0
  %3521 = vmatprep.mubr.bf16.mxu0 0
  %3522 = vmatmul.mubr.bf16.gmra.mrb[0].mxu0 %v2803
  %v3523 = vpop.f32.mrb[0].mxu0
  %v3524 = vadd.f32 %v3235, %v3523
  %v3525 = vpop.f32.mrb[0].mxu0
  %v3526 = vpop.f32.mrb[0].mxu0
  %v3527 = vadd.f32 %v3238, %v3526
  %v3528 = vpop.f32.mrb[0].mxu0
  %3529 = vmatprep.mubr.bf16.mxu0 0
  %3530 = vmatmul.mubr.bf16.gmra.mrb[0].mxu0 %v2806
  %v3531 = vpop.f32.mrb[0].mxu0
  %v3532 = vadd.f32 %v3243, %v3531
  %v3533 = vpop.f32.mrb[0].mxu0
  %v3534 = vpop.f32.mrb[0].mxu0
  %v3535 = vadd.f32 %v3246, %v3534
  %v3536 = vpop.f32.mrb[0].mxu0
  %3537 = vmatprep.mubr.bf16.mxu0 0
  %3538 = vmatmul.mubr.bf16.gmra.mrb[0].mxu0 %v2809
  %v3539 = vpop.f32.mrb[0].mxu0
  %v3540 = vadd.f32 %v3251, %v3539
  %v3541 = vpop.f32.mrb[0].mxu0
  %v3542 = vpop.f32.mrb[0].mxu0
  %v3543 = vadd.f32 %v3254, %v3542
  %v3544 = vpop.f32.mrb[0].mxu0
  %3545 = vmatprep.mubr.bf16.mxu0 0
  %3546 = vmatmul.mubr.bf16.gmra.mrb[0].mxu0 %v2812
  %v3547 = vpop.f32.mrb[0].mxu0
  %v3548 = vadd.f32 %v3259, %v3547
  %v3549 = vpop.f32.mrb[0].mxu0
  %v3550 = vpop.f32.mrb[0].mxu0
  %v3551 = vadd.f32 %v3262, %v3550
  %v3552 = vpop.f32.mrb[0].mxu0
  %3553 = vmatprep.mubr.bf16.mxu0 0
  %3554 = vmatmul.mubr.bf16.gmra.mrb[0].mxu0 %v2815
  %v3555 = vpop.f32.mrb[0].mxu0
  %v3556 = vadd.f32 %v3267, %v3555
  %v3557 = vpop.f32.mrb[0].mxu0
  %v3558 = vpop.f32.mrb[0].mxu0
  %v3559 = vadd.f32 %v3270, %v3558
  %v3560 = vpop.f32.mrb[0].mxu0
  %3561 = vmatprep.mubr.bf16.mxu0 0
  %3562 = vmatmul.mubr.bf16.gmra.mrb[0].mxu0 %v2818
  %v3563 = vpop.f32.mrb[0].mxu0
  %v3564 = vadd.f32 %v3275, %v3563
  %v3565 = vpop.f32.mrb[0].mxu0
  %v3566 = vpop.f32.mrb[0].mxu0
  %v3567 = vadd.f32 %v3278, %v3566
  %v3568 = vpop.f32.mrb[0].mxu0
  %3569 = vmatprep.mubr.bf16.mxu0 0
  %3570 = vmatmul.mubr.bf16.gmra.mrb[0].mxu0 %v2821
  %v3571 = vpop.f32.mrb[0].mxu0
  %v3572 = vadd.f32 %v3283, %v3571
  %v3573 = vpop.f32.mrb[0].mxu0
  %v3574 = vpop.f32.mrb[0].mxu0
  %v3575 = vadd.f32 %v3286, %v3574
  %v3576 = vpop.f32.mrb[0].mxu0
  %3577 = vmatprep.mubr.bf16.mxu0 0
  %3578 = vmatmul.mubr.bf16.gmra.mrb[0].mxu0 %v2824
  %v3579 = vpop.f32.mrb[0].mxu0
  %v3580 = vadd.f32 %v3291, %v3579
  %v3581 = vpop.f32.mrb[0].mxu0
  %v3582 = vpop.f32.mrb[0].mxu0
  %v3583 = vadd.f32 %v3294, %v3582
  %v3584 = vpop.f32.mrb[0].mxu0
  %3585 = vmatprep.mubr.bf16.mxu0 0
  %3586 = vmatmul.mubr.bf16.gmra.mrb[0].mxu0 %v2827
  %v3587 = vpop.f32.mrb[0].mxu0
  %v3588 = vadd.f32 %v3299, %v3587
  %v3589 = vpop.f32.mrb[0].mxu0
  %v3590 = vpop.f32.mrb[0].mxu0
  %v3591 = vadd.f32 %v3302, %v3590
  %v3592 = vpop.f32.mrb[0].mxu0
  %3593 = vmatprep.mubr.bf16.mxu0 0
  %3594 = vmatmul.mubr.bf16.gmra.mrb[0].mxu0 %v2830
  %v3595 = vpop.f32.mrb[0].mxu0
  %v3596 = vadd.f32 %v3307, %v3595
  %v3597 = vpop.f32.mrb[0].mxu0
  %v3598 = vpop.f32.mrb[0].mxu0
  %v3599 = vadd.f32 %v3310, %v3598
  %v3600 = vpop.f32.mrb[0].mxu0
  %3601 = vdwg.mxu0
  %v3602 = vadd.f32 %v2671, %v3348
  %v3603 = vadd.f32 %v2672, %v3351
  %v3604 = vadd.f32 %v2673, %v3356
  %v3605 = vadd.f32 %v2674, %v3359
  %v3606 = vadd.f32 %v2675, %v3364
  %v3607 = vadd.f32 %v2676, %v3367
  %v3608 = vadd.f32 %v2677, %v3372
  %v3609 = vadd.f32 %v2678, %v3375
  %v3610 = vadd.f32 %v2679, %v3380
  %v3611 = vadd.f32 %v2680, %v3383
  %v3612 = vadd.f32 %v2681, %v3388
  %v3613 = vadd.f32 %v2682, %v3391
  %v3614 = vadd.f32 %v2683, %v3396
  %v3615 = vadd.f32 %v2684, %v3399
  %v3616 = vadd.f32 %v2685, %v3404
  %v3617 = vadd.f32 %v2686, %v3407
  %v3618 = vadd.f32 %v2687, %v3412
  %v3619 = vadd.f32 %v2688, %v3415
  %v3620 = vadd.f32 %v2689, %v3420
  %v3621 = vadd.f32 %v2690, %v3423
  %v3622 = vadd.f32 %v2691, %v3428
  %v3623 = vadd.f32 %v2692, %v3431
  %v3624 = vadd.f32 %v2693, %v3436
  %v3625 = vadd.f32 %v2694, %v3439
  %v3626 = vadd.f32 %v2695, %v3444
  %v3627 = vadd.f32 %v2696, %v3447
  %v3628 = vadd.f32 %v2697, %v3452
  %v3629 = vadd.f32 %v2698, %v3455
  %v3630 = vadd.f32 %v2699, %v3460
  %v3631 = vadd.f32 %v2700, %v3463
  %v3632 = vadd.f32 %v2701, %v3468
  %v3633 = vadd.f32 %v2702, %v3471
  %v3634 = vadd.f32 %v2703, %v3476
  %v3635 = vadd.f32 %v2704, %v3479
  %v3636 = vadd.f32 %v2705, %v3484
  %v3637 = vadd.f32 %v2706, %v3487
  %v3638 = vadd.f32 %v2707, %v3492
  %v3639 = vadd.f32 %v2708, %v3495
  %v3640 = vadd.f32 %v2709, %v3500
  %v3641 = vadd.f32 %v2710, %v3503
  %v3642 = vadd.f32 %v2711, %v3508
  %v3643 = vadd.f32 %v2712, %v3511
  %v3644 = vadd.f32 %v2713, %v3516
  %v3645 = vadd.f32 %v2714, %v3519
  %v3646 = vadd.f32 %v2715, %v3524
  %v3647 = vadd.f32 %v2716, %v3527
  %v3648 = vadd.f32 %v2717, %v3532
  %v3649 = vadd.f32 %v2718, %v3535
  %v3650 = vadd.f32 %v2719, %v3540
  %v3651 = vadd.f32 %v2720, %v3543
  %v3652 = vadd.f32 %v2721, %v3548
  %v3653 = vadd.f32 %v2722, %v3551
  %v3654 = vadd.f32 %v2723, %v3556
  %v3655 = vadd.f32 %v2724, %v3559
  %v3656 = vadd.f32 %v2725, %v3564
  %v3657 = vadd.f32 %v2726, %v3567
  %v3658 = vadd.f32 %v2727, %v3572
  %v3659 = vadd.f32 %v2728, %v3575
  %v3660 = vadd.f32 %v2729, %v3580
  %v3661 = vadd.f32 %v2730, %v3583
  %v3662 = vadd.f32 %v2731, %v3588
  %v3663 = vadd.f32 %v2732, %v3591
  %v3664 = vadd.f32 %v2733, %v3596
  %v3665 = vadd.f32 %v2734, %v3599
  %3666 = vst.msk [vmem:[#allocation3] sm:$0xff] %vm2606, %v3602
  %3667 = vst.msk [vmem:[#allocation3 + $0x8] sm:$0xff] %vm2606, %v3603
  %3668 = vst.msk [vmem:[#allocation3 + $0x10] sm:$0xff] %vm2606, %v3604
  %3669 = vst.msk [vmem:[#allocation3 + $0x18] sm:$0xff] %vm2606, %v3605
  %3670 = vst.msk [vmem:[#allocation3 + $0x20] sm:$0xff] %vm2606, %v3606
  %3671 = vst.msk [vmem:[#allocation3 + $0x28] sm:$0xff] %vm2606, %v3607
  %3672 = vst.msk [vmem:[#allocation3 + $0x30] sm:$0xff] %vm2606, %v3608
  %3673 = vst.msk [vmem:[#allocation3 + $0x38] sm:$0xff] %vm2606, %v3609
  %3674 = vst.msk [vmem:[#allocation3 + $0x40] sm:$0xff] %vm2606, %v3610
  %3675 = vst.msk [vmem:[#allocation3 + $0x48] sm:$0xff] %vm2606, %v3611
  %3676 = vst.msk [vmem:[#allocation3 + $0x50] sm:$0xff] %vm2606, %v3612
  %3677 = vst.msk [vmem:[#allocation3 + $0x58] sm:$0xff] %vm2606, %v3613
  %3678 = vst.msk [vmem:[#allocation3 + $0x60] sm:$0xff] %vm2606, %v3614
  %3679 = vst.msk [vmem:[#allocation3 + $0x68] sm:$0xff] %vm2606, %v3615
  %3680 = vst.msk [vmem:[#allocation3 + $0x70] sm:$0xff] %vm2606, %v3616
  %3681 = vst.msk [vmem:[#allocation3 + $0x78] sm:$0xff] %vm2606, %v3617
  %3682 = vst.msk [vmem:[#allocation3 + $0x80] sm:$0xff] %vm2606, %v3618
  %3683 = vst.msk [vmem:[#allocation3 + $0x88] sm:$0xff] %vm2606, %v3619
  %3684 = vst.msk [vmem:[#allocation3 + $0x90] sm:$0xff] %vm2606, %v3620
  %3685 = vst.msk [vmem:[#allocation3 + $0x98] sm:$0xff] %vm2606, %v3621
  %3686 = vst.msk [vmem:[#allocation3 + $0xa0] sm:$0xff] %vm2606, %v3622
  %3687 = vst.msk [vmem:[#allocation3 + $0xa8] sm:$0xff] %vm2606, %v3623
  %3688 = vst.msk [vmem:[#allocation3 + $0xb0] sm:$0xff] %vm2606, %v3624
  %3689 = vst.msk [vmem:[#allocation3 + $0xb8] sm:$0xff] %vm2606, %v3625
  %3690 = vst.msk [vmem:[#allocation3 + $0xc0] sm:$0xff] %vm2606, %v3626
  %3691 = vst.msk [vmem:[#allocation3 + $0xc8] sm:$0xff] %vm2606, %v3627
  %3692 = vst.msk [vmem:[#allocation3 + $0xd0] sm:$0xff] %vm2606, %v3628
  %3693 = vst.msk [vmem:[#allocation3 + $0xd8] sm:$0xff] %vm2606, %v3629
  %3694 = vst.msk [vmem:[#allocation3 + $0xe0] sm:$0xff] %vm2606, %v3630
  %3695 = vst.msk [vmem:[#allocation3 + $0xe8] sm:$0xff] %vm2606, %v3631
  %3696 = vst.msk [vmem:[#allocation3 + $0xf0] sm:$0xff] %vm2606, %v3632
  %3697 = vst.msk [vmem:[#allocation3 + $0xf8] sm:$0xff] %vm2606, %v3633
  %3698 = vst.msk [vmem:[#allocation3 + $0x100] sm:$0xff] %vm2606, %v3634
  %3699 = vst.msk [vmem:[#allocation3 + $0x108] sm:$0xff] %vm2606, %v3635
  %3700 = vst.msk [vmem:[#allocation3 + $0x110] sm:$0xff] %vm2606, %v3636
  %3701 = vst.msk [vmem:[#allocation3 + $0x118] sm:$0xff] %vm2606, %v3637
  %3702 = vst.msk [vmem:[#allocation3 + $0x120] sm:$0xff] %vm2606, %v3638
  %3703 = vst.msk [vmem:[#allocation3 + $0x128] sm:$0xff] %vm2606, %v3639
  %3704 = vst.msk [vmem:[#allocation3 + $0x130] sm:$0xff] %vm2606, %v3640
  %3705 = vst.msk [vmem:[#allocation3 + $0x138] sm:$0xff] %vm2606, %v3641
  %3706 = vst.msk [vmem:[#allocation3 + $0x140] sm:$0xff] %vm2606, %v3642
  %3707 = vst.msk [vmem:[#allocation3 + $0x148] sm:$0xff] %vm2606, %v3643
  %3708 = vst.msk [vmem:[#allocation3 + $0x150] sm:$0xff] %vm2606, %v3644
  %3709 = vst.msk [vmem:[#allocation3 + $0x158] sm:$0xff] %vm2606, %v3645
  %3710 = vst.msk [vmem:[#allocation3 + $0x160] sm:$0xff] %vm2606, %v3646
  %3711 = vst.msk [vmem:[#allocation3 + $0x168] sm:$0xff] %vm2606, %v3647
  %3712 = vst.msk [vmem:[#allocation3 + $0x170] sm:$0xff] %vm2606, %v3648
  %3713 = vst.msk [vmem:[#allocation3 + $0x178] sm:$0xff] %vm2606, %v3649
  %3714 = vst.msk [vmem:[#allocation3 + $0x180] sm:$0xff] %vm2606, %v3650
  %3715 = vst.msk [vmem:[#allocation3 + $0x188] sm:$0xff] %vm2606, %v3651
  %3716 = vst.msk [vmem:[#allocation3 + $0x190] sm:$0xff] %vm2606, %v3652
  %3717 = vst.msk [vmem:[#allocation3 + $0x198] sm:$0xff] %vm2606, %v3653
  %3718 = vst.msk [vmem:[#allocation3 + $0x1a0] sm:$0xff] %vm2606, %v3654
  %3719 = vst.msk [vmem:[#allocation3 + $0x1a8] sm:$0xff] %vm2606, %v3655
  %3720 = vst.msk [vmem:[#allocation3 + $0x1b0] sm:$0xff] %vm2606, %v3656
  %3721 = vst.msk [vmem:[#allocation3 + $0x1b8] sm:$0xff] %vm2606, %v3657
  %3722 = vst.msk [vmem:[#allocation3 + $0x1c0] sm:$0xff] %vm2606, %v3658
  %3723 = vst.msk [vmem:[#allocation3 + $0x1c8] sm:$0xff] %vm2606, %v3659
  %3724 = vst.msk [vmem:[#allocation3 + $0x1d0] sm:$0xff] %vm2606, %v3660
  %3725 = vst.msk [vmem:[#allocation3 + $0x1d8] sm:$0xff] %vm2606, %v3661
  %3726 = vst.msk [vmem:[#allocation3 + $0x1e0] sm:$0xff] %vm2606, %v3662
  %3727 = vst.msk [vmem:[#allocation3 + $0x1e8] sm:$0xff] %vm2606, %v3663
  %3728 = vst.msk [vmem:[#allocation3 + $0x1f0] sm:$0xff] %vm2606, %v3664
  %3729 = vst.msk [vmem:[#allocation3 + $0x1f8] sm:$0xff] %vm2606, %v3665
  %v3730 = vld [vmem:[#allocation3] sm:$0xff]
  %v3731 = vld [vmem:[#allocation3 + $0x8] sm:$0xff]
  %v3732 = vld [vmem:[#allocation3 + $0x10] sm:$0xff]
  %v3733 = vld [vmem:[#allocation3 + $0x18] sm:$0xff]
  %v3734 = vld [vmem:[#allocation3 + $0x20] sm:$0xff]
  %v3735 = vld [vmem:[#allocation3 + $0x28] sm:$0xff]
  %v3736 = vld [vmem:[#allocation3 + $0x30] sm:$0xff]
  %v3737 = vld [vmem:[#allocation3 + $0x38] sm:$0xff]
  %v3738 = vld [vmem:[#allocation3 + $0x40] sm:$0xff]
  %v3739 = vld [vmem:[#allocation3 + $0x48] sm:$0xff]
  %v3740 = vld [vmem:[#allocation3 + $0x50] sm:$0xff]
  %v3741 = vld [vmem:[#allocation3 + $0x58] sm:$0xff]
  %v3742 = vld [vmem:[#allocation3 + $0x60] sm:$0xff]
  %v3743 = vld [vmem:[#allocation3 + $0x68] sm:$0xff]
  %v3744 = vld [vmem:[#allocation3 + $0x70] sm:$0xff]
  %v3745 = vld [vmem:[#allocation3 + $0x78] sm:$0xff]
  %v3746 = vld [vmem:[#allocation3 + $0x80] sm:$0xff]
  %v3747 = vld [vmem:[#allocation3 + $0x88] sm:$0xff]
  %v3748 = vld [vmem:[#allocation3 + $0x90] sm:$0xff]
  %v3749 = vld [vmem:[#allocation3 + $0x98] sm:$0xff]
  %v3750 = vld [vmem:[#allocation3 + $0xa0] sm:$0xff]
  %v3751 = vld [vmem:[#allocation3 + $0xa8] sm:$0xff]
  %v3752 = vld [vmem:[#allocation3 + $0xb0] sm:$0xff]
  %v3753 = vld [vmem:[#allocation3 + $0xb8] sm:$0xff]
  %v3754 = vld [vmem:[#allocation3 + $0xc0] sm:$0xff]
  %v3755 = vld [vmem:[#allocation3 + $0xc8] sm:$0xff]
  %v3756 = vld [vmem:[#allocation3 + $0xd0] sm:$0xff]
  %v3757 = vld [vmem:[#allocation3 + $0xd8] sm:$0xff]
  %v3758 = vld [vmem:[#allocation3 + $0xe0] sm:$0xff]
  %v3759 = vld [vmem:[#allocation3 + $0xe8] sm:$0xff]
  %v3760 = vld [vmem:[#allocation3 + $0xf0] sm:$0xff]
  %v3761 = vld [vmem:[#allocation3 + $0xf8] sm:$0xff]
  %v3762 = vld [vmem:[#allocation3 + $0x100] sm:$0xff]
  %v3763 = vld [vmem:[#allocation3 + $0x108] sm:$0xff]
  %v3764 = vld [vmem:[#allocation3 + $0x110] sm:$0xff]
  %v3765 = vld [vmem:[#allocation3 + $0x118] sm:$0xff]
  %v3766 = vld [vmem:[#allocation3 + $0x120] sm:$0xff]
  %v3767 = vld [vmem:[#allocation3 + $0x128] sm:$0xff]
  %v3768 = vld [vmem:[#allocation3 + $0x130] sm:$0xff]
  %v3769 = vld [vmem:[#allocation3 + $0x138] sm:$0xff]
  %v3770 = vld [vmem:[#allocation3 + $0x140] sm:$0xff]
  %v3771 = vld [vmem:[#allocation3 + $0x148] sm:$0xff]
  %v3772 = vld [vmem:[#allocation3 + $0x150] sm:$0xff]
  %v3773 = vld [vmem:[#allocation3 + $0x158] sm:$0xff]
  %v3774 = vld [vmem:[#allocation3 + $0x160] sm:$0xff]
  %v3775 = vld [vmem:[#allocation3 + $0x168] sm:$0xff]
  %v3776 = vld [vmem:[#allocation3 + $0x170] sm:$0xff]
  %v3777 = vld [vmem:[#allocation3 + $0x178] sm:$0xff]
  %v3778 = vld [vmem:[#allocation3 + $0x180] sm:$0xff]
  %v3779 = vld [vmem:[#allocation3 + $0x188] sm:$0xff]
  %v3780 = vld [vmem:[#allocation3 + $0x190] sm:$0xff]
  %v3781 = vld [vmem:[#allocation3 + $0x198] sm:$0xff]
  %v3782 = vld [vmem:[#allocation3 + $0x1a0] sm:$0xff]
  %v3783 = vld [vmem:[#allocation3 + $0x1a8] sm:$0xff]
  %v3784 = vld [vmem:[#allocation3 + $0x1b0] sm:$0xff]
  %v3785 = vld [vmem:[#allocation3 + $0x1b8] sm:$0xff]
  %v3786 = vld [vmem:[#allocation3 + $0x1c0] sm:$0xff]
  %v3787 = vld [vmem:[#allocation3 + $0x1c8] sm:$0xff]
  %v3788 = vld [vmem:[#allocation3 + $0x1d0] sm:$0xff]
  %v3789 = vld [vmem:[#allocation3 + $0x1d8] sm:$0xff]
  %v3790 = vld [vmem:[#allocation3 + $0x1e0] sm:$0xff]
  %v3791 = vld [vmem:[#allocation3 + $0x1e8] sm:$0xff]
  %v3792 = vld [vmem:[#allocation3 + $0x1f0] sm:$0xff]
  %v3793 = vld [vmem:[#allocation3 + $0x1f8] sm:$0xff]
  %s3794 = scalar_lea.vmem [#allocation2], 48
  %v3795 = vld [vmem:[%s3794] sm:$0xff]
  %v3796 = vld [vmem:[%s3794 + $0x8] sm:$0xff]
  %v3797 = vld [vmem:[%s3794 + $0x10] sm:$0xff]
  %v3798 = vld [vmem:[%s3794 + $0x18] sm:$0xff]
  %v3799 = vld [vmem:[%s3794 + $0x20] sm:$0xff]
  %v3800 = vld [vmem:[%s3794 + $0x28] sm:$0xff]
  %v3801 = vld [vmem:[%s3794 + $0x30] sm:$0xff]
  %v3802 = vld [vmem:[%s3794 + $0x38] sm:$0xff]
  %v3803 = vld [vmem:[%s3794 + $0x40] sm:$0xff]
  %v3804 = vld [vmem:[%s3794 + $0x48] sm:$0xff]
  %v3805 = vld [vmem:[%s3794 + $0x50] sm:$0xff]
  %v3806 = vld [vmem:[%s3794 + $0x58] sm:$0xff]
  %v3807 = vld [vmem:[%s3794 + $0x60] sm:$0xff]
  %v3808 = vld [vmem:[%s3794 + $0x68] sm:$0xff]
  %v3809 = vld [vmem:[%s3794 + $0x70] sm:$0xff]
  %v3810 = vld [vmem:[%s3794 + $0x78] sm:$0xff]
  %v3811 = vld [vmem:[%s3794 + $0x80] sm:$0xff]
  %v3812 = vld [vmem:[%s3794 + $0x88] sm:$0xff]
  %v3813 = vld [vmem:[%s3794 + $0x90] sm:$0xff]
  %v3814 = vld [vmem:[%s3794 + $0x98] sm:$0xff]
  %v3815 = vld [vmem:[%s3794 + $0xa0] sm:$0xff]
  %v3816 = vld [vmem:[%s3794 + $0xa8] sm:$0xff]
  %v3817 = vld [vmem:[%s3794 + $0xb0] sm:$0xff]
  %v3818 = vld [vmem:[%s3794 + $0xb8] sm:$0xff]
  %v3819 = vld [vmem:[%s3794 + $0xc0] sm:$0xff]
  %v3820 = vld [vmem:[%s3794 + $0xc8] sm:$0xff]
  %v3821 = vld [vmem:[%s3794 + $0xd0] sm:$0xff]
  %v3822 = vld [vmem:[%s3794 + $0xd8] sm:$0xff]
  %v3823 = vld [vmem:[%s3794 + $0xe0] sm:$0xff]
  %v3824 = vld [vmem:[%s3794 + $0xe8] sm:$0xff]
  %v3825 = vld [vmem:[%s3794 + $0xf0] sm:$0xff]
  %v3826 = vld [vmem:[%s3794 + $0xf8] sm:$0xff]
  %v3827 = vld [vmem:[%s3794 + $0x100] sm:$0xff]
  %v3828 = vld [vmem:[%s3794 + $0x108] sm:$0xff]
  %v3829 = vld [vmem:[%s3794 + $0x110] sm:$0xff]
  %v3830 = vld [vmem:[%s3794 + $0x118] sm:$0xff]
  %v3831 = vld [vmem:[%s3794 + $0x120] sm:$0xff]
  %v3832 = vld [vmem:[%s3794 + $0x128] sm:$0xff]
  %v3833 = vld [vmem:[%s3794 + $0x130] sm:$0xff]
  %v3834 = vld [vmem:[%s3794 + $0x138] sm:$0xff]
  %v3835 = vld [vmem:[%s3794 + $0x140] sm:$0xff]
  %v3836 = vld [vmem:[%s3794 + $0x148] sm:$0xff]
  %v3837 = vld [vmem:[%s3794 + $0x150] sm:$0xff]
  %v3838 = vld [vmem:[%s3794 + $0x158] sm:$0xff]
  %v3839 = vld [vmem:[%s3794 + $0x160] sm:$0xff]
  %v3840 = vld [vmem:[%s3794 + $0x168] sm:$0xff]
  %v3841 = vld [vmem:[%s3794 + $0x170] sm:$0xff]
  %v3842 = vld [vmem:[%s3794 + $0x178] sm:$0xff]
  %v3843 = vld [vmem:[%s3794 + $0x1b0] sm:$0xff]
  %v3844 = vld [vmem:[%s3794 + $0x1b8] sm:$0xff]
  %v3845 = vld [vmem:[%s3794 + $0x1c0] sm:$0xff]
  %v3846 = vld [vmem:[%s3794 + $0x1c8] sm:$0xff]
  %v3847 = vld [vmem:[%s3794 + $0x1d0] sm:$0xff]
  %v3848 = vld [vmem:[%s3794 + $0x1d8] sm:$0xff]
  %v3849 = vld [vmem:[%s3794 + $0x1e0] sm:$0xff]
  %v3850 = vld [vmem:[%s3794 + $0x1e8] sm:$0xff]
  %v3851 = vld [vmem:[%s3794 + $0x1f0] sm:$0xff]
  %v3852 = vld [vmem:[%s3794 + $0x1f8] sm:$0xff]
  %v3853 = vld [vmem:[%s3794 + $0x200] sm:$0xff]
  %v3854 = vld [vmem:[%s3794 + $0x208] sm:$0xff]
  %v3855 = vld [vmem:[%s3794 + $0x210] sm:$0xff]
  %v3856 = vld [vmem:[%s3794 + $0x218] sm:$0xff]
  %v3857 = vld [vmem:[%s3794 + $0x220] sm:$0xff]
  %v3858 = vld [vmem:[%s3794 + $0x228] sm:$0xff]
  %v3859 = vld [vmem:[%s3794 + $0x230] sm:$0xff]
  %v3860 = vld [vmem:[%s3794 + $0x238] sm:$0xff]
  %v3861 = vld [vmem:[%s3794 + $0x240] sm:$0xff]
  %v3862 = vld [vmem:[%s3794 + $0x248] sm:$0xff]
  %v3863 = vld [vmem:[%s3794 + $0x250] sm:$0xff]
  %v3864 = vld [vmem:[%s3794 + $0x258] sm:$0xff]
  %v3865 = vld [vmem:[%s3794 + $0x260] sm:$0xff]
  %v3866 = vld [vmem:[%s3794 + $0x268] sm:$0xff]
  %v3867 = vld [vmem:[%s3794 + $0x270] sm:$0xff]
  %v3868 = vld [vmem:[%s3794 + $0x278] sm:$0xff]
  %v3869 = vld [vmem:[%s3794 + $0x280] sm:$0xff]
  %v3870 = vld [vmem:[%s3794 + $0x288] sm:$0xff]
  %v3871 = vld [vmem:[%s3794 + $0x290] sm:$0xff]
  %v3872 = vld [vmem:[%s3794 + $0x298] sm:$0xff]
  %v3873 = vld [vmem:[%s3794 + $0x2a0] sm:$0xff]
  %v3874 = vld [vmem:[%s3794 + $0x2a8] sm:$0xff]
  %v3875 = vld [vmem:[%s3794 + $0x2b0] sm:$0xff]
  %v3876 = vld [vmem:[%s3794 + $0x2b8] sm:$0xff]
  %v3877 = vld [vmem:[%s3794 + $0x2c0] sm:$0xff]
  %v3878 = vld [vmem:[%s3794 + $0x2c8] sm:$0xff]
  %v3879 = vld [vmem:[%s3794 + $0x2d0] sm:$0xff]
  %v3880 = vld [vmem:[%s3794 + $0x2d8] sm:$0xff]
  %v3881 = vld [vmem:[%s3794 + $0x2e0] sm:$0xff]
  %v3882 = vld [vmem:[%s3794 + $0x2e8] sm:$0xff]
  %v3883 = vld [vmem:[%s3794 + $0x2f0] sm:$0xff]
  %v3884 = vld [vmem:[%s3794 + $0x2f8] sm:$0xff]
  %v3885 = vld [vmem:[%s3794 + $0x300] sm:$0xff]
  %v3886 = vld [vmem:[%s3794 + $0x308] sm:$0xff]
  %v3887 = vld [vmem:[%s3794 + $0x310] sm:$0xff]
  %v3888 = vld [vmem:[%s3794 + $0x318] sm:$0xff]
  %v3889 = vld [vmem:[%s3794 + $0x320] sm:$0xff]
  %v3890 = vld [vmem:[%s3794 + $0x328] sm:$0xff]
  %s3891 = scalar_lea.vmem %s3, 384
  %v3892 = vld [vmem:[%s3891] sm:$0xf]
  %v3893 = vld [vmem:[%s3891 + $0x4] sm:$0xf]
  %v3894 = vld [vmem:[%s3891 + $0x8] sm:$0xf]
  %v3895 = vld [vmem:[%s3891 + $0xc] sm:$0xf]
  %v3896 = vld [vmem:[%s3891 + $0x10] sm:$0xf]
  %v3897 = vld [vmem:[%s3891 + $0x14] sm:$0xf]
  %v3898 = vld [vmem:[%s3891 + $0x18] sm:$0xf]
  %v3899 = vld [vmem:[%s3891 + $0x1c] sm:$0xf]
  %v3900 = vld [vmem:[%s3891 + $0x20] sm:$0xf]
  %v3901 = vld [vmem:[%s3891 + $0x24] sm:$0xf]
  %v3902 = vld [vmem:[%s3891 + $0x28] sm:$0xf]
  %v3903 = vld [vmem:[%s3891 + $0x2c] sm:$0xf]
  %v3904 = vld [vmem:[%s3891 + $0x30] sm:$0xf]
  %v3905 = vld [vmem:[%s3891 + $0x34] sm:$0xf]
  %v3906 = vld [vmem:[%s3891 + $0x38] sm:$0xf]
  %v3907 = vld [vmem:[%s3891 + $0x3c] sm:$0xf]
  %v3908 = vld [vmem:[%s3891 + $0x40] sm:$0xf]
  %v3909 = vld [vmem:[%s3891 + $0x44] sm:$0xf]
  %v3910 = vld [vmem:[%s3891 + $0x48] sm:$0xf]
  %v3911 = vld [vmem:[%s3891 + $0x4c] sm:$0xf]
  %v3912 = vld [vmem:[%s3891 + $0x50] sm:$0xf]
  %v3913 = vld [vmem:[%s3891 + $0x54] sm:$0xf]
  %v3914 = vld [vmem:[%s3891 + $0x58] sm:$0xf]
  %v3915 = vld [vmem:[%s3891 + $0x5c] sm:$0xf]
  %v3916 = vld [vmem:[%s3891 + $0x60] sm:$0xf]
  %v3917 = vld [vmem:[%s3891 + $0x64] sm:$0xf]
  %v3918 = vld [vmem:[%s3891 + $0x68] sm:$0xf]
  %v3919 = vld [vmem:[%s3891 + $0x6c] sm:$0xf]
  %v3920 = vld [vmem:[%s3891 + $0x70] sm:$0xf]
  %v3921 = vld [vmem:[%s3891 + $0x74] sm:$0xf]
  %v3922 = vld [vmem:[%s3891 + $0x78] sm:$0xf]
  %v3923 = vld [vmem:[%s3891 + $0x7c] sm:$0xf]
  %v3924 = vld [vmem:[%s3891 + $0x80] sm:$0xf]
  %v3925 = vld [vmem:[%s3891 + $0x84] sm:$0xf]
  %v3926 = vld [vmem:[%s3891 + $0x88] sm:$0xf]
  %v3927 = vld [vmem:[%s3891 + $0x8c] sm:$0xf]
  %v3928 = vld [vmem:[%s3891 + $0x90] sm:$0xf]
  %v3929 = vld [vmem:[%s3891 + $0x94] sm:$0xf]
  %v3930 = vld [vmem:[%s3891 + $0x98] sm:$0xf]
  %v3931 = vld [vmem:[%s3891 + $0x9c] sm:$0xf]
  %v3932 = vld [vmem:[%s3891 + $0xa0] sm:$0xf]
  %v3933 = vld [vmem:[%s3891 + $0xa4] sm:$0xf]
  %v3934 = vld [vmem:[%s3891 + $0xa8] sm:$0xf]
  %v3935 = vld [vmem:[%s3891 + $0xac] sm:$0xf]
  %v3936 = vld [vmem:[%s3891 + $0xb0] sm:$0xf]
  %v3937 = vld [vmem:[%s3891 + $0xb4] sm:$0xf]
  %v3938 = vld [vmem:[%s3891 + $0xb8] sm:$0xf]
  %v3939 = vld [vmem:[%s3891 + $0xbc] sm:$0xf]
  %v3988 = vunpack.c.l.b16 %v3892
  %v3989 = vunpack.c.l.b16 %v3893
  %v3990 = vunpack.c.l.b16 %v3894
  %v3991 = vunpack.c.l.b16 %v3895
  %v3992 = vunpack.c.l.b16 %v3896
  %v3993 = vunpack.c.l.b16 %v3897
  %v3994 = vunpack.c.l.b16 %v3898
  %v3995 = vunpack.c.l.b16 %v3899
  %v3996 = vunpack.c.l.b16 %v3900
  %v3997 = vunpack.c.l.b16 %v3901
  %v3998 = vunpack.c.l.b16 %v3902
  %v3999 = vunpack.c.l.b16 %v3903
  %v4000 = vunpack.c.l.b16 %v3904
  %v4001 = vunpack.c.l.b16 %v3905
  %v4002 = vunpack.c.l.b16 %v3906
  %v4003 = vunpack.c.l.b16 %v3907
  %v4004 = vunpack.c.l.b16 %v3908
  %v4005 = vunpack.c.l.b16 %v3909
  %v4006 = vunpack.c.l.b16 %v3910
  %v4007 = vunpack.c.l.b16 %v3911
  %v4008 = vunpack.c.l.b16 %v3912
  %v4009 = vunpack.c.l.b16 %v3913
  %v4010 = vunpack.c.l.b16 %v3914
  %v4011 = vunpack.c.l.b16 %v3915
  %v4012 = vunpack.c.l.b16 %v3916
  %v4013 = vunpack.c.l.b16 %v3917
  %v4014 = vunpack.c.l.b16 %v3918
  %v4015 = vunpack.c.l.b16 %v3919
  %v4016 = vunpack.c.l.b16 %v3920
  %v4017 = vunpack.c.l.b16 %v3921
  %v4018 = vunpack.c.l.b16 %v3922
  %v4019 = vunpack.c.l.b16 %v3923
  %v4020 = vunpack.c.l.b16 %v3924
  %v4021 = vunpack.c.l.b16 %v3925
  %v4022 = vunpack.c.l.b16 %v3926
  %v4023 = vunpack.c.l.b16 %v3927
  %v4024 = vunpack.c.l.b16 %v3928
  %v4025 = vunpack.c.l.b16 %v3929
  %v4026 = vunpack.c.l.b16 %v3930
  %v4027 = vunpack.c.l.b16 %v3931
  %v4028 = vunpack.c.l.b16 %v3932
  %v4029 = vunpack.c.l.b16 %v3933
  %v4030 = vunpack.c.l.b16 %v3934
  %v4031 = vunpack.c.l.b16 %v3935
  %v4032 = vunpack.c.l.b16 %v3936
  %v4033 = vunpack.c.l.b16 %v3937
  %v4034 = vunpack.c.l.b16 %v3938
  %v4035 = vunpack.c.l.b16 %v3939
  %v4036 = vpack.c.b16 %v3989, %v3988
  %v4037 = vpack.c.b16 %v3991, %v3990
  %v4038 = vpack.c.b16 %v3993, %v3992
  %v4039 = vpack.c.b16 %v3995, %v3994
  %v4040 = vpack.c.b16 %v3997, %v3996
  %v4041 = vpack.c.b16 %v3999, %v3998
  %v4042 = vpack.c.b16 %v4001, %v4000
  %v4043 = vpack.c.b16 %v4003, %v4002
  %v4044 = vpack.c.b16 %v4005, %v4004
  %v4045 = vpack.c.b16 %v4007, %v4006
  %v4046 = vpack.c.b16 %v4009, %v4008
  %v4047 = vpack.c.b16 %v4011, %v4010
  %v4048 = vpack.c.b16 %v4013, %v4012
  %v4049 = vpack.c.b16 %v4015, %v4014
  %v4050 = vpack.c.b16 %v4017, %v4016
  %v4051 = vpack.c.b16 %v4019, %v4018
  %v4052 = vpack.c.b16 %v4021, %v4020
  %v4053 = vpack.c.b16 %v4023, %v4022
  %v4054 = vpack.c.b16 %v4025, %v4024
  %v4055 = vpack.c.b16 %v4027, %v4026
  %v4056 = vpack.c.b16 %v4029, %v4028
  %v4057 = vpack.c.b16 %v4031, %v4030
  %v4058 = vpack.c.b16 %v4033, %v4032
  %v4059 = vpack.c.b16 %v4035, %v4034
  %4084 = vmatprep.subr.bf16.mxu0 0
  %4085 = vmatpush1.bf16.msra.mxu0 %v4036
  %4086 = vmatprep.subr.bf16.mxu0 0
  %4087 = vmatpush1.bf16.msra.mxu0 %v4037
  %4088 = vmatprep.subr.bf16.mxu0 0
  %4089 = vmatpush1.bf16.msra.mxu0 %v4038
  %4090 = vmatprep.subr.bf16.mxu0 0
  %4091 = vmatpush1.bf16.msra.mxu0 %v4039
  %4092 = vmatprep.subr.bf16.mxu0 0
  %4093 = vmatpush1.bf16.msra.mxu0 %v4040
  %4094 = vmatprep.subr.bf16.mxu0 0
  %4095 = vmatpush1.bf16.msra.mxu0 %v4041
  %4096 = vmatprep.subr.bf16.mxu0 0
  %4097 = vmatpush1.bf16.msra.mxu0 %v4042
  %4098 = vmatprep.subr.bf16.mxu0 0
  %4099 = vmatpush1.bf16.msra.mxu0 %v4043
  %4100 = vmatprep.subr.bf16.mxu0 0
  %4101 = vmatpush1.bf16.msra.mxu0 %v4044
  %4102 = vmatprep.subr.bf16.mxu0 0
  %4103 = vmatpush1.bf16.msra.mxu0 %v4045
  %4104 = vmatprep.subr.bf16.mxu0 0
  %4105 = vmatpush1.bf16.msra.mxu0 %v4046
  %4106 = vmatprep.subr.bf16.mxu0 0
  %4107 = vmatpush1.bf16.msra.mxu0 %v4047
  %4108 = vmatprep.subr.bf16.mxu0 0
  %4109 = vmatpush1.bf16.msra.mxu0 %v4048
  %4110 = vmatprep.subr.bf16.mxu0 0
  %4111 = vmatpush1.bf16.msra.mxu0 %v4049
  %4112 = vmatprep.subr.bf16.mxu0 0
  %4113 = vmatpush1.bf16.msra.mxu0 %v4050
  %4114 = vmatprep.subr.bf16.mxu0 0
  %4115 = vmatpush1.bf16.msra.mxu0 %v4051
  %4116 = vmatprep.mubr.bf16.mxu0 %v3796
  %4117 = vmatmul.mubr.bf16.gmra.mrb[0].mxu0 %v3795
  %v4118 = vpop.f32.mrb[0].mxu0
  %v4119 = vadd.f32 0.0, %v4118
  %v4120 = vpop.f32.mrb[0].mxu0
  %v4121 = vpop.f32.mrb[0].mxu0
  %v4122 = vadd.f32 0.0, %v4121
  %v4123 = vpop.f32.mrb[0].mxu0
  %4124 = vmatprep.mubr.bf16.mxu0 %v3799
  %4125 = vmatmul.mubr.bf16.gmra.mrb[0].mxu0 %v3798
  %v4126 = vpop.f32.mrb[0].mxu0
  %v4127 = vadd.f32 0.0, %v4126
  %v4128 = vpop.f32.mrb[0].mxu0
  %v4129 = vpop.f32.mrb[0].mxu0
  %v4130 = vadd.f32 0.0, %v4129
  %v4131 = vpop.f32.mrb[0].mxu0
  %4132 = vmatprep.mubr.bf16.mxu0 %v3802
  %4133 = vmatmul.mubr.bf16.gmra.mrb[0].mxu0 %v3801
  %v4134 = vpop.f32.mrb[0].mxu0
  %v4135 = vadd.f32 0.0, %v4134
  %v4136 = vpop.f32.mrb[0].mxu0
  %v4137 = vpop.f32.mrb[0].mxu0
  %v4138 = vadd.f32 0.0, %v4137
  %v4139 = vpop.f32.mrb[0].mxu0
  %4140 = vmatprep.mubr.bf16.mxu0 %v3805
  %4141 = vmatmul.mubr.bf16.gmra.mrb[0].mxu0 %v3804
  %v4142 = vpop.f32.mrb[0].mxu0
  %v4143 = vadd.f32 0.0, %v4142
  %v4144 = vpop.f32.mrb[0].mxu0
  %v4145 = vpop.f32.mrb[0].mxu0
  %v4146 = vadd.f32 0.0, %v4145
  %v4147 = vpop.f32.mrb[0].mxu0
  %4148 = vmatprep.mubr.bf16.mxu0 %v3808
  %4149 = vmatmul.mubr.bf16.gmra.mrb[0].mxu0 %v3807
  %v4150 = vpop.f32.mrb[0].mxu0
  %v4151 = vadd.f32 0.0, %v4150
  %v4152 = vpop.f32.mrb[0].mxu0
  %v4153 = vpop.f32.mrb[0].mxu0
  %v4154 = vadd.f32 0.0, %v4153
  %v4155 = vpop.f32.mrb[0].mxu0
  %4156 = vmatprep.mubr.bf16.mxu0 %v3811
  %4157 = vmatmul.mubr.bf16.gmra.mrb[0].mxu0 %v3810
  %v4158 = vpop.f32.mrb[0].mxu0
  %v4159 = vadd.f32 0.0, %v4158
  %v4160 = vpop.f32.mrb[0].mxu0
  %v4161 = vpop.f32.mrb[0].mxu0
  %v4162 = vadd.f32 0.0, %v4161
  %v4163 = vpop.f32.mrb[0].mxu0
  %4164 = vmatprep.mubr.bf16.mxu0 %v3814
  %4165 = vmatmul.mubr.bf16.gmra.mrb[0].mxu0 %v3813
  %v4166 = vpop.f32.mrb[0].mxu0
  %v4167 = vadd.f32 0.0, %v4166
  %v4168 = vpop.f32.mrb[0].mxu0
  %v4169 = vpop.f32.mrb[0].mxu0
  %v4170 = vadd.f32 0.0, %v4169
  %v4171 = vpop.f32.mrb[0].mxu0
  %4172 = vmatprep.mubr.bf16.mxu0 %v3817
  %4173 = vmatmul.mubr.bf16.gmra.mrb[0].mxu0 %v3816
  %v4174 = vpop.f32.mrb[0].mxu0
  %v4175 = vadd.f32 0.0, %v4174
  %v4176 = vpop.f32.mrb[0].mxu0
  %v4177 = vpop.f32.mrb[0].mxu0
  %v4178 = vadd.f32 0.0, %v4177
  %v4179 = vpop.f32.mrb[0].mxu0
  %4180 = vmatprep.mubr.bf16.mxu0 %v3820
  %4181 = vmatmul.mubr.bf16.gmra.mrb[0].mxu0 %v3819
  %v4182 = vpop.f32.mrb[0].mxu0
  %v4183 = vadd.f32 0.0, %v4182
  %v4184 = vpop.f32.mrb[0].mxu0
  %v4185 = vpop.f32.mrb[0].mxu0
  %v4186 = vadd.f32 0.0, %v4185
  %v4187 = vpop.f32.mrb[0].mxu0
  %4188 = vmatprep.mubr.bf16.mxu0 %v3823
  %4189 = vmatmul.mubr.bf16.gmra.mrb[0].mxu0 %v3822
  %v4190 = vpop.f32.mrb[0].mxu0
  %v4191 = vadd.f32 0.0, %v4190
  %v4192 = vpop.f32.mrb[0].mxu0
  %v4193 = vpop.f32.mrb[0].mxu0
  %v4194 = vadd.f32 0.0, %v4193
  %v4195 = vpop.f32.mrb[0].mxu0
  %4196 = vmatprep.mubr.bf16.mxu0 %v3826
  %4197 = vmatmul.mubr.bf16.gmra.mrb[0].mxu0 %v3825
  %v4198 = vpop.f32.mrb[0].mxu0
  %v4199 = vadd.f32 0.0, %v4198
  %v4200 = vpop.f32.mrb[0].mxu0
  %v4201 = vpop.f32.mrb[0].mxu0
  %v4202 = vadd.f32 0.0, %v4201
  %v4203 = vpop.f32.mrb[0].mxu0
  %4204 = vmatprep.mubr.bf16.mxu0 %v3829
  %4205 = vmatmul.mubr.bf16.gmra.mrb[0].mxu0 %v3828
  %v4206 = vpop.f32.mrb[0].mxu0
  %v4207 = vadd.f32 0.0, %v4206
  %v4208 = vpop.f32.mrb[0].mxu0
  %v4209 = vpop.f32.mrb[0].mxu0
  %v4210 = vadd.f32 0.0, %v4209
  %v4211 = vpop.f32.mrb[0].mxu0
  %4212 = vmatprep.mubr.bf16.mxu0 %v3832
  %4213 = vmatmul.mubr.bf16.gmra.mrb[0].mxu0 %v3831
  %v4214 = vpop.f32.mrb[0].mxu0
  %v4215 = vadd.f32 0.0, %v4214
  %v4216 = vpop.f32.mrb[0].mxu0
  %v4217 = vpop.f32.mrb[0].mxu0
  %v4218 = vadd.f32 0.0, %v4217
  %v4219 = vpop.f32.mrb[0].mxu0
  %4220 = vmatprep.mubr.bf16.mxu0 %v3835
  %4221 = vmatmul.mubr.bf16.gmra.mrb[0].mxu0 %v3834
  %v4222 = vpop.f32.mrb[0].mxu0
  %v4223 = vadd.f32 0.0, %v4222
  %v4224 = vpop.f32.mrb[0].mxu0
  %v4225 = vpop.f32.mrb[0].mxu0
  %v4226 = vadd.f32 0.0, %v4225
  %v4227 = vpop.f32.mrb[0].mxu0
  %4228 = vmatprep.mubr.bf16.mxu0 %v3838
  %4229 = vmatmul.mubr.bf16.gmra.mrb[0].mxu0 %v3837
  %v4230 = vpop.f32.mrb[0].mxu0
  %v4231 = vadd.f32 0.0, %v4230
  %v4232 = vpop.f32.mrb[0].mxu0
  %v4233 = vpop.f32.mrb[0].mxu0
  %v4234 = vadd.f32 0.0, %v4233
  %v4235 = vpop.f32.mrb[0].mxu0
  %4236 = vmatprep.mubr.bf16.mxu0 %v3841
  %4237 = vmatmul.mubr.bf16.gmra.mrb[0].mxu0 %v3840
  %v4238 = vpop.f32.mrb[0].mxu0
  %v4239 = vadd.f32 0.0, %v4238
  %v4240 = vpop.f32.mrb[0].mxu0
  %v4241 = vpop.f32.mrb[0].mxu0
  %v4242 = vadd.f32 0.0, %v4241
  %v4243 = vpop.f32.mrb[0].mxu0
  %4244 = vmatprep.mubr.bf16.mxu0 %v3844
  %4245 = vmatmul.mubr.bf16.gmra.mrb[0].mxu0 %v3843
  %v4246 = vpop.f32.mrb[0].mxu0
  %v4247 = vadd.f32 0.0, %v4246
  %v4248 = vpop.f32.mrb[0].mxu0
  %v4249 = vpop.f32.mrb[0].mxu0
  %v4250 = vadd.f32 0.0, %v4249
  %v4251 = vpop.f32.mrb[0].mxu0
  %4252 = vmatprep.mubr.bf16.mxu0 %v3847
  %4253 = vmatmul.mubr.bf16.gmra.mrb[0].mxu0 %v3846
  %v4254 = vpop.f32.mrb[0].mxu0
  %v4255 = vadd.f32 0.0, %v4254
  %v4256 = vpop.f32.mrb[0].mxu0
  %v4257 = vpop.f32.mrb[0].mxu0
  %v4258 = vadd.f32 0.0, %v4257
  %v4259 = vpop.f32.mrb[0].mxu0
  %4260 = vmatprep.mubr.bf16.mxu0 %v3850
  %4261 = vmatmul.mubr.bf16.gmra.mrb[0].mxu0 %v3849
  %v4262 = vpop.f32.mrb[0].mxu0
  %v4263 = vadd.f32 0.0, %v4262
  %v4264 = vpop.f32.mrb[0].mxu0
  %v4265 = vpop.f32.mrb[0].mxu0
  %v4266 = vadd.f32 0.0, %v4265
  %v4267 = vpop.f32.mrb[0].mxu0
  %4268 = vmatprep.mubr.bf16.mxu0 %v3853
  %4269 = vmatmul.mubr.bf16.gmra.mrb[0].mxu0 %v3852
  %v4270 = vpop.f32.mrb[0].mxu0
  %v4271 = vadd.f32 0.0, %v4270
  %v4272 = vpop.f32.mrb[0].mxu0
  %v4273 = vpop.f32.mrb[0].mxu0
  %v4274 = vadd.f32 0.0, %v4273
  %v4275 = vpop.f32.mrb[0].mxu0
  %4276 = vmatprep.mubr.bf16.mxu0 %v3856
  %4277 = vmatmul.mubr.bf16.gmra.mrb[0].mxu0 %v3855
  %v4278 = vpop.f32.mrb[0].mxu0
  %v4279 = vadd.f32 0.0, %v4278
  %v4280 = vpop.f32.mrb[0].mxu0
  %v4281 = vpop.f32.mrb[0].mxu0
  %v4282 = vadd.f32 0.0, %v4281
  %v4283 = vpop.f32.mrb[0].mxu0
  %4284 = vmatprep.mubr.bf16.mxu0 %v3859
  %4285 = vmatmul.mubr.bf16.gmra.mrb[0].mxu0 %v3858
  %v4286 = vpop.f32.mrb[0].mxu0
  %v4287 = vadd.f32 0.0, %v4286
  %v4288 = vpop.f32.mrb[0].mxu0
  %v4289 = vpop.f32.mrb[0].mxu0
  %v4290 = vadd.f32 0.0, %v4289
  %v4291 = vpop.f32.mrb[0].mxu0
  %4292 = vmatprep.mubr.bf16.mxu0 %v3862
  %4293 = vmatmul.mubr.bf16.gmra.mrb[0].mxu0 %v3861
  %v4294 = vpop.f32.mrb[0].mxu0
  %v4295 = vadd.f32 0.0, %v4294
  %v4296 = vpop.f32.mrb[0].mxu0
  %v4297 = vpop.f32.mrb[0].mxu0
  %v4298 = vadd.f32 0.0, %v4297
  %v4299 = vpop.f32.mrb[0].mxu0
  %4300 = vmatprep.mubr.bf16.mxu0 %v3865
  %4301 = vmatmul.mubr.bf16.gmra.mrb[0].mxu0 %v3864
  %v4302 = vpop.f32.mrb[0].mxu0
  %v4303 = vadd.f32 0.0, %v4302
  %v4304 = vpop.f32.mrb[0].mxu0
  %v4305 = vpop.f32.mrb[0].mxu0
  %v4306 = vadd.f32 0.0, %v4305
  %v4307 = vpop.f32.mrb[0].mxu0
  %4308 = vmatprep.mubr.bf16.mxu0 %v3868
  %4309 = vmatmul.mubr.bf16.gmra.mrb[0].mxu0 %v3867
  %v4310 = vpop.f32.mrb[0].mxu0
  %v4311 = vadd.f32 0.0, %v4310
  %v4312 = vpop.f32.mrb[0].mxu0
  %v4313 = vpop.f32.mrb[0].mxu0
  %v4314 = vadd.f32 0.0, %v4313
  %v4315 = vpop.f32.mrb[0].mxu0
  %4316 = vmatprep.mubr.bf16.mxu0 %v3871
  %4317 = vmatmul.mubr.bf16.gmra.mrb[0].mxu0 %v3870
  %v4318 = vpop.f32.mrb[0].mxu0
  %v4319 = vadd.f32 0.0, %v4318
  %v4320 = vpop.f32.mrb[0].mxu0
  %v4321 = vpop.f32.mrb[0].mxu0
  %v4322 = vadd.f32 0.0, %v4321
  %v4323 = vpop.f32.mrb[0].mxu0
  %4324 = vmatprep.mubr.bf16.mxu0 %v3874
  %4325 = vmatmul.mubr.bf16.gmra.mrb[0].mxu0 %v3873
  %v4326 = vpop.f32.mrb[0].mxu0
  %v4327 = vadd.f32 0.0, %v4326
  %v4328 = vpop.f32.mrb[0].mxu0
  %v4329 = vpop.f32.mrb[0].mxu0
  %v4330 = vadd.f32 0.0, %v4329
  %v4331 = vpop.f32.mrb[0].mxu0
  %4332 = vmatprep.mubr.bf16.mxu0 %v3877
  %4333 = vmatmul.mubr.bf16.gmra.mrb[0].mxu0 %v3876
  %v4334 = vpop.f32.mrb[0].mxu0
  %v4335 = vadd.f32 0.0, %v4334
  %v4336 = vpop.f32.mrb[0].mxu0
  %v4337 = vpop.f32.mrb[0].mxu0
  %v4338 = vadd.f32 0.0, %v4337
  %v4339 = vpop.f32.mrb[0].mxu0
  %4340 = vmatprep.mubr.bf16.mxu0 %v3880
  %4341 = vmatmul.mubr.bf16.gmra.mrb[0].mxu0 %v3879
  %v4342 = vpop.f32.mrb[0].mxu0
  %v4343 = vadd.f32 0.0, %v4342
  %v4344 = vpop.f32.mrb[0].mxu0
  %v4345 = vpop.f32.mrb[0].mxu0
  %v4346 = vadd.f32 0.0, %v4345
  %v4347 = vpop.f32.mrb[0].mxu0
  %4348 = vmatprep.mubr.bf16.mxu0 %v3883
  %4349 = vmatmul.mubr.bf16.gmra.mrb[0].mxu0 %v3882
  %v4350 = vpop.f32.mrb[0].mxu0
  %v4351 = vadd.f32 0.0, %v4350
  %v4352 = vpop.f32.mrb[0].mxu0
  %v4353 = vpop.f32.mrb[0].mxu0
  %v4354 = vadd.f32 0.0, %v4353
  %v4355 = vpop.f32.mrb[0].mxu0
  %4356 = vmatprep.mubr.bf16.mxu0 %v3886
  %4357 = vmatmul.mubr.bf16.gmra.mrb[0].mxu0 %v3885
  %v4358 = vpop.f32.mrb[0].mxu0
  %v4359 = vadd.f32 0.0, %v4358
  %v4360 = vpop.f32.mrb[0].mxu0
  %v4361 = vpop.f32.mrb[0].mxu0
  %v4362 = vadd.f32 0.0, %v4361
  %v4363 = vpop.f32.mrb[0].mxu0
  %4364 = vmatprep.mubr.bf16.mxu0 %v3889
  %4365 = vmatmul.mubr.bf16.gmra.mrb[0].mxu0 %v3888
  %v4366 = vpop.f32.mrb[0].mxu0
  %v4367 = vadd.f32 0.0, %v4366
  %v4368 = vpop.f32.mrb[0].mxu0
  %v4369 = vpop.f32.mrb[0].mxu0
  %v4370 = vadd.f32 0.0, %v4369
  %v4371 = vpop.f32.mrb[0].mxu0
  %4372 = vdwg.mxu0
  %4373 = vmatprep.subr.bf16.mxu0 0
  %4374 = vmatpush1.bf16.msra.mxu0 %v4052
  %4375 = vmatprep.subr.bf16.mxu0 0
  %4376 = vmatpush1.bf16.msra.mxu0 %v4053
  %4377 = vmatprep.subr.bf16.mxu0 0
  %4378 = vmatpush1.bf16.msra.mxu0 %v4054
  %4379 = vmatprep.subr.bf16.mxu0 0
  %4380 = vmatpush1.bf16.msra.mxu0 %v4055
  %4381 = vmatprep.subr.bf16.mxu0 0
  %4382 = vmatpush1.bf16.msra.mxu0 %v4056
  %4383 = vmatprep.subr.bf16.mxu0 0
  %4384 = vmatpush1.bf16.msra.mxu0 %v4057
  %4385 = vmatprep.subr.bf16.mxu0 0
  %4386 = vmatpush1.bf16.msra.mxu0 %v4058
  %4387 = vmatprep.subr.bf16.mxu0 0
  %4388 = vmatpush1.bf16.msra.mxu0 %v4059
  %4389 = vmatprep.subr.bf16.mxu0 0
  %4390 = vmatpush1.bf16.msra.mxu0 0
  %4391 = vmatprep.subr.bf16.mxu0 0
  %4392 = vmatpush1.bf16.msra.mxu0 0
  %4393 = vmatprep.subr.bf16.mxu0 0
  %4394 = vmatpush1.bf16.msra.mxu0 0
  %4395 = vmatprep.subr.bf16.mxu0 0
  %4396 = vmatpush1.bf16.msra.mxu0 0
  %4397 = vmatprep.subr.bf16.mxu0 0
  %4398 = vmatpush1.bf16.msra.mxu0 0
  %4399 = vmatprep.subr.bf16.mxu0 0
  %4400 = vmatpush1.bf16.msra.mxu0 0
  %4401 = vmatprep.subr.bf16.mxu0 0
  %4402 = vmatpush1.bf16.msra.mxu0 0
  %4403 = vmatprep.subr.bf16.mxu0 0
  %4404 = vmatpush1.bf16.msra.mxu0 0
  %4405 = vmatprep.mubr.bf16.mxu0 0
  %4406 = vmatmul.mubr.bf16.gmra.mrb[0].mxu0 %v3797
  %v4407 = vpop.f32.mrb[0].mxu0
  %v4408 = vadd.f32 %v4119, %v4407
  %v4409 = vpop.f32.mrb[0].mxu0
  %v4410 = vpop.f32.mrb[0].mxu0
  %v4411 = vadd.f32 %v4122, %v4410
  %v4412 = vpop.f32.mrb[0].mxu0
  %4413 = vmatprep.mubr.bf16.mxu0 0
  %4414 = vmatmul.mubr.bf16.gmra.mrb[0].mxu0 %v3800
  %v4415 = vpop.f32.mrb[0].mxu0
  %v4416 = vadd.f32 %v4127, %v4415
  %v4417 = vpop.f32.mrb[0].mxu0
  %v4418 = vpop.f32.mrb[0].mxu0
  %v4419 = vadd.f32 %v4130, %v4418
  %v4420 = vpop.f32.mrb[0].mxu0
  %4421 = vmatprep.mubr.bf16.mxu0 0
  %4422 = vmatmul.mubr.bf16.gmra.mrb[0].mxu0 %v3803
  %v4423 = vpop.f32.mrb[0].mxu0
  %v4424 = vadd.f32 %v4135, %v4423
  %v4425 = vpop.f32.mrb[0].mxu0
  %v4426 = vpop.f32.mrb[0].mxu0
  %v4427 = vadd.f32 %v4138, %v4426
  %v4428 = vpop.f32.mrb[0].mxu0
  %4429 = vmatprep.mubr.bf16.mxu0 0
  %4430 = vmatmul.mubr.bf16.gmra.mrb[0].mxu0 %v3806
  %v4431 = vpop.f32.mrb[0].mxu0
  %v4432 = vadd.f32 %v4143, %v4431
  %v4433 = vpop.f32.mrb[0].mxu0
  %v4434 = vpop.f32.mrb[0].mxu0
  %v4435 = vadd.f32 %v4146, %v4434
  %v4436 = vpop.f32.mrb[0].mxu0
  %4437 = vmatprep.mubr.bf16.mxu0 0
  %4438 = vmatmul.mubr.bf16.gmra.mrb[0].mxu0 %v3809
  %v4439 = vpop.f32.mrb[0].mxu0
  %v4440 = vadd.f32 %v4151, %v4439
  %v4441 = vpop.f32.mrb[0].mxu0
  %v4442 = vpop.f32.mrb[0].mxu0
  %v4443 = vadd.f32 %v4154, %v4442
  %v4444 = vpop.f32.mrb[0].mxu0
  %4445 = vmatprep.mubr.bf16.mxu0 0
  %4446 = vmatmul.mubr.bf16.gmra.mrb[0].mxu0 %v3812
  %v4447 = vpop.f32.mrb[0].mxu0
  %v4448 = vadd.f32 %v4159, %v4447
  %v4449 = vpop.f32.mrb[0].mxu0
  %v4450 = vpop.f32.mrb[0].mxu0
  %v4451 = vadd.f32 %v4162, %v4450
  %v4452 = vpop.f32.mrb[0].mxu0
  %4453 = vmatprep.mubr.bf16.mxu0 0
  %4454 = vmatmul.mubr.bf16.gmra.mrb[0].mxu0 %v3815
  %v4455 = vpop.f32.mrb[0].mxu0
  %v4456 = vadd.f32 %v4167, %v4455
  %v4457 = vpop.f32.mrb[0].mxu0
  %v4458 = vpop.f32.mrb[0].mxu0
  %v4459 = vadd.f32 %v4170, %v4458
  %v4460 = vpop.f32.mrb[0].mxu0
  %4461 = vmatprep.mubr.bf16.mxu0 0
  %4462 = vmatmul.mubr.bf16.gmra.mrb[0].mxu0 %v3818
  %v4463 = vpop.f32.mrb[0].mxu0
  %v4464 = vadd.f32 %v4175, %v4463
  %v4465 = vpop.f32.mrb[0].mxu0
  %v4466 = vpop.f32.mrb[0].mxu0
  %v4467 = vadd.f32 %v4178, %v4466
  %v4468 = vpop.f32.mrb[0].mxu0
  %4469 = vmatprep.mubr.bf16.mxu0 0
  %4470 = vmatmul.mubr.bf16.gmra.mrb[0].mxu0 %v3821
  %v4471 = vpop.f32.mrb[0].mxu0
  %v4472 = vadd.f32 %v4183, %v4471
  %v4473 = vpop.f32.mrb[0].mxu0
  %v4474 = vpop.f32.mrb[0].mxu0
  %v4475 = vadd.f32 %v4186, %v4474
  %v4476 = vpop.f32.mrb[0].mxu0
  %4477 = vmatprep.mubr.bf16.mxu0 0
  %4478 = vmatmul.mubr.bf16.gmra.mrb[0].mxu0 %v3824
  %v4479 = vpop.f32.mrb[0].mxu0
  %v4480 = vadd.f32 %v4191, %v4479
  %v4481 = vpop.f32.mrb[0].mxu0
  %v4482 = vpop.f32.mrb[0].mxu0
  %v4483 = vadd.f32 %v4194, %v4482
  %v4484 = vpop.f32.mrb[0].mxu0
  %4485 = vmatprep.mubr.bf16.mxu0 0
  %4486 = vmatmul.mubr.bf16.gmra.mrb[0].mxu0 %v3827
  %v4487 = vpop.f32.mrb[0].mxu0
  %v4488 = vadd.f32 %v4199, %v4487
  %v4489 = vpop.f32.mrb[0].mxu0
  %v4490 = vpop.f32.mrb[0].mxu0
  %v4491 = vadd.f32 %v4202, %v4490
  %v4492 = vpop.f32.mrb[0].mxu0
  %4493 = vmatprep.mubr.bf16.mxu0 0
  %4494 = vmatmul.mubr.bf16.gmra.mrb[0].mxu0 %v3830
  %v4495 = vpop.f32.mrb[0].mxu0
  %v4496 = vadd.f32 %v4207, %v4495
  %v4497 = vpop.f32.mrb[0].mxu0
  %v4498 = vpop.f32.mrb[0].mxu0
  %v4499 = vadd.f32 %v4210, %v4498
  %v4500 = vpop.f32.mrb[0].mxu0
  %4501 = vmatprep.mubr.bf16.mxu0 0
  %4502 = vmatmul.mubr.bf16.gmra.mrb[0].mxu0 %v3833
  %v4503 = vpop.f32.mrb[0].mxu0
  %v4504 = vadd.f32 %v4215, %v4503
  %v4505 = vpop.f32.mrb[0].mxu0
  %v4506 = vpop.f32.mrb[0].mxu0
  %v4507 = vadd.f32 %v4218, %v4506
  %v4508 = vpop.f32.mrb[0].mxu0
  %4509 = vmatprep.mubr.bf16.mxu0 0
  %4510 = vmatmul.mubr.bf16.gmra.mrb[0].mxu0 %v3836
  %v4511 = vpop.f32.mrb[0].mxu0
  %v4512 = vadd.f32 %v4223, %v4511
  %v4513 = vpop.f32.mrb[0].mxu0
  %v4514 = vpop.f32.mrb[0].mxu0
  %v4515 = vadd.f32 %v4226, %v4514
  %v4516 = vpop.f32.mrb[0].mxu0
  %4517 = vmatprep.mubr.bf16.mxu0 0
  %4518 = vmatmul.mubr.bf16.gmra.mrb[0].mxu0 %v3839
  %v4519 = vpop.f32.mrb[0].mxu0
  %v4520 = vadd.f32 %v4231, %v4519
  %v4521 = vpop.f32.mrb[0].mxu0
  %v4522 = vpop.f32.mrb[0].mxu0
  %v4523 = vadd.f32 %v4234, %v4522
  %v4524 = vpop.f32.mrb[0].mxu0
  %4525 = vmatprep.mubr.bf16.mxu0 0
  %4526 = vmatmul.mubr.bf16.gmra.mrb[0].mxu0 %v3842
  %v4527 = vpop.f32.mrb[0].mxu0
  %v4528 = vadd.f32 %v4239, %v4527
  %v4529 = vpop.f32.mrb[0].mxu0
  %v4530 = vpop.f32.mrb[0].mxu0
  %v4531 = vadd.f32 %v4242, %v4530
  %v4532 = vpop.f32.mrb[0].mxu0
  %4533 = vmatprep.mubr.bf16.mxu0 0
  %4534 = vmatmul.mubr.bf16.gmra.mrb[0].mxu0 %v3845
  %v4535 = vpop.f32.mrb[0].mxu0
  %v4536 = vadd.f32 %v4247, %v4535
  %v4537 = vpop.f32.mrb[0].mxu0
  %v4538 = vpop.f32.mrb[0].mxu0
  %v4539 = vadd.f32 %v4250, %v4538
  %v4540 = vpop.f32.mrb[0].mxu0
  %4541 = vmatprep.mubr.bf16.mxu0 0
  %4542 = vmatmul.mubr.bf16.gmra.mrb[0].mxu0 %v3848
  %v4543 = vpop.f32.mrb[0].mxu0
  %v4544 = vadd.f32 %v4255, %v4543
  %v4545 = vpop.f32.mrb[0].mxu0
  %v4546 = vpop.f32.mrb[0].mxu0
  %v4547 = vadd.f32 %v4258, %v4546
  %v4548 = vpop.f32.mrb[0].mxu0
  %4549 = vmatprep.mubr.bf16.mxu0 0
  %4550 = vmatmul.mubr.bf16.gmra.mrb[0].mxu0 %v3851
  %v4551 = vpop.f32.mrb[0].mxu0
  %v4552 = vadd.f32 %v4263, %v4551
  %v4553 = vpop.f32.mrb[0].mxu0
  %v4554 = vpop.f32.mrb[0].mxu0
  %v4555 = vadd.f32 %v4266, %v4554
  %v4556 = vpop.f32.mrb[0].mxu0
  %4557 = vmatprep.mubr.bf16.mxu0 0
  %4558 = vmatmul.mubr.bf16.gmra.mrb[0].mxu0 %v3854
  %v4559 = vpop.f32.mrb[0].mxu0
  %v4560 = vadd.f32 %v4271, %v4559
  %v4561 = vpop.f32.mrb[0].mxu0
  %v4562 = vpop.f32.mrb[0].mxu0
  %v4563 = vadd.f32 %v4274, %v4562
  %v4564 = vpop.f32.mrb[0].mxu0
  %4565 = vmatprep.mubr.bf16.mxu0 0
  %4566 = vmatmul.mubr.bf16.gmra.mrb[0].mxu0 %v3857
  %v4567 = vpop.f32.mrb[0].mxu0
  %v4568 = vadd.f32 %v4279, %v4567
  %v4569 = vpop.f32.mrb[0].mxu0
  %v4570 = vpop.f32.mrb[0].mxu0
  %v4571 = vadd.f32 %v4282, %v4570
  %v4572 = vpop.f32.mrb[0].mxu0
  %4573 = vmatprep.mubr.bf16.mxu0 0
  %4574 = vmatmul.mubr.bf16.gmra.mrb[0].mxu0 %v3860
  %v4575 = vpop.f32.mrb[0].mxu0
  %v4576 = vadd.f32 %v4287, %v4575
  %v4577 = vpop.f32.mrb[0].mxu0
  %v4578 = vpop.f32.mrb[0].mxu0
  %v4579 = vadd.f32 %v4290, %v4578
  %v4580 = vpop.f32.mrb[0].mxu0
  %4581 = vmatprep.mubr.bf16.mxu0 0
  %4582 = vmatmul.mubr.bf16.gmra.mrb[0].mxu0 %v3863
  %v4583 = vpop.f32.mrb[0].mxu0
  %v4584 = vadd.f32 %v4295, %v4583
  %v4585 = vpop.f32.mrb[0].mxu0
  %v4586 = vpop.f32.mrb[0].mxu0
  %v4587 = vadd.f32 %v4298, %v4586
  %v4588 = vpop.f32.mrb[0].mxu0
  %4589 = vmatprep.mubr.bf16.mxu0 0
  %4590 = vmatmul.mubr.bf16.gmra.mrb[0].mxu0 %v3866
  %v4591 = vpop.f32.mrb[0].mxu0
  %v4592 = vadd.f32 %v4303, %v4591
  %v4593 = vpop.f32.mrb[0].mxu0
  %v4594 = vpop.f32.mrb[0].mxu0
  %v4595 = vadd.f32 %v4306, %v4594
  %v4596 = vpop.f32.mrb[0].mxu0
  %4597 = vmatprep.mubr.bf16.mxu0 0
  %4598 = vmatmul.mubr.bf16.gmra.mrb[0].mxu0 %v3869
  %v4599 = vpop.f32.mrb[0].mxu0
  %v4600 = vadd.f32 %v4311, %v4599
  %v4601 = vpop.f32.mrb[0].mxu0
  %v4602 = vpop.f32.mrb[0].mxu0
  %v4603 = vadd.f32 %v4314, %v4602
  %v4604 = vpop.f32.mrb[0].mxu0
  %4605 = vmatprep.mubr.bf16.mxu0 0
  %4606 = vmatmul.mubr.bf16.gmra.mrb[0].mxu0 %v3872
  %v4607 = vpop.f32.mrb[0].mxu0
  %v4608 = vadd.f32 %v4319, %v4607
  %v4609 = vpop.f32.mrb[0].mxu0
  %v4610 = vpop.f32.mrb[0].mxu0
  %v4611 = vadd.f32 %v4322, %v4610
  %v4612 = vpop.f32.mrb[0].mxu0
  %4613 = vmatprep.mubr.bf16.mxu0 0
  %4614 = vmatmul.mubr.bf16.gmra.mrb[0].mxu0 %v3875
  %v4615 = vpop.f32.mrb[0].mxu0
  %v4616 = vadd.f32 %v4327, %v4615
  %v4617 = vpop.f32.mrb[0].mxu0
  %v4618 = vpop.f32.mrb[0].mxu0
  %v4619 = vadd.f32 %v4330, %v4618
  %v4620 = vpop.f32.mrb[0].mxu0
  %4621 = vmatprep.mubr.bf16.mxu0 0
  %4622 = vmatmul.mubr.bf16.gmra.mrb[0].mxu0 %v3878
  %v4623 = vpop.f32.mrb[0].mxu0
  %v4624 = vadd.f32 %v4335, %v4623
  %v4625 = vpop.f32.mrb[0].mxu0
  %v4626 = vpop.f32.mrb[0].mxu0
  %v4627 = vadd.f32 %v4338, %v4626
  %v4628 = vpop.f32.mrb[0].mxu0
  %4629 = vmatprep.mubr.bf16.mxu0 0
  %4630 = vmatmul.mubr.bf16.gmra.mrb[0].mxu0 %v3881
  %v4631 = vpop.f32.mrb[0].mxu0
  %v4632 = vadd.f32 %v4343, %v4631
  %v4633 = vpop.f32.mrb[0].mxu0
  %v4634 = vpop.f32.mrb[0].mxu0
  %v4635 = vadd.f32 %v4346, %v4634
  %v4636 = vpop.f32.mrb[0].mxu0
  %4637 = vmatprep.mubr.bf16.mxu0 0
  %4638 = vmatmul.mubr.bf16.gmra.mrb[0].mxu0 %v3884
  %v4639 = vpop.f32.mrb[0].mxu0
  %v4640 = vadd.f32 %v4351, %v4639
  %v4641 = vpop.f32.mrb[0].mxu0
  %v4642 = vpop.f32.mrb[0].mxu0
  %v4643 = vadd.f32 %v4354, %v4642
  %v4644 = vpop.f32.mrb[0].mxu0
  %4645 = vmatprep.mubr.bf16.mxu0 0
  %4646 = vmatmul.mubr.bf16.gmra.mrb[0].mxu0 %v3887
  %v4647 = vpop.f32.mrb[0].mxu0
  %v4648 = vadd.f32 %v4359, %v4647
  %v4649 = vpop.f32.mrb[0].mxu0
  %v4650 = vpop.f32.mrb[0].mxu0
  %v4651 = vadd.f32 %v4362, %v4650
  %v4652 = vpop.f32.mrb[0].mxu0
  %4653 = vmatprep.mubr.bf16.mxu0 0
  %4654 = vmatmul.mubr.bf16.gmra.mrb[0].mxu0 %v3890
  %v4655 = vpop.f32.mrb[0].mxu0
  %v4656 = vadd.f32 %v4367, %v4655
  %v4657 = vpop.f32.mrb[0].mxu0
  %v4658 = vpop.f32.mrb[0].mxu0
  %v4659 = vadd.f32 %v4370, %v4658
  %v4660 = vpop.f32.mrb[0].mxu0
  %4661 = vdwg.mxu0
  %v4662 = vadd.f32 %v3730, %v4408
  %v4663 = vadd.f32 %v3731, %v4411
  %v4664 = vadd.f32 %v3732, %v4416
  %v4665 = vadd.f32 %v3733, %v4419
  %v4666 = vadd.f32 %v3734, %v4424
  %v4667 = vadd.f32 %v3735, %v4427
  %v4668 = vadd.f32 %v3736, %v4432
  %v4669 = vadd.f32 %v3737, %v4435
  %v4670 = vadd.f32 %v3738, %v4440
  %v4671 = vadd.f32 %v3739, %v4443
  %v4672 = vadd.f32 %v3740, %v4448
  %v4673 = vadd.f32 %v3741, %v4451
  %v4674 = vadd.f32 %v3742, %v4456
  %v4675 = vadd.f32 %v3743, %v4459
  %v4676 = vadd.f32 %v3744, %v4464
  %v4677 = vadd.f32 %v3745, %v4467
  %v4678 = vadd.f32 %v3746, %v4472
  %v4679 = vadd.f32 %v3747, %v4475
  %v4680 = vadd.f32 %v3748, %v4480
  %v4681 = vadd.f32 %v3749, %v4483
  %v4682 = vadd.f32 %v3750, %v4488
  %v4683 = vadd.f32 %v3751, %v4491
  %v4684 = vadd.f32 %v3752, %v4496
  %v4685 = vadd.f32 %v3753, %v4499
  %v4686 = vadd.f32 %v3754, %v4504
  %v4687 = vadd.f32 %v3755, %v4507
  %v4688 = vadd.f32 %v3756, %v4512
  %v4689 = vadd.f32 %v3757, %v4515
  %v4690 = vadd.f32 %v3758, %v4520
  %v4691 = vadd.f32 %v3759, %v4523
  %v4692 = vadd.f32 %v3760, %v4528
  %v4693 = vadd.f32 %v3761, %v4531
  %v4694 = vadd.f32 %v3762, %v4536
  %v4695 = vadd.f32 %v3763, %v4539
  %v4696 = vadd.f32 %v3764, %v4544
  %v4697 = vadd.f32 %v3765, %v4547
  %v4698 = vadd.f32 %v3766, %v4552
  %v4699 = vadd.f32 %v3767, %v4555
  %v4700 = vadd.f32 %v3768, %v4560
  %v4701 = vadd.f32 %v3769, %v4563
  %v4702 = vadd.f32 %v3770, %v4568
  %v4703 = vadd.f32 %v3771, %v4571
  %v4704 = vadd.f32 %v3772, %v4576
  %v4705 = vadd.f32 %v3773, %v4579
  %v4706 = vadd.f32 %v3774, %v4584
  %v4707 = vadd.f32 %v3775, %v4587
  %v4708 = vadd.f32 %v3776, %v4592
  %v4709 = vadd.f32 %v3777, %v4595
  %v4710 = vadd.f32 %v3778, %v4600
  %v4711 = vadd.f32 %v3779, %v4603
  %v4712 = vadd.f32 %v3780, %v4608
  %v4713 = vadd.f32 %v3781, %v4611
  %v4714 = vadd.f32 %v3782, %v4616
  %v4715 = vadd.f32 %v3783, %v4619
  %v4716 = vadd.f32 %v3784, %v4624
  %v4717 = vadd.f32 %v3785, %v4627
  %v4718 = vadd.f32 %v3786, %v4632
  %v4719 = vadd.f32 %v3787, %v4635
  %v4720 = vadd.f32 %v3788, %v4640
  %v4721 = vadd.f32 %v3789, %v4643
  %v4722 = vadd.f32 %v3790, %v4648
  %v4723 = vadd.f32 %v3791, %v4651
  %v4724 = vadd.f32 %v3792, %v4656
  %v4725 = vadd.f32 %v3793, %v4659
  %4726 = vst.msk [vmem:[#allocation3] sm:$0xff] %vm2606, %v4662
  %4727 = vst.msk [vmem:[#allocation3 + $0x8] sm:$0xff] %vm2606, %v4663
  %4728 = vst.msk [vmem:[#allocation3 + $0x10] sm:$0xff] %vm2606, %v4664
  %4729 = vst.msk [vmem:[#allocation3 + $0x18] sm:$0xff] %vm2606, %v4665
  %4730 = vst.msk [vmem:[#allocation3 + $0x20] sm:$0xff] %vm2606, %v4666
  %4731 = vst.msk [vmem:[#allocation3 + $0x28] sm:$0xff] %vm2606, %v4667
  %4732 = vst.msk [vmem:[#allocation3 + $0x30] sm:$0xff] %vm2606, %v4668
  %4733 = vst.msk [vmem:[#allocation3 + $0x38] sm:$0xff] %vm2606, %v4669
  %4734 = vst.msk [vmem:[#allocation3 + $0x40] sm:$0xff] %vm2606, %v4670
  %4735 = vst.msk [vmem:[#allocation3 + $0x48] sm:$0xff] %vm2606, %v4671
  %4736 = vst.msk [vmem:[#allocation3 + $0x50] sm:$0xff] %vm2606, %v4672
  %4737 = vst.msk [vmem:[#allocation3 + $0x58] sm:$0xff] %vm2606, %v4673
  %4738 = vst.msk [vmem:[#allocation3 + $0x60] sm:$0xff] %vm2606, %v4674
  %4739 = vst.msk [vmem:[#allocation3 + $0x68] sm:$0xff] %vm2606, %v4675
  %4740 = vst.msk [vmem:[#allocation3 + $0x70] sm:$0xff] %vm2606, %v4676
  %4741 = vst.msk [vmem:[#allocation3 + $0x78] sm:$0xff] %vm2606, %v4677
  %4742 = vst.msk [vmem:[#allocation3 + $0x80] sm:$0xff] %vm2606, %v4678
  %4743 = vst.msk [vmem:[#allocation3 + $0x88] sm:$0xff] %vm2606, %v4679
  %4744 = vst.msk [vmem:[#allocation3 + $0x90] sm:$0xff] %vm2606, %v4680
  %4745 = vst.msk [vmem:[#allocation3 + $0x98] sm:$0xff] %vm2606, %v4681
  %4746 = vst.msk [vmem:[#allocation3 + $0xa0] sm:$0xff] %vm2606, %v4682
  %4747 = vst.msk [vmem:[#allocation3 + $0xa8] sm:$0xff] %vm2606, %v4683
  %4748 = vst.msk [vmem:[#allocation3 + $0xb0] sm:$0xff] %vm2606, %v4684
  %4749 = vst.msk [vmem:[#allocation3 + $0xb8] sm:$0xff] %vm2606, %v4685
  %4750 = vst.msk [vmem:[#allocation3 + $0xc0] sm:$0xff] %vm2606, %v4686
  %4751 = vst.msk [vmem:[#allocation3 + $0xc8] sm:$0xff] %vm2606, %v4687
  %4752 = vst.msk [vmem:[#allocation3 + $0xd0] sm:$0xff] %vm2606, %v4688
  %4753 = vst.msk [vmem:[#allocation3 + $0xd8] sm:$0xff] %vm2606, %v4689
  %4754 = vst.msk [vmem:[#allocation3 + $0xe0] sm:$0xff] %vm2606, %v4690
  %4755 = vst.msk [vmem:[#allocation3 + $0xe8] sm:$0xff] %vm2606, %v4691
  %4756 = vst.msk [vmem:[#allocation3 + $0xf0] sm:$0xff] %vm2606, %v4692
  %4757 = vst.msk [vmem:[#allocation3 + $0xf8] sm:$0xff] %vm2606, %v4693
  %4758 = vst.msk [vmem:[#allocation3 + $0x100] sm:$0xff] %vm2606, %v4694
  %4759 = vst.msk [vmem:[#allocation3 + $0x108] sm:$0xff] %vm2606, %v4695
  %4760 = vst.msk [vmem:[#allocation3 + $0x110] sm:$0xff] %vm2606, %v4696
  %4761 = vst.msk [vmem:[#allocation3 + $0x118] sm:$0xff] %vm2606, %v4697
  %4762 = vst.msk [vmem:[#allocation3 + $0x120] sm:$0xff] %vm2606, %v4698
  %4763 = vst.msk [vmem:[#allocation3 + $0x128] sm:$0xff] %vm2606, %v4699
  %4764 = vst.msk [vmem:[#allocation3 + $0x130] sm:$0xff] %vm2606, %v4700
  %4765 = vst.msk [vmem:[#allocation3 + $0x138] sm:$0xff] %vm2606, %v4701
  %4766 = vst.msk [vmem:[#allocation3 + $0x140] sm:$0xff] %vm2606, %v4702
  %4767 = vst.msk [vmem:[#allocation3 + $0x148] sm:$0xff] %vm2606, %v4703
  %4768 = vst.msk [vmem:[#allocation3 + $0x150] sm:$0xff] %vm2606, %v4704
  %4769 = vst.msk [vmem:[#allocation3 + $0x158] sm:$0xff] %vm2606, %v4705
  %4770 = vst.msk [vmem:[#allocation3 + $0x160] sm:$0xff] %vm2606, %v4706
  %4771 = vst.msk [vmem:[#allocation3 + $0x168] sm:$0xff] %vm2606, %v4707
  %4772 = vst.msk [vmem:[#allocation3 + $0x170] sm:$0xff] %vm2606, %v4708
  %4773 = vst.msk [vmem:[#allocation3 + $0x178] sm:$0xff] %vm2606, %v4709
  %4774 = vst.msk [vmem:[#allocation3 + $0x180] sm:$0xff] %vm2606, %v4710
  %4775 = vst.msk [vmem:[#allocation3 + $0x188] sm:$0xff] %vm2606, %v4711
  %4776 = vst.msk [vmem:[#allocation3 + $0x190] sm:$0xff] %vm2606, %v4712
  %4777 = vst.msk [vmem:[#allocation3 + $0x198] sm:$0xff] %vm2606, %v4713
  %4778 = vst.msk [vmem:[#allocation3 + $0x1a0] sm:$0xff] %vm2606, %v4714
  %4779 = vst.msk [vmem:[#allocation3 + $0x1a8] sm:$0xff] %vm2606, %v4715
  %4780 = vst.msk [vmem:[#allocation3 + $0x1b0] sm:$0xff] %vm2606, %v4716
  %4781 = vst.msk [vmem:[#allocation3 + $0x1b8] sm:$0xff] %vm2606, %v4717
  %4782 = vst.msk [vmem:[#allocation3 + $0x1c0] sm:$0xff] %vm2606, %v4718
  %4783 = vst.msk [vmem:[#allocation3 + $0x1c8] sm:$0xff] %vm2606, %v4719
  %4784 = vst.msk [vmem:[#allocation3 + $0x1d0] sm:$0xff] %vm2606, %v4720
  %4785 = vst.msk [vmem:[#allocation3 + $0x1d8] sm:$0xff] %vm2606, %v4721
  %4786 = vst.msk [vmem:[#allocation3 + $0x1e0] sm:$0xff] %vm2606, %v4722
  %4787 = vst.msk [vmem:[#allocation3 + $0x1e8] sm:$0xff] %vm2606, %v4723
  %4788 = vst.msk [vmem:[#allocation3 + $0x1f0] sm:$0xff] %vm2606, %v4724
  %4789 = vst.msk [vmem:[#allocation3 + $0x1f8] sm:$0xff] %vm2606, %v4725
  %v4790 = vld [vmem:[#allocation3] sm:$0xff]
  %v4791 = vld [vmem:[#allocation3 + $0x8] sm:$0xff]
  %v4792 = vld [vmem:[#allocation3 + $0x10] sm:$0xff]
  %v4793 = vld [vmem:[#allocation3 + $0x18] sm:$0xff]
  %v4794 = vld [vmem:[#allocation3 + $0x20] sm:$0xff]
  %v4795 = vld [vmem:[#allocation3 + $0x28] sm:$0xff]
  %v4796 = vld [vmem:[#allocation3 + $0x30] sm:$0xff]
  %v4797 = vld [vmem:[#allocation3 + $0x38] sm:$0xff]
  %v4798 = vld [vmem:[#allocation3 + $0x40] sm:$0xff]
  %v4799 = vld [vmem:[#allocation3 + $0x48] sm:$0xff]
  %v4800 = vld [vmem:[#allocation3 + $0x50] sm:$0xff]
  %v4801 = vld [vmem:[#allocation3 + $0x58] sm:$0xff]
  %v4802 = vld [vmem:[#allocation3 + $0x60] sm:$0xff]
  %v4803 = vld [vmem:[#allocation3 + $0x68] sm:$0xff]
  %v4804 = vld [vmem:[#allocation3 + $0x70] sm:$0xff]
  %v4805 = vld [vmem:[#allocation3 + $0x78] sm:$0xff]
  %v4806 = vld [vmem:[#allocation3 + $0x80] sm:$0xff]
  %v4807 = vld [vmem:[#allocation3 + $0x88] sm:$0xff]
  %v4808 = vld [vmem:[#allocation3 + $0x90] sm:$0xff]
  %v4809 = vld [vmem:[#allocation3 + $0x98] sm:$0xff]
  %v4810 = vld [vmem:[#allocation3 + $0xa0] sm:$0xff]
  %v4811 = vld [vmem:[#allocation3 + $0xa8] sm:$0xff]
  %v4812 = vld [vmem:[#allocation3 + $0xb0] sm:$0xff]
  %v4813 = vld [vmem:[#allocation3 + $0xb8] sm:$0xff]
  %v4814 = vld [vmem:[#allocation3 + $0xc0] sm:$0xff]
  %v4815 = vld [vmem:[#allocation3 + $0xc8] sm:$0xff]
  %v4816 = vld [vmem:[#allocation3 + $0xd0] sm:$0xff]
  %v4817 = vld [vmem:[#allocation3 + $0xd8] sm:$0xff]
  %v4818 = vld [vmem:[#allocation3 + $0xe0] sm:$0xff]
  %v4819 = vld [vmem:[#allocation3 + $0xe8] sm:$0xff]
  %v4820 = vld [vmem:[#allocation3 + $0xf0] sm:$0xff]
  %v4821 = vld [vmem:[#allocation3 + $0xf8] sm:$0xff]
  %v4822 = vld [vmem:[#allocation3 + $0x100] sm:$0xff]
  %v4823 = vld [vmem:[#allocation3 + $0x108] sm:$0xff]
  %v4824 = vld [vmem:[#allocation3 + $0x110] sm:$0xff]
  %v4825 = vld [vmem:[#allocation3 + $0x118] sm:$0xff]
  %v4826 = vld [vmem:[#allocation3 + $0x120] sm:$0xff]
  %v4827 = vld [vmem:[#allocation3 + $0x128] sm:$0xff]
  %v4828 = vld [vmem:[#allocation3 + $0x130] sm:$0xff]
  %v4829 = vld [vmem:[#allocation3 + $0x138] sm:$0xff]
  %v4830 = vld [vmem:[#allocation3 + $0x140] sm:$0xff]
  %v4831 = vld [vmem:[#allocation3 + $0x148] sm:$0xff]
  %v4832 = vld [vmem:[#allocation3 + $0x150] sm:$0xff]
  %v4833 = vld [vmem:[#allocation3 + $0x158] sm:$0xff]
  %v4834 = vld [vmem:[#allocation3 + $0x160] sm:$0xff]
  %v4835 = vld [vmem:[#allocation3 + $0x168] sm:$0xff]
  %v4836 = vld [vmem:[#allocation3 + $0x170] sm:$0xff]
  %v4837 = vld [vmem:[#allocation3 + $0x178] sm:$0xff]
  %v4838 = vld [vmem:[#allocation3 + $0x180] sm:$0xff]
  %v4839 = vld [vmem:[#allocation3 + $0x188] sm:$0xff]
  %v4840 = vld [vmem:[#allocation3 + $0x190] sm:$0xff]
  %v4841 = vld [vmem:[#allocation3 + $0x198] sm:$0xff]
  %v4842 = vld [vmem:[#allocation3 + $0x1a0] sm:$0xff]
  %v4843 = vld [vmem:[#allocation3 + $0x1a8] sm:$0xff]
  %v4844 = vld [vmem:[#allocation3 + $0x1b0] sm:$0xff]
  %v4845 = vld [vmem:[#allocation3 + $0x1b8] sm:$0xff]
  %v4846 = vld [vmem:[#allocation3 + $0x1c0] sm:$0xff]
  %v4847 = vld [vmem:[#allocation3 + $0x1c8] sm:$0xff]
  %v4848 = vld [vmem:[#allocation3 + $0x1d0] sm:$0xff]
  %v4849 = vld [vmem:[#allocation3 + $0x1d8] sm:$0xff]
  %v4850 = vld [vmem:[#allocation3 + $0x1e0] sm:$0xff]
  %v4851 = vld [vmem:[#allocation3 + $0x1e8] sm:$0xff]
  %v4852 = vld [vmem:[#allocation3 + $0x1f0] sm:$0xff]
  %v4853 = vld [vmem:[#allocation3 + $0x1f8] sm:$0xff]
  %4918 = vrot.lane.b32.xlu0 %v4790, 4
  %v4919 = vpop.permute.xlu0 %4918
  %4920 = vrot.lane.b32.xlu0 %v4791, 4
  %v4921 = vpop.permute.xlu0 %4920
  %4922 = vrot.lane.b32.xlu0 %v4792, 4
  %v4923 = vpop.permute.xlu0 %4922
  %4924 = vrot.lane.b32.xlu0 %v4793, 4
  %v4925 = vpop.permute.xlu0 %4924
  %4926 = vrot.lane.b32.xlu0 %v4794, 4
  %v4927 = vpop.permute.xlu0 %4926
  %4928 = vrot.lane.b32.xlu0 %v4795, 4
  %v4929 = vpop.permute.xlu0 %4928
  %4930 = vrot.lane.b32.xlu0 %v4796, 4
  %v4931 = vpop.permute.xlu0 %4930
  %4932 = vrot.lane.b32.xlu0 %v4797, 4
  %v4933 = vpop.permute.xlu0 %4932
  %4934 = vrot.lane.b32.xlu0 %v4798, 4
  %v4935 = vpop.permute.xlu0 %4934
  %4936 = vrot.lane.b32.xlu0 %v4799, 4
  %v4937 = vpop.permute.xlu0 %4936
  %4938 = vrot.lane.b32.xlu0 %v4800, 4
  %v4939 = vpop.permute.xlu0 %4938
  %4940 = vrot.lane.b32.xlu0 %v4801, 4
  %v4941 = vpop.permute.xlu0 %4940
  %4942 = vrot.lane.b32.xlu0 %v4802, 4
  %v4943 = vpop.permute.xlu0 %4942
  %4944 = vrot.lane.b32.xlu0 %v4803, 4
  %v4945 = vpop.permute.xlu0 %4944
  %4946 = vrot.lane.b32.xlu0 %v4804, 4
  %v4947 = vpop.permute.xlu0 %4946
  %4948 = vrot.lane.b32.xlu0 %v4805, 4
  %v4949 = vpop.permute.xlu0 %4948
  %4950 = vrot.lane.b32.xlu0 %v4806, 4
  %v4951 = vpop.permute.xlu0 %4950
  %4952 = vrot.lane.b32.xlu0 %v4807, 4
  %v4953 = vpop.permute.xlu0 %4952
  %4954 = vrot.lane.b32.xlu0 %v4808, 4
  %v4955 = vpop.permute.xlu0 %4954
  %4956 = vrot.lane.b32.xlu0 %v4809, 4
  %v4957 = vpop.permute.xlu0 %4956
  %4958 = vrot.lane.b32.xlu0 %v4810, 4
  %v4959 = vpop.permute.xlu0 %4958
  %4960 = vrot.lane.b32.xlu0 %v4811, 4
  %v4961 = vpop.permute.xlu0 %4960
  %4962 = vrot.lane.b32.xlu0 %v4812, 4
  %v4963 = vpop.permute.xlu0 %4962
  %4964 = vrot.lane.b32.xlu0 %v4813, 4
  %v4965 = vpop.permute.xlu0 %4964
  %4966 = vrot.lane.b32.xlu0 %v4814, 4
  %v4967 = vpop.permute.xlu0 %4966
  %4968 = vrot.lane.b32.xlu0 %v4815, 4
  %v4969 = vpop.permute.xlu0 %4968
  %4970 = vrot.lane.b32.xlu0 %v4816, 4
  %v4971 = vpop.permute.xlu0 %4970
  %4972 = vrot.lane.b32.xlu0 %v4817, 4
  %v4973 = vpop.permute.xlu0 %4972
  %4974 = vrot.lane.b32.xlu0 %v4818, 4
  %v4975 = vpop.permute.xlu0 %4974
  %4976 = vrot.lane.b32.xlu0 %v4819, 4
  %v4977 = vpop.permute.xlu0 %4976
  %4978 = vrot.lane.b32.xlu0 %v4820, 4
  %v4979 = vpop.permute.xlu0 %4978
  %4980 = vrot.lane.b32.xlu0 %v4821, 4
  %v4981 = vpop.permute.xlu0 %4980
  %4982 = vrot.lane.b32.xlu0 %v4822, 4
  %v4983 = vpop.permute.xlu0 %4982
  %4984 = vrot.lane.b32.xlu0 %v4823, 4
  %v4985 = vpop.permute.xlu0 %4984
  %4986 = vrot.lane.b32.xlu0 %v4824, 4
  %v4987 = vpop.permute.xlu0 %4986
  %4988 = vrot.lane.b32.xlu0 %v4825, 4
  %v4989 = vpop.permute.xlu0 %4988
  %4990 = vrot.lane.b32.xlu0 %v4826, 4
  %v4991 = vpop.permute.xlu0 %4990
  %4992 = vrot.lane.b32.xlu0 %v4827, 4
  %v4993 = vpop.permute.xlu0 %4992
  %4994 = vrot.lane.b32.xlu0 %v4828, 4
  %v4995 = vpop.permute.xlu0 %4994
  %4996 = vrot.lane.b32.xlu0 %v4829, 4
  %v4997 = vpop.permute.xlu0 %4996
  %4998 = vrot.lane.b32.xlu0 %v4830, 4
  %v4999 = vpop.permute.xlu0 %4998
  %5000 = vrot.lane.b32.xlu0 %v4831, 4
  %v5001 = vpop.permute.xlu0 %5000
  %5002 = vrot.lane.b32.xlu0 %v4832, 4
  %v5003 = vpop.permute.xlu0 %5002
  %5004 = vrot.lane.b32.xlu0 %v4833, 4
  %v5005 = vpop.permute.xlu0 %5004
  %5006 = vrot.lane.b32.xlu0 %v4834, 4
  %v5007 = vpop.permute.xlu0 %5006
  %5008 = vrot.lane.b32.xlu0 %v4835, 4
  %v5009 = vpop.permute.xlu0 %5008
  %5010 = vrot.lane.b32.xlu0 %v4836, 4
  %v5011 = vpop.permute.xlu0 %5010
  %5012 = vrot.lane.b32.xlu0 %v4837, 4
  %v5013 = vpop.permute.xlu0 %5012
  %5014 = vrot.lane.b32.xlu0 %v4838, 4
  %v5015 = vpop.permute.xlu0 %5014
  %5016 = vrot.lane.b32.xlu0 %v4839, 4
  %v5017 = vpop.permute.xlu0 %5016
  %5018 = vrot.lane.b32.xlu0 %v4840, 4
  %v5019 = vpop.permute.xlu0 %5018
  %5020 = vrot.lane.b32.xlu0 %v4841, 4
  %v5021 = vpop.permute.xlu0 %5020
  %5022 = vrot.lane.b32.xlu0 %v4842, 4
  %v5023 = vpop.permute.xlu0 %5022
  %5024 = vrot.lane.b32.xlu0 %v4843, 4
  %v5025 = vpop.permute.xlu0 %5024
  %5026 = vrot.lane.b32.xlu0 %v4844, 4
  %v5027 = vpop.permute.xlu0 %5026
  %5028 = vrot.lane.b32.xlu0 %v4845, 4
  %v5029 = vpop.permute.xlu0 %5028
  %5030 = vrot.lane.b32.xlu0 %v4846, 4
  %v5031 = vpop.permute.xlu0 %5030
  %5032 = vrot.lane.b32.xlu0 %v4847, 4
  %v5033 = vpop.permute.xlu0 %5032
  %5034 = vrot.lane.b32.xlu0 %v4848, 4
  %v5035 = vpop.permute.xlu0 %5034
  %5036 = vrot.lane.b32.xlu0 %v4849, 4
  %v5037 = vpop.permute.xlu0 %5036
  %5038 = vrot.lane.b32.xlu0 %v4850, 4
  %v5039 = vpop.permute.xlu0 %5038
  %5040 = vrot.lane.b32.xlu0 %v4851, 4
  %v5041 = vpop.permute.xlu0 %5040
  %5042 = vrot.lane.b32.xlu0 %v4852, 4
  %v5043 = vpop.permute.xlu0 %5042
  %5044 = vrot.lane.b32.xlu0 %v4853, 4
  %v5045 = vpop.permute.xlu0 %5044
  %vm5110 = vcmask 97312
  %5111 = vst.msk [vmem:[%s9] sm:$0xff] %vm5110, %v4919
  %5112 = vst.msk [vmem:[%s9 + $0x8] sm:$0xff] %vm5110, %v4921
  %5113 = vst.msk [vmem:[%s9 + $0x10] sm:$0xff] %vm5110, %v4923
  %5114 = vst.msk [vmem:[%s9 + $0x18] sm:$0xff] %vm5110, %v4925
  %5115 = vst.msk [vmem:[%s9 + $0x20] sm:$0xff] %vm5110, %v4927
  %5116 = vst.msk [vmem:[%s9 + $0x28] sm:$0xff] %vm5110, %v4929
  %5117 = vst.msk [vmem:[%s9 + $0x30] sm:$0xff] %vm5110, %v4931
  %5118 = vst.msk [vmem:[%s9 + $0x38] sm:$0xff] %vm5110, %v4933
  %5119 = vst.msk [vmem:[%s9 + $0x40] sm:$0xff] %vm5110, %v4935
  %5120 = vst.msk [vmem:[%s9 + $0x48] sm:$0xff] %vm5110, %v4937
  %5121 = vst.msk [vmem:[%s9 + $0x50] sm:$0xff] %vm5110, %v4939
  %5122 = vst.msk [vmem:[%s9 + $0x58] sm:$0xff] %vm5110, %v4941
  %5123 = vst.msk [vmem:[%s9 + $0x60] sm:$0xff] %vm5110, %v4943
  %5124 = vst.msk [vmem:[%s9 + $0x68] sm:$0xff] %vm5110, %v4945
  %5125 = vst.msk [vmem:[%s9 + $0x70] sm:$0xff] %vm5110, %v4947
  %5126 = vst.msk [vmem:[%s9 + $0x78] sm:$0xff] %vm5110, %v4949
  %5127 = vst.msk [vmem:[%s9 + $0x80] sm:$0xff] %vm5110, %v4951
  %5128 = vst.msk [vmem:[%s9 + $0x88] sm:$0xff] %vm5110, %v4953
  %5129 = vst.msk [vmem:[%s9 + $0x90] sm:$0xff] %vm5110, %v4955
  %5130 = vst.msk [vmem:[%s9 + $0x98] sm:$0xff] %vm5110, %v4957
  %5131 = vst.msk [vmem:[%s9 + $0xa0] sm:$0xff] %vm5110, %v4959
  %5132 = vst.msk [vmem:[%s9 + $0xa8] sm:$0xff] %vm5110, %v4961
  %5133 = vst.msk [vmem:[%s9 + $0xb0] sm:$0xff] %vm5110, %v4963
  %5134 = vst.msk [vmem:[%s9 + $0xb8] sm:$0xff] %vm5110, %v4965
  %5135 = vst.msk [vmem:[%s9 + $0xc0] sm:$0xff] %vm5110, %v4967
  %5136 = vst.msk [vmem:[%s9 + $0xc8] sm:$0xff] %vm5110, %v4969
  %5137 = vst.msk [vmem:[%s9 + $0xd0] sm:$0xff] %vm5110, %v4971
  %5138 = vst.msk [vmem:[%s9 + $0xd8] sm:$0xff] %vm5110, %v4973
  %5139 = vst.msk [vmem:[%s9 + $0xe0] sm:$0xff] %vm5110, %v4975
  %5140 = vst.msk [vmem:[%s9 + $0xe8] sm:$0xff] %vm5110, %v4977
  %5141 = vst.msk [vmem:[%s9 + $0xf0] sm:$0xff] %vm5110, %v4979
  %5142 = vst.msk [vmem:[%s9 + $0xf8] sm:$0xff] %vm5110, %v4981
  %5143 = vst.msk [vmem:[%s9 + $0x100] sm:$0xff] %vm5110, %v4983
  %5144 = vst.msk [vmem:[%s9 + $0x108] sm:$0xff] %vm5110, %v4985
  %5145 = vst.msk [vmem:[%s9 + $0x110] sm:$0xff] %vm5110, %v4987
  %5146 = vst.msk [vmem:[%s9 + $0x118] sm:$0xff] %vm5110, %v4989
  %5147 = vst.msk [vmem:[%s9 + $0x120] sm:$0xff] %vm5110, %v4991
  %5148 = vst.msk [vmem:[%s9 + $0x128] sm:$0xff] %vm5110, %v4993
  %5149 = vst.msk [vmem:[%s9 + $0x130] sm:$0xff] %vm5110, %v4995
  %5150 = vst.msk [vmem:[%s9 + $0x138] sm:$0xff] %vm5110, %v4997
  %5151 = vst.msk [vmem:[%s9 + $0x140] sm:$0xff] %vm5110, %v4999
  %5152 = vst.msk [vmem:[%s9 + $0x148] sm:$0xff] %vm5110, %v5001
  %5153 = vst.msk [vmem:[%s9 + $0x150] sm:$0xff] %vm5110, %v5003
  %5154 = vst.msk [vmem:[%s9 + $0x158] sm:$0xff] %vm5110, %v5005
  %5155 = vst.msk [vmem:[%s9 + $0x160] sm:$0xff] %vm5110, %v5007
  %5156 = vst.msk [vmem:[%s9 + $0x168] sm:$0xff] %vm5110, %v5009
  %5157 = vst.msk [vmem:[%s9 + $0x170] sm:$0xff] %vm5110, %v5011
  %5158 = vst.msk [vmem:[%s9 + $0x178] sm:$0xff] %vm5110, %v5013
  %5159 = vst.msk [vmem:[%s9 + $0x180] sm:$0xff] %vm5110, %v5015
  %5160 = vst.msk [vmem:[%s9 + $0x188] sm:$0xff] %vm5110, %v5017
  %5161 = vst.msk [vmem:[%s9 + $0x190] sm:$0xff] %vm5110, %v5019
  %5162 = vst.msk [vmem:[%s9 + $0x198] sm:$0xff] %vm5110, %v5021
  %5163 = vst.msk [vmem:[%s9 + $0x1a0] sm:$0xff] %vm5110, %v5023
  %5164 = vst.msk [vmem:[%s9 + $0x1a8] sm:$0xff] %vm5110, %v5025
  %5165 = vst.msk [vmem:[%s9 + $0x1b0] sm:$0xff] %vm5110, %v5027
  %5166 = vst.msk [vmem:[%s9 + $0x1b8] sm:$0xff] %vm5110, %v5029
  %5167 = vst.msk [vmem:[%s9 + $0x1c0] sm:$0xff] %vm5110, %v5031
  %5168 = vst.msk [vmem:[%s9 + $0x1c8] sm:$0xff] %vm5110, %v5033
  %5169 = vst.msk [vmem:[%s9 + $0x1d0] sm:$0xff] %vm5110, %v5035
  %5170 = vst.msk [vmem:[%s9 + $0x1d8] sm:$0xff] %vm5110, %v5037
  %5171 = vst.msk [vmem:[%s9 + $0x1e0] sm:$0xff] %vm5110, %v5039
  %5172 = vst.msk [vmem:[%s9 + $0x1e8] sm:$0xff] %vm5110, %v5041
  %5173 = vst.msk [vmem:[%s9 + $0x1f0] sm:$0xff] %vm5110, %v5043
  %5174 = vst.msk [vmem:[%s9 + $0x1f8] sm:$0xff] %vm5110, %v5045
  %v5175 = vsel %vm2606, %v4790, 0.0
  %v5176 = vsel %vm2606, %v4791, 0.0
  %v5177 = vadd.f32 %v5175, %v5176
  %v5178 = vsel %vm2606, %v4792, 0.0
  %v5179 = vadd.f32 %v5177, %v5178
  %v5180 = vsel %vm2606, %v4793, 0.0
  %v5181 = vadd.f32 %v5179, %v5180
  %v5182 = vsel %vm2606, %v4794, 0.0
  %v5183 = vadd.f32 %v5181, %v5182
  %v5184 = vsel %vm2606, %v4795, 0.0
  %v5185 = vadd.f32 %v5183, %v5184
  %v5186 = vsel %vm2606, %v4796, 0.0
  %v5187 = vadd.f32 %v5185, %v5186
  %v5188 = vsel %vm2606, %v4797, 0.0
  %v5189 = vadd.f32 %v5187, %v5188
  %v5190 = vsel %vm2606, %v4798, 0.0
  %v5191 = vadd.f32 %v5189, %v5190
  %v5192 = vsel %vm2606, %v4799, 0.0
  %v5193 = vadd.f32 %v5191, %v5192
  %v5194 = vsel %vm2606, %v4800, 0.0
  %v5195 = vadd.f32 %v5193, %v5194
  %v5196 = vsel %vm2606, %v4801, 0.0
  %v5197 = vadd.f32 %v5195, %v5196
  %v5198 = vsel %vm2606, %v4802, 0.0
  %v5199 = vadd.f32 %v5197, %v5198
  %v5200 = vsel %vm2606, %v4803, 0.0
  %v5201 = vadd.f32 %v5199, %v5200
  %v5202 = vsel %vm2606, %v4804, 0.0
  %v5203 = vadd.f32 %v5201, %v5202
  %v5204 = vsel %vm2606, %v4805, 0.0
  %v5205 = vadd.f32 %v5203, %v5204
  %v5206 = vsel %vm2606, %v4806, 0.0
  %v5207 = vadd.f32 %v5205, %v5206
  %v5208 = vsel %vm2606, %v4807, 0.0
  %v5209 = vadd.f32 %v5207, %v5208
  %v5210 = vsel %vm2606, %v4808, 0.0
  %v5211 = vadd.f32 %v5209, %v5210
  %v5212 = vsel %vm2606, %v4809, 0.0
  %v5213 = vadd.f32 %v5211, %v5212
  %v5214 = vsel %vm2606, %v4810, 0.0
  %v5215 = vadd.f32 %v5213, %v5214
  %v5216 = vsel %vm2606, %v4811, 0.0
  %v5217 = vadd.f32 %v5215, %v5216
  %v5218 = vsel %vm2606, %v4812, 0.0
  %v5219 = vadd.f32 %v5217, %v5218
  %v5220 = vsel %vm2606, %v4813, 0.0
  %v5221 = vadd.f32 %v5219, %v5220
  %v5222 = vsel %vm2606, %v4814, 0.0
  %v5223 = vadd.f32 %v5221, %v5222
  %v5224 = vsel %vm2606, %v4815, 0.0
  %v5225 = vadd.f32 %v5223, %v5224
  %v5226 = vsel %vm2606, %v4816, 0.0
  %v5227 = vadd.f32 %v5225, %v5226
  %v5228 = vsel %vm2606, %v4817, 0.0
  %v5229 = vadd.f32 %v5227, %v5228
  %v5230 = vsel %vm2606, %v4818, 0.0
  %v5231 = vadd.f32 %v5229, %v5230
  %v5232 = vsel %vm2606, %v4819, 0.0
  %v5233 = vadd.f32 %v5231, %v5232
  %v5234 = vsel %vm2606, %v4820, 0.0
  %v5235 = vadd.f32 %v5233, %v5234
  %v5236 = vsel %vm2606, %v4821, 0.0
  %v5237 = vadd.f32 %v5235, %v5236
  %v5238 = vsel %vm2606, %v4822, 0.0
  %v5239 = vadd.f32 %v5237, %v5238
  %v5240 = vsel %vm2606, %v4823, 0.0
  %v5241 = vadd.f32 %v5239, %v5240
  %v5242 = vsel %vm2606, %v4824, 0.0
  %v5243 = vadd.f32 %v5241, %v5242
  %v5244 = vsel %vm2606, %v4825, 0.0
  %v5245 = vadd.f32 %v5243, %v5244
  %v5246 = vsel %vm2606, %v4826, 0.0
  %v5247 = vadd.f32 %v5245, %v5246
  %v5248 = vsel %vm2606, %v4827, 0.0
  %v5249 = vadd.f32 %v5247, %v5248
  %v5250 = vsel %vm2606, %v4828, 0.0
  %v5251 = vadd.f32 %v5249, %v5250
  %v5252 = vsel %vm2606, %v4829, 0.0
  %v5253 = vadd.f32 %v5251, %v5252
  %v5254 = vsel %vm2606, %v4830, 0.0
  %v5255 = vadd.f32 %v5253, %v5254
  %v5256 = vsel %vm2606, %v4831, 0.0
  %v5257 = vadd.f32 %v5255, %v5256
  %v5258 = vsel %vm2606, %v4832, 0.0
  %v5259 = vadd.f32 %v5257, %v5258
  %v5260 = vsel %vm2606, %v4833, 0.0
  %v5261 = vadd.f32 %v5259, %v5260
  %v5262 = vsel %vm2606, %v4834, 0.0
  %v5263 = vadd.f32 %v5261, %v5262
  %v5264 = vsel %vm2606, %v4835, 0.0
  %v5265 = vadd.f32 %v5263, %v5264
  %v5266 = vsel %vm2606, %v4836, 0.0
  %v5267 = vadd.f32 %v5265, %v5266
  %v5268 = vsel %vm2606, %v4837, 0.0
  %v5269 = vadd.f32 %v5267, %v5268
  %v5270 = vsel %vm2606, %v4838, 0.0
  %v5271 = vadd.f32 %v5269, %v5270
  %v5272 = vsel %vm2606, %v4839, 0.0
  %v5273 = vadd.f32 %v5271, %v5272
  %v5274 = vsel %vm2606, %v4840, 0.0
  %v5275 = vadd.f32 %v5273, %v5274
  %v5276 = vsel %vm2606, %v4841, 0.0
  %v5277 = vadd.f32 %v5275, %v5276
  %v5278 = vsel %vm2606, %v4842, 0.0
  %v5279 = vadd.f32 %v5277, %v5278
  %v5280 = vsel %vm2606, %v4843, 0.0
  %v5281 = vadd.f32 %v5279, %v5280
  %v5282 = vsel %vm2606, %v4844, 0.0
  %v5283 = vadd.f32 %v5281, %v5282
  %v5284 = vsel %vm2606, %v4845, 0.0
  %v5285 = vadd.f32 %v5283, %v5284
  %v5286 = vsel %vm2606, %v4846, 0.0
  %v5287 = vadd.f32 %v5285, %v5286
  %v5288 = vsel %vm2606, %v4847, 0.0
  %v5289 = vadd.f32 %v5287, %v5288
  %v5290 = vsel %vm2606, %v4848, 0.0
  %v5291 = vadd.f32 %v5289, %v5290
  %v5292 = vsel %vm2606, %v4849, 0.0
  %v5293 = vadd.f32 %v5291, %v5292
  %v5294 = vsel %vm2606, %v4850, 0.0
  %v5295 = vadd.f32 %v5293, %v5294
  %v5296 = vsel %vm2606, %v4851, 0.0
  %v5297 = vadd.f32 %v5295, %v5296
  %v5298 = vsel %vm2606, %v4852, 0.0
  %v5299 = vadd.f32 %v5297, %v5298
  %v5300 = vsel %vm2606, %v4853, 0.0
  %v5301 = vadd.f32 %v5299, %v5300
  %v5302 = vrot.slane %v5301, 4
  %v5303 = vadd.f32 %v5301, %v5302
  %v5304 = vrot.slane %v5303, 2
  %v5305 = vadd.f32 %v5303, %v5304
  %v5306 = vrot.slane %v5305, 1
  %v5307 = vadd.f32 %v5305, %v5306
  %5309 = vrot.lane.b32.xlu0 %v5307, 4
  %v5310 = vpop.permute.xlu0 %5309
  %vm5312 = vcmask 90144
  %5313 = vst.msk [vmem:[#allocation4] sm:$0x1] %vm5312, %v5310
  %v5314 = vmul.f32 %v4790, %v4790
  %v5315 = vmul.f32 %v4791, %v4791
  %v5316 = vmul.f32 %v4792, %v4792
  %v5317 = vmul.f32 %v4793, %v4793
  %v5318 = vmul.f32 %v4794, %v4794
  %v5319 = vmul.f32 %v4795, %v4795
  %v5320 = vmul.f32 %v4796, %v4796
  %v5321 = vmul.f32 %v4797, %v4797
  %v5322 = vmul.f32 %v4798, %v4798
  %v5323 = vmul.f32 %v4799, %v4799
  %v5324 = vmul.f32 %v4800, %v4800
  %v5325 = vmul.f32 %v4801, %v4801
  %v5326 = vmul.f32 %v4802, %v4802
  %v5327 = vmul.f32 %v4803, %v4803
  %v5328 = vmul.f32 %v4804, %v4804
  %v5329 = vmul.f32 %v4805, %v4805
  %v5330 = vmul.f32 %v4806, %v4806
  %v5331 = vmul.f32 %v4807, %v4807
  %v5332 = vmul.f32 %v4808, %v4808
  %v5333 = vmul.f32 %v4809, %v4809
  %v5334 = vmul.f32 %v4810, %v4810
  %v5335 = vmul.f32 %v4811, %v4811
  %v5336 = vmul.f32 %v4812, %v4812
  %v5337 = vmul.f32 %v4813, %v4813
  %v5338 = vmul.f32 %v4814, %v4814
  %v5339 = vmul.f32 %v4815, %v4815
  %v5340 = vmul.f32 %v4816, %v4816
  %v5341 = vmul.f32 %v4817, %v4817
  %v5342 = vmul.f32 %v4818, %v4818
  %v5343 = vmul.f32 %v4819, %v4819
  %v5344 = vmul.f32 %v4820, %v4820
  %v5345 = vmul.f32 %v4821, %v4821
  %v5346 = vmul.f32 %v4822, %v4822
  %v5347 = vmul.f32 %v4823, %v4823
  %v5348 = vmul.f32 %v4824, %v4824
  %v5349 = vmul.f32 %v4825, %v4825
  %v5350 = vmul.f32 %v4826, %v4826
  %v5351 = vmul.f32 %v4827, %v4827
  %v5352 = vmul.f32 %v4828, %v4828
  %v5353 = vmul.f32 %v4829, %v4829
  %v5354 = vmul.f32 %v4830, %v4830
  %v5355 = vmul.f32 %v4831, %v4831
  %v5356 = vmul.f32 %v4832, %v4832
  %v5357 = vmul.f32 %v4833, %v4833
  %v5358 = vmul.f32 %v4834, %v4834
  %v5359 = vmul.f32 %v4835, %v4835
  %v5360 = vmul.f32 %v4836, %v4836
  %v5361 = vmul.f32 %v4837, %v4837
  %v5362 = vmul.f32 %v4838, %v4838
  %v5363 = vmul.f32 %v4839, %v4839
  %v5364 = vmul.f32 %v4840, %v4840
  %v5365 = vmul.f32 %v4841, %v4841
  %v5366 = vmul.f32 %v4842, %v4842
  %v5367 = vmul.f32 %v4843, %v4843
  %v5368 = vmul.f32 %v4844, %v4844
  %v5369 = vmul.f32 %v4845, %v4845
  %v5370 = vmul.f32 %v4846, %v4846
  %v5371 = vmul.f32 %v4847, %v4847
  %v5372 = vmul.f32 %v4848, %v4848
  %v5373 = vmul.f32 %v4849, %v4849
  %v5374 = vmul.f32 %v4850, %v4850
  %v5375 = vmul.f32 %v4851, %v4851
  %v5376 = vmul.f32 %v4852, %v4852
  %v5377 = vmul.f32 %v4853, %v4853
  %v5378 = vsel %vm2606, %v5314, 0.0
  %v5379 = vsel %vm2606, %v5315, 0.0
  %v5380 = vadd.f32 %v5378, %v5379
  %v5381 = vsel %vm2606, %v5316, 0.0
  %v5382 = vadd.f32 %v5380, %v5381
  %v5383 = vsel %vm2606, %v5317, 0.0
  %v5384 = vadd.f32 %v5382, %v5383
  %v5385 = vsel %vm2606, %v5318, 0.0
  %v5386 = vadd.f32 %v5384, %v5385
  %v5387 = vsel %vm2606, %v5319, 0.0
  %v5388 = vadd.f32 %v5386, %v5387
  %v5389 = vsel %vm2606, %v5320, 0.0
  %v5390 = vadd.f32 %v5388, %v5389
  %v5391 = vsel %vm2606, %v5321, 0.0
  %v5392 = vadd.f32 %v5390, %v5391
  %v5393 = vsel %vm2606, %v5322, 0.0
  %v5394 = vadd.f32 %v5392, %v5393
  %v5395 = vsel %vm2606, %v5323, 0.0
  %v5396 = vadd.f32 %v5394, %v5395
  %v5397 = vsel %vm2606, %v5324, 0.0
  %v5398 = vadd.f32 %v5396, %v5397
  %v5399 = vsel %vm2606, %v5325, 0.0
  %v5400 = vadd.f32 %v5398, %v5399
  %v5401 = vsel %vm2606, %v5326, 0.0
  %v5402 = vadd.f32 %v5400, %v5401
  %v5403 = vsel %vm2606, %v5327, 0.0
  %v5404 = vadd.f32 %v5402, %v5403
  %v5405 = vsel %vm2606, %v5328, 0.0
  %v5406 = vadd.f32 %v5404, %v5405
  %v5407 = vsel %vm2606, %v5329, 0.0
  %v5408 = vadd.f32 %v5406, %v5407
  %v5409 = vsel %vm2606, %v5330, 0.0
  %v5410 = vadd.f32 %v5408, %v5409
  %v5411 = vsel %vm2606, %v5331, 0.0
  %v5412 = vadd.f32 %v5410, %v5411
  %v5413 = vsel %vm2606, %v5332, 0.0
  %v5414 = vadd.f32 %v5412, %v5413
  %v5415 = vsel %vm2606, %v5333, 0.0
  %v5416 = vadd.f32 %v5414, %v5415
  %v5417 = vsel %vm2606, %v5334, 0.0
  %v5418 = vadd.f32 %v5416, %v5417
  %v5419 = vsel %vm2606, %v5335, 0.0
  %v5420 = vadd.f32 %v5418, %v5419
  %v5421 = vsel %vm2606, %v5336, 0.0
  %v5422 = vadd.f32 %v5420, %v5421
  %v5423 = vsel %vm2606, %v5337, 0.0
  %v5424 = vadd.f32 %v5422, %v5423
  %v5425 = vsel %vm2606, %v5338, 0.0
  %v5426 = vadd.f32 %v5424, %v5425
  %v5427 = vsel %vm2606, %v5339, 0.0
  %v5428 = vadd.f32 %v5426, %v5427
  %v5429 = vsel %vm2606, %v5340, 0.0
  %v5430 = vadd.f32 %v5428, %v5429
  %v5431 = vsel %vm2606, %v5341, 0.0
  %v5432 = vadd.f32 %v5430, %v5431
  %v5433 = vsel %vm2606, %v5342, 0.0
  %v5434 = vadd.f32 %v5432, %v5433
  %v5435 = vsel %vm2606, %v5343, 0.0
  %v5436 = vadd.f32 %v5434, %v5435
  %v5437 = vsel %vm2606, %v5344, 0.0
  %v5438 = vadd.f32 %v5436, %v5437
  %v5439 = vsel %vm2606, %v5345, 0.0
  %v5440 = vadd.f32 %v5438, %v5439
  %v5441 = vsel %vm2606, %v5346, 0.0
  %v5442 = vadd.f32 %v5440, %v5441
  %v5443 = vsel %vm2606, %v5347, 0.0
  %v5444 = vadd.f32 %v5442, %v5443
  %v5445 = vsel %vm2606, %v5348, 0.0
  %v5446 = vadd.f32 %v5444, %v5445
  %v5447 = vsel %vm2606, %v5349, 0.0
  %v5448 = vadd.f32 %v5446, %v5447
  %v5449 = vsel %vm2606, %v5350, 0.0
  %v5450 = vadd.f32 %v5448, %v5449
  %v5451 = vsel %vm2606, %v5351, 0.0
  %v5452 = vadd.f32 %v5450, %v5451
  %v5453 = vsel %vm2606, %v5352, 0.0
  %v5454 = vadd.f32 %v5452, %v5453
  %v5455 = vsel %vm2606, %v5353, 0.0
  %v5456 = vadd.f32 %v5454, %v5455
  %v5457 = vsel %vm2606, %v5354, 0.0
  %v5458 = vadd.f32 %v5456, %v5457
  %v5459 = vsel %vm2606, %v5355, 0.0
  %v5460 = vadd.f32 %v5458, %v5459
  %v5461 = vsel %vm2606, %v5356, 0.0
  %v5462 = vadd.f32 %v5460, %v5461
  %v5463 = vsel %vm2606, %v5357, 0.0
  %v5464 = vadd.f32 %v5462, %v5463
  %v5465 = vsel %vm2606, %v5358, 0.0
  %v5466 = vadd.f32 %v5464, %v5465
  %v5467 = vsel %vm2606, %v5359, 0.0
  %v5468 = vadd.f32 %v5466, %v5467
  %v5469 = vsel %vm2606, %v5360, 0.0
  %v5470 = vadd.f32 %v5468, %v5469
  %v5471 = vsel %vm2606, %v5361, 0.0
  %v5472 = vadd.f32 %v5470, %v5471
  %v5473 = vsel %vm2606, %v5362, 0.0
  %v5474 = vadd.f32 %v5472, %v5473
  %v5475 = vsel %vm2606, %v5363, 0.0
  %v5476 = vadd.f32 %v5474, %v5475
  %v5477 = vsel %vm2606, %v5364, 0.0
  %v5478 = vadd.f32 %v5476, %v5477
  %v5479 = vsel %vm2606, %v5365, 0.0
  %v5480 = vadd.f32 %v5478, %v5479
  %v5481 = vsel %vm2606, %v5366, 0.0
  %v5482 = vadd.f32 %v5480, %v5481
  %v5483 = vsel %vm2606, %v5367, 0.0
  %v5484 = vadd.f32 %v5482, %v5483
  %v5485 = vsel %vm2606, %v5368, 0.0
  %v5486 = vadd.f32 %v5484, %v5485
  %v5487 = vsel %vm2606, %v5369, 0.0
  %v5488 = vadd.f32 %v5486, %v5487
  %v5489 = vsel %vm2606, %v5370, 0.0
  %v5490 = vadd.f32 %v5488, %v5489
  %v5491 = vsel %vm2606, %v5371, 0.0
  %v5492 = vadd.f32 %v5490, %v5491
  %v5493 = vsel %vm2606, %v5372, 0.0
  %v5494 = vadd.f32 %v5492, %v5493
  %v5495 = vsel %vm2606, %v5373, 0.0
  %v5496 = vadd.f32 %v5494, %v5495
  %v5497 = vsel %vm2606, %v5374, 0.0
  %v5498 = vadd.f32 %v5496, %v5497
  %v5499 = vsel %vm2606, %v5375, 0.0
  %v5500 = vadd.f32 %v5498, %v5499
  %v5501 = vsel %vm2606, %v5376, 0.0
  %v5502 = vadd.f32 %v5500, %v5501
  %v5503 = vsel %vm2606, %v5377, 0.0
  %v5504 = vadd.f32 %v5502, %v5503
  %v5505 = vrot.slane %v5504, 4
  %v5506 = vadd.f32 %v5504, %v5505
  %v5507 = vrot.slane %v5506, 2
  %v5508 = vadd.f32 %v5506, %v5507
  %v5509 = vrot.slane %v5508, 1
  %v5510 = vadd.f32 %v5508, %v5509
  %5512 = vrot.lane.b32.xlu0 %v5510, 4
  %v5513 = vpop.permute.xlu0 %5512
  %5515 = vst.msk [vmem:[#allocation5] sm:$0x1] %vm5312, %v5513
  %v5516 = vld [vmem:[#allocation4] sm:$0x1]
  %v5517 = vmul.f32 %v5516, 0.001953125
  %v5518 = vld [vmem:[#allocation5] sm:$0x1]
  %v5519 = vmul.f32 %v5518, 0.001953125
  %v5520 = vmul.f32 %v5517, %v5517
  %v5521 = vsub.f32 %v5519, %v5520
  %v5522 = vmax.f32 %v5521, 0.0
  %v5523 = vld [vmem:[%s5] sm:$0x1]
  %v5524 = vadd.f32 %v5522, 1e-05
  %v5525 = vrsqrt.pop %v5524
  %v5526 = vmul.f32 %v5523, %v5525
  %v5527 = vld [vmem:[%s6] sm:$0x1]
  %v5528 = vmul.f32 %v5517, %v5526
  %v5529 = vsub.f32 %v5527, %v5528
  %v5530 = vld [vmem:[%s9] sm:$0xff]
  %v5531 = vld [vmem:[%s9 + $0x8] sm:$0xff]
  %v5532 = vld [vmem:[%s9 + $0x10] sm:$0xff]
  %v5533 = vld [vmem:[%s9 + $0x18] sm:$0xff]
  %v5534 = vld [vmem:[%s9 + $0x20] sm:$0xff]
  %v5535 = vld [vmem:[%s9 + $0x28] sm:$0xff]
  %v5536 = vld [vmem:[%s9 + $0x30] sm:$0xff]
  %v5537 = vld [vmem:[%s9 + $0x38] sm:$0xff]
  %v5538 = vld [vmem:[%s9 + $0x40] sm:$0xff]
  %v5539 = vld [vmem:[%s9 + $0x48] sm:$0xff]
  %v5540 = vld [vmem:[%s9 + $0x50] sm:$0xff]
  %v5541 = vld [vmem:[%s9 + $0x58] sm:$0xff]
  %v5542 = vld [vmem:[%s9 + $0x60] sm:$0xff]
  %v5543 = vld [vmem:[%s9 + $0x68] sm:$0xff]
  %v5544 = vld [vmem:[%s9 + $0x70] sm:$0xff]
  %v5545 = vld [vmem:[%s9 + $0x78] sm:$0xff]
  %v5546 = vld [vmem:[%s9 + $0x80] sm:$0xff]
  %v5547 = vld [vmem:[%s9 + $0x88] sm:$0xff]
  %v5548 = vld [vmem:[%s9 + $0x90] sm:$0xff]
  %v5549 = vld [vmem:[%s9 + $0x98] sm:$0xff]
  %v5550 = vld [vmem:[%s9 + $0xa0] sm:$0xff]
  %v5551 = vld [vmem:[%s9 + $0xa8] sm:$0xff]
  %v5552 = vld [vmem:[%s9 + $0xb0] sm:$0xff]
  %v5553 = vld [vmem:[%s9 + $0xb8] sm:$0xff]
  %v5554 = vld [vmem:[%s9 + $0xc0] sm:$0xff]
  %v5555 = vld [vmem:[%s9 + $0xc8] sm:$0xff]
  %v5556 = vld [vmem:[%s9 + $0xd0] sm:$0xff]
  %v5557 = vld [vmem:[%s9 + $0xd8] sm:$0xff]
  %v5558 = vld [vmem:[%s9 + $0xe0] sm:$0xff]
  %v5559 = vld [vmem:[%s9 + $0xe8] sm:$0xff]
  %v5560 = vld [vmem:[%s9 + $0xf0] sm:$0xff]
  %v5561 = vld [vmem:[%s9 + $0xf8] sm:$0xff]
  %v5562 = vld [vmem:[%s9 + $0x100] sm:$0xff]
  %v5563 = vld [vmem:[%s9 + $0x108] sm:$0xff]
  %v5564 = vld [vmem:[%s9 + $0x110] sm:$0xff]
  %v5565 = vld [vmem:[%s9 + $0x118] sm:$0xff]
  %v5566 = vld [vmem:[%s9 + $0x120] sm:$0xff]
  %v5567 = vld [vmem:[%s9 + $0x128] sm:$0xff]
  %v5568 = vld [vmem:[%s9 + $0x130] sm:$0xff]
  %v5569 = vld [vmem:[%s9 + $0x138] sm:$0xff]
  %v5570 = vld [vmem:[%s9 + $0x140] sm:$0xff]
  %v5571 = vld [vmem:[%s9 + $0x148] sm:$0xff]
  %v5572 = vld [vmem:[%s9 + $0x150] sm:$0xff]
  %v5573 = vld [vmem:[%s9 + $0x158] sm:$0xff]
  %v5574 = vld [vmem:[%s9 + $0x160] sm:$0xff]
  %v5575 = vld [vmem:[%s9 + $0x168] sm:$0xff]
  %v5576 = vld [vmem:[%s9 + $0x170] sm:$0xff]
  %v5577 = vld [vmem:[%s9 + $0x178] sm:$0xff]
  %v5578 = vld [vmem:[%s9 + $0x180] sm:$0xff]
  %v5579 = vld [vmem:[%s9 + $0x188] sm:$0xff]
  %v5580 = vld [vmem:[%s9 + $0x190] sm:$0xff]
  %v5581 = vld [vmem:[%s9 + $0x198] sm:$0xff]
  %v5582 = vld [vmem:[%s9 + $0x1a0] sm:$0xff]
  %v5583 = vld [vmem:[%s9 + $0x1a8] sm:$0xff]
  %v5584 = vld [vmem:[%s9 + $0x1b0] sm:$0xff]
  %v5585 = vld [vmem:[%s9 + $0x1b8] sm:$0xff]
  %v5586 = vld [vmem:[%s9 + $0x1c0] sm:$0xff]
  %v5587 = vld [vmem:[%s9 + $0x1c8] sm:$0xff]
  %v5588 = vld [vmem:[%s9 + $0x1d0] sm:$0xff]
  %v5589 = vld [vmem:[%s9 + $0x1d8] sm:$0xff]
  %v5590 = vld [vmem:[%s9 + $0x1e0] sm:$0xff]
  %v5591 = vld [vmem:[%s9 + $0x1e8] sm:$0xff]
  %v5592 = vld [vmem:[%s9 + $0x1f0] sm:$0xff]
  %v5593 = vld [vmem:[%s9 + $0x1f8] sm:$0xff]
  %v5595 = vlaneseq
  %v5596 = vshrl.u32 %v5595, 7
  %v5597 = vsub.s32 0, %v5596
  %v5598 = vrot.slane %v5526, %v5597
  %v5600 = vmul.f32 %v5530, %v5598
  %v5601 = vmul.f32 %v5531, %v5598
  %v5602 = vmul.f32 %v5532, %v5598
  %v5603 = vmul.f32 %v5533, %v5598
  %v5604 = vmul.f32 %v5534, %v5598
  %v5605 = vmul.f32 %v5535, %v5598
  %v5606 = vmul.f32 %v5536, %v5598
  %v5607 = vmul.f32 %v5537, %v5598
  %v5608 = vmul.f32 %v5538, %v5598
  %v5609 = vmul.f32 %v5539, %v5598
  %v5610 = vmul.f32 %v5540, %v5598
  %v5611 = vmul.f32 %v5541, %v5598
  %v5612 = vmul.f32 %v5542, %v5598
  %v5613 = vmul.f32 %v5543, %v5598
  %v5614 = vmul.f32 %v5544, %v5598
  %v5615 = vmul.f32 %v5545, %v5598
  %v5616 = vmul.f32 %v5546, %v5598
  %v5617 = vmul.f32 %v5547, %v5598
  %v5618 = vmul.f32 %v5548, %v5598
  %v5619 = vmul.f32 %v5549, %v5598
  %v5620 = vmul.f32 %v5550, %v5598
  %v5621 = vmul.f32 %v5551, %v5598
  %v5622 = vmul.f32 %v5552, %v5598
  %v5623 = vmul.f32 %v5553, %v5598
  %v5624 = vmul.f32 %v5554, %v5598
  %v5625 = vmul.f32 %v5555, %v5598
  %v5626 = vmul.f32 %v5556, %v5598
  %v5627 = vmul.f32 %v5557, %v5598
  %v5628 = vmul.f32 %v5558, %v5598
  %v5629 = vmul.f32 %v5559, %v5598
  %v5630 = vmul.f32 %v5560, %v5598
  %v5631 = vmul.f32 %v5561, %v5598
  %v5632 = vmul.f32 %v5562, %v5598
  %v5633 = vmul.f32 %v5563, %v5598
  %v5634 = vmul.f32 %v5564, %v5598
  %v5635 = vmul.f32 %v5565, %v5598
  %v5636 = vmul.f32 %v5566, %v5598
  %v5637 = vmul.f32 %v5567, %v5598
  %v5638 = vmul.f32 %v5568, %v5598
  %v5639 = vmul.f32 %v5569, %v5598
  %v5640 = vmul.f32 %v5570, %v5598
  %v5641 = vmul.f32 %v5571, %v5598
  %v5642 = vmul.f32 %v5572, %v5598
  %v5643 = vmul.f32 %v5573, %v5598
  %v5644 = vmul.f32 %v5574, %v5598
  %v5645 = vmul.f32 %v5575, %v5598
  %v5646 = vmul.f32 %v5576, %v5598
  %v5647 = vmul.f32 %v5577, %v5598
  %v5648 = vmul.f32 %v5578, %v5598
  %v5649 = vmul.f32 %v5579, %v5598
  %v5650 = vmul.f32 %v5580, %v5598
  %v5651 = vmul.f32 %v5581, %v5598
  %v5652 = vmul.f32 %v5582, %v5598
  %v5653 = vmul.f32 %v5583, %v5598
  %v5654 = vmul.f32 %v5584, %v5598
  %v5655 = vmul.f32 %v5585, %v5598
  %v5656 = vmul.f32 %v5586, %v5598
  %v5657 = vmul.f32 %v5587, %v5598
  %v5658 = vmul.f32 %v5588, %v5598
  %v5659 = vmul.f32 %v5589, %v5598
  %v5660 = vmul.f32 %v5590, %v5598
  %v5661 = vmul.f32 %v5591, %v5598
  %v5662 = vmul.f32 %v5592, %v5598
  %v5663 = vmul.f32 %v5593, %v5598
  %v5665 = vlaneseq
  %v5666 = vshrl.u32 %v5665, 7
  %v5667 = vsub.s32 0, %v5666
  %v5668 = vrot.slane %v5529, %v5667
  %v5670 = vadd.f32 %v5600, %v5668
  %v5671 = vadd.f32 %v5601, %v5668
  %v5672 = vadd.f32 %v5602, %v5668
  %v5673 = vadd.f32 %v5603, %v5668
  %v5674 = vadd.f32 %v5604, %v5668
  %v5675 = vadd.f32 %v5605, %v5668
  %v5676 = vadd.f32 %v5606, %v5668
  %v5677 = vadd.f32 %v5607, %v5668
  %v5678 = vadd.f32 %v5608, %v5668
  %v5679 = vadd.f32 %v5609, %v5668
  %v5680 = vadd.f32 %v5610, %v5668
  %v5681 = vadd.f32 %v5611, %v5668
  %v5682 = vadd.f32 %v5612, %v5668
  %v5683 = vadd.f32 %v5613, %v5668
  %v5684 = vadd.f32 %v5614, %v5668
  %v5685 = vadd.f32 %v5615, %v5668
  %v5686 = vadd.f32 %v5616, %v5668
  %v5687 = vadd.f32 %v5617, %v5668
  %v5688 = vadd.f32 %v5618, %v5668
  %v5689 = vadd.f32 %v5619, %v5668
  %v5690 = vadd.f32 %v5620, %v5668
  %v5691 = vadd.f32 %v5621, %v5668
  %v5692 = vadd.f32 %v5622, %v5668
  %v5693 = vadd.f32 %v5623, %v5668
  %v5694 = vadd.f32 %v5624, %v5668
  %v5695 = vadd.f32 %v5625, %v5668
  %v5696 = vadd.f32 %v5626, %v5668
  %v5697 = vadd.f32 %v5627, %v5668
  %v5698 = vadd.f32 %v5628, %v5668
  %v5699 = vadd.f32 %v5629, %v5668
  %v5700 = vadd.f32 %v5630, %v5668
  %v5701 = vadd.f32 %v5631, %v5668
  %v5702 = vadd.f32 %v5632, %v5668
  %v5703 = vadd.f32 %v5633, %v5668
  %v5704 = vadd.f32 %v5634, %v5668
  %v5705 = vadd.f32 %v5635, %v5668
  %v5706 = vadd.f32 %v5636, %v5668
  %v5707 = vadd.f32 %v5637, %v5668
  %v5708 = vadd.f32 %v5638, %v5668
  %v5709 = vadd.f32 %v5639, %v5668
  %v5710 = vadd.f32 %v5640, %v5668
  %v5711 = vadd.f32 %v5641, %v5668
  %v5712 = vadd.f32 %v5642, %v5668
  %v5713 = vadd.f32 %v5643, %v5668
  %v5714 = vadd.f32 %v5644, %v5668
  %v5715 = vadd.f32 %v5645, %v5668
  %v5716 = vadd.f32 %v5646, %v5668
  %v5717 = vadd.f32 %v5647, %v5668
  %v5718 = vadd.f32 %v5648, %v5668
  %v5719 = vadd.f32 %v5649, %v5668
  %v5720 = vadd.f32 %v5650, %v5668
  %v5721 = vadd.f32 %v5651, %v5668
  %v5722 = vadd.f32 %v5652, %v5668
  %v5723 = vadd.f32 %v5653, %v5668
  %v5724 = vadd.f32 %v5654, %v5668
  %v5725 = vadd.f32 %v5655, %v5668
  %v5726 = vadd.f32 %v5656, %v5668
  %v5727 = vadd.f32 %v5657, %v5668
  %v5728 = vadd.f32 %v5658, %v5668
  %v5729 = vadd.f32 %v5659, %v5668
  %v5730 = vadd.f32 %v5660, %v5668
  %v5731 = vadd.f32 %v5661, %v5668
  %v5732 = vadd.f32 %v5662, %v5668
  %v5733 = vadd.f32 %v5663, %v5668
  %v5734 = vmax.f32 %v5670, 0.0
  %v5735 = vmax.f32 %v5671, 0.0
  %v5736 = vmax.f32 %v5672, 0.0
  %v5737 = vmax.f32 %v5673, 0.0
  %v5738 = vmax.f32 %v5674, 0.0
  %v5739 = vmax.f32 %v5675, 0.0
  %v5740 = vmax.f32 %v5676, 0.0
  %v5741 = vmax.f32 %v5677, 0.0
  %v5742 = vmax.f32 %v5678, 0.0
  %v5743 = vmax.f32 %v5679, 0.0
  %v5744 = vmax.f32 %v5680, 0.0
  %v5745 = vmax.f32 %v5681, 0.0
  %v5746 = vmax.f32 %v5682, 0.0
  %v5747 = vmax.f32 %v5683, 0.0
  %v5748 = vmax.f32 %v5684, 0.0
  %v5749 = vmax.f32 %v5685, 0.0
  %v5750 = vmax.f32 %v5686, 0.0
  %v5751 = vmax.f32 %v5687, 0.0
  %v5752 = vmax.f32 %v5688, 0.0
  %v5753 = vmax.f32 %v5689, 0.0
  %v5754 = vmax.f32 %v5690, 0.0
  %v5755 = vmax.f32 %v5691, 0.0
  %v5756 = vmax.f32 %v5692, 0.0
  %v5757 = vmax.f32 %v5693, 0.0
  %v5758 = vmax.f32 %v5694, 0.0
  %v5759 = vmax.f32 %v5695, 0.0
  %v5760 = vmax.f32 %v5696, 0.0
  %v5761 = vmax.f32 %v5697, 0.0
  %v5762 = vmax.f32 %v5698, 0.0
  %v5763 = vmax.f32 %v5699, 0.0
  %v5764 = vmax.f32 %v5700, 0.0
  %v5765 = vmax.f32 %v5701, 0.0
  %v5766 = vmax.f32 %v5702, 0.0
  %v5767 = vmax.f32 %v5703, 0.0
  %v5768 = vmax.f32 %v5704, 0.0
  %v5769 = vmax.f32 %v5705, 0.0
  %v5770 = vmax.f32 %v5706, 0.0
  %v5771 = vmax.f32 %v5707, 0.0
  %v5772 = vmax.f32 %v5708, 0.0
  %v5773 = vmax.f32 %v5709, 0.0
  %v5774 = vmax.f32 %v5710, 0.0
  %v5775 = vmax.f32 %v5711, 0.0
  %v5776 = vmax.f32 %v5712, 0.0
  %v5777 = vmax.f32 %v5713, 0.0
  %v5778 = vmax.f32 %v5714, 0.0
  %v5779 = vmax.f32 %v5715, 0.0
  %v5780 = vmax.f32 %v5716, 0.0
  %v5781 = vmax.f32 %v5717, 0.0
  %v5782 = vmax.f32 %v5718, 0.0
  %v5783 = vmax.f32 %v5719, 0.0
  %v5784 = vmax.f32 %v5720, 0.0
  %v5785 = vmax.f32 %v5721, 0.0
  %v5786 = vmax.f32 %v5722, 0.0
  %v5787 = vmax.f32 %v5723, 0.0
  %v5788 = vmax.f32 %v5724, 0.0
  %v5789 = vmax.f32 %v5725, 0.0
  %v5790 = vmax.f32 %v5726, 0.0
  %v5791 = vmax.f32 %v5727, 0.0
  %v5792 = vmax.f32 %v5728, 0.0
  %v5793 = vmax.f32 %v5729, 0.0
  %v5794 = vmax.f32 %v5730, 0.0
  %v5795 = vmax.f32 %v5731, 0.0
  %v5796 = vmax.f32 %v5732, 0.0
  %v5797 = vmax.f32 %v5733, 0.0
  %v5798 = vpack.c.bf16 %v5735, %v5734
  %v5799 = vpack.c.bf16 %v5737, %v5736
  %v5800 = vpack.c.bf16 %v5739, %v5738
  %v5801 = vpack.c.bf16 %v5741, %v5740
  %v5802 = vpack.c.bf16 %v5743, %v5742
  %v5803 = vpack.c.bf16 %v5745, %v5744
  %v5804 = vpack.c.bf16 %v5747, %v5746
  %v5805 = vpack.c.bf16 %v5749, %v5748
  %v5806 = vpack.c.bf16 %v5751, %v5750
  %v5807 = vpack.c.bf16 %v5753, %v5752
  %v5808 = vpack.c.bf16 %v5755, %v5754
  %v5809 = vpack.c.bf16 %v5757, %v5756
  %v5810 = vpack.c.bf16 %v5759, %v5758
  %v5811 = vpack.c.bf16 %v5761, %v5760
  %v5812 = vpack.c.bf16 %v5763, %v5762
  %v5813 = vpack.c.bf16 %v5765, %v5764
  %v5814 = vpack.c.bf16 %v5767, %v5766
  %v5815 = vpack.c.bf16 %v5769, %v5768
  %v5816 = vpack.c.bf16 %v5771, %v5770
  %v5817 = vpack.c.bf16 %v5773, %v5772
  %v5818 = vpack.c.bf16 %v5775, %v5774
  %v5819 = vpack.c.bf16 %v5777, %v5776
  %v5820 = vpack.c.bf16 %v5779, %v5778
  %v5821 = vpack.c.bf16 %v5781, %v5780
  %v5822 = vpack.c.bf16 %v5783, %v5782
  %v5823 = vpack.c.bf16 %v5785, %v5784
  %v5824 = vpack.c.bf16 %v5787, %v5786
  %v5825 = vpack.c.bf16 %v5789, %v5788
  %v5826 = vpack.c.bf16 %v5791, %v5790
  %v5827 = vpack.c.bf16 %v5793, %v5792
  %v5828 = vpack.c.bf16 %v5795, %v5794
  %v5829 = vpack.c.bf16 %v5797, %v5796
  %v5830 = vld [vmem:[%s889] sm:$0x1]
  %v5831 = vsel %vm892, 0, %v5830
  %5832 = vst [vmem:[%s889] sm:$0x1] %v5831
  %v5833 = vld [vmem:[%s889 + $0x18] sm:$0x1]
  %v5834 = vsel %vm892, 0, %v5833
  %5835 = vst [vmem:[%s889 + $0x18] sm:$0x1] %v5834
  %v5836 = vld [vmem:[%s889 + $0x30] sm:$0x1]
  %v5837 = vsel %vm892, 0, %v5836
  %5838 = vst [vmem:[%s889 + $0x30] sm:$0x1] %v5837
  %v5839 = vld [vmem:[%s889 + $0x48] sm:$0x1]
  %v5840 = vsel %vm892, 0, %v5839
  %5841 = vst [vmem:[%s889 + $0x48] sm:$0x1] %v5840
  %v5842 = vld [vmem:[%s889 + $0x60] sm:$0x1]
  %v5843 = vsel %vm892, 0, %v5842
  %5844 = vst [vmem:[%s889 + $0x60] sm:$0x1] %v5843
  %v5845 = vld [vmem:[%s889 + $0x78] sm:$0x1]
  %v5846 = vsel %vm892, 0, %v5845
  %5847 = vst [vmem:[%s889 + $0x78] sm:$0x1] %v5846
  %v5848 = vld [vmem:[%s889 + $0x90] sm:$0x1]
  %v5849 = vsel %vm892, 0, %v5848
  %5850 = vst [vmem:[%s889 + $0x90] sm:$0x1] %v5849
  %v5851 = vld [vmem:[%s889 + $0xa8] sm:$0x1]
  %v5852 = vsel %vm892, 0, %v5851
  %5853 = vst [vmem:[%s889 + $0xa8] sm:$0x1] %v5852
  %v5854 = vld [vmem:[%s889 + $0xc0] sm:$0x1]
  %v5855 = vsel %vm892, 0, %v5854
  %5856 = vst [vmem:[%s889 + $0xc0] sm:$0x1] %v5855
  %v5857 = vld [vmem:[%s889 + $0xd8] sm:$0x1]
  %v5858 = vsel %vm892, 0, %v5857
  %5859 = vst [vmem:[%s889 + $0xd8] sm:$0x1] %v5858
  %v5860 = vld [vmem:[%s889 + $0xf0] sm:$0x1]
  %v5861 = vsel %vm892, 0, %v5860
  %5862 = vst [vmem:[%s889 + $0xf0] sm:$0x1] %v5861
  %v5863 = vld [vmem:[%s889 + $0x108] sm:$0x1]
  %v5864 = vsel %vm892, 0, %v5863
  %5865 = vst [vmem:[%s889 + $0x108] sm:$0x1] %v5864
  %v5866 = vld [vmem:[%s889 + $0x120] sm:$0x1]
  %v5867 = vsel %vm892, 0, %v5866
  %5868 = vst [vmem:[%s889 + $0x120] sm:$0x1] %v5867
  %v5869 = vld [vmem:[%s889 + $0x138] sm:$0x1]
  %v5870 = vsel %vm892, 0, %v5869
  %5871 = vst [vmem:[%s889 + $0x138] sm:$0x1] %v5870
  %v5872 = vld [vmem:[%s889 + $0x150] sm:$0x1]
  %v5873 = vsel %vm892, 0, %v5872
  %5874 = vst [vmem:[%s889 + $0x150] sm:$0x1] %v5873
  %v5875 = vld [vmem:[%s889 + $0x168] sm:$0x1]
  %v5876 = vsel %vm892, 0, %v5875
  %5877 = vst [vmem:[%s889 + $0x168] sm:$0x1] %v5876
  %v5878 = vld [vmem:[%s889 + $0x1b0] sm:$0x1]
  %v5879 = vsel %vm892, 0, %v5878
  %5880 = vst [vmem:[%s889 + $0x1b0] sm:$0x1] %v5879
  %v5881 = vld [vmem:[%s889 + $0x1c8] sm:$0x1]
  %v5882 = vsel %vm892, 0, %v5881
  %5883 = vst [vmem:[%s889 + $0x1c8] sm:$0x1] %v5882
  %v5884 = vld [vmem:[%s889 + $0x1e0] sm:$0x1]
  %v5885 = vsel %vm892, 0, %v5884
  %5886 = vst [vmem:[%s889 + $0x1e0] sm:$0x1] %v5885
  %v5887 = vld [vmem:[%s889 + $0x1f8] sm:$0x1]
  %v5888 = vsel %vm892, 0, %v5887
  %5889 = vst [vmem:[%s889 + $0x1f8] sm:$0x1] %v5888
  %v5890 = vld [vmem:[%s889 + $0x210] sm:$0x1]
  %v5891 = vsel %vm892, 0, %v5890
  %5892 = vst [vmem:[%s889 + $0x210] sm:$0x1] %v5891
  %v5893 = vld [vmem:[%s889 + $0x228] sm:$0x1]
  %v5894 = vsel %vm892, 0, %v5893
  %5895 = vst [vmem:[%s889 + $0x228] sm:$0x1] %v5894
  %v5896 = vld [vmem:[%s889 + $0x240] sm:$0x1]
  %v5897 = vsel %vm892, 0, %v5896
  %5898 = vst [vmem:[%s889 + $0x240] sm:$0x1] %v5897
  %v5899 = vld [vmem:[%s889 + $0x258] sm:$0x1]
  %v5900 = vsel %vm892, 0, %v5899
  %5901 = vst [vmem:[%s889 + $0x258] sm:$0x1] %v5900
  %v5902 = vld [vmem:[%s889 + $0x270] sm:$0x1]
  %v5903 = vsel %vm892, 0, %v5902
  %5904 = vst [vmem:[%s889 + $0x270] sm:$0x1] %v5903
  %v5905 = vld [vmem:[%s889 + $0x288] sm:$0x1]
  %v5906 = vsel %vm892, 0, %v5905
  %5907 = vst [vmem:[%s889 + $0x288] sm:$0x1] %v5906
  %v5908 = vld [vmem:[%s889 + $0x2a0] sm:$0x1]
  %v5909 = vsel %vm892, 0, %v5908
  %5910 = vst [vmem:[%s889 + $0x2a0] sm:$0x1] %v5909
  %v5911 = vld [vmem:[%s889 + $0x2b8] sm:$0x1]
  %v5912 = vsel %vm892, 0, %v5911
  %5913 = vst [vmem:[%s889 + $0x2b8] sm:$0x1] %v5912
  %v5914 = vld [vmem:[%s889 + $0x2d0] sm:$0x1]
  %v5915 = vsel %vm892, 0, %v5914
  %5916 = vst [vmem:[%s889 + $0x2d0] sm:$0x1] %v5915
  %v5917 = vld [vmem:[%s889 + $0x2e8] sm:$0x1]
  %v5918 = vsel %vm892, 0, %v5917
  %5919 = vst [vmem:[%s889 + $0x2e8] sm:$0x1] %v5918
  %v5920 = vld [vmem:[%s889 + $0x300] sm:$0x1]
  %v5921 = vsel %vm892, 0, %v5920
  %5922 = vst [vmem:[%s889 + $0x300] sm:$0x1] %v5921
  %v5923 = vld [vmem:[%s889 + $0x318] sm:$0x1]
  %v5924 = vsel %vm892, 0, %v5923
  %5925 = vst [vmem:[%s889 + $0x318] sm:$0x1] %v5924
  %v5927 = vshrl.u32 %v5798, 16
  %v5929 = vrot.slane %v5927, 7
  %v5930 = vshll.u32 %v5798, 16
  %v5932 = vor.u32 %v5929, %v5930
  %v5934 = vshrl.u32 %v5799, 16
  %v5936 = vrot.slane %v5934, 7
  %v5937 = vshll.u32 %v5799, 16
  %v5939 = vor.u32 %v5936, %v5937
  %v5941 = vshrl.u32 %v5800, 16
  %v5943 = vrot.slane %v5941, 7
  %v5944 = vshll.u32 %v5800, 16
  %v5946 = vor.u32 %v5943, %v5944
  %v5948 = vshrl.u32 %v5801, 16
  %v5950 = vrot.slane %v5948, 7
  %v5951 = vshll.u32 %v5801, 16
  %v5953 = vor.u32 %v5950, %v5951
  %v5955 = vshrl.u32 %v5802, 16
  %v5957 = vrot.slane %v5955, 7
  %v5958 = vshll.u32 %v5802, 16
  %v5960 = vor.u32 %v5957, %v5958
  %v5962 = vshrl.u32 %v5803, 16
  %v5964 = vrot.slane %v5962, 7
  %v5965 = vshll.u32 %v5803, 16
  %v5967 = vor.u32 %v5964, %v5965
  %v5969 = vshrl.u32 %v5804, 16
  %v5971 = vrot.slane %v5969, 7
  %v5972 = vshll.u32 %v5804, 16
  %v5974 = vor.u32 %v5971, %v5972
  %v5976 = vshrl.u32 %v5805, 16
  %v5978 = vrot.slane %v5976, 7
  %v5979 = vshll.u32 %v5805, 16
  %v5981 = vor.u32 %v5978, %v5979
  %v5983 = vshrl.u32 %v5806, 16
  %v5985 = vrot.slane %v5983, 7
  %v5986 = vshll.u32 %v5806, 16
  %v5988 = vor.u32 %v5985, %v5986
  %v5990 = vshrl.u32 %v5807, 16
  %v5992 = vrot.slane %v5990, 7
  %v5993 = vshll.u32 %v5807, 16
  %v5995 = vor.u32 %v5992, %v5993
  %v5997 = vshrl.u32 %v5808, 16
  %v5999 = vrot.slane %v5997, 7
  %v6000 = vshll.u32 %v5808, 16
  %v6002 = vor.u32 %v5999, %v6000
  %v6004 = vshrl.u32 %v5809, 16
  %v6006 = vrot.slane %v6004, 7
  %v6007 = vshll.u32 %v5809, 16
  %v6009 = vor.u32 %v6006, %v6007
  %v6011 = vshrl.u32 %v5810, 16
  %v6013 = vrot.slane %v6011, 7
  %v6014 = vshll.u32 %v5810, 16
  %v6016 = vor.u32 %v6013, %v6014
  %v6018 = vshrl.u32 %v5811, 16
  %v6020 = vrot.slane %v6018, 7
  %v6021 = vshll.u32 %v5811, 16
  %v6023 = vor.u32 %v6020, %v6021
  %v6025 = vshrl.u32 %v5812, 16
  %v6027 = vrot.slane %v6025, 7
  %v6028 = vshll.u32 %v5812, 16
  %v6030 = vor.u32 %v6027, %v6028
  %v6032 = vshrl.u32 %v5813, 16
  %v6034 = vrot.slane %v6032, 7
  %v6035 = vshll.u32 %v5813, 16
  %v6037 = vor.u32 %v6034, %v6035
  %v6039 = vshrl.u32 %v5814, 16
  %v6041 = vrot.slane %v6039, 7
  %v6042 = vshll.u32 %v5814, 16
  %v6044 = vor.u32 %v6041, %v6042
  %v6046 = vshrl.u32 %v5815, 16
  %v6048 = vrot.slane %v6046, 7
  %v6049 = vshll.u32 %v5815, 16
  %v6051 = vor.u32 %v6048, %v6049
  %v6053 = vshrl.u32 %v5816, 16
  %v6055 = vrot.slane %v6053, 7
  %v6056 = vshll.u32 %v5816, 16
  %v6058 = vor.u32 %v6055, %v6056
  %v6060 = vshrl.u32 %v5817, 16
  %v6062 = vrot.slane %v6060, 7
  %v6063 = vshll.u32 %v5817, 16
  %v6065 = vor.u32 %v6062, %v6063
  %v6067 = vshrl.u32 %v5818, 16
  %v6069 = vrot.slane %v6067, 7
  %v6070 = vshll.u32 %v5818, 16
  %v6072 = vor.u32 %v6069, %v6070
  %v6074 = vshrl.u32 %v5819, 16
  %v6076 = vrot.slane %v6074, 7
  %v6077 = vshll.u32 %v5819, 16
  %v6079 = vor.u32 %v6076, %v6077
  %v6081 = vshrl.u32 %v5820, 16
  %v6083 = vrot.slane %v6081, 7
  %v6084 = vshll.u32 %v5820, 16
  %v6086 = vor.u32 %v6083, %v6084
  %v6088 = vshrl.u32 %v5821, 16
  %v6090 = vrot.slane %v6088, 7
  %v6091 = vshll.u32 %v5821, 16
  %v6093 = vor.u32 %v6090, %v6091
  %v6095 = vshrl.u32 %v5822, 16
  %v6097 = vrot.slane %v6095, 7
  %v6098 = vshll.u32 %v5822, 16
  %v6100 = vor.u32 %v6097, %v6098
  %v6102 = vshrl.u32 %v5823, 16
  %v6104 = vrot.slane %v6102, 7
  %v6105 = vshll.u32 %v5823, 16
  %v6107 = vor.u32 %v6104, %v6105
  %v6109 = vshrl.u32 %v5824, 16
  %v6111 = vrot.slane %v6109, 7
  %v6112 = vshll.u32 %v5824, 16
  %v6114 = vor.u32 %v6111, %v6112
  %v6116 = vshrl.u32 %v5825, 16
  %v6118 = vrot.slane %v6116, 7
  %v6119 = vshll.u32 %v5825, 16
  %v6121 = vor.u32 %v6118, %v6119
  %v6123 = vshrl.u32 %v5826, 16
  %v6125 = vrot.slane %v6123, 7
  %v6126 = vshll.u32 %v5826, 16
  %v6128 = vor.u32 %v6125, %v6126
  %v6130 = vshrl.u32 %v5827, 16
  %v6132 = vrot.slane %v6130, 7
  %v6133 = vshll.u32 %v5827, 16
  %v6135 = vor.u32 %v6132, %v6133
  %v6137 = vshrl.u32 %v5828, 16
  %v6139 = vrot.slane %v6137, 7
  %v6140 = vshll.u32 %v5828, 16
  %v6142 = vor.u32 %v6139, %v6140
  %v6144 = vshrl.u32 %v5829, 16
  %v6146 = vrot.slane %v6144, 7
  %v6147 = vshll.u32 %v5829, 16
  %v6149 = vor.u32 %v6146, %v6147
  %v6182 = vld [vmem:[%s889] sm:$0xff]
  %v6183 = vsel %vm1247, %v5932, %v6182
  %6184 = vst [vmem:[%s889] sm:$0xff] %v6183
  %v6185 = vld [vmem:[%s889 + $0x18] sm:$0xff]
  %v6186 = vsel %vm1247, %v5939, %v6185
  %6187 = vst [vmem:[%s889 + $0x18] sm:$0xff] %v6186
  %v6188 = vld [vmem:[%s889 + $0x30] sm:$0xff]
  %v6189 = vsel %vm1247, %v5946, %v6188
  %6190 = vst [vmem:[%s889 + $0x30] sm:$0xff] %v6189
  %v6191 = vld [vmem:[%s889 + $0x48] sm:$0xff]
  %v6192 = vsel %vm1247, %v5953, %v6191
  %6193 = vst [vmem:[%s889 + $0x48] sm:$0xff] %v6192
  %v6194 = vld [vmem:[%s889 + $0x60] sm:$0xff]
  %v6195 = vsel %vm1247, %v5960, %v6194
  %6196 = vst [vmem:[%s889 + $0x60] sm:$0xff] %v6195
  %v6197 = vld [vmem:[%s889 + $0x78] sm:$0xff]
  %v6198 = vsel %vm1247, %v5967, %v6197
  %6199 = vst [vmem:[%s889 + $0x78] sm:$0xff] %v6198
  %v6200 = vld [vmem:[%s889 + $0x90] sm:$0xff]
  %v6201 = vsel %vm1247, %v5974, %v6200
  %6202 = vst [vmem:[%s889 + $0x90] sm:$0xff] %v6201
  %v6203 = vld [vmem:[%s889 + $0xa8] sm:$0xff]
  %v6204 = vsel %vm1247, %v5981, %v6203
  %6205 = vst [vmem:[%s889 + $0xa8] sm:$0xff] %v6204
  %v6206 = vld [vmem:[%s889 + $0xc0] sm:$0xff]
  %v6207 = vsel %vm1247, %v5988, %v6206
  %6208 = vst [vmem:[%s889 + $0xc0] sm:$0xff] %v6207
  %v6209 = vld [vmem:[%s889 + $0xd8] sm:$0xff]
  %v6210 = vsel %vm1247, %v5995, %v6209
  %6211 = vst [vmem:[%s889 + $0xd8] sm:$0xff] %v6210
  %v6212 = vld [vmem:[%s889 + $0xf0] sm:$0xff]
  %v6213 = vsel %vm1247, %v6002, %v6212
  %6214 = vst [vmem:[%s889 + $0xf0] sm:$0xff] %v6213
  %v6215 = vld [vmem:[%s889 + $0x108] sm:$0xff]
  %v6216 = vsel %vm1247, %v6009, %v6215
  %6217 = vst [vmem:[%s889 + $0x108] sm:$0xff] %v6216
  %v6218 = vld [vmem:[%s889 + $0x120] sm:$0xff]
  %v6219 = vsel %vm1247, %v6016, %v6218
  %6220 = vst [vmem:[%s889 + $0x120] sm:$0xff] %v6219
  %v6221 = vld [vmem:[%s889 + $0x138] sm:$0xff]
  %v6222 = vsel %vm1247, %v6023, %v6221
  %6223 = vst [vmem:[%s889 + $0x138] sm:$0xff] %v6222
  %v6224 = vld [vmem:[%s889 + $0x150] sm:$0xff]
  %v6225 = vsel %vm1247, %v6030, %v6224
  %6226 = vst [vmem:[%s889 + $0x150] sm:$0xff] %v6225
  %v6227 = vld [vmem:[%s889 + $0x168] sm:$0xff]
  %v6228 = vsel %vm1247, %v6037, %v6227
  %6229 = vst [vmem:[%s889 + $0x168] sm:$0xff] %v6228
  %v6230 = vld [vmem:[%s889 + $0x1b0] sm:$0xff]
  %v6231 = vsel %vm1247, %v6044, %v6230
  %6232 = vst [vmem:[%s889 + $0x1b0] sm:$0xff] %v6231
  %v6233 = vld [vmem:[%s889 + $0x1c8] sm:$0xff]
  %v6234 = vsel %vm1247, %v6051, %v6233
  %6235 = vst [vmem:[%s889 + $0x1c8] sm:$0xff] %v6234
  %v6236 = vld [vmem:[%s889 + $0x1e0] sm:$0xff]
  %v6237 = vsel %vm1247, %v6058, %v6236
  %6238 = vst [vmem:[%s889 + $0x1e0] sm:$0xff] %v6237
  %v6239 = vld [vmem:[%s889 + $0x1f8] sm:$0xff]
  %v6240 = vsel %vm1247, %v6065, %v6239
  %6241 = vst [vmem:[%s889 + $0x1f8] sm:$0xff] %v6240
  %v6242 = vld [vmem:[%s889 + $0x210] sm:$0xff]
  %v6243 = vsel %vm1247, %v6072, %v6242
  %6244 = vst [vmem:[%s889 + $0x210] sm:$0xff] %v6243
  %v6245 = vld [vmem:[%s889 + $0x228] sm:$0xff]
  %v6246 = vsel %vm1247, %v6079, %v6245
  %6247 = vst [vmem:[%s889 + $0x228] sm:$0xff] %v6246
  %v6248 = vld [vmem:[%s889 + $0x240] sm:$0xff]
  %v6249 = vsel %vm1247, %v6086, %v6248
  %6250 = vst [vmem:[%s889 + $0x240] sm:$0xff] %v6249
  %v6251 = vld [vmem:[%s889 + $0x258] sm:$0xff]
  %v6252 = vsel %vm1247, %v6093, %v6251
  %6253 = vst [vmem:[%s889 + $0x258] sm:$0xff] %v6252
  %v6254 = vld [vmem:[%s889 + $0x270] sm:$0xff]
  %v6255 = vsel %vm1247, %v6100, %v6254
  %6256 = vst [vmem:[%s889 + $0x270] sm:$0xff] %v6255
  %v6257 = vld [vmem:[%s889 + $0x288] sm:$0xff]
  %v6258 = vsel %vm1247, %v6107, %v6257
  %6259 = vst [vmem:[%s889 + $0x288] sm:$0xff] %v6258
  %v6260 = vld [vmem:[%s889 + $0x2a0] sm:$0xff]
  %v6261 = vsel %vm1247, %v6114, %v6260
  %6262 = vst [vmem:[%s889 + $0x2a0] sm:$0xff] %v6261
  %v6263 = vld [vmem:[%s889 + $0x2b8] sm:$0xff]
  %v6264 = vsel %vm1247, %v6121, %v6263
  %6265 = vst [vmem:[%s889 + $0x2b8] sm:$0xff] %v6264
  %v6266 = vld [vmem:[%s889 + $0x2d0] sm:$0xff]
  %v6267 = vsel %vm1247, %v6128, %v6266
  %6268 = vst [vmem:[%s889 + $0x2d0] sm:$0xff] %v6267
  %v6269 = vld [vmem:[%s889 + $0x2e8] sm:$0xff]
  %v6270 = vsel %vm1247, %v6135, %v6269
  %6271 = vst [vmem:[%s889 + $0x2e8] sm:$0xff] %v6270
  %v6272 = vld [vmem:[%s889 + $0x300] sm:$0xff]
  %v6273 = vsel %vm1247, %v6142, %v6272
  %6274 = vst [vmem:[%s889 + $0x300] sm:$0xff] %v6273
  %v6275 = vld [vmem:[%s889 + $0x318] sm:$0xff]
  %v6276 = vsel %vm1247, %v6149, %v6275
  %6277 = vst [vmem:[%s889 + $0x318] sm:$0xff] %v6276
  %6278 = vst [vmem:[%s889 + $0x8] sm:$0xff] %v5798
  %6279 = vst [vmem:[%s889 + $0x20] sm:$0xff] %v5799
  %6280 = vst [vmem:[%s889 + $0x38] sm:$0xff] %v5800
  %6281 = vst [vmem:[%s889 + $0x50] sm:$0xff] %v5801
  %6282 = vst [vmem:[%s889 + $0x68] sm:$0xff] %v5802
  %6283 = vst [vmem:[%s889 + $0x80] sm:$0xff] %v5803
  %6284 = vst [vmem:[%s889 + $0x98] sm:$0xff] %v5804
  %6285 = vst [vmem:[%s889 + $0xb0] sm:$0xff] %v5805
  %6286 = vst [vmem:[%s889 + $0xc8] sm:$0xff] %v5806
  %6287 = vst [vmem:[%s889 + $0xe0] sm:$0xff] %v5807
  %6288 = vst [vmem:[%s889 + $0xf8] sm:$0xff] %v5808
  %6289 = vst [vmem:[%s889 + $0x110] sm:$0xff] %v5809
  %6290 = vst [vmem:[%s889 + $0x128] sm:$0xff] %v5810
  %6291 = vst [vmem:[%s889 + $0x140] sm:$0xff] %v5811
  %6292 = vst [vmem:[%s889 + $0x158] sm:$0xff] %v5812
  %6293 = vst [vmem:[%s889 + $0x170] sm:$0xff] %v5813
  %6294 = vst [vmem:[%s889 + $0x1b8] sm:$0xff] %v5814
  %6295 = vst [vmem:[%s889 + $0x1d0] sm:$0xff] %v5815
  %6296 = vst [vmem:[%s889 + $0x1e8] sm:$0xff] %v5816
  %6297 = vst [vmem:[%s889 + $0x200] sm:$0xff] %v5817
  %6298 = vst [vmem:[%s889 + $0x218] sm:$0xff] %v5818
  %6299 = vst [vmem:[%s889 + $0x230] sm:$0xff] %v5819
  %6300 = vst [vmem:[%s889 + $0x248] sm:$0xff] %v5820
  %6301 = vst [vmem:[%s889 + $0x260] sm:$0xff] %v5821
  %6302 = vst [vmem:[%s889 + $0x278] sm:$0xff] %v5822
  %6303 = vst [vmem:[%s889 + $0x290] sm:$0xff] %v5823
  %6304 = vst [vmem:[%s889 + $0x2a8] sm:$0xff] %v5824
  %6305 = vst [vmem:[%s889 + $0x2c0] sm:$0xff] %v5825
  %6306 = vst [vmem:[%s889 + $0x2d8] sm:$0xff] %v5826
  %6307 = vst [vmem:[%s889 + $0x2f0] sm:$0xff] %v5827
  %6308 = vst [vmem:[%s889 + $0x308] sm:$0xff] %v5828
  %6309 = vst [vmem:[%s889 + $0x320] sm:$0xff] %v5829
  %v6310 = vrot.slane %v5930, 1
  %v6311 = vor.u32 %v5927, %v6310
  %v6312 = vrot.slane %v5937, 1
  %v6313 = vor.u32 %v5934, %v6312
  %v6314 = vrot.slane %v5944, 1
  %v6315 = vor.u32 %v5941, %v6314
  %v6316 = vrot.slane %v5951, 1
  %v6317 = vor.u32 %v5948, %v6316
  %v6318 = vrot.slane %v5958, 1
  %v6319 = vor.u32 %v5955, %v6318
  %v6320 = vrot.slane %v5965, 1
  %v6321 = vor.u32 %v5962, %v6320
  %v6322 = vrot.slane %v5972, 1
  %v6323 = vor.u32 %v5969, %v6322
  %v6324 = vrot.slane %v5979, 1
  %v6325 = vor.u32 %v5976, %v6324
  %v6326 = vrot.slane %v5986, 1
  %v6327 = vor.u32 %v5983, %v6326
  %v6328 = vrot.slane %v5993, 1
  %v6329 = vor.u32 %v5990, %v6328
  %v6330 = vrot.slane %v6000, 1
  %v6331 = vor.u32 %v5997, %v6330
  %v6332 = vrot.slane %v6007, 1
  %v6333 = vor.u32 %v6004, %v6332
  %v6334 = vrot.slane %v6014, 1
  %v6335 = vor.u32 %v6011, %v6334
  %v6336 = vrot.slane %v6021, 1
  %v6337 = vor.u32 %v6018, %v6336
  %v6338 = vrot.slane %v6028, 1
  %v6339 = vor.u32 %v6025, %v6338
  %v6340 = vrot.slane %v6035, 1
  %v6341 = vor.u32 %v6032, %v6340
  %v6342 = vrot.slane %v6042, 1
  %v6343 = vor.u32 %v6039, %v6342
  %v6344 = vrot.slane %v6049, 1
  %v6345 = vor.u32 %v6046, %v6344
  %v6346 = vrot.slane %v6056, 1
  %v6347 = vor.u32 %v6053, %v6346
  %v6348 = vrot.slane %v6063, 1
  %v6349 = vor.u32 %v6060, %v6348
  %v6350 = vrot.slane %v6070, 1
  %v6351 = vor.u32 %v6067, %v6350
  %v6352 = vrot.slane %v6077, 1
  %v6353 = vor.u32 %v6074, %v6352
  %v6354 = vrot.slane %v6084, 1
  %v6355 = vor.u32 %v6081, %v6354
  %v6356 = vrot.slane %v6091, 1
  %v6357 = vor.u32 %v6088, %v6356
  %v6358 = vrot.slane %v6098, 1
  %v6359 = vor.u32 %v6095, %v6358
  %v6360 = vrot.slane %v6105, 1
  %v6361 = vor.u32 %v6102, %v6360
  %v6362 = vrot.slane %v6112, 1
  %v6363 = vor.u32 %v6109, %v6362
  %v6364 = vrot.slane %v6119, 1
  %v6365 = vor.u32 %v6116, %v6364
  %v6366 = vrot.slane %v6126, 1
  %v6367 = vor.u32 %v6123, %v6366
  %v6368 = vrot.slane %v6133, 1
  %v6369 = vor.u32 %v6130, %v6368
  %v6370 = vrot.slane %v6140, 1
  %v6371 = vor.u32 %v6137, %v6370
  %v6372 = vrot.slane %v6147, 1
  %v6373 = vor.u32 %v6144, %v6372
  %v6406 = vld [vmem:[%s889 + $0x10] sm:$0xff]
  %v6407 = vsel %vm1473, %v6311, %v6406
  %6408 = vst [vmem:[%s889 + $0x10] sm:$0xff] %v6407
  %v6409 = vld [vmem:[%s889 + $0x28] sm:$0xff]
  %v6410 = vsel %vm1473, %v6313, %v6409
  %6411 = vst [vmem:[%s889 + $0x28] sm:$0xff] %v6410
  %v6412 = vld [vmem:[%s889 + $0x40] sm:$0xff]
  %v6413 = vsel %vm1473, %v6315, %v6412
  %6414 = vst [vmem:[%s889 + $0x40] sm:$0xff] %v6413
  %v6415 = vld [vmem:[%s889 + $0x58] sm:$0xff]
  %v6416 = vsel %vm1473, %v6317, %v6415
  %6417 = vst [vmem:[%s889 + $0x58] sm:$0xff] %v6416
  %v6418 = vld [vmem:[%s889 + $0x70] sm:$0xff]
  %v6419 = vsel %vm1473, %v6319, %v6418
  %6420 = vst [vmem:[%s889 + $0x70] sm:$0xff] %v6419
  %v6421 = vld [vmem:[%s889 + $0x88] sm:$0xff]
  %v6422 = vsel %vm1473, %v6321, %v6421
  %6423 = vst [vmem:[%s889 + $0x88] sm:$0xff] %v6422
  %v6424 = vld [vmem:[%s889 + $0xa0] sm:$0xff]
  %v6425 = vsel %vm1473, %v6323, %v6424
  %6426 = vst [vmem:[%s889 + $0xa0] sm:$0xff] %v6425
  %v6427 = vld [vmem:[%s889 + $0xb8] sm:$0xff]
  %v6428 = vsel %vm1473, %v6325, %v6427
  %6429 = vst [vmem:[%s889 + $0xb8] sm:$0xff] %v6428
  %v6430 = vld [vmem:[%s889 + $0xd0] sm:$0xff]
  %v6431 = vsel %vm1473, %v6327, %v6430
  %6432 = vst [vmem:[%s889 + $0xd0] sm:$0xff] %v6431
  %v6433 = vld [vmem:[%s889 + $0xe8] sm:$0xff]
  %v6434 = vsel %vm1473, %v6329, %v6433
  %6435 = vst [vmem:[%s889 + $0xe8] sm:$0xff] %v6434
  %v6436 = vld [vmem:[%s889 + $0x100] sm:$0xff]
  %v6437 = vsel %vm1473, %v6331, %v6436
  %6438 = vst [vmem:[%s889 + $0x100] sm:$0xff] %v6437
  %v6439 = vld [vmem:[%s889 + $0x118] sm:$0xff]
  %v6440 = vsel %vm1473, %v6333, %v6439
  %6441 = vst [vmem:[%s889 + $0x118] sm:$0xff] %v6440
  %v6442 = vld [vmem:[%s889 + $0x130] sm:$0xff]
  %v6443 = vsel %vm1473, %v6335, %v6442
  %6444 = vst [vmem:[%s889 + $0x130] sm:$0xff] %v6443
  %v6445 = vld [vmem:[%s889 + $0x148] sm:$0xff]
  %v6446 = vsel %vm1473, %v6337, %v6445
  %6447 = vst [vmem:[%s889 + $0x148] sm:$0xff] %v6446
  %v6448 = vld [vmem:[%s889 + $0x160] sm:$0xff]
  %v6449 = vsel %vm1473, %v6339, %v6448
  %6450 = vst [vmem:[%s889 + $0x160] sm:$0xff] %v6449
  %v6451 = vld [vmem:[%s889 + $0x178] sm:$0xff]
  %v6452 = vsel %vm1473, %v6341, %v6451
  %6453 = vst [vmem:[%s889 + $0x178] sm:$0xff] %v6452
  %v6454 = vld [vmem:[%s889 + $0x1c0] sm:$0xff]
  %v6455 = vsel %vm1473, %v6343, %v6454
  %6456 = vst [vmem:[%s889 + $0x1c0] sm:$0xff] %v6455
  %v6457 = vld [vmem:[%s889 + $0x1d8] sm:$0xff]
  %v6458 = vsel %vm1473, %v6345, %v6457
  %6459 = vst [vmem:[%s889 + $0x1d8] sm:$0xff] %v6458
  %v6460 = vld [vmem:[%s889 + $0x1f0] sm:$0xff]
  %v6461 = vsel %vm1473, %v6347, %v6460
  %6462 = vst [vmem:[%s889 + $0x1f0] sm:$0xff] %v6461
  %v6463 = vld [vmem:[%s889 + $0x208] sm:$0xff]
  %v6464 = vsel %vm1473, %v6349, %v6463
  %6465 = vst [vmem:[%s889 + $0x208] sm:$0xff] %v6464
  %v6466 = vld [vmem:[%s889 + $0x220] sm:$0xff]
  %v6467 = vsel %vm1473, %v6351, %v6466
  %6468 = vst [vmem:[%s889 + $0x220] sm:$0xff] %v6467
  %v6469 = vld [vmem:[%s889 + $0x238] sm:$0xff]
  %v6470 = vsel %vm1473, %v6353, %v6469
  %6471 = vst [vmem:[%s889 + $0x238] sm:$0xff] %v6470
  %v6472 = vld [vmem:[%s889 + $0x250] sm:$0xff]
  %v6473 = vsel %vm1473, %v6355, %v6472
  %6474 = vst [vmem:[%s889 + $0x250] sm:$0xff] %v6473
  %v6475 = vld [vmem:[%s889 + $0x268] sm:$0xff]
  %v6476 = vsel %vm1473, %v6357, %v6475
  %6477 = vst [vmem:[%s889 + $0x268] sm:$0xff] %v6476
  %v6478 = vld [vmem:[%s889 + $0x280] sm:$0xff]
  %v6479 = vsel %vm1473, %v6359, %v6478
  %6480 = vst [vmem:[%s889 + $0x280] sm:$0xff] %v6479
  %v6481 = vld [vmem:[%s889 + $0x298] sm:$0xff]
  %v6482 = vsel %vm1473, %v6361, %v6481
  %6483 = vst [vmem:[%s889 + $0x298] sm:$0xff] %v6482
  %v6484 = vld [vmem:[%s889 + $0x2b0] sm:$0xff]
  %v6485 = vsel %vm1473, %v6363, %v6484
  %6486 = vst [vmem:[%s889 + $0x2b0] sm:$0xff] %v6485
  %v6487 = vld [vmem:[%s889 + $0x2c8] sm:$0xff]
  %v6488 = vsel %vm1473, %v6365, %v6487
  %6489 = vst [vmem:[%s889 + $0x2c8] sm:$0xff] %v6488
  %v6490 = vld [vmem:[%s889 + $0x2e0] sm:$0xff]
  %v6491 = vsel %vm1473, %v6367, %v6490
  %6492 = vst [vmem:[%s889 + $0x2e0] sm:$0xff] %v6491
  %v6493 = vld [vmem:[%s889 + $0x2f8] sm:$0xff]
  %v6494 = vsel %vm1473, %v6369, %v6493
  %6495 = vst [vmem:[%s889 + $0x2f8] sm:$0xff] %v6494
  %v6496 = vld [vmem:[%s889 + $0x310] sm:$0xff]
  %v6497 = vsel %vm1473, %v6371, %v6496
  %6498 = vst [vmem:[%s889 + $0x310] sm:$0xff] %v6497
  %v6499 = vld [vmem:[%s889 + $0x328] sm:$0xff]
  %v6500 = vsel %vm1473, %v6373, %v6499
  %6501 = vst [vmem:[%s889 + $0x328] sm:$0xff] %v6500
  %v6502 = vld [vmem:[%s889 + $0x10] sm:$0x80]
  %v6503 = vsel %vm1572, 0, %v6502
  %6504 = vst [vmem:[%s889 + $0x10] sm:$0x80] %v6503
  %v6505 = vld [vmem:[%s889 + $0x28] sm:$0x80]
  %v6506 = vsel %vm1572, 0, %v6505
  %6507 = vst [vmem:[%s889 + $0x28] sm:$0x80] %v6506
  %v6508 = vld [vmem:[%s889 + $0x40] sm:$0x80]
  %v6509 = vsel %vm1572, 0, %v6508
  %6510 = vst [vmem:[%s889 + $0x40] sm:$0x80] %v6509
  %v6511 = vld [vmem:[%s889 + $0x58] sm:$0x80]
  %v6512 = vsel %vm1572, 0, %v6511
  %6513 = vst [vmem:[%s889 + $0x58] sm:$0x80] %v6512
  %v6514 = vld [vmem:[%s889 + $0x70] sm:$0x80]
  %v6515 = vsel %vm1572, 0, %v6514
  %6516 = vst [vmem:[%s889 + $0x70] sm:$0x80] %v6515
  %v6517 = vld [vmem:[%s889 + $0x88] sm:$0x80]
  %v6518 = vsel %vm1572, 0, %v6517
  %6519 = vst [vmem:[%s889 + $0x88] sm:$0x80] %v6518
  %v6520 = vld [vmem:[%s889 + $0xa0] sm:$0x80]
  %v6521 = vsel %vm1572, 0, %v6520
  %6522 = vst [vmem:[%s889 + $0xa0] sm:$0x80] %v6521
  %v6523 = vld [vmem:[%s889 + $0xb8] sm:$0x80]
  %v6524 = vsel %vm1572, 0, %v6523
  %6525 = vst [vmem:[%s889 + $0xb8] sm:$0x80] %v6524
  %v6526 = vld [vmem:[%s889 + $0xd0] sm:$0x80]
  %v6527 = vsel %vm1572, 0, %v6526
  %6528 = vst [vmem:[%s889 + $0xd0] sm:$0x80] %v6527
  %v6529 = vld [vmem:[%s889 + $0xe8] sm:$0x80]
  %v6530 = vsel %vm1572, 0, %v6529
  %6531 = vst [vmem:[%s889 + $0xe8] sm:$0x80] %v6530
  %v6532 = vld [vmem:[%s889 + $0x100] sm:$0x80]
  %v6533 = vsel %vm1572, 0, %v6532
  %6534 = vst [vmem:[%s889 + $0x100] sm:$0x80] %v6533
  %v6535 = vld [vmem:[%s889 + $0x118] sm:$0x80]
  %v6536 = vsel %vm1572, 0, %v6535
  %6537 = vst [vmem:[%s889 + $0x118] sm:$0x80] %v6536
  %v6538 = vld [vmem:[%s889 + $0x130] sm:$0x80]
  %v6539 = vsel %vm1572, 0, %v6538
  %6540 = vst [vmem:[%s889 + $0x130] sm:$0x80] %v6539
  %v6541 = vld [vmem:[%s889 + $0x148] sm:$0x80]
  %v6542 = vsel %vm1572, 0, %v6541
  %6543 = vst [vmem:[%s889 + $0x148] sm:$0x80] %v6542
  %v6544 = vld [vmem:[%s889 + $0x160] sm:$0x80]
  %v6545 = vsel %vm1572, 0, %v6544
  %6546 = vst [vmem:[%s889 + $0x160] sm:$0x80] %v6545
  %v6547 = vld [vmem:[%s889 + $0x178] sm:$0x80]
  %v6548 = vsel %vm1572, 0, %v6547
  %6549 = vst [vmem:[%s889 + $0x178] sm:$0x80] %v6548
  %v6550 = vld [vmem:[%s889 + $0x1c0] sm:$0x80]
  %v6551 = vsel %vm1572, 0, %v6550
  %6552 = vst [vmem:[%s889 + $0x1c0] sm:$0x80] %v6551
  %v6553 = vld [vmem:[%s889 + $0x1d8] sm:$0x80]
  %v6554 = vsel %vm1572, 0, %v6553
  %6555 = vst [vmem:[%s889 + $0x1d8] sm:$0x80] %v6554
  %v6556 = vld [vmem:[%s889 + $0x1f0] sm:$0x80]
  %v6557 = vsel %vm1572, 0, %v6556
  %6558 = vst [vmem:[%s889 + $0x1f0] sm:$0x80] %v6557
  %v6559 = vld [vmem:[%s889 + $0x208] sm:$0x80]
  %v6560 = vsel %vm1572, 0, %v6559
  %6561 = vst [vmem:[%s889 + $0x208] sm:$0x80] %v6560
  %v6562 = vld [vmem:[%s889 + $0x220] sm:$0x80]
  %v6563 = vsel %vm1572, 0, %v6562
  %6564 = vst [vmem:[%s889 + $0x220] sm:$0x80] %v6563
  %v6565 = vld [vmem:[%s889 + $0x238] sm:$0x80]
  %v6566 = vsel %vm1572, 0, %v6565
  %6567 = vst [vmem:[%s889 + $0x238] sm:$0x80] %v6566
  %v6568 = vld [vmem:[%s889 + $0x250] sm:$0x80]
  %v6569 = vsel %vm1572, 0, %v6568
  %6570 = vst [vmem:[%s889 + $0x250] sm:$0x80] %v6569
  %v6571 = vld [vmem:[%s889 + $0x268] sm:$0x80]
  %v6572 = vsel %vm1572, 0, %v6571
  %6573 = vst [vmem:[%s889 + $0x268] sm:$0x80] %v6572
  %v6574 = vld [vmem:[%s889 + $0x280] sm:$0x80]
  %v6575 = vsel %vm1572, 0, %v6574
  %6576 = vst [vmem:[%s889 + $0x280] sm:$0x80] %v6575
  %v6577 = vld [vmem:[%s889 + $0x298] sm:$0x80]
  %v6578 = vsel %vm1572, 0, %v6577
  %6579 = vst [vmem:[%s889 + $0x298] sm:$0x80] %v6578
  %v6580 = vld [vmem:[%s889 + $0x2b0] sm:$0x80]
  %v6581 = vsel %vm1572, 0, %v6580
  %6582 = vst [vmem:[%s889 + $0x2b0] sm:$0x80] %v6581
  %v6583 = vld [vmem:[%s889 + $0x2c8] sm:$0x80]
  %v6584 = vsel %vm1572, 0, %v6583
  %6585 = vst [vmem:[%s889 + $0x2c8] sm:$0x80] %v6584
  %v6586 = vld [vmem:[%s889 + $0x2e0] sm:$0x80]
  %v6587 = vsel %vm1572, 0, %v6586
  %6588 = vst [vmem:[%s889 + $0x2e0] sm:$0x80] %v6587
  %v6589 = vld [vmem:[%s889 + $0x2f8] sm:$0x80]
  %v6590 = vsel %vm1572, 0, %v6589
  %6591 = vst [vmem:[%s889 + $0x2f8] sm:$0x80] %v6590
  %v6592 = vld [vmem:[%s889 + $0x310] sm:$0x80]
  %v6593 = vsel %vm1572, 0, %v6592
  %6594 = vst [vmem:[%s889 + $0x310] sm:$0x80] %v6593
  %v6595 = vld [vmem:[%s889 + $0x328] sm:$0x80]
  %v6596 = vsel %vm1572, 0, %v6595
  %6597 = vst [vmem:[%s889 + $0x328] sm:$0x80] %v6596
  %v6598 = vld [vmem:[%s8] sm:$0x1]
  %v6599 = vld [vmem:[#allocation2] sm:$0xff]
  %v6600 = vld [vmem:[#allocation2 + $0x8] sm:$0xff]
  %v6601 = vld [vmem:[#allocation2 + $0x10] sm:$0xff]
  %v6602 = vld [vmem:[#allocation2 + $0x18] sm:$0xff]
  %v6603 = vld [vmem:[#allocation2 + $0x20] sm:$0xff]
  %v6604 = vld [vmem:[#allocation2 + $0x28] sm:$0xff]
  %v6605 = vld [vmem:[#allocation2 + $0x30] sm:$0xff]
  %v6606 = vld [vmem:[#allocation2 + $0x38] sm:$0xff]
  %v6607 = vld [vmem:[#allocation2 + $0x40] sm:$0xff]
  %v6608 = vld [vmem:[#allocation2 + $0x48] sm:$0xff]
  %v6609 = vld [vmem:[#allocation2 + $0x50] sm:$0xff]
  %v6610 = vld [vmem:[#allocation2 + $0x58] sm:$0xff]
  %v6611 = vld [vmem:[#allocation2 + $0x60] sm:$0xff]
  %v6612 = vld [vmem:[#allocation2 + $0x68] sm:$0xff]
  %v6613 = vld [vmem:[#allocation2 + $0x70] sm:$0xff]
  %v6614 = vld [vmem:[#allocation2 + $0x78] sm:$0xff]
  %v6615 = vld [vmem:[#allocation2 + $0x80] sm:$0xff]
  %v6616 = vld [vmem:[#allocation2 + $0x88] sm:$0xff]
  %v6617 = vld [vmem:[#allocation2 + $0x90] sm:$0xff]
  %v6618 = vld [vmem:[#allocation2 + $0x98] sm:$0xff]
  %v6619 = vld [vmem:[#allocation2 + $0xa0] sm:$0xff]
  %v6620 = vld [vmem:[#allocation2 + $0xa8] sm:$0xff]
  %v6621 = vld [vmem:[#allocation2 + $0xb0] sm:$0xff]
  %v6622 = vld [vmem:[#allocation2 + $0xb8] sm:$0xff]
  %v6623 = vld [vmem:[#allocation2 + $0xc0] sm:$0xff]
  %v6624 = vld [vmem:[#allocation2 + $0xc8] sm:$0xff]
  %v6625 = vld [vmem:[#allocation2 + $0xd0] sm:$0xff]
  %v6626 = vld [vmem:[#allocation2 + $0xd8] sm:$0xff]
  %v6627 = vld [vmem:[#allocation2 + $0xe0] sm:$0xff]
  %v6628 = vld [vmem:[#allocation2 + $0xe8] sm:$0xff]
  %v6629 = vld [vmem:[#allocation2 + $0xf0] sm:$0xff]
  %v6630 = vld [vmem:[#allocation2 + $0xf8] sm:$0xff]
  %v6631 = vld [vmem:[#allocation2 + $0x100] sm:$0xff]
  %v6632 = vld [vmem:[#allocation2 + $0x108] sm:$0xff]
  %v6633 = vld [vmem:[#allocation2 + $0x110] sm:$0xff]
  %v6634 = vld [vmem:[#allocation2 + $0x118] sm:$0xff]
  %v6635 = vld [vmem:[#allocation2 + $0x120] sm:$0xff]
  %v6636 = vld [vmem:[#allocation2 + $0x128] sm:$0xff]
  %v6637 = vld [vmem:[#allocation2 + $0x130] sm:$0xff]
  %v6638 = vld [vmem:[#allocation2 + $0x138] sm:$0xff]
  %v6639 = vld [vmem:[#allocation2 + $0x140] sm:$0xff]
  %v6640 = vld [vmem:[#allocation2 + $0x148] sm:$0xff]
  %v6641 = vld [vmem:[#allocation2 + $0x150] sm:$0xff]
  %v6642 = vld [vmem:[#allocation2 + $0x158] sm:$0xff]
  %v6643 = vld [vmem:[#allocation2 + $0x160] sm:$0xff]
  %v6644 = vld [vmem:[#allocation2 + $0x168] sm:$0xff]
  %v6645 = vld [vmem:[#allocation2 + $0x170] sm:$0xff]
  %v6646 = vld [vmem:[#allocation2 + $0x178] sm:$0xff]
  %v6647 = vld [vmem:[#allocation2 + $0x1b0] sm:$0xff]
  %v6648 = vld [vmem:[#allocation2 + $0x1b8] sm:$0xff]
  %v6649 = vld [vmem:[#allocation2 + $0x1c0] sm:$0xff]
  %v6650 = vld [vmem:[#allocation2 + $0x1c8] sm:$0xff]
  %v6651 = vld [vmem:[#allocation2 + $0x1d0] sm:$0xff]
  %v6652 = vld [vmem:[#allocation2 + $0x1d8] sm:$0xff]
  %v6653 = vld [vmem:[#allocation2 + $0x1e0] sm:$0xff]
  %v6654 = vld [vmem:[#allocation2 + $0x1e8] sm:$0xff]
  %v6655 = vld [vmem:[#allocation2 + $0x1f0] sm:$0xff]
  %v6656 = vld [vmem:[#allocation2 + $0x1f8] sm:$0xff]
  %v6657 = vld [vmem:[#allocation2 + $0x200] sm:$0xff]
  %v6658 = vld [vmem:[#allocation2 + $0x208] sm:$0xff]
  %v6659 = vld [vmem:[#allocation2 + $0x210] sm:$0xff]
  %v6660 = vld [vmem:[#allocation2 + $0x218] sm:$0xff]
  %v6661 = vld [vmem:[#allocation2 + $0x220] sm:$0xff]
  %v6662 = vld [vmem:[#allocation2 + $0x228] sm:$0xff]
  %v6663 = vld [vmem:[#allocation2 + $0x230] sm:$0xff]
  %v6664 = vld [vmem:[#allocation2 + $0x238] sm:$0xff]
  %v6665 = vld [vmem:[#allocation2 + $0x240] sm:$0xff]
  %v6666 = vld [vmem:[#allocation2 + $0x248] sm:$0xff]
  %v6667 = vld [vmem:[#allocation2 + $0x250] sm:$0xff]
  %v6668 = vld [vmem:[#allocation2 + $0x258] sm:$0xff]
  %v6669 = vld [vmem:[#allocation2 + $0x260] sm:$0xff]
  %v6670 = vld [vmem:[#allocation2 + $0x268] sm:$0xff]
  %v6671 = vld [vmem:[#allocation2 + $0x270] sm:$0xff]
  %v6672 = vld [vmem:[#allocation2 + $0x278] sm:$0xff]
  %v6673 = vld [vmem:[#allocation2 + $0x280] sm:$0xff]
  %v6674 = vld [vmem:[#allocation2 + $0x288] sm:$0xff]
  %v6675 = vld [vmem:[#allocation2 + $0x290] sm:$0xff]
  %v6676 = vld [vmem:[#allocation2 + $0x298] sm:$0xff]
  %v6677 = vld [vmem:[#allocation2 + $0x2a0] sm:$0xff]
  %v6678 = vld [vmem:[#allocation2 + $0x2a8] sm:$0xff]
  %v6679 = vld [vmem:[#allocation2 + $0x2b0] sm:$0xff]
  %v6680 = vld [vmem:[#allocation2 + $0x2b8] sm:$0xff]
  %v6681 = vld [vmem:[#allocation2 + $0x2c0] sm:$0xff]
  %v6682 = vld [vmem:[#allocation2 + $0x2c8] sm:$0xff]
  %v6683 = vld [vmem:[#allocation2 + $0x2d0] sm:$0xff]
  %v6684 = vld [vmem:[#allocation2 + $0x2d8] sm:$0xff]
  %v6685 = vld [vmem:[#allocation2 + $0x2e0] sm:$0xff]
  %v6686 = vld [vmem:[#allocation2 + $0x2e8] sm:$0xff]
  %v6687 = vld [vmem:[#allocation2 + $0x2f0] sm:$0xff]
  %v6688 = vld [vmem:[#allocation2 + $0x2f8] sm:$0xff]
  %v6689 = vld [vmem:[#allocation2 + $0x300] sm:$0xff]
  %v6690 = vld [vmem:[#allocation2 + $0x308] sm:$0xff]
  %v6691 = vld [vmem:[#allocation2 + $0x310] sm:$0xff]
  %v6692 = vld [vmem:[#allocation2 + $0x318] sm:$0xff]
  %v6693 = vld [vmem:[#allocation2 + $0x320] sm:$0xff]
  %v6694 = vld [vmem:[#allocation2 + $0x328] sm:$0xff]
  %v6695 = vld [vmem:[%s7] sm:$0xf]
  %v6696 = vld [vmem:[%s7 + $0x4] sm:$0xf]
  %v6697 = vld [vmem:[%s7 + $0x8] sm:$0xf]
  %v6698 = vld [vmem:[%s7 + $0xc] sm:$0xf]
  %v6699 = vld [vmem:[%s7 + $0x10] sm:$0xf]
  %v6700 = vld [vmem:[%s7 + $0x14] sm:$0xf]
  %v6701 = vld [vmem:[%s7 + $0x18] sm:$0xf]
  %v6702 = vld [vmem:[%s7 + $0x1c] sm:$0xf]
  %v6703 = vld [vmem:[%s7 + $0x20] sm:$0xf]
  %v6704 = vld [vmem:[%s7 + $0x24] sm:$0xf]
  %v6705 = vld [vmem:[%s7 + $0x28] sm:$0xf]
  %v6706 = vld [vmem:[%s7 + $0x2c] sm:$0xf]
  %v6707 = vld [vmem:[%s7 + $0x30] sm:$0xf]
  %v6708 = vld [vmem:[%s7 + $0x34] sm:$0xf]
  %v6709 = vld [vmem:[%s7 + $0x38] sm:$0xf]
  %v6710 = vld [vmem:[%s7 + $0x3c] sm:$0xf]
  %v6711 = vld [vmem:[%s7 + $0x40] sm:$0xf]
  %v6712 = vld [vmem:[%s7 + $0x44] sm:$0xf]
  %v6713 = vld [vmem:[%s7 + $0x48] sm:$0xf]
  %v6714 = vld [vmem:[%s7 + $0x4c] sm:$0xf]
  %v6715 = vld [vmem:[%s7 + $0x50] sm:$0xf]
  %v6716 = vld [vmem:[%s7 + $0x54] sm:$0xf]
  %v6717 = vld [vmem:[%s7 + $0x58] sm:$0xf]
  %v6718 = vld [vmem:[%s7 + $0x5c] sm:$0xf]
  %v6719 = vld [vmem:[%s7 + $0x60] sm:$0xf]
  %v6720 = vld [vmem:[%s7 + $0x64] sm:$0xf]
  %v6721 = vld [vmem:[%s7 + $0x68] sm:$0xf]
  %v6722 = vld [vmem:[%s7 + $0x6c] sm:$0xf]
  %v6723 = vld [vmem:[%s7 + $0x70] sm:$0xf]
  %v6724 = vld [vmem:[%s7 + $0x74] sm:$0xf]
  %v6725 = vld [vmem:[%s7 + $0x78] sm:$0xf]
  %v6726 = vld [vmem:[%s7 + $0x7c] sm:$0xf]
  %v6727 = vld [vmem:[%s7 + $0x80] sm:$0xf]
  %v6728 = vld [vmem:[%s7 + $0x84] sm:$0xf]
  %v6729 = vld [vmem:[%s7 + $0x88] sm:$0xf]
  %v6730 = vld [vmem:[%s7 + $0x8c] sm:$0xf]
  %v6731 = vld [vmem:[%s7 + $0x90] sm:$0xf]
  %v6732 = vld [vmem:[%s7 + $0x94] sm:$0xf]
  %v6733 = vld [vmem:[%s7 + $0x98] sm:$0xf]
  %v6734 = vld [vmem:[%s7 + $0x9c] sm:$0xf]
  %v6735 = vld [vmem:[%s7 + $0xa0] sm:$0xf]
  %v6736 = vld [vmem:[%s7 + $0xa4] sm:$0xf]
  %v6737 = vld [vmem:[%s7 + $0xa8] sm:$0xf]
  %v6738 = vld [vmem:[%s7 + $0xac] sm:$0xf]
  %v6739 = vld [vmem:[%s7 + $0xb0] sm:$0xf]
  %v6740 = vld [vmem:[%s7 + $0xb4] sm:$0xf]
  %v6741 = vld [vmem:[%s7 + $0xb8] sm:$0xf]
  %v6742 = vld [vmem:[%s7 + $0xbc] sm:$0xf]
  %v6791 = vunpack.c.l.b16 %v6695
  %v6792 = vunpack.c.l.b16 %v6696
  %v6793 = vunpack.c.l.b16 %v6697
  %v6794 = vunpack.c.l.b16 %v6698
  %v6795 = vunpack.c.l.b16 %v6699
  %v6796 = vunpack.c.l.b16 %v6700
  %v6797 = vunpack.c.l.b16 %v6701
  %v6798 = vunpack.c.l.b16 %v6702
  %v6799 = vunpack.c.l.b16 %v6703
  %v6800 = vunpack.c.l.b16 %v6704
  %v6801 = vunpack.c.l.b16 %v6705
  %v6802 = vunpack.c.l.b16 %v6706
  %v6803 = vunpack.c.l.b16 %v6707
  %v6804 = vunpack.c.l.b16 %v6708
  %v6805 = vunpack.c.l.b16 %v6709
  %v6806 = vunpack.c.l.b16 %v6710
  %v6807 = vunpack.c.l.b16 %v6711
  %v6808 = vunpack.c.l.b16 %v6712
  %v6809 = vunpack.c.l.b16 %v6713
  %v6810 = vunpack.c.l.b16 %v6714
  %v6811 = vunpack.c.l.b16 %v6715
  %v6812 = vunpack.c.l.b16 %v6716
  %v6813 = vunpack.c.l.b16 %v6717
  %v6814 = vunpack.c.l.b16 %v6718
  %v6815 = vunpack.c.l.b16 %v6719
  %v6816 = vunpack.c.l.b16 %v6720
  %v6817 = vunpack.c.l.b16 %v6721
  %v6818 = vunpack.c.l.b16 %v6722
  %v6819 = vunpack.c.l.b16 %v6723
  %v6820 = vunpack.c.l.b16 %v6724
  %v6821 = vunpack.c.l.b16 %v6725
  %v6822 = vunpack.c.l.b16 %v6726
  %v6823 = vunpack.c.l.b16 %v6727
  %v6824 = vunpack.c.l.b16 %v6728
  %v6825 = vunpack.c.l.b16 %v6729
  %v6826 = vunpack.c.l.b16 %v6730
  %v6827 = vunpack.c.l.b16 %v6731
  %v6828 = vunpack.c.l.b16 %v6732
  %v6829 = vunpack.c.l.b16 %v6733
  %v6830 = vunpack.c.l.b16 %v6734
  %v6831 = vunpack.c.l.b16 %v6735
  %v6832 = vunpack.c.l.b16 %v6736
  %v6833 = vunpack.c.l.b16 %v6737
  %v6834 = vunpack.c.l.b16 %v6738
  %v6835 = vunpack.c.l.b16 %v6739
  %v6836 = vunpack.c.l.b16 %v6740
  %v6837 = vunpack.c.l.b16 %v6741
  %v6838 = vunpack.c.l.b16 %v6742
  %v6839 = vpack.c.b16 %v6792, %v6791
  %v6840 = vpack.c.b16 %v6794, %v6793
  %v6841 = vpack.c.b16 %v6796, %v6795
  %v6842 = vpack.c.b16 %v6798, %v6797
  %v6843 = vpack.c.b16 %v6800, %v6799
  %v6844 = vpack.c.b16 %v6802, %v6801
  %v6845 = vpack.c.b16 %v6804, %v6803
  %v6846 = vpack.c.b16 %v6806, %v6805
  %v6847 = vpack.c.b16 %v6808, %v6807
  %v6848 = vpack.c.b16 %v6810, %v6809
  %v6849 = vpack.c.b16 %v6812, %v6811
  %v6850 = vpack.c.b16 %v6814, %v6813
  %v6851 = vpack.c.b16 %v6816, %v6815
  %v6852 = vpack.c.b16 %v6818, %v6817
  %v6853 = vpack.c.b16 %v6820, %v6819
  %v6854 = vpack.c.b16 %v6822, %v6821
  %v6855 = vpack.c.b16 %v6824, %v6823
  %v6856 = vpack.c.b16 %v6826, %v6825
  %v6857 = vpack.c.b16 %v6828, %v6827
  %v6858 = vpack.c.b16 %v6830, %v6829
  %v6859 = vpack.c.b16 %v6832, %v6831
  %v6860 = vpack.c.b16 %v6834, %v6833
  %v6861 = vpack.c.b16 %v6836, %v6835
  %v6862 = vpack.c.b16 %v6838, %v6837
  %6887 = vmatprep.subr.bf16.mxu0 0
  %6888 = vmatpush1.bf16.msra.mxu0 %v6839
  %6889 = vmatprep.subr.bf16.mxu0 0
  %6890 = vmatpush1.bf16.msra.mxu0 %v6840
  %6891 = vmatprep.subr.bf16.mxu0 0
  %6892 = vmatpush1.bf16.msra.mxu0 %v6841
  %6893 = vmatprep.subr.bf16.mxu0 0
  %6894 = vmatpush1.bf16.msra.mxu0 %v6842
  %6895 = vmatprep.subr.bf16.mxu0 0
  %6896 = vmatpush1.bf16.msra.mxu0 %v6843
  %6897 = vmatprep.subr.bf16.mxu0 0
  %6898 = vmatpush1.bf16.msra.mxu0 %v6844
  %6899 = vmatprep.subr.bf16.mxu0 0
  %6900 = vmatpush1.bf16.msra.mxu0 %v6845
  %6901 = vmatprep.subr.bf16.mxu0 0
  %6902 = vmatpush1.bf16.msra.mxu0 %v6846
  %6903 = vmatprep.subr.bf16.mxu0 0
  %6904 = vmatpush1.bf16.msra.mxu0 %v6847
  %6905 = vmatprep.subr.bf16.mxu0 0
  %6906 = vmatpush1.bf16.msra.mxu0 %v6848
  %6907 = vmatprep.subr.bf16.mxu0 0
  %6908 = vmatpush1.bf16.msra.mxu0 %v6849
  %6909 = vmatprep.subr.bf16.mxu0 0
  %6910 = vmatpush1.bf16.msra.mxu0 %v6850
  %6911 = vmatprep.subr.bf16.mxu0 0
  %6912 = vmatpush1.bf16.msra.mxu0 %v6851
  %6913 = vmatprep.subr.bf16.mxu0 0
  %6914 = vmatpush1.bf16.msra.mxu0 %v6852
  %6915 = vmatprep.subr.bf16.mxu0 0
  %6916 = vmatpush1.bf16.msra.mxu0 %v6853
  %6917 = vmatprep.subr.bf16.mxu0 0
  %6918 = vmatpush1.bf16.msra.mxu0 %v6854
  %6919 = vmatprep.mubr.bf16.mxu0 %v6600
  %6920 = vmatmul.mubr.bf16.gmra.mrb[0].mxu0 %v6599
  %v6921 = vpop.f32.mrb[0].mxu0
  %v6922 = vadd.f32 0.0, %v6921
  %v6923 = vpop.f32.mrb[0].mxu0
  %v6924 = vpop.f32.mrb[0].mxu0
  %v6925 = vadd.f32 0.0, %v6924
  %v6926 = vpop.f32.mrb[0].mxu0
  %6927 = vmatprep.mubr.bf16.mxu0 %v6603
  %6928 = vmatmul.mubr.bf16.gmra.mrb[0].mxu0 %v6602
  %v6929 = vpop.f32.mrb[0].mxu0
  %v6930 = vadd.f32 0.0, %v6929
  %v6931 = vpop.f32.mrb[0].mxu0
  %v6932 = vpop.f32.mrb[0].mxu0
  %v6933 = vadd.f32 0.0, %v6932
  %v6934 = vpop.f32.mrb[0].mxu0
  %6935 = vmatprep.mubr.bf16.mxu0 %v6606
  %6936 = vmatmul.mubr.bf16.gmra.mrb[0].mxu0 %v6605
  %v6937 = vpop.f32.mrb[0].mxu0
  %v6938 = vadd.f32 0.0, %v6937
  %v6939 = vpop.f32.mrb[0].mxu0
  %v6940 = vpop.f32.mrb[0].mxu0
  %v6941 = vadd.f32 0.0, %v6940
  %v6942 = vpop.f32.mrb[0].mxu0
  %6943 = vmatprep.mubr.bf16.mxu0 %v6609
  %6944 = vmatmul.mubr.bf16.gmra.mrb[0].mxu0 %v6608
  %v6945 = vpop.f32.mrb[0].mxu0
  %v6946 = vadd.f32 0.0, %v6945
  %v6947 = vpop.f32.mrb[0].mxu0
  %v6948 = vpop.f32.mrb[0].mxu0
  %v6949 = vadd.f32 0.0, %v6948
  %v6950 = vpop.f32.mrb[0].mxu0
  %6951 = vmatprep.mubr.bf16.mxu0 %v6612
  %6952 = vmatmul.mubr.bf16.gmra.mrb[0].mxu0 %v6611
  %v6953 = vpop.f32.mrb[0].mxu0
  %v6954 = vadd.f32 0.0, %v6953
  %v6955 = vpop.f32.mrb[0].mxu0
  %v6956 = vpop.f32.mrb[0].mxu0
  %v6957 = vadd.f32 0.0, %v6956
  %v6958 = vpop.f32.mrb[0].mxu0
  %6959 = vmatprep.mubr.bf16.mxu0 %v6615
  %6960 = vmatmul.mubr.bf16.gmra.mrb[0].mxu0 %v6614
  %v6961 = vpop.f32.mrb[0].mxu0
  %v6962 = vadd.f32 0.0, %v6961
  %v6963 = vpop.f32.mrb[0].mxu0
  %v6964 = vpop.f32.mrb[0].mxu0
  %v6965 = vadd.f32 0.0, %v6964
  %v6966 = vpop.f32.mrb[0].mxu0
  %6967 = vmatprep.mubr.bf16.mxu0 %v6618
  %6968 = vmatmul.mubr.bf16.gmra.mrb[0].mxu0 %v6617
  %v6969 = vpop.f32.mrb[0].mxu0
  %v6970 = vadd.f32 0.0, %v6969
  %v6971 = vpop.f32.mrb[0].mxu0
  %v6972 = vpop.f32.mrb[0].mxu0
  %v6973 = vadd.f32 0.0, %v6972
  %v6974 = vpop.f32.mrb[0].mxu0
  %6975 = vmatprep.mubr.bf16.mxu0 %v6621
  %6976 = vmatmul.mubr.bf16.gmra.mrb[0].mxu0 %v6620
  %v6977 = vpop.f32.mrb[0].mxu0
  %v6978 = vadd.f32 0.0, %v6977
  %v6979 = vpop.f32.mrb[0].mxu0
  %v6980 = vpop.f32.mrb[0].mxu0
  %v6981 = vadd.f32 0.0, %v6980
  %v6982 = vpop.f32.mrb[0].mxu0
  %6983 = vmatprep.mubr.bf16.mxu0 %v6624
  %6984 = vmatmul.mubr.bf16.gmra.mrb[0].mxu0 %v6623
  %v6985 = vpop.f32.mrb[0].mxu0
  %v6986 = vadd.f32 0.0, %v6985
  %v6987 = vpop.f32.mrb[0].mxu0
  %v6988 = vpop.f32.mrb[0].mxu0
  %v6989 = vadd.f32 0.0, %v6988
  %v6990 = vpop.f32.mrb[0].mxu0
  %6991 = vmatprep.mubr.bf16.mxu0 %v6627
  %6992 = vmatmul.mubr.bf16.gmra.mrb[0].mxu0 %v6626
  %v6993 = vpop.f32.mrb[0].mxu0
  %v6994 = vadd.f32 0.0, %v6993
  %v6995 = vpop.f32.mrb[0].mxu0
  %v6996 = vpop.f32.mrb[0].mxu0
  %v6997 = vadd.f32 0.0, %v6996
  %v6998 = vpop.f32.mrb[0].mxu0
  %6999 = vmatprep.mubr.bf16.mxu0 %v6630
  %7000 = vmatmul.mubr.bf16.gmra.mrb[0].mxu0 %v6629
  %v7001 = vpop.f32.mrb[0].mxu0
  %v7002 = vadd.f32 0.0, %v7001
  %v7003 = vpop.f32.mrb[0].mxu0
  %v7004 = vpop.f32.mrb[0].mxu0
  %v7005 = vadd.f32 0.0, %v7004
  %v7006 = vpop.f32.mrb[0].mxu0
  %7007 = vmatprep.mubr.bf16.mxu0 %v6633
  %7008 = vmatmul.mubr.bf16.gmra.mrb[0].mxu0 %v6632
  %v7009 = vpop.f32.mrb[0].mxu0
  %v7010 = vadd.f32 0.0, %v7009
  %v7011 = vpop.f32.mrb[0].mxu0
  %v7012 = vpop.f32.mrb[0].mxu0
  %v7013 = vadd.f32 0.0, %v7012
  %v7014 = vpop.f32.mrb[0].mxu0
  %7015 = vmatprep.mubr.bf16.mxu0 %v6636
  %7016 = vmatmul.mubr.bf16.gmra.mrb[0].mxu0 %v6635
  %v7017 = vpop.f32.mrb[0].mxu0
  %v7018 = vadd.f32 0.0, %v7017
  %v7019 = vpop.f32.mrb[0].mxu0
  %v7020 = vpop.f32.mrb[0].mxu0
  %v7021 = vadd.f32 0.0, %v7020
  %v7022 = vpop.f32.mrb[0].mxu0
  %7023 = vmatprep.mubr.bf16.mxu0 %v6639
  %7024 = vmatmul.mubr.bf16.gmra.mrb[0].mxu0 %v6638
  %v7025 = vpop.f32.mrb[0].mxu0
  %v7026 = vadd.f32 0.0, %v7025
  %v7027 = vpop.f32.mrb[0].mxu0
  %v7028 = vpop.f32.mrb[0].mxu0
  %v7029 = vadd.f32 0.0, %v7028
  %v7030 = vpop.f32.mrb[0].mxu0
  %7031 = vmatprep.mubr.bf16.mxu0 %v6642
  %7032 = vmatmul.mubr.bf16.gmra.mrb[0].mxu0 %v6641
  %v7033 = vpop.f32.mrb[0].mxu0
  %v7034 = vadd.f32 0.0, %v7033
  %v7035 = vpop.f32.mrb[0].mxu0
  %v7036 = vpop.f32.mrb[0].mxu0
  %v7037 = vadd.f32 0.0, %v7036
  %v7038 = vpop.f32.mrb[0].mxu0
  %7039 = vmatprep.mubr.bf16.mxu0 %v6645
  %7040 = vmatmul.mubr.bf16.gmra.mrb[0].mxu0 %v6644
  %v7041 = vpop.f32.mrb[0].mxu0
  %v7042 = vadd.f32 0.0, %v7041
  %v7043 = vpop.f32.mrb[0].mxu0
  %v7044 = vpop.f32.mrb[0].mxu0
  %v7045 = vadd.f32 0.0, %v7044
  %v7046 = vpop.f32.mrb[0].mxu0
  %7047 = vmatprep.mubr.bf16.mxu0 %v6648
  %7048 = vmatmul.mubr.bf16.gmra.mrb[0].mxu0 %v6647
  %v7049 = vpop.f32.mrb[0].mxu0
  %v7050 = vadd.f32 0.0, %v7049
  %v7051 = vpop.f32.mrb[0].mxu0
  %v7052 = vpop.f32.mrb[0].mxu0
  %v7053 = vadd.f32 0.0, %v7052
  %v7054 = vpop.f32.mrb[0].mxu0
  %7055 = vmatprep.mubr.bf16.mxu0 %v6651
  %7056 = vmatmul.mubr.bf16.gmra.mrb[0].mxu0 %v6650
  %v7057 = vpop.f32.mrb[0].mxu0
  %v7058 = vadd.f32 0.0, %v7057
  %v7059 = vpop.f32.mrb[0].mxu0
  %v7060 = vpop.f32.mrb[0].mxu0
  %v7061 = vadd.f32 0.0, %v7060
  %v7062 = vpop.f32.mrb[0].mxu0
  %7063 = vmatprep.mubr.bf16.mxu0 %v6654
  %7064 = vmatmul.mubr.bf16.gmra.mrb[0].mxu0 %v6653
  %v7065 = vpop.f32.mrb[0].mxu0
  %v7066 = vadd.f32 0.0, %v7065
  %v7067 = vpop.f32.mrb[0].mxu0
  %v7068 = vpop.f32.mrb[0].mxu0
  %v7069 = vadd.f32 0.0, %v7068
  %v7070 = vpop.f32.mrb[0].mxu0
  %7071 = vmatprep.mubr.bf16.mxu0 %v6657
  %7072 = vmatmul.mubr.bf16.gmra.mrb[0].mxu0 %v6656
  %v7073 = vpop.f32.mrb[0].mxu0
  %v7074 = vadd.f32 0.0, %v7073
  %v7075 = vpop.f32.mrb[0].mxu0
  %v7076 = vpop.f32.mrb[0].mxu0
  %v7077 = vadd.f32 0.0, %v7076
  %v7078 = vpop.f32.mrb[0].mxu0
  %7079 = vmatprep.mubr.bf16.mxu0 %v6660
  %7080 = vmatmul.mubr.bf16.gmra.mrb[0].mxu0 %v6659
  %v7081 = vpop.f32.mrb[0].mxu0
  %v7082 = vadd.f32 0.0, %v7081
  %v7083 = vpop.f32.mrb[0].mxu0
  %v7084 = vpop.f32.mrb[0].mxu0
  %v7085 = vadd.f32 0.0, %v7084
  %v7086 = vpop.f32.mrb[0].mxu0
  %7087 = vmatprep.mubr.bf16.mxu0 %v6663
  %7088 = vmatmul.mubr.bf16.gmra.mrb[0].mxu0 %v6662
  %v7089 = vpop.f32.mrb[0].mxu0
  %v7090 = vadd.f32 0.0, %v7089
  %v7091 = vpop.f32.mrb[0].mxu0
  %v7092 = vpop.f32.mrb[0].mxu0
  %v7093 = vadd.f32 0.0, %v7092
  %v7094 = vpop.f32.mrb[0].mxu0
  %7095 = vmatprep.mubr.bf16.mxu0 %v6666
  %7096 = vmatmul.mubr.bf16.gmra.mrb[0].mxu0 %v6665
  %v7097 = vpop.f32.mrb[0].mxu0
  %v7098 = vadd.f32 0.0, %v7097
  %v7099 = vpop.f32.mrb[0].mxu0
  %v7100 = vpop.f32.mrb[0].mxu0
  %v7101 = vadd.f32 0.0, %v7100
  %v7102 = vpop.f32.mrb[0].mxu0
  %7103 = vmatprep.mubr.bf16.mxu0 %v6669
  %7104 = vmatmul.mubr.bf16.gmra.mrb[0].mxu0 %v6668
  %v7105 = vpop.f32.mrb[0].mxu0
  %v7106 = vadd.f32 0.0, %v7105
  %v7107 = vpop.f32.mrb[0].mxu0
  %v7108 = vpop.f32.mrb[0].mxu0
  %v7109 = vadd.f32 0.0, %v7108
  %v7110 = vpop.f32.mrb[0].mxu0
  %7111 = vmatprep.mubr.bf16.mxu0 %v6672
  %7112 = vmatmul.mubr.bf16.gmra.mrb[0].mxu0 %v6671
  %v7113 = vpop.f32.mrb[0].mxu0
  %v7114 = vadd.f32 0.0, %v7113
  %v7115 = vpop.f32.mrb[0].mxu0
  %v7116 = vpop.f32.mrb[0].mxu0
  %v7117 = vadd.f32 0.0, %v7116
  %v7118 = vpop.f32.mrb[0].mxu0
  %7119 = vmatprep.mubr.bf16.mxu0 %v6675
  %7120 = vmatmul.mubr.bf16.gmra.mrb[0].mxu0 %v6674
  %v7121 = vpop.f32.mrb[0].mxu0
  %v7122 = vadd.f32 0.0, %v7121
  %v7123 = vpop.f32.mrb[0].mxu0
  %v7124 = vpop.f32.mrb[0].mxu0
  %v7125 = vadd.f32 0.0, %v7124
  %v7126 = vpop.f32.mrb[0].mxu0
  %7127 = vmatprep.mubr.bf16.mxu0 %v6678
  %7128 = vmatmul.mubr.bf16.gmra.mrb[0].mxu0 %v6677
  %v7129 = vpop.f32.mrb[0].mxu0
  %v7130 = vadd.f32 0.0, %v7129
  %v7131 = vpop.f32.mrb[0].mxu0
  %v7132 = vpop.f32.mrb[0].mxu0
  %v7133 = vadd.f32 0.0, %v7132
  %v7134 = vpop.f32.mrb[0].mxu0
  %7135 = vmatprep.mubr.bf16.mxu0 %v6681
  %7136 = vmatmul.mubr.bf16.gmra.mrb[0].mxu0 %v6680
  %v7137 = vpop.f32.mrb[0].mxu0
  %v7138 = vadd.f32 0.0, %v7137
  %v7139 = vpop.f32.mrb[0].mxu0
  %v7140 = vpop.f32.mrb[0].mxu0
  %v7141 = vadd.f32 0.0, %v7140
  %v7142 = vpop.f32.mrb[0].mxu0
  %7143 = vmatprep.mubr.bf16.mxu0 %v6684
  %7144 = vmatmul.mubr.bf16.gmra.mrb[0].mxu0 %v6683
  %v7145 = vpop.f32.mrb[0].mxu0
  %v7146 = vadd.f32 0.0, %v7145
  %v7147 = vpop.f32.mrb[0].mxu0
  %v7148 = vpop.f32.mrb[0].mxu0
  %v7149 = vadd.f32 0.0, %v7148
  %v7150 = vpop.f32.mrb[0].mxu0
  %7151 = vmatprep.mubr.bf16.mxu0 %v6687
  %7152 = vmatmul.mubr.bf16.gmra.mrb[0].mxu0 %v6686
  %v7153 = vpop.f32.mrb[0].mxu0
  %v7154 = vadd.f32 0.0, %v7153
  %v7155 = vpop.f32.mrb[0].mxu0
  %v7156 = vpop.f32.mrb[0].mxu0
  %v7157 = vadd.f32 0.0, %v7156
  %v7158 = vpop.f32.mrb[0].mxu0
  %7159 = vmatprep.mubr.bf16.mxu0 %v6690
  %7160 = vmatmul.mubr.bf16.gmra.mrb[0].mxu0 %v6689
  %v7161 = vpop.f32.mrb[0].mxu0
  %v7162 = vadd.f32 0.0, %v7161
  %v7163 = vpop.f32.mrb[0].mxu0
  %v7164 = vpop.f32.mrb[0].mxu0
  %v7165 = vadd.f32 0.0, %v7164
  %v7166 = vpop.f32.mrb[0].mxu0
  %7167 = vmatprep.mubr.bf16.mxu0 %v6693
  %7168 = vmatmul.mubr.bf16.gmra.mrb[0].mxu0 %v6692
  %v7169 = vpop.f32.mrb[0].mxu0
  %v7170 = vadd.f32 0.0, %v7169
  %v7171 = vpop.f32.mrb[0].mxu0
  %v7172 = vpop.f32.mrb[0].mxu0
  %v7173 = vadd.f32 0.0, %v7172
  %v7174 = vpop.f32.mrb[0].mxu0
  %7175 = vdwg.mxu0
  %7176 = vmatprep.subr.bf16.mxu0 0
  %7177 = vmatpush1.bf16.msra.mxu0 %v6855
  %7178 = vmatprep.subr.bf16.mxu0 0
  %7179 = vmatpush1.bf16.msra.mxu0 %v6856
  %7180 = vmatprep.subr.bf16.mxu0 0
  %7181 = vmatpush1.bf16.msra.mxu0 %v6857
  %7182 = vmatprep.subr.bf16.mxu0 0
  %7183 = vmatpush1.bf16.msra.mxu0 %v6858
  %7184 = vmatprep.subr.bf16.mxu0 0
  %7185 = vmatpush1.bf16.msra.mxu0 %v6859
  %7186 = vmatprep.subr.bf16.mxu0 0
  %7187 = vmatpush1.bf16.msra.mxu0 %v6860
  %7188 = vmatprep.subr.bf16.mxu0 0
  %7189 = vmatpush1.bf16.msra.mxu0 %v6861
  %7190 = vmatprep.subr.bf16.mxu0 0
  %7191 = vmatpush1.bf16.msra.mxu0 %v6862
  %7192 = vmatprep.subr.bf16.mxu0 0
  %7193 = vmatpush1.bf16.msra.mxu0 0
  %7194 = vmatprep.subr.bf16.mxu0 0
  %7195 = vmatpush1.bf16.msra.mxu0 0
  %7196 = vmatprep.subr.bf16.mxu0 0
  %7197 = vmatpush1.bf16.msra.mxu0 0
  %7198 = vmatprep.subr.bf16.mxu0 0
  %7199 = vmatpush1.bf16.msra.mxu0 0
  %7200 = vmatprep.subr.bf16.mxu0 0
  %7201 = vmatpush1.bf16.msra.mxu0 0
  %7202 = vmatprep.subr.bf16.mxu0 0
  %7203 = vmatpush1.bf16.msra.mxu0 0
  %7204 = vmatprep.subr.bf16.mxu0 0
  %7205 = vmatpush1.bf16.msra.mxu0 0
  %7206 = vmatprep.subr.bf16.mxu0 0
  %7207 = vmatpush1.bf16.msra.mxu0 0
  %7208 = vmatprep.mubr.bf16.mxu0 0
  %7209 = vmatmul.mubr.bf16.gmra.mrb[0].mxu0 %v6601
  %v7210 = vpop.f32.mrb[0].mxu0
  %v7211 = vadd.f32 %v6922, %v7210
  %v7212 = vpop.f32.mrb[0].mxu0
  %v7213 = vpop.f32.mrb[0].mxu0
  %v7214 = vadd.f32 %v6925, %v7213
  %v7215 = vpop.f32.mrb[0].mxu0
  %7216 = vmatprep.mubr.bf16.mxu0 0
  %7217 = vmatmul.mubr.bf16.gmra.mrb[0].mxu0 %v6604
  %v7218 = vpop.f32.mrb[0].mxu0
  %v7219 = vadd.f32 %v6930, %v7218
  %v7220 = vpop.f32.mrb[0].mxu0
  %v7221 = vpop.f32.mrb[0].mxu0
  %v7222 = vadd.f32 %v6933, %v7221
  %v7223 = vpop.f32.mrb[0].mxu0
  %7224 = vmatprep.mubr.bf16.mxu0 0
  %7225 = vmatmul.mubr.bf16.gmra.mrb[0].mxu0 %v6607
  %v7226 = vpop.f32.mrb[0].mxu0
  %v7227 = vadd.f32 %v6938, %v7226
  %v7228 = vpop.f32.mrb[0].mxu0
  %v7229 = vpop.f32.mrb[0].mxu0
  %v7230 = vadd.f32 %v6941, %v7229
  %v7231 = vpop.f32.mrb[0].mxu0
  %7232 = vmatprep.mubr.bf16.mxu0 0
  %7233 = vmatmul.mubr.bf16.gmra.mrb[0].mxu0 %v6610
  %v7234 = vpop.f32.mrb[0].mxu0
  %v7235 = vadd.f32 %v6946, %v7234
  %v7236 = vpop.f32.mrb[0].mxu0
  %v7237 = vpop.f32.mrb[0].mxu0
  %v7238 = vadd.f32 %v6949, %v7237
  %v7239 = vpop.f32.mrb[0].mxu0
  %7240 = vmatprep.mubr.bf16.mxu0 0
  %7241 = vmatmul.mubr.bf16.gmra.mrb[0].mxu0 %v6613
  %v7242 = vpop.f32.mrb[0].mxu0
  %v7243 = vadd.f32 %v6954, %v7242
  %v7244 = vpop.f32.mrb[0].mxu0
  %v7245 = vpop.f32.mrb[0].mxu0
  %v7246 = vadd.f32 %v6957, %v7245
  %v7247 = vpop.f32.mrb[0].mxu0
  %7248 = vmatprep.mubr.bf16.mxu0 0
  %7249 = vmatmul.mubr.bf16.gmra.mrb[0].mxu0 %v6616
  %v7250 = vpop.f32.mrb[0].mxu0
  %v7251 = vadd.f32 %v6962, %v7250
  %v7252 = vpop.f32.mrb[0].mxu0
  %v7253 = vpop.f32.mrb[0].mxu0
  %v7254 = vadd.f32 %v6965, %v7253
  %v7255 = vpop.f32.mrb[0].mxu0
  %7256 = vmatprep.mubr.bf16.mxu0 0
  %7257 = vmatmul.mubr.bf16.gmra.mrb[0].mxu0 %v6619
  %v7258 = vpop.f32.mrb[0].mxu0
  %v7259 = vadd.f32 %v6970, %v7258
  %v7260 = vpop.f32.mrb[0].mxu0
  %v7261 = vpop.f32.mrb[0].mxu0
  %v7262 = vadd.f32 %v6973, %v7261
  %v7263 = vpop.f32.mrb[0].mxu0
  %7264 = vmatprep.mubr.bf16.mxu0 0
  %7265 = vmatmul.mubr.bf16.gmra.mrb[0].mxu0 %v6622
  %v7266 = vpop.f32.mrb[0].mxu0
  %v7267 = vadd.f32 %v6978, %v7266
  %v7268 = vpop.f32.mrb[0].mxu0
  %v7269 = vpop.f32.mrb[0].mxu0
  %v7270 = vadd.f32 %v6981, %v7269
  %v7271 = vpop.f32.mrb[0].mxu0
  %7272 = vmatprep.mubr.bf16.mxu0 0
  %7273 = vmatmul.mubr.bf16.gmra.mrb[0].mxu0 %v6625
  %v7274 = vpop.f32.mrb[0].mxu0
  %v7275 = vadd.f32 %v6986, %v7274
  %v7276 = vpop.f32.mrb[0].mxu0
  %v7277 = vpop.f32.mrb[0].mxu0
  %v7278 = vadd.f32 %v6989, %v7277
  %v7279 = vpop.f32.mrb[0].mxu0
  %7280 = vmatprep.mubr.bf16.mxu0 0
  %7281 = vmatmul.mubr.bf16.gmra.mrb[0].mxu0 %v6628
  %v7282 = vpop.f32.mrb[0].mxu0
  %v7283 = vadd.f32 %v6994, %v7282
  %v7284 = vpop.f32.mrb[0].mxu0
  %v7285 = vpop.f32.mrb[0].mxu0
  %v7286 = vadd.f32 %v6997, %v7285
  %v7287 = vpop.f32.mrb[0].mxu0
  %7288 = vmatprep.mubr.bf16.mxu0 0
  %7289 = vmatmul.mubr.bf16.gmra.mrb[0].mxu0 %v6631
  %v7290 = vpop.f32.mrb[0].mxu0
  %v7291 = vadd.f32 %v7002, %v7290
  %v7292 = vpop.f32.mrb[0].mxu0
  %v7293 = vpop.f32.mrb[0].mxu0
  %v7294 = vadd.f32 %v7005, %v7293
  %v7295 = vpop.f32.mrb[0].mxu0
  %7296 = vmatprep.mubr.bf16.mxu0 0
  %7297 = vmatmul.mubr.bf16.gmra.mrb[0].mxu0 %v6634
  %v7298 = vpop.f32.mrb[0].mxu0
  %v7299 = vadd.f32 %v7010, %v7298
  %v7300 = vpop.f32.mrb[0].mxu0
  %v7301 = vpop.f32.mrb[0].mxu0
  %v7302 = vadd.f32 %v7013, %v7301
  %v7303 = vpop.f32.mrb[0].mxu0
  %7304 = vmatprep.mubr.bf16.mxu0 0
  %7305 = vmatmul.mubr.bf16.gmra.mrb[0].mxu0 %v6637
  %v7306 = vpop.f32.mrb[0].mxu0
  %v7307 = vadd.f32 %v7018, %v7306
  %v7308 = vpop.f32.mrb[0].mxu0
  %v7309 = vpop.f32.mrb[0].mxu0
  %v7310 = vadd.f32 %v7021, %v7309
  %v7311 = vpop.f32.mrb[0].mxu0
  %7312 = vmatprep.mubr.bf16.mxu0 0
  %7313 = vmatmul.mubr.bf16.gmra.mrb[0].mxu0 %v6640
  %v7314 = vpop.f32.mrb[0].mxu0
  %v7315 = vadd.f32 %v7026, %v7314
  %v7316 = vpop.f32.mrb[0].mxu0
  %v7317 = vpop.f32.mrb[0].mxu0
  %v7318 = vadd.f32 %v7029, %v7317
  %v7319 = vpop.f32.mrb[0].mxu0
  %7320 = vmatprep.mubr.bf16.mxu0 0
  %7321 = vmatmul.mubr.bf16.gmra.mrb[0].mxu0 %v6643
  %v7322 = vpop.f32.mrb[0].mxu0
  %v7323 = vadd.f32 %v7034, %v7322
  %v7324 = vpop.f32.mrb[0].mxu0
  %v7325 = vpop.f32.mrb[0].mxu0
  %v7326 = vadd.f32 %v7037, %v7325
  %v7327 = vpop.f32.mrb[0].mxu0
  %7328 = vmatprep.mubr.bf16.mxu0 0
  %7329 = vmatmul.mubr.bf16.gmra.mrb[0].mxu0 %v6646
  %v7330 = vpop.f32.mrb[0].mxu0
  %v7331 = vadd.f32 %v7042, %v7330
  %v7332 = vpop.f32.mrb[0].mxu0
  %v7333 = vpop.f32.mrb[0].mxu0
  %v7334 = vadd.f32 %v7045, %v7333
  %v7335 = vpop.f32.mrb[0].mxu0
  %7336 = vmatprep.mubr.bf16.mxu0 0
  %7337 = vmatmul.mubr.bf16.gmra.mrb[0].mxu0 %v6649
  %v7338 = vpop.f32.mrb[0].mxu0
  %v7339 = vadd.f32 %v7050, %v7338
  %v7340 = vpop.f32.mrb[0].mxu0
  %v7341 = vpop.f32.mrb[0].mxu0
  %v7342 = vadd.f32 %v7053, %v7341
  %v7343 = vpop.f32.mrb[0].mxu0
  %7344 = vmatprep.mubr.bf16.mxu0 0
  %7345 = vmatmul.mubr.bf16.gmra.mrb[0].mxu0 %v6652
  %v7346 = vpop.f32.mrb[0].mxu0
  %v7347 = vadd.f32 %v7058, %v7346
  %v7348 = vpop.f32.mrb[0].mxu0
  %v7349 = vpop.f32.mrb[0].mxu0
  %v7350 = vadd.f32 %v7061, %v7349
  %v7351 = vpop.f32.mrb[0].mxu0
  %7352 = vmatprep.mubr.bf16.mxu0 0
  %7353 = vmatmul.mubr.bf16.gmra.mrb[0].mxu0 %v6655
  %v7354 = vpop.f32.mrb[0].mxu0
  %v7355 = vadd.f32 %v7066, %v7354
  %v7356 = vpop.f32.mrb[0].mxu0
  %v7357 = vpop.f32.mrb[0].mxu0
  %v7358 = vadd.f32 %v7069, %v7357
  %v7359 = vpop.f32.mrb[0].mxu0
  %7360 = vmatprep.mubr.bf16.mxu0 0
  %7361 = vmatmul.mubr.bf16.gmra.mrb[0].mxu0 %v6658
  %v7362 = vpop.f32.mrb[0].mxu0
  %v7363 = vadd.f32 %v7074, %v7362
  %v7364 = vpop.f32.mrb[0].mxu0
  %v7365 = vpop.f32.mrb[0].mxu0
  %v7366 = vadd.f32 %v7077, %v7365
  %v7367 = vpop.f32.mrb[0].mxu0
  %7368 = vmatprep.mubr.bf16.mxu0 0
  %7369 = vmatmul.mubr.bf16.gmra.mrb[0].mxu0 %v6661
  %v7370 = vpop.f32.mrb[0].mxu0
  %v7371 = vadd.f32 %v7082, %v7370
  %v7372 = vpop.f32.mrb[0].mxu0
  %v7373 = vpop.f32.mrb[0].mxu0
  %v7374 = vadd.f32 %v7085, %v7373
  %v7375 = vpop.f32.mrb[0].mxu0
  %7376 = vmatprep.mubr.bf16.mxu0 0
  %7377 = vmatmul.mubr.bf16.gmra.mrb[0].mxu0 %v6664
  %v7378 = vpop.f32.mrb[0].mxu0
  %v7379 = vadd.f32 %v7090, %v7378
  %v7380 = vpop.f32.mrb[0].mxu0
  %v7381 = vpop.f32.mrb[0].mxu0
  %v7382 = vadd.f32 %v7093, %v7381
  %v7383 = vpop.f32.mrb[0].mxu0
  %7384 = vmatprep.mubr.bf16.mxu0 0
  %7385 = vmatmul.mubr.bf16.gmra.mrb[0].mxu0 %v6667
  %v7386 = vpop.f32.mrb[0].mxu0
  %v7387 = vadd.f32 %v7098, %v7386
  %v7388 = vpop.f32.mrb[0].mxu0
  %v7389 = vpop.f32.mrb[0].mxu0
  %v7390 = vadd.f32 %v7101, %v7389
  %v7391 = vpop.f32.mrb[0].mxu0
  %7392 = vmatprep.mubr.bf16.mxu0 0
  %7393 = vmatmul.mubr.bf16.gmra.mrb[0].mxu0 %v6670
  %v7394 = vpop.f32.mrb[0].mxu0
  %v7395 = vadd.f32 %v7106, %v7394
  %v7396 = vpop.f32.mrb[0].mxu0
  %v7397 = vpop.f32.mrb[0].mxu0
  %v7398 = vadd.f32 %v7109, %v7397
  %v7399 = vpop.f32.mrb[0].mxu0
  %7400 = vmatprep.mubr.bf16.mxu0 0
  %7401 = vmatmul.mubr.bf16.gmra.mrb[0].mxu0 %v6673
  %v7402 = vpop.f32.mrb[0].mxu0
  %v7403 = vadd.f32 %v7114, %v7402
  %v7404 = vpop.f32.mrb[0].mxu0
  %v7405 = vpop.f32.mrb[0].mxu0
  %v7406 = vadd.f32 %v7117, %v7405
  %v7407 = vpop.f32.mrb[0].mxu0
  %7408 = vmatprep.mubr.bf16.mxu0 0
  %7409 = vmatmul.mubr.bf16.gmra.mrb[0].mxu0 %v6676
  %v7410 = vpop.f32.mrb[0].mxu0
  %v7411 = vadd.f32 %v7122, %v7410
  %v7412 = vpop.f32.mrb[0].mxu0
  %v7413 = vpop.f32.mrb[0].mxu0
  %v7414 = vadd.f32 %v7125, %v7413
  %v7415 = vpop.f32.mrb[0].mxu0
  %7416 = vmatprep.mubr.bf16.mxu0 0
  %7417 = vmatmul.mubr.bf16.gmra.mrb[0].mxu0 %v6679
  %v7418 = vpop.f32.mrb[0].mxu0
  %v7419 = vadd.f32 %v7130, %v7418
  %v7420 = vpop.f32.mrb[0].mxu0
  %v7421 = vpop.f32.mrb[0].mxu0
  %v7422 = vadd.f32 %v7133, %v7421
  %v7423 = vpop.f32.mrb[0].mxu0
  %7424 = vmatprep.mubr.bf16.mxu0 0
  %7425 = vmatmul.mubr.bf16.gmra.mrb[0].mxu0 %v6682
  %v7426 = vpop.f32.mrb[0].mxu0
  %v7427 = vadd.f32 %v7138, %v7426
  %v7428 = vpop.f32.mrb[0].mxu0
  %v7429 = vpop.f32.mrb[0].mxu0
  %v7430 = vadd.f32 %v7141, %v7429
  %v7431 = vpop.f32.mrb[0].mxu0
  %7432 = vmatprep.mubr.bf16.mxu0 0
  %7433 = vmatmul.mubr.bf16.gmra.mrb[0].mxu0 %v6685
  %v7434 = vpop.f32.mrb[0].mxu0
  %v7435 = vadd.f32 %v7146, %v7434
  %v7436 = vpop.f32.mrb[0].mxu0
  %v7437 = vpop.f32.mrb[0].mxu0
  %v7438 = vadd.f32 %v7149, %v7437
  %v7439 = vpop.f32.mrb[0].mxu0
  %7440 = vmatprep.mubr.bf16.mxu0 0
  %7441 = vmatmul.mubr.bf16.gmra.mrb[0].mxu0 %v6688
  %v7442 = vpop.f32.mrb[0].mxu0
  %v7443 = vadd.f32 %v7154, %v7442
  %v7444 = vpop.f32.mrb[0].mxu0
  %v7445 = vpop.f32.mrb[0].mxu0
  %v7446 = vadd.f32 %v7157, %v7445
  %v7447 = vpop.f32.mrb[0].mxu0
  %7448 = vmatprep.mubr.bf16.mxu0 0
  %7449 = vmatmul.mubr.bf16.gmra.mrb[0].mxu0 %v6691
  %v7450 = vpop.f32.mrb[0].mxu0
  %v7451 = vadd.f32 %v7162, %v7450
  %v7452 = vpop.f32.mrb[0].mxu0
  %v7453 = vpop.f32.mrb[0].mxu0
  %v7454 = vadd.f32 %v7165, %v7453
  %v7455 = vpop.f32.mrb[0].mxu0
  %7456 = vmatprep.mubr.bf16.mxu0 0
  %7457 = vmatmul.mubr.bf16.gmra.mrb[0].mxu0 %v6694
  %v7458 = vpop.f32.mrb[0].mxu0
  %v7459 = vadd.f32 %v7170, %v7458
  %v7460 = vpop.f32.mrb[0].mxu0
  %v7461 = vpop.f32.mrb[0].mxu0
  %v7462 = vadd.f32 %v7173, %v7461
  %v7463 = vpop.f32.mrb[0].mxu0
  %7464 = vdwg.mxu0
  %v7466 = vlaneseq
  %v7467 = vshrl.u32 %v7466, 7
  %v7468 = vsub.s32 0, %v7467
  %v7469 = vrot.slane %v6598, %v7468
  %v7471 = vadd.f32 %v7469, %v7211
  %v7472 = vadd.f32 %v7469, %v7214
  %v7473 = vadd.f32 %v7469, %v7219
  %v7474 = vadd.f32 %v7469, %v7222
  %v7475 = vadd.f32 %v7469, %v7227
  %v7476 = vadd.f32 %v7469, %v7230
  %v7477 = vadd.f32 %v7469, %v7235
  %v7478 = vadd.f32 %v7469, %v7238
  %v7479 = vadd.f32 %v7469, %v7243
  %v7480 = vadd.f32 %v7469, %v7246
  %v7481 = vadd.f32 %v7469, %v7251
  %v7482 = vadd.f32 %v7469, %v7254
  %v7483 = vadd.f32 %v7469, %v7259
  %v7484 = vadd.f32 %v7469, %v7262
  %v7485 = vadd.f32 %v7469, %v7267
  %v7486 = vadd.f32 %v7469, %v7270
  %v7487 = vadd.f32 %v7469, %v7275
  %v7488 = vadd.f32 %v7469, %v7278
  %v7489 = vadd.f32 %v7469, %v7283
  %v7490 = vadd.f32 %v7469, %v7286
  %v7491 = vadd.f32 %v7469, %v7291
  %v7492 = vadd.f32 %v7469, %v7294
  %v7493 = vadd.f32 %v7469, %v7299
  %v7494 = vadd.f32 %v7469, %v7302
  %v7495 = vadd.f32 %v7469, %v7307
  %v7496 = vadd.f32 %v7469, %v7310
  %v7497 = vadd.f32 %v7469, %v7315
  %v7498 = vadd.f32 %v7469, %v7318
  %v7499 = vadd.f32 %v7469, %v7323
  %v7500 = vadd.f32 %v7469, %v7326
  %v7501 = vadd.f32 %v7469, %v7331
  %v7502 = vadd.f32 %v7469, %v7334
  %v7503 = vadd.f32 %v7469, %v7339
  %v7504 = vadd.f32 %v7469, %v7342
  %v7505 = vadd.f32 %v7469, %v7347
  %v7506 = vadd.f32 %v7469, %v7350
  %v7507 = vadd.f32 %v7469, %v7355
  %v7508 = vadd.f32 %v7469, %v7358
  %v7509 = vadd.f32 %v7469, %v7363
  %v7510 = vadd.f32 %v7469, %v7366
  %v7511 = vadd.f32 %v7469, %v7371
  %v7512 = vadd.f32 %v7469, %v7374
  %v7513 = vadd.f32 %v7469, %v7379
  %v7514 = vadd.f32 %v7469, %v7382
  %v7515 = vadd.f32 %v7469, %v7387
  %v7516 = vadd.f32 %v7469, %v7390
  %v7517 = vadd.f32 %v7469, %v7395
  %v7518 = vadd.f32 %v7469, %v7398
  %v7519 = vadd.f32 %v7469, %v7403
  %v7520 = vadd.f32 %v7469, %v7406
  %v7521 = vadd.f32 %v7469, %v7411
  %v7522 = vadd.f32 %v7469, %v7414
  %v7523 = vadd.f32 %v7469, %v7419
  %v7524 = vadd.f32 %v7469, %v7422
  %v7525 = vadd.f32 %v7469, %v7427
  %v7526 = vadd.f32 %v7469, %v7430
  %v7527 = vadd.f32 %v7469, %v7435
  %v7528 = vadd.f32 %v7469, %v7438
  %v7529 = vadd.f32 %v7469, %v7443
  %v7530 = vadd.f32 %v7469, %v7446
  %v7531 = vadd.f32 %v7469, %v7451
  %v7532 = vadd.f32 %v7469, %v7454
  %v7533 = vadd.f32 %v7469, %v7459
  %v7534 = vadd.f32 %v7469, %v7462
  %7535 = vst.msk [vmem:[#allocation3] sm:$0xff] %vm2606, %v7471
  %7536 = vst.msk [vmem:[#allocation3 + $0x8] sm:$0xff] %vm2606, %v7472
  %7537 = vst.msk [vmem:[#allocation3 + $0x10] sm:$0xff] %vm2606, %v7473
  %7538 = vst.msk [vmem:[#allocation3 + $0x18] sm:$0xff] %vm2606, %v7474
  %7539 = vst.msk [vmem:[#allocation3 + $0x20] sm:$0xff] %vm2606, %v7475
  %7540 = vst.msk [vmem:[#allocation3 + $0x28] sm:$0xff] %vm2606, %v7476
  %7541 = vst.msk [vmem:[#allocation3 + $0x30] sm:$0xff] %vm2606, %v7477
  %7542 = vst.msk [vmem:[#allocation3 + $0x38] sm:$0xff] %vm2606, %v7478
  %7543 = vst.msk [vmem:[#allocation3 + $0x40] sm:$0xff] %vm2606, %v7479
  %7544 = vst.msk [vmem:[#allocation3 + $0x48] sm:$0xff] %vm2606, %v7480
  %7545 = vst.msk [vmem:[#allocation3 + $0x50] sm:$0xff] %vm2606, %v7481
  %7546 = vst.msk [vmem:[#allocation3 + $0x58] sm:$0xff] %vm2606, %v7482
  %7547 = vst.msk [vmem:[#allocation3 + $0x60] sm:$0xff] %vm2606, %v7483
  %7548 = vst.msk [vmem:[#allocation3 + $0x68] sm:$0xff] %vm2606, %v7484
  %7549 = vst.msk [vmem:[#allocation3 + $0x70] sm:$0xff] %vm2606, %v7485
  %7550 = vst.msk [vmem:[#allocation3 + $0x78] sm:$0xff] %vm2606, %v7486
  %7551 = vst.msk [vmem:[#allocation3 + $0x80] sm:$0xff] %vm2606, %v7487
  %7552 = vst.msk [vmem:[#allocation3 + $0x88] sm:$0xff] %vm2606, %v7488
  %7553 = vst.msk [vmem:[#allocation3 + $0x90] sm:$0xff] %vm2606, %v7489
  %7554 = vst.msk [vmem:[#allocation3 + $0x98] sm:$0xff] %vm2606, %v7490
  %7555 = vst.msk [vmem:[#allocation3 + $0xa0] sm:$0xff] %vm2606, %v7491
  %7556 = vst.msk [vmem:[#allocation3 + $0xa8] sm:$0xff] %vm2606, %v7492
  %7557 = vst.msk [vmem:[#allocation3 + $0xb0] sm:$0xff] %vm2606, %v7493
  %7558 = vst.msk [vmem:[#allocation3 + $0xb8] sm:$0xff] %vm2606, %v7494
  %7559 = vst.msk [vmem:[#allocation3 + $0xc0] sm:$0xff] %vm2606, %v7495
  %7560 = vst.msk [vmem:[#allocation3 + $0xc8] sm:$0xff] %vm2606, %v7496
  %7561 = vst.msk [vmem:[#allocation3 + $0xd0] sm:$0xff] %vm2606, %v7497
  %7562 = vst.msk [vmem:[#allocation3 + $0xd8] sm:$0xff] %vm2606, %v7498
  %7563 = vst.msk [vmem:[#allocation3 + $0xe0] sm:$0xff] %vm2606, %v7499
  %7564 = vst.msk [vmem:[#allocation3 + $0xe8] sm:$0xff] %vm2606, %v7500
  %7565 = vst.msk [vmem:[#allocation3 + $0xf0] sm:$0xff] %vm2606, %v7501
  %7566 = vst.msk [vmem:[#allocation3 + $0xf8] sm:$0xff] %vm2606, %v7502
  %7567 = vst.msk [vmem:[#allocation3 + $0x100] sm:$0xff] %vm2606, %v7503
  %7568 = vst.msk [vmem:[#allocation3 + $0x108] sm:$0xff] %vm2606, %v7504
  %7569 = vst.msk [vmem:[#allocation3 + $0x110] sm:$0xff] %vm2606, %v7505
  %7570 = vst.msk [vmem:[#allocation3 + $0x118] sm:$0xff] %vm2606, %v7506
  %7571 = vst.msk [vmem:[#allocation3 + $0x120] sm:$0xff] %vm2606, %v7507
  %7572 = vst.msk [vmem:[#allocation3 + $0x128] sm:$0xff] %vm2606, %v7508
  %7573 = vst.msk [vmem:[#allocation3 + $0x130] sm:$0xff] %vm2606, %v7509
  %7574 = vst.msk [vmem:[#allocation3 + $0x138] sm:$0xff] %vm2606, %v7510
  %7575 = vst.msk [vmem:[#allocation3 + $0x140] sm:$0xff] %vm2606, %v7511
  %7576 = vst.msk [vmem:[#allocation3 + $0x148] sm:$0xff] %vm2606, %v7512
  %7577 = vst.msk [vmem:[#allocation3 + $0x150] sm:$0xff] %vm2606, %v7513
  %7578 = vst.msk [vmem:[#allocation3 + $0x158] sm:$0xff] %vm2606, %v7514
  %7579 = vst.msk [vmem:[#allocation3 + $0x160] sm:$0xff] %vm2606, %v7515
  %7580 = vst.msk [vmem:[#allocation3 + $0x168] sm:$0xff] %vm2606, %v7516
  %7581 = vst.msk [vmem:[#allocation3 + $0x170] sm:$0xff] %vm2606, %v7517
  %7582 = vst.msk [vmem:[#allocation3 + $0x178] sm:$0xff] %vm2606, %v7518
  %7583 = vst.msk [vmem:[#allocation3 + $0x180] sm:$0xff] %vm2606, %v7519
  %7584 = vst.msk [vmem:[#allocation3 + $0x188] sm:$0xff] %vm2606, %v7520
  %7585 = vst.msk [vmem:[#allocation3 + $0x190] sm:$0xff] %vm2606, %v7521
  %7586 = vst.msk [vmem:[#allocation3 + $0x198] sm:$0xff] %vm2606, %v7522
  %7587 = vst.msk [vmem:[#allocation3 + $0x1a0] sm:$0xff] %vm2606, %v7523
  %7588 = vst.msk [vmem:[#allocation3 + $0x1a8] sm:$0xff] %vm2606, %v7524
  %7589 = vst.msk [vmem:[#allocation3 + $0x1b0] sm:$0xff] %vm2606, %v7525
  %7590 = vst.msk [vmem:[#allocation3 + $0x1b8] sm:$0xff] %vm2606, %v7526
  %7591 = vst.msk [vmem:[#allocation3 + $0x1c0] sm:$0xff] %vm2606, %v7527
  %7592 = vst.msk [vmem:[#allocation3 + $0x1c8] sm:$0xff] %vm2606, %v7528
  %7593 = vst.msk [vmem:[#allocation3 + $0x1d0] sm:$0xff] %vm2606, %v7529
  %7594 = vst.msk [vmem:[#allocation3 + $0x1d8] sm:$0xff] %vm2606, %v7530
  %7595 = vst.msk [vmem:[#allocation3 + $0x1e0] sm:$0xff] %vm2606, %v7531
  %7596 = vst.msk [vmem:[#allocation3 + $0x1e8] sm:$0xff] %vm2606, %v7532
  %7597 = vst.msk [vmem:[#allocation3 + $0x1f0] sm:$0xff] %vm2606, %v7533
  %7598 = vst.msk [vmem:[#allocation3 + $0x1f8] sm:$0xff] %vm2606, %v7534
  %v7599 = vld [vmem:[#allocation3] sm:$0xff]
  %v7600 = vld [vmem:[#allocation3 + $0x8] sm:$0xff]
  %v7601 = vld [vmem:[#allocation3 + $0x10] sm:$0xff]
  %v7602 = vld [vmem:[#allocation3 + $0x18] sm:$0xff]
  %v7603 = vld [vmem:[#allocation3 + $0x20] sm:$0xff]
  %v7604 = vld [vmem:[#allocation3 + $0x28] sm:$0xff]
  %v7605 = vld [vmem:[#allocation3 + $0x30] sm:$0xff]
  %v7606 = vld [vmem:[#allocation3 + $0x38] sm:$0xff]
  %v7607 = vld [vmem:[#allocation3 + $0x40] sm:$0xff]
  %v7608 = vld [vmem:[#allocation3 + $0x48] sm:$0xff]
  %v7609 = vld [vmem:[#allocation3 + $0x50] sm:$0xff]
  %v7610 = vld [vmem:[#allocation3 + $0x58] sm:$0xff]
  %v7611 = vld [vmem:[#allocation3 + $0x60] sm:$0xff]
  %v7612 = vld [vmem:[#allocation3 + $0x68] sm:$0xff]
  %v7613 = vld [vmem:[#allocation3 + $0x70] sm:$0xff]
  %v7614 = vld [vmem:[#allocation3 + $0x78] sm:$0xff]
  %v7615 = vld [vmem:[#allocation3 + $0x80] sm:$0xff]
  %v7616 = vld [vmem:[#allocation3 + $0x88] sm:$0xff]
  %v7617 = vld [vmem:[#allocation3 + $0x90] sm:$0xff]
  %v7618 = vld [vmem:[#allocation3 + $0x98] sm:$0xff]
  %v7619 = vld [vmem:[#allocation3 + $0xa0] sm:$0xff]
  %v7620 = vld [vmem:[#allocation3 + $0xa8] sm:$0xff]
  %v7621 = vld [vmem:[#allocation3 + $0xb0] sm:$0xff]
  %v7622 = vld [vmem:[#allocation3 + $0xb8] sm:$0xff]
  %v7623 = vld [vmem:[#allocation3 + $0xc0] sm:$0xff]
  %v7624 = vld [vmem:[#allocation3 + $0xc8] sm:$0xff]
  %v7625 = vld [vmem:[#allocation3 + $0xd0] sm:$0xff]
  %v7626 = vld [vmem:[#allocation3 + $0xd8] sm:$0xff]
  %v7627 = vld [vmem:[#allocation3 + $0xe0] sm:$0xff]
  %v7628 = vld [vmem:[#allocation3 + $0xe8] sm:$0xff]
  %v7629 = vld [vmem:[#allocation3 + $0xf0] sm:$0xff]
  %v7630 = vld [vmem:[#allocation3 + $0xf8] sm:$0xff]
  %v7631 = vld [vmem:[#allocation3 + $0x100] sm:$0xff]
  %v7632 = vld [vmem:[#allocation3 + $0x108] sm:$0xff]
  %v7633 = vld [vmem:[#allocation3 + $0x110] sm:$0xff]
  %v7634 = vld [vmem:[#allocation3 + $0x118] sm:$0xff]
  %v7635 = vld [vmem:[#allocation3 + $0x120] sm:$0xff]
  %v7636 = vld [vmem:[#allocation3 + $0x128] sm:$0xff]
  %v7637 = vld [vmem:[#allocation3 + $0x130] sm:$0xff]
  %v7638 = vld [vmem:[#allocation3 + $0x138] sm:$0xff]
  %v7639 = vld [vmem:[#allocation3 + $0x140] sm:$0xff]
  %v7640 = vld [vmem:[#allocation3 + $0x148] sm:$0xff]
  %v7641 = vld [vmem:[#allocation3 + $0x150] sm:$0xff]
  %v7642 = vld [vmem:[#allocation3 + $0x158] sm:$0xff]
  %v7643 = vld [vmem:[#allocation3 + $0x160] sm:$0xff]
  %v7644 = vld [vmem:[#allocation3 + $0x168] sm:$0xff]
  %v7645 = vld [vmem:[#allocation3 + $0x170] sm:$0xff]
  %v7646 = vld [vmem:[#allocation3 + $0x178] sm:$0xff]
  %v7647 = vld [vmem:[#allocation3 + $0x180] sm:$0xff]
  %v7648 = vld [vmem:[#allocation3 + $0x188] sm:$0xff]
  %v7649 = vld [vmem:[#allocation3 + $0x190] sm:$0xff]
  %v7650 = vld [vmem:[#allocation3 + $0x198] sm:$0xff]
  %v7651 = vld [vmem:[#allocation3 + $0x1a0] sm:$0xff]
  %v7652 = vld [vmem:[#allocation3 + $0x1a8] sm:$0xff]
  %v7653 = vld [vmem:[#allocation3 + $0x1b0] sm:$0xff]
  %v7654 = vld [vmem:[#allocation3 + $0x1b8] sm:$0xff]
  %v7655 = vld [vmem:[#allocation3 + $0x1c0] sm:$0xff]
  %v7656 = vld [vmem:[#allocation3 + $0x1c8] sm:$0xff]
  %v7657 = vld [vmem:[#allocation3 + $0x1d0] sm:$0xff]
  %v7658 = vld [vmem:[#allocation3 + $0x1d8] sm:$0xff]
  %v7659 = vld [vmem:[#allocation3 + $0x1e0] sm:$0xff]
  %v7660 = vld [vmem:[#allocation3 + $0x1e8] sm:$0xff]
  %v7661 = vld [vmem:[#allocation3 + $0x1f0] sm:$0xff]
  %v7662 = vld [vmem:[#allocation3 + $0x1f8] sm:$0xff]
  %v7663 = vld [vmem:[%s889] sm:$0xff]
  %v7664 = vld [vmem:[%s889 + $0x8] sm:$0xff]
  %v7665 = vld [vmem:[%s889 + $0x10] sm:$0xff]
  %v7666 = vld [vmem:[%s889 + $0x18] sm:$0xff]
  %v7667 = vld [vmem:[%s889 + $0x20] sm:$0xff]
  %v7668 = vld [vmem:[%s889 + $0x28] sm:$0xff]
  %v7669 = vld [vmem:[%s889 + $0x30] sm:$0xff]
  %v7670 = vld [vmem:[%s889 + $0x38] sm:$0xff]
  %v7671 = vld [vmem:[%s889 + $0x40] sm:$0xff]
  %v7672 = vld [vmem:[%s889 + $0x48] sm:$0xff]
  %v7673 = vld [vmem:[%s889 + $0x50] sm:$0xff]
  %v7674 = vld [vmem:[%s889 + $0x58] sm:$0xff]
  %v7675 = vld [vmem:[%s889 + $0x60] sm:$0xff]
  %v7676 = vld [vmem:[%s889 + $0x68] sm:$0xff]
  %v7677 = vld [vmem:[%s889 + $0x70] sm:$0xff]
  %v7678 = vld [vmem:[%s889 + $0x78] sm:$0xff]
  %v7679 = vld [vmem:[%s889 + $0x80] sm:$0xff]
  %v7680 = vld [vmem:[%s889 + $0x88] sm:$0xff]
  %v7681 = vld [vmem:[%s889 + $0x90] sm:$0xff]
  %v7682 = vld [vmem:[%s889 + $0x98] sm:$0xff]
  %v7683 = vld [vmem:[%s889 + $0xa0] sm:$0xff]
  %v7684 = vld [vmem:[%s889 + $0xa8] sm:$0xff]
  %v7685 = vld [vmem:[%s889 + $0xb0] sm:$0xff]
  %v7686 = vld [vmem:[%s889 + $0xb8] sm:$0xff]
  %v7687 = vld [vmem:[%s889 + $0xc0] sm:$0xff]
  %v7688 = vld [vmem:[%s889 + $0xc8] sm:$0xff]
  %v7689 = vld [vmem:[%s889 + $0xd0] sm:$0xff]
  %v7690 = vld [vmem:[%s889 + $0xd8] sm:$0xff]
  %v7691 = vld [vmem:[%s889 + $0xe0] sm:$0xff]
  %v7692 = vld [vmem:[%s889 + $0xe8] sm:$0xff]
  %v7693 = vld [vmem:[%s889 + $0xf0] sm:$0xff]
  %v7694 = vld [vmem:[%s889 + $0xf8] sm:$0xff]
  %v7695 = vld [vmem:[%s889 + $0x100] sm:$0xff]
  %v7696 = vld [vmem:[%s889 + $0x108] sm:$0xff]
  %v7697 = vld [vmem:[%s889 + $0x110] sm:$0xff]
  %v7698 = vld [vmem:[%s889 + $0x118] sm:$0xff]
  %v7699 = vld [vmem:[%s889 + $0x120] sm:$0xff]
  %v7700 = vld [vmem:[%s889 + $0x128] sm:$0xff]
  %v7701 = vld [vmem:[%s889 + $0x130] sm:$0xff]
  %v7702 = vld [vmem:[%s889 + $0x138] sm:$0xff]
  %v7703 = vld [vmem:[%s889 + $0x140] sm:$0xff]
  %v7704 = vld [vmem:[%s889 + $0x148] sm:$0xff]
  %v7705 = vld [vmem:[%s889 + $0x150] sm:$0xff]
  %v7706 = vld [vmem:[%s889 + $0x158] sm:$0xff]
  %v7707 = vld [vmem:[%s889 + $0x160] sm:$0xff]
  %v7708 = vld [vmem:[%s889 + $0x168] sm:$0xff]
  %v7709 = vld [vmem:[%s889 + $0x170] sm:$0xff]
  %v7710 = vld [vmem:[%s889 + $0x178] sm:$0xff]
  %v7711 = vld [vmem:[%s889 + $0x1b0] sm:$0xff]
  %v7712 = vld [vmem:[%s889 + $0x1b8] sm:$0xff]
  %v7713 = vld [vmem:[%s889 + $0x1c0] sm:$0xff]
  %v7714 = vld [vmem:[%s889 + $0x1c8] sm:$0xff]
  %v7715 = vld [vmem:[%s889 + $0x1d0] sm:$0xff]
  %v7716 = vld [vmem:[%s889 + $0x1d8] sm:$0xff]
  %v7717 = vld [vmem:[%s889 + $0x1e0] sm:$0xff]
  %v7718 = vld [vmem:[%s889 + $0x1e8] sm:$0xff]
  %v7719 = vld [vmem:[%s889 + $0x1f0] sm:$0xff]
  %v7720 = vld [vmem:[%s889 + $0x1f8] sm:$0xff]
  %v7721 = vld [vmem:[%s889 + $0x200] sm:$0xff]
  %v7722 = vld [vmem:[%s889 + $0x208] sm:$0xff]
  %v7723 = vld [vmem:[%s889 + $0x210] sm:$0xff]
  %v7724 = vld [vmem:[%s889 + $0x218] sm:$0xff]
  %v7725 = vld [vmem:[%s889 + $0x220] sm:$0xff]
  %v7726 = vld [vmem:[%s889 + $0x228] sm:$0xff]
  %v7727 = vld [vmem:[%s889 + $0x230] sm:$0xff]
  %v7728 = vld [vmem:[%s889 + $0x238] sm:$0xff]
  %v7729 = vld [vmem:[%s889 + $0x240] sm:$0xff]
  %v7730 = vld [vmem:[%s889 + $0x248] sm:$0xff]
  %v7731 = vld [vmem:[%s889 + $0x250] sm:$0xff]
  %v7732 = vld [vmem:[%s889 + $0x258] sm:$0xff]
  %v7733 = vld [vmem:[%s889 + $0x260] sm:$0xff]
  %v7734 = vld [vmem:[%s889 + $0x268] sm:$0xff]
  %v7735 = vld [vmem:[%s889 + $0x270] sm:$0xff]
  %v7736 = vld [vmem:[%s889 + $0x278] sm:$0xff]
  %v7737 = vld [vmem:[%s889 + $0x280] sm:$0xff]
  %v7738 = vld [vmem:[%s889 + $0x288] sm:$0xff]
  %v7739 = vld [vmem:[%s889 + $0x290] sm:$0xff]
  %v7740 = vld [vmem:[%s889 + $0x298] sm:$0xff]
  %v7741 = vld [vmem:[%s889 + $0x2a0] sm:$0xff]
  %v7742 = vld [vmem:[%s889 + $0x2a8] sm:$0xff]
  %v7743 = vld [vmem:[%s889 + $0x2b0] sm:$0xff]
  %v7744 = vld [vmem:[%s889 + $0x2b8] sm:$0xff]
  %v7745 = vld [vmem:[%s889 + $0x2c0] sm:$0xff]
  %v7746 = vld [vmem:[%s889 + $0x2c8] sm:$0xff]
  %v7747 = vld [vmem:[%s889 + $0x2d0] sm:$0xff]
  %v7748 = vld [vmem:[%s889 + $0x2d8] sm:$0xff]
  %v7749 = vld [vmem:[%s889 + $0x2e0] sm:$0xff]
  %v7750 = vld [vmem:[%s889 + $0x2e8] sm:$0xff]
  %v7751 = vld [vmem:[%s889 + $0x2f0] sm:$0xff]
  %v7752 = vld [vmem:[%s889 + $0x2f8] sm:$0xff]
  %v7753 = vld [vmem:[%s889 + $0x300] sm:$0xff]
  %v7754 = vld [vmem:[%s889 + $0x308] sm:$0xff]
  %v7755 = vld [vmem:[%s889 + $0x310] sm:$0xff]
  %v7756 = vld [vmem:[%s889 + $0x318] sm:$0xff]
  %v7757 = vld [vmem:[%s889 + $0x320] sm:$0xff]
  %v7758 = vld [vmem:[%s889 + $0x328] sm:$0xff]
  %s7759 = scalar_lea.vmem %s7, 192
  %v7760 = vld [vmem:[%s7759] sm:$0xf]
  %v7761 = vld [vmem:[%s7759 + $0x4] sm:$0xf]
  %v7762 = vld [vmem:[%s7759 + $0x8] sm:$0xf]
  %v7763 = vld [vmem:[%s7759 + $0xc] sm:$0xf]
  %v7764 = vld [vmem:[%s7759 + $0x10] sm:$0xf]
  %v7765 = vld [vmem:[%s7759 + $0x14] sm:$0xf]
  %v7766 = vld [vmem:[%s7759 + $0x18] sm:$0xf]
  %v7767 = vld [vmem:[%s7759 + $0x1c] sm:$0xf]
  %v7768 = vld [vmem:[%s7759 + $0x20] sm:$0xf]
  %v7769 = vld [vmem:[%s7759 + $0x24] sm:$0xf]
  %v7770 = vld [vmem:[%s7759 + $0x28] sm:$0xf]
  %v7771 = vld [vmem:[%s7759 + $0x2c] sm:$0xf]
  %v7772 = vld [vmem:[%s7759 + $0x30] sm:$0xf]
  %v7773 = vld [vmem:[%s7759 + $0x34] sm:$0xf]
  %v7774 = vld [vmem:[%s7759 + $0x38] sm:$0xf]
  %v7775 = vld [vmem:[%s7759 + $0x3c] sm:$0xf]
  %v7776 = vld [vmem:[%s7759 + $0x40] sm:$0xf]
  %v7777 = vld [vmem:[%s7759 + $0x44] sm:$0xf]
  %v7778 = vld [vmem:[%s7759 + $0x48] sm:$0xf]
  %v7779 = vld [vmem:[%s7759 + $0x4c] sm:$0xf]
  %v7780 = vld [vmem:[%s7759 + $0x50] sm:$0xf]
  %v7781 = vld [vmem:[%s7759 + $0x54] sm:$0xf]
  %v7782 = vld [vmem:[%s7759 + $0x58] sm:$0xf]
  %v7783 = vld [vmem:[%s7759 + $0x5c] sm:$0xf]
  %v7784 = vld [vmem:[%s7759 + $0x60] sm:$0xf]
  %v7785 = vld [vmem:[%s7759 + $0x64] sm:$0xf]
  %v7786 = vld [vmem:[%s7759 + $0x68] sm:$0xf]
  %v7787 = vld [vmem:[%s7759 + $0x6c] sm:$0xf]
  %v7788 = vld [vmem:[%s7759 + $0x70] sm:$0xf]
  %v7789 = vld [vmem:[%s7759 + $0x74] sm:$0xf]
  %v7790 = vld [vmem:[%s7759 + $0x78] sm:$0xf]
  %v7791 = vld [vmem:[%s7759 + $0x7c] sm:$0xf]
  %v7792 = vld [vmem:[%s7759 + $0x80] sm:$0xf]
  %v7793 = vld [vmem:[%s7759 + $0x84] sm:$0xf]
  %v7794 = vld [vmem:[%s7759 + $0x88] sm:$0xf]
  %v7795 = vld [vmem:[%s7759 + $0x8c] sm:$0xf]
  %v7796 = vld [vmem:[%s7759 + $0x90] sm:$0xf]
  %v7797 = vld [vmem:[%s7759 + $0x94] sm:$0xf]
  %v7798 = vld [vmem:[%s7759 + $0x98] sm:$0xf]
  %v7799 = vld [vmem:[%s7759 + $0x9c] sm:$0xf]
  %v7800 = vld [vmem:[%s7759 + $0xa0] sm:$0xf]
  %v7801 = vld [vmem:[%s7759 + $0xa4] sm:$0xf]
  %v7802 = vld [vmem:[%s7759 + $0xa8] sm:$0xf]
  %v7803 = vld [vmem:[%s7759 + $0xac] sm:$0xf]
  %v7804 = vld [vmem:[%s7759 + $0xb0] sm:$0xf]
  %v7805 = vld [vmem:[%s7759 + $0xb4] sm:$0xf]
  %v7806 = vld [vmem:[%s7759 + $0xb8] sm:$0xf]
  %v7807 = vld [vmem:[%s7759 + $0xbc] sm:$0xf]
  %v7856 = vunpack.c.l.b16 %v7760
  %v7857 = vunpack.c.l.b16 %v7761
  %v7858 = vunpack.c.l.b16 %v7762
  %v7859 = vunpack.c.l.b16 %v7763
  %v7860 = vunpack.c.l.b16 %v7764
  %v7861 = vunpack.c.l.b16 %v7765
  %v7862 = vunpack.c.l.b16 %v7766
  %v7863 = vunpack.c.l.b16 %v7767
  %v7864 = vunpack.c.l.b16 %v7768
  %v7865 = vunpack.c.l.b16 %v7769
  %v7866 = vunpack.c.l.b16 %v7770
  %v7867 = vunpack.c.l.b16 %v7771
  %v7868 = vunpack.c.l.b16 %v7772
  %v7869 = vunpack.c.l.b16 %v7773
  %v7870 = vunpack.c.l.b16 %v7774
  %v7871 = vunpack.c.l.b16 %v7775
  %v7872 = vunpack.c.l.b16 %v7776
  %v7873 = vunpack.c.l.b16 %v7777
  %v7874 = vunpack.c.l.b16 %v7778
  %v7875 = vunpack.c.l.b16 %v7779
  %v7876 = vunpack.c.l.b16 %v7780
  %v7877 = vunpack.c.l.b16 %v7781
  %v7878 = vunpack.c.l.b16 %v7782
  %v7879 = vunpack.c.l.b16 %v7783
  %v7880 = vunpack.c.l.b16 %v7784
  %v7881 = vunpack.c.l.b16 %v7785
  %v7882 = vunpack.c.l.b16 %v7786
  %v7883 = vunpack.c.l.b16 %v7787
  %v7884 = vunpack.c.l.b16 %v7788
  %v7885 = vunpack.c.l.b16 %v7789
  %v7886 = vunpack.c.l.b16 %v7790
  %v7887 = vunpack.c.l.b16 %v7791
  %v7888 = vunpack.c.l.b16 %v7792
  %v7889 = vunpack.c.l.b16 %v7793
  %v7890 = vunpack.c.l.b16 %v7794
  %v7891 = vunpack.c.l.b16 %v7795
  %v7892 = vunpack.c.l.b16 %v7796
  %v7893 = vunpack.c.l.b16 %v7797
  %v7894 = vunpack.c.l.b16 %v7798
  %v7895 = vunpack.c.l.b16 %v7799
  %v7896 = vunpack.c.l.b16 %v7800
  %v7897 = vunpack.c.l.b16 %v7801
  %v7898 = vunpack.c.l.b16 %v7802
  %v7899 = vunpack.c.l.b16 %v7803
  %v7900 = vunpack.c.l.b16 %v7804
  %v7901 = vunpack.c.l.b16 %v7805
  %v7902 = vunpack.c.l.b16 %v7806
  %v7903 = vunpack.c.l.b16 %v7807
  %v7904 = vpack.c.b16 %v7857, %v7856
  %v7905 = vpack.c.b16 %v7859, %v7858
  %v7906 = vpack.c.b16 %v7861, %v7860
  %v7907 = vpack.c.b16 %v7863, %v7862
  %v7908 = vpack.c.b16 %v7865, %v7864
  %v7909 = vpack.c.b16 %v7867, %v7866
  %v7910 = vpack.c.b16 %v7869, %v7868
  %v7911 = vpack.c.b16 %v7871, %v7870
  %v7912 = vpack.c.b16 %v7873, %v7872
  %v7913 = vpack.c.b16 %v7875, %v7874
  %v7914 = vpack.c.b16 %v7877, %v7876
  %v7915 = vpack.c.b16 %v7879, %v7878
  %v7916 = vpack.c.b16 %v7881, %v7880
  %v7917 = vpack.c.b16 %v7883, %v7882
  %v7918 = vpack.c.b16 %v7885, %v7884
  %v7919 = vpack.c.b16 %v7887, %v7886
  %v7920 = vpack.c.b16 %v7889, %v7888
  %v7921 = vpack.c.b16 %v7891, %v7890
  %v7922 = vpack.c.b16 %v7893, %v7892
  %v7923 = vpack.c.b16 %v7895, %v7894
  %v7924 = vpack.c.b16 %v7897, %v7896
  %v7925 = vpack.c.b16 %v7899, %v7898
  %v7926 = vpack.c.b16 %v7901, %v7900
  %v7927 = vpack.c.b16 %v7903, %v7902
  %7952 = vmatprep.subr.bf16.mxu0 0
  %7953 = vmatpush1.bf16.msra.mxu0 %v7904
  %7954 = vmatprep.subr.bf16.mxu0 0
  %7955 = vmatpush1.bf16.msra.mxu0 %v7905
  %7956 = vmatprep.subr.bf16.mxu0 0
  %7957 = vmatpush1.bf16.msra.mxu0 %v7906
  %7958 = vmatprep.subr.bf16.mxu0 0
  %7959 = vmatpush1.bf16.msra.mxu0 %v7907
  %7960 = vmatprep.subr.bf16.mxu0 0
  %7961 = vmatpush1.bf16.msra.mxu0 %v7908
  %7962 = vmatprep.subr.bf16.mxu0 0
  %7963 = vmatpush1.bf16.msra.mxu0 %v7909
  %7964 = vmatprep.subr.bf16.mxu0 0
  %7965 = vmatpush1.bf16.msra.mxu0 %v7910
  %7966 = vmatprep.subr.bf16.mxu0 0
  %7967 = vmatpush1.bf16.msra.mxu0 %v7911
  %7968 = vmatprep.subr.bf16.mxu0 0
  %7969 = vmatpush1.bf16.msra.mxu0 %v7912
  %7970 = vmatprep.subr.bf16.mxu0 0
  %7971 = vmatpush1.bf16.msra.mxu0 %v7913
  %7972 = vmatprep.subr.bf16.mxu0 0
  %7973 = vmatpush1.bf16.msra.mxu0 %v7914
  %7974 = vmatprep.subr.bf16.mxu0 0
  %7975 = vmatpush1.bf16.msra.mxu0 %v7915
  %7976 = vmatprep.subr.bf16.mxu0 0
  %7977 = vmatpush1.bf16.msra.mxu0 %v7916
  %7978 = vmatprep.subr.bf16.mxu0 0
  %7979 = vmatpush1.bf16.msra.mxu0 %v7917
  %7980 = vmatprep.subr.bf16.mxu0 0
  %7981 = vmatpush1.bf16.msra.mxu0 %v7918
  %7982 = vmatprep.subr.bf16.mxu0 0
  %7983 = vmatpush1.bf16.msra.mxu0 %v7919
  %7984 = vmatprep.mubr.bf16.mxu0 %v7664
  %7985 = vmatmul.mubr.bf16.gmra.mrb[0].mxu0 %v7663
  %v7986 = vpop.f32.mrb[0].mxu0
  %v7987 = vadd.f32 0.0, %v7986
  %v7988 = vpop.f32.mrb[0].mxu0
  %v7989 = vpop.f32.mrb[0].mxu0
  %v7990 = vadd.f32 0.0, %v7989
  %v7991 = vpop.f32.mrb[0].mxu0
  %7992 = vmatprep.mubr.bf16.mxu0 %v7667
  %7993 = vmatmul.mubr.bf16.gmra.mrb[0].mxu0 %v7666
  %v7994 = vpop.f32.mrb[0].mxu0
  %v7995 = vadd.f32 0.0, %v7994
  %v7996 = vpop.f32.mrb[0].mxu0
  %v7997 = vpop.f32.mrb[0].mxu0
  %v7998 = vadd.f32 0.0, %v7997
  %v7999 = vpop.f32.mrb[0].mxu0
  %8000 = vmatprep.mubr.bf16.mxu0 %v7670
  %8001 = vmatmul.mubr.bf16.gmra.mrb[0].mxu0 %v7669
  %v8002 = vpop.f32.mrb[0].mxu0
  %v8003 = vadd.f32 0.0, %v8002
  %v8004 = vpop.f32.mrb[0].mxu0
  %v8005 = vpop.f32.mrb[0].mxu0
  %v8006 = vadd.f32 0.0, %v8005
  %v8007 = vpop.f32.mrb[0].mxu0
  %8008 = vmatprep.mubr.bf16.mxu0 %v7673
  %8009 = vmatmul.mubr.bf16.gmra.mrb[0].mxu0 %v7672
  %v8010 = vpop.f32.mrb[0].mxu0
  %v8011 = vadd.f32 0.0, %v8010
  %v8012 = vpop.f32.mrb[0].mxu0
  %v8013 = vpop.f32.mrb[0].mxu0
  %v8014 = vadd.f32 0.0, %v8013
  %v8015 = vpop.f32.mrb[0].mxu0
  %8016 = vmatprep.mubr.bf16.mxu0 %v7676
  %8017 = vmatmul.mubr.bf16.gmra.mrb[0].mxu0 %v7675
  %v8018 = vpop.f32.mrb[0].mxu0
  %v8019 = vadd.f32 0.0, %v8018
  %v8020 = vpop.f32.mrb[0].mxu0
  %v8021 = vpop.f32.mrb[0].mxu0
  %v8022 = vadd.f32 0.0, %v8021
  %v8023 = vpop.f32.mrb[0].mxu0
  %8024 = vmatprep.mubr.bf16.mxu0 %v7679
  %8025 = vmatmul.mubr.bf16.gmra.mrb[0].mxu0 %v7678
  %v8026 = vpop.f32.mrb[0].mxu0
  %v8027 = vadd.f32 0.0, %v8026
  %v8028 = vpop.f32.mrb[0].mxu0
  %v8029 = vpop.f32.mrb[0].mxu0
  %v8030 = vadd.f32 0.0, %v8029
  %v8031 = vpop.f32.mrb[0].mxu0
  %8032 = vmatprep.mubr.bf16.mxu0 %v7682
  %8033 = vmatmul.mubr.bf16.gmra.mrb[0].mxu0 %v7681
  %v8034 = vpop.f32.mrb[0].mxu0
  %v8035 = vadd.f32 0.0, %v8034
  %v8036 = vpop.f32.mrb[0].mxu0
  %v8037 = vpop.f32.mrb[0].mxu0
  %v8038 = vadd.f32 0.0, %v8037
  %v8039 = vpop.f32.mrb[0].mxu0
  %8040 = vmatprep.mubr.bf16.mxu0 %v7685
  %8041 = vmatmul.mubr.bf16.gmra.mrb[0].mxu0 %v7684
  %v8042 = vpop.f32.mrb[0].mxu0
  %v8043 = vadd.f32 0.0, %v8042
  %v8044 = vpop.f32.mrb[0].mxu0
  %v8045 = vpop.f32.mrb[0].mxu0
  %v8046 = vadd.f32 0.0, %v8045
  %v8047 = vpop.f32.mrb[0].mxu0
  %8048 = vmatprep.mubr.bf16.mxu0 %v7688
  %8049 = vmatmul.mubr.bf16.gmra.mrb[0].mxu0 %v7687
  %v8050 = vpop.f32.mrb[0].mxu0
  %v8051 = vadd.f32 0.0, %v8050
  %v8052 = vpop.f32.mrb[0].mxu0
  %v8053 = vpop.f32.mrb[0].mxu0
  %v8054 = vadd.f32 0.0, %v8053
  %v8055 = vpop.f32.mrb[0].mxu0
  %8056 = vmatprep.mubr.bf16.mxu0 %v7691
  %8057 = vmatmul.mubr.bf16.gmra.mrb[0].mxu0 %v7690
  %v8058 = vpop.f32.mrb[0].mxu0
  %v8059 = vadd.f32 0.0, %v8058
  %v8060 = vpop.f32.mrb[0].mxu0
  %v8061 = vpop.f32.mrb[0].mxu0
  %v8062 = vadd.f32 0.0, %v8061
  %v8063 = vpop.f32.mrb[0].mxu0
  %8064 = vmatprep.mubr.bf16.mxu0 %v7694
  %8065 = vmatmul.mubr.bf16.gmra.mrb[0].mxu0 %v7693
  %v8066 = vpop.f32.mrb[0].mxu0
  %v8067 = vadd.f32 0.0, %v8066
  %v8068 = vpop.f32.mrb[0].mxu0
  %v8069 = vpop.f32.mrb[0].mxu0
  %v8070 = vadd.f32 0.0, %v8069
  %v8071 = vpop.f32.mrb[0].mxu0
  %8072 = vmatprep.mubr.bf16.mxu0 %v7697
  %8073 = vmatmul.mubr.bf16.gmra.mrb[0].mxu0 %v7696
  %v8074 = vpop.f32.mrb[0].mxu0
  %v8075 = vadd.f32 0.0, %v8074
  %v8076 = vpop.f32.mrb[0].mxu0
  %v8077 = vpop.f32.mrb[0].mxu0
  %v8078 = vadd.f32 0.0, %v8077
  %v8079 = vpop.f32.mrb[0].mxu0
  %8080 = vmatprep.mubr.bf16.mxu0 %v7700
  %8081 = vmatmul.mubr.bf16.gmra.mrb[0].mxu0 %v7699
  %v8082 = vpop.f32.mrb[0].mxu0
  %v8083 = vadd.f32 0.0, %v8082
  %v8084 = vpop.f32.mrb[0].mxu0
  %v8085 = vpop.f32.mrb[0].mxu0
  %v8086 = vadd.f32 0.0, %v8085
  %v8087 = vpop.f32.mrb[0].mxu0
  %8088 = vmatprep.mubr.bf16.mxu0 %v7703
  %8089 = vmatmul.mubr.bf16.gmra.mrb[0].mxu0 %v7702
  %v8090 = vpop.f32.mrb[0].mxu0
  %v8091 = vadd.f32 0.0, %v8090
  %v8092 = vpop.f32.mrb[0].mxu0
  %v8093 = vpop.f32.mrb[0].mxu0
  %v8094 = vadd.f32 0.0, %v8093
  %v8095 = vpop.f32.mrb[0].mxu0
  %8096 = vmatprep.mubr.bf16.mxu0 %v7706
  %8097 = vmatmul.mubr.bf16.gmra.mrb[0].mxu0 %v7705
  %v8098 = vpop.f32.mrb[0].mxu0
  %v8099 = vadd.f32 0.0, %v8098
  %v8100 = vpop.f32.mrb[0].mxu0
  %v8101 = vpop.f32.mrb[0].mxu0
  %v8102 = vadd.f32 0.0, %v8101
  %v8103 = vpop.f32.mrb[0].mxu0
  %8104 = vmatprep.mubr.bf16.mxu0 %v7709
  %8105 = vmatmul.mubr.bf16.gmra.mrb[0].mxu0 %v7708
  %v8106 = vpop.f32.mrb[0].mxu0
  %v8107 = vadd.f32 0.0, %v8106
  %v8108 = vpop.f32.mrb[0].mxu0
  %v8109 = vpop.f32.mrb[0].mxu0
  %v8110 = vadd.f32 0.0, %v8109
  %v8111 = vpop.f32.mrb[0].mxu0
  %8112 = vmatprep.mubr.bf16.mxu0 %v7712
  %8113 = vmatmul.mubr.bf16.gmra.mrb[0].mxu0 %v7711
  %v8114 = vpop.f32.mrb[0].mxu0
  %v8115 = vadd.f32 0.0, %v8114
  %v8116 = vpop.f32.mrb[0].mxu0
  %v8117 = vpop.f32.mrb[0].mxu0
  %v8118 = vadd.f32 0.0, %v8117
  %v8119 = vpop.f32.mrb[0].mxu0
  %8120 = vmatprep.mubr.bf16.mxu0 %v7715
  %8121 = vmatmul.mubr.bf16.gmra.mrb[0].mxu0 %v7714
  %v8122 = vpop.f32.mrb[0].mxu0
  %v8123 = vadd.f32 0.0, %v8122
  %v8124 = vpop.f32.mrb[0].mxu0
  %v8125 = vpop.f32.mrb[0].mxu0
  %v8126 = vadd.f32 0.0, %v8125
  %v8127 = vpop.f32.mrb[0].mxu0
  %8128 = vmatprep.mubr.bf16.mxu0 %v7718
  %8129 = vmatmul.mubr.bf16.gmra.mrb[0].mxu0 %v7717
  %v8130 = vpop.f32.mrb[0].mxu0
  %v8131 = vadd.f32 0.0, %v8130
  %v8132 = vpop.f32.mrb[0].mxu0
  %v8133 = vpop.f32.mrb[0].mxu0
  %v8134 = vadd.f32 0.0, %v8133
  %v8135 = vpop.f32.mrb[0].mxu0
  %8136 = vmatprep.mubr.bf16.mxu0 %v7721
  %8137 = vmatmul.mubr.bf16.gmra.mrb[0].mxu0 %v7720
  %v8138 = vpop.f32.mrb[0].mxu0
  %v8139 = vadd.f32 0.0, %v8138
  %v8140 = vpop.f32.mrb[0].mxu0
  %v8141 = vpop.f32.mrb[0].mxu0
  %v8142 = vadd.f32 0.0, %v8141
  %v8143 = vpop.f32.mrb[0].mxu0
  %8144 = vmatprep.mubr.bf16.mxu0 %v7724
  %8145 = vmatmul.mubr.bf16.gmra.mrb[0].mxu0 %v7723
  %v8146 = vpop.f32.mrb[0].mxu0
  %v8147 = vadd.f32 0.0, %v8146
  %v8148 = vpop.f32.mrb[0].mxu0
  %v8149 = vpop.f32.mrb[0].mxu0
  %v8150 = vadd.f32 0.0, %v8149
  %v8151 = vpop.f32.mrb[0].mxu0
  %8152 = vmatprep.mubr.bf16.mxu0 %v7727
  %8153 = vmatmul.mubr.bf16.gmra.mrb[0].mxu0 %v7726
  %v8154 = vpop.f32.mrb[0].mxu0
  %v8155 = vadd.f32 0.0, %v8154
  %v8156 = vpop.f32.mrb[0].mxu0
  %v8157 = vpop.f32.mrb[0].mxu0
  %v8158 = vadd.f32 0.0, %v8157
  %v8159 = vpop.f32.mrb[0].mxu0
  %8160 = vmatprep.mubr.bf16.mxu0 %v7730
  %8161 = vmatmul.mubr.bf16.gmra.mrb[0].mxu0 %v7729
  %v8162 = vpop.f32.mrb[0].mxu0
  %v8163 = vadd.f32 0.0, %v8162
  %v8164 = vpop.f32.mrb[0].mxu0
  %v8165 = vpop.f32.mrb[0].mxu0
  %v8166 = vadd.f32 0.0, %v8165
  %v8167 = vpop.f32.mrb[0].mxu0
  %8168 = vmatprep.mubr.bf16.mxu0 %v7733
  %8169 = vmatmul.mubr.bf16.gmra.mrb[0].mxu0 %v7732
  %v8170 = vpop.f32.mrb[0].mxu0
  %v8171 = vadd.f32 0.0, %v8170
  %v8172 = vpop.f32.mrb[0].mxu0
  %v8173 = vpop.f32.mrb[0].mxu0
  %v8174 = vadd.f32 0.0, %v8173
  %v8175 = vpop.f32.mrb[0].mxu0
  %8176 = vmatprep.mubr.bf16.mxu0 %v7736
  %8177 = vmatmul.mubr.bf16.gmra.mrb[0].mxu0 %v7735
  %v8178 = vpop.f32.mrb[0].mxu0
  %v8179 = vadd.f32 0.0, %v8178
  %v8180 = vpop.f32.mrb[0].mxu0
  %v8181 = vpop.f32.mrb[0].mxu0
  %v8182 = vadd.f32 0.0, %v8181
  %v8183 = vpop.f32.mrb[0].mxu0
  %8184 = vmatprep.mubr.bf16.mxu0 %v7739
  %8185 = vmatmul.mubr.bf16.gmra.mrb[0].mxu0 %v7738
  %v8186 = vpop.f32.mrb[0].mxu0
  %v8187 = vadd.f32 0.0, %v8186
  %v8188 = vpop.f32.mrb[0].mxu0
  %v8189 = vpop.f32.mrb[0].mxu0
  %v8190 = vadd.f32 0.0, %v8189
  %v8191 = vpop.f32.mrb[0].mxu0
  %8192 = vmatprep.mubr.bf16.mxu0 %v7742
  %8193 = vmatmul.mubr.bf16.gmra.mrb[0].mxu0 %v7741
  %v8194 = vpop.f32.mrb[0].mxu0
  %v8195 = vadd.f32 0.0, %v8194
  %v8196 = vpop.f32.mrb[0].mxu0
  %v8197 = vpop.f32.mrb[0].mxu0
  %v8198 = vadd.f32 0.0, %v8197
  %v8199 = vpop.f32.mrb[0].mxu0
  %8200 = vmatprep.mubr.bf16.mxu0 %v7745
  %8201 = vmatmul.mubr.bf16.gmra.mrb[0].mxu0 %v7744
  %v8202 = vpop.f32.mrb[0].mxu0
  %v8203 = vadd.f32 0.0, %v8202
  %v8204 = vpop.f32.mrb[0].mxu0
  %v8205 = vpop.f32.mrb[0].mxu0
  %v8206 = vadd.f32 0.0, %v8205
  %v8207 = vpop.f32.mrb[0].mxu0
  %8208 = vmatprep.mubr.bf16.mxu0 %v7748
  %8209 = vmatmul.mubr.bf16.gmra.mrb[0].mxu0 %v7747
  %v8210 = vpop.f32.mrb[0].mxu0
  %v8211 = vadd.f32 0.0, %v8210
  %v8212 = vpop.f32.mrb[0].mxu0
  %v8213 = vpop.f32.mrb[0].mxu0
  %v8214 = vadd.f32 0.0, %v8213
  %v8215 = vpop.f32.mrb[0].mxu0
  %8216 = vmatprep.mubr.bf16.mxu0 %v7751
  %8217 = vmatmul.mubr.bf16.gmra.mrb[0].mxu0 %v7750
  %v8218 = vpop.f32.mrb[0].mxu0
  %v8219 = vadd.f32 0.0, %v8218
  %v8220 = vpop.f32.mrb[0].mxu0
  %v8221 = vpop.f32.mrb[0].mxu0
  %v8222 = vadd.f32 0.0, %v8221
  %v8223 = vpop.f32.mrb[0].mxu0
  %8224 = vmatprep.mubr.bf16.mxu0 %v7754
  %8225 = vmatmul.mubr.bf16.gmra.mrb[0].mxu0 %v7753
  %v8226 = vpop.f32.mrb[0].mxu0
  %v8227 = vadd.f32 0.0, %v8226
  %v8228 = vpop.f32.mrb[0].mxu0
  %v8229 = vpop.f32.mrb[0].mxu0
  %v8230 = vadd.f32 0.0, %v8229
  %v8231 = vpop.f32.mrb[0].mxu0
  %8232 = vmatprep.mubr.bf16.mxu0 %v7757
  %8233 = vmatmul.mubr.bf16.gmra.mrb[0].mxu0 %v7756
  %v8234 = vpop.f32.mrb[0].mxu0
  %v8235 = vadd.f32 0.0, %v8234
  %v8236 = vpop.f32.mrb[0].mxu0
  %v8237 = vpop.f32.mrb[0].mxu0
  %v8238 = vadd.f32 0.0, %v8237
  %v8239 = vpop.f32.mrb[0].mxu0
  %8240 = vdwg.mxu0
  %8241 = vmatprep.subr.bf16.mxu0 0
  %8242 = vmatpush1.bf16.msra.mxu0 %v7920
  %8243 = vmatprep.subr.bf16.mxu0 0
  %8244 = vmatpush1.bf16.msra.mxu0 %v7921
  %8245 = vmatprep.subr.bf16.mxu0 0
  %8246 = vmatpush1.bf16.msra.mxu0 %v7922
  %8247 = vmatprep.subr.bf16.mxu0 0
  %8248 = vmatpush1.bf16.msra.mxu0 %v7923
  %8249 = vmatprep.subr.bf16.mxu0 0
  %8250 = vmatpush1.bf16.msra.mxu0 %v7924
  %8251 = vmatprep.subr.bf16.mxu0 0
  %8252 = vmatpush1.bf16.msra.mxu0 %v7925
  %8253 = vmatprep.subr.bf16.mxu0 0
  %8254 = vmatpush1.bf16.msra.mxu0 %v7926
  %8255 = vmatprep.subr.bf16.mxu0 0
  %8256 = vmatpush1.bf16.msra.mxu0 %v7927
  %8257 = vmatprep.subr.bf16.mxu0 0
  %8258 = vmatpush1.bf16.msra.mxu0 0
  %8259 = vmatprep.subr.bf16.mxu0 0
  %8260 = vmatpush1.bf16.msra.mxu0 0
  %8261 = vmatprep.subr.bf16.mxu0 0
  %8262 = vmatpush1.bf16.msra.mxu0 0
  %8263 = vmatprep.subr.bf16.mxu0 0
  %8264 = vmatpush1.bf16.msra.mxu0 0
  %8265 = vmatprep.subr.bf16.mxu0 0
  %8266 = vmatpush1.bf16.msra.mxu0 0
  %8267 = vmatprep.subr.bf16.mxu0 0
  %8268 = vmatpush1.bf16.msra.mxu0 0
  %8269 = vmatprep.subr.bf16.mxu0 0
  %8270 = vmatpush1.bf16.msra.mxu0 0
  %8271 = vmatprep.subr.bf16.mxu0 0
  %8272 = vmatpush1.bf16.msra.mxu0 0
  %8273 = vmatprep.mubr.bf16.mxu0 0
  %8274 = vmatmul.mubr.bf16.gmra.mrb[0].mxu0 %v7665
  %v8275 = vpop.f32.mrb[0].mxu0
  %v8276 = vadd.f32 %v7987, %v8275
  %v8277 = vpop.f32.mrb[0].mxu0
  %v8278 = vpop.f32.mrb[0].mxu0
  %v8279 = vadd.f32 %v7990, %v8278
  %v8280 = vpop.f32.mrb[0].mxu0
  %8281 = vmatprep.mubr.bf16.mxu0 0
  %8282 = vmatmul.mubr.bf16.gmra.mrb[0].mxu0 %v7668
  %v8283 = vpop.f32.mrb[0].mxu0
  %v8284 = vadd.f32 %v7995, %v8283
  %v8285 = vpop.f32.mrb[0].mxu0
  %v8286 = vpop.f32.mrb[0].mxu0
  %v8287 = vadd.f32 %v7998, %v8286
  %v8288 = vpop.f32.mrb[0].mxu0
  %8289 = vmatprep.mubr.bf16.mxu0 0
  %8290 = vmatmul.mubr.bf16.gmra.mrb[0].mxu0 %v7671
  %v8291 = vpop.f32.mrb[0].mxu0
  %v8292 = vadd.f32 %v8003, %v8291
  %v8293 = vpop.f32.mrb[0].mxu0
  %v8294 = vpop.f32.mrb[0].mxu0
  %v8295 = vadd.f32 %v8006, %v8294
  %v8296 = vpop.f32.mrb[0].mxu0
  %8297 = vmatprep.mubr.bf16.mxu0 0
  %8298 = vmatmul.mubr.bf16.gmra.mrb[0].mxu0 %v7674
  %v8299 = vpop.f32.mrb[0].mxu0
  %v8300 = vadd.f32 %v8011, %v8299
  %v8301 = vpop.f32.mrb[0].mxu0
  %v8302 = vpop.f32.mrb[0].mxu0
  %v8303 = vadd.f32 %v8014, %v8302
  %v8304 = vpop.f32.mrb[0].mxu0
  %8305 = vmatprep.mubr.bf16.mxu0 0
  %8306 = vmatmul.mubr.bf16.gmra.mrb[0].mxu0 %v7677
  %v8307 = vpop.f32.mrb[0].mxu0
  %v8308 = vadd.f32 %v8019, %v8307
  %v8309 = vpop.f32.mrb[0].mxu0
  %v8310 = vpop.f32.mrb[0].mxu0
  %v8311 = vadd.f32 %v8022, %v8310
  %v8312 = vpop.f32.mrb[0].mxu0
  %8313 = vmatprep.mubr.bf16.mxu0 0
  %8314 = vmatmul.mubr.bf16.gmra.mrb[0].mxu0 %v7680
  %v8315 = vpop.f32.mrb[0].mxu0
  %v8316 = vadd.f32 %v8027, %v8315
  %v8317 = vpop.f32.mrb[0].mxu0
  %v8318 = vpop.f32.mrb[0].mxu0
  %v8319 = vadd.f32 %v8030, %v8318
  %v8320 = vpop.f32.mrb[0].mxu0
  %8321 = vmatprep.mubr.bf16.mxu0 0
  %8322 = vmatmul.mubr.bf16.gmra.mrb[0].mxu0 %v7683
  %v8323 = vpop.f32.mrb[0].mxu0
  %v8324 = vadd.f32 %v8035, %v8323
  %v8325 = vpop.f32.mrb[0].mxu0
  %v8326 = vpop.f32.mrb[0].mxu0
  %v8327 = vadd.f32 %v8038, %v8326
  %v8328 = vpop.f32.mrb[0].mxu0
  %8329 = vmatprep.mubr.bf16.mxu0 0
  %8330 = vmatmul.mubr.bf16.gmra.mrb[0].mxu0 %v7686
  %v8331 = vpop.f32.mrb[0].mxu0
  %v8332 = vadd.f32 %v8043, %v8331
  %v8333 = vpop.f32.mrb[0].mxu0
  %v8334 = vpop.f32.mrb[0].mxu0
  %v8335 = vadd.f32 %v8046, %v8334
  %v8336 = vpop.f32.mrb[0].mxu0
  %8337 = vmatprep.mubr.bf16.mxu0 0
  %8338 = vmatmul.mubr.bf16.gmra.mrb[0].mxu0 %v7689
  %v8339 = vpop.f32.mrb[0].mxu0
  %v8340 = vadd.f32 %v8051, %v8339
  %v8341 = vpop.f32.mrb[0].mxu0
  %v8342 = vpop.f32.mrb[0].mxu0
  %v8343 = vadd.f32 %v8054, %v8342
  %v8344 = vpop.f32.mrb[0].mxu0
  %8345 = vmatprep.mubr.bf16.mxu0 0
  %8346 = vmatmul.mubr.bf16.gmra.mrb[0].mxu0 %v7692
  %v8347 = vpop.f32.mrb[0].mxu0
  %v8348 = vadd.f32 %v8059, %v8347
  %v8349 = vpop.f32.mrb[0].mxu0
  %v8350 = vpop.f32.mrb[0].mxu0
  %v8351 = vadd.f32 %v8062, %v8350
  %v8352 = vpop.f32.mrb[0].mxu0
  %8353 = vmatprep.mubr.bf16.mxu0 0
  %8354 = vmatmul.mubr.bf16.gmra.mrb[0].mxu0 %v7695
  %v8355 = vpop.f32.mrb[0].mxu0
  %v8356 = vadd.f32 %v8067, %v8355
  %v8357 = vpop.f32.mrb[0].mxu0
  %v8358 = vpop.f32.mrb[0].mxu0
  %v8359 = vadd.f32 %v8070, %v8358
  %v8360 = vpop.f32.mrb[0].mxu0
  %8361 = vmatprep.mubr.bf16.mxu0 0
  %8362 = vmatmul.mubr.bf16.gmra.mrb[0].mxu0 %v7698
  %v8363 = vpop.f32.mrb[0].mxu0
  %v8364 = vadd.f32 %v8075, %v8363
  %v8365 = vpop.f32.mrb[0].mxu0
  %v8366 = vpop.f32.mrb[0].mxu0
  %v8367 = vadd.f32 %v8078, %v8366
  %v8368 = vpop.f32.mrb[0].mxu0
  %8369 = vmatprep.mubr.bf16.mxu0 0
  %8370 = vmatmul.mubr.bf16.gmra.mrb[0].mxu0 %v7701
  %v8371 = vpop.f32.mrb[0].mxu0
  %v8372 = vadd.f32 %v8083, %v8371
  %v8373 = vpop.f32.mrb[0].mxu0
  %v8374 = vpop.f32.mrb[0].mxu0
  %v8375 = vadd.f32 %v8086, %v8374
  %v8376 = vpop.f32.mrb[0].mxu0
  %8377 = vmatprep.mubr.bf16.mxu0 0
  %8378 = vmatmul.mubr.bf16.gmra.mrb[0].mxu0 %v7704
  %v8379 = vpop.f32.mrb[0].mxu0
  %v8380 = vadd.f32 %v8091, %v8379
  %v8381 = vpop.f32.mrb[0].mxu0
  %v8382 = vpop.f32.mrb[0].mxu0
  %v8383 = vadd.f32 %v8094, %v8382
  %v8384 = vpop.f32.mrb[0].mxu0
  %8385 = vmatprep.mubr.bf16.mxu0 0
  %8386 = vmatmul.mubr.bf16.gmra.mrb[0].mxu0 %v7707
  %v8387 = vpop.f32.mrb[0].mxu0
  %v8388 = vadd.f32 %v8099, %v8387
  %v8389 = vpop.f32.mrb[0].mxu0
  %v8390 = vpop.f32.mrb[0].mxu0
  %v8391 = vadd.f32 %v8102, %v8390
  %v8392 = vpop.f32.mrb[0].mxu0
  %8393 = vmatprep.mubr.bf16.mxu0 0
  %8394 = vmatmul.mubr.bf16.gmra.mrb[0].mxu0 %v7710
  %v8395 = vpop.f32.mrb[0].mxu0
  %v8396 = vadd.f32 %v8107, %v8395
  %v8397 = vpop.f32.mrb[0].mxu0
  %v8398 = vpop.f32.mrb[0].mxu0
  %v8399 = vadd.f32 %v8110, %v8398
  %v8400 = vpop.f32.mrb[0].mxu0
  %8401 = vmatprep.mubr.bf16.mxu0 0
  %8402 = vmatmul.mubr.bf16.gmra.mrb[0].mxu0 %v7713
  %v8403 = vpop.f32.mrb[0].mxu0
  %v8404 = vadd.f32 %v8115, %v8403
  %v8405 = vpop.f32.mrb[0].mxu0
  %v8406 = vpop.f32.mrb[0].mxu0
  %v8407 = vadd.f32 %v8118, %v8406
  %v8408 = vpop.f32.mrb[0].mxu0
  %8409 = vmatprep.mubr.bf16.mxu0 0
  %8410 = vmatmul.mubr.bf16.gmra.mrb[0].mxu0 %v7716
  %v8411 = vpop.f32.mrb[0].mxu0
  %v8412 = vadd.f32 %v8123, %v8411
  %v8413 = vpop.f32.mrb[0].mxu0
  %v8414 = vpop.f32.mrb[0].mxu0
  %v8415 = vadd.f32 %v8126, %v8414
  %v8416 = vpop.f32.mrb[0].mxu0
  %8417 = vmatprep.mubr.bf16.mxu0 0
  %8418 = vmatmul.mubr.bf16.gmra.mrb[0].mxu0 %v7719
  %v8419 = vpop.f32.mrb[0].mxu0
  %v8420 = vadd.f32 %v8131, %v8419
  %v8421 = vpop.f32.mrb[0].mxu0
  %v8422 = vpop.f32.mrb[0].mxu0
  %v8423 = vadd.f32 %v8134, %v8422
  %v8424 = vpop.f32.mrb[0].mxu0
  %8425 = vmatprep.mubr.bf16.mxu0 0
  %8426 = vmatmul.mubr.bf16.gmra.mrb[0].mxu0 %v7722
  %v8427 = vpop.f32.mrb[0].mxu0
  %v8428 = vadd.f32 %v8139, %v8427
  %v8429 = vpop.f32.mrb[0].mxu0
  %v8430 = vpop.f32.mrb[0].mxu0
  %v8431 = vadd.f32 %v8142, %v8430
  %v8432 = vpop.f32.mrb[0].mxu0
  %8433 = vmatprep.mubr.bf16.mxu0 0
  %8434 = vmatmul.mubr.bf16.gmra.mrb[0].mxu0 %v7725
  %v8435 = vpop.f32.mrb[0].mxu0
  %v8436 = vadd.f32 %v8147, %v8435
  %v8437 = vpop.f32.mrb[0].mxu0
  %v8438 = vpop.f32.mrb[0].mxu0
  %v8439 = vadd.f32 %v8150, %v8438
  %v8440 = vpop.f32.mrb[0].mxu0
  %8441 = vmatprep.mubr.bf16.mxu0 0
  %8442 = vmatmul.mubr.bf16.gmra.mrb[0].mxu0 %v7728
  %v8443 = vpop.f32.mrb[0].mxu0
  %v8444 = vadd.f32 %v8155, %v8443
  %v8445 = vpop.f32.mrb[0].mxu0
  %v8446 = vpop.f32.mrb[0].mxu0
  %v8447 = vadd.f32 %v8158, %v8446
  %v8448 = vpop.f32.mrb[0].mxu0
  %8449 = vmatprep.mubr.bf16.mxu0 0
  %8450 = vmatmul.mubr.bf16.gmra.mrb[0].mxu0 %v7731
  %v8451 = vpop.f32.mrb[0].mxu0
  %v8452 = vadd.f32 %v8163, %v8451
  %v8453 = vpop.f32.mrb[0].mxu0
  %v8454 = vpop.f32.mrb[0].mxu0
  %v8455 = vadd.f32 %v8166, %v8454
  %v8456 = vpop.f32.mrb[0].mxu0
  %8457 = vmatprep.mubr.bf16.mxu0 0
  %8458 = vmatmul.mubr.bf16.gmra.mrb[0].mxu0 %v7734
  %v8459 = vpop.f32.mrb[0].mxu0
  %v8460 = vadd.f32 %v8171, %v8459
  %v8461 = vpop.f32.mrb[0].mxu0
  %v8462 = vpop.f32.mrb[0].mxu0
  %v8463 = vadd.f32 %v8174, %v8462
  %v8464 = vpop.f32.mrb[0].mxu0
  %8465 = vmatprep.mubr.bf16.mxu0 0
  %8466 = vmatmul.mubr.bf16.gmra.mrb[0].mxu0 %v7737
  %v8467 = vpop.f32.mrb[0].mxu0
  %v8468 = vadd.f32 %v8179, %v8467
  %v8469 = vpop.f32.mrb[0].mxu0
  %v8470 = vpop.f32.mrb[0].mxu0
  %v8471 = vadd.f32 %v8182, %v8470
  %v8472 = vpop.f32.mrb[0].mxu0
  %8473 = vmatprep.mubr.bf16.mxu0 0
  %8474 = vmatmul.mubr.bf16.gmra.mrb[0].mxu0 %v7740
  %v8475 = vpop.f32.mrb[0].mxu0
  %v8476 = vadd.f32 %v8187, %v8475
  %v8477 = vpop.f32.mrb[0].mxu0
  %v8478 = vpop.f32.mrb[0].mxu0
  %v8479 = vadd.f32 %v8190, %v8478
  %v8480 = vpop.f32.mrb[0].mxu0
  %8481 = vmatprep.mubr.bf16.mxu0 0
  %8482 = vmatmul.mubr.bf16.gmra.mrb[0].mxu0 %v7743
  %v8483 = vpop.f32.mrb[0].mxu0
  %v8484 = vadd.f32 %v8195, %v8483
  %v8485 = vpop.f32.mrb[0].mxu0
  %v8486 = vpop.f32.mrb[0].mxu0
  %v8487 = vadd.f32 %v8198, %v8486
  %v8488 = vpop.f32.mrb[0].mxu0
  %8489 = vmatprep.mubr.bf16.mxu0 0
  %8490 = vmatmul.mubr.bf16.gmra.mrb[0].mxu0 %v7746
  %v8491 = vpop.f32.mrb[0].mxu0
  %v8492 = vadd.f32 %v8203, %v8491
  %v8493 = vpop.f32.mrb[0].mxu0
  %v8494 = vpop.f32.mrb[0].mxu0
  %v8495 = vadd.f32 %v8206, %v8494
  %v8496 = vpop.f32.mrb[0].mxu0
  %8497 = vmatprep.mubr.bf16.mxu0 0
  %8498 = vmatmul.mubr.bf16.gmra.mrb[0].mxu0 %v7749
  %v8499 = vpop.f32.mrb[0].mxu0
  %v8500 = vadd.f32 %v8211, %v8499
  %v8501 = vpop.f32.mrb[0].mxu0
  %v8502 = vpop.f32.mrb[0].mxu0
  %v8503 = vadd.f32 %v8214, %v8502
  %v8504 = vpop.f32.mrb[0].mxu0
  %8505 = vmatprep.mubr.bf16.mxu0 0
  %8506 = vmatmul.mubr.bf16.gmra.mrb[0].mxu0 %v7752
  %v8507 = vpop.f32.mrb[0].mxu0
  %v8508 = vadd.f32 %v8219, %v8507
  %v8509 = vpop.f32.mrb[0].mxu0
  %v8510 = vpop.f32.mrb[0].mxu0
  %v8511 = vadd.f32 %v8222, %v8510
  %v8512 = vpop.f32.mrb[0].mxu0
  %8513 = vmatprep.mubr.bf16.mxu0 0
  %8514 = vmatmul.mubr.bf16.gmra.mrb[0].mxu0 %v7755
  %v8515 = vpop.f32.mrb[0].mxu0
  %v8516 = vadd.f32 %v8227, %v8515
  %v8517 = vpop.f32.mrb[0].mxu0
  %v8518 = vpop.f32.mrb[0].mxu0
  %v8519 = vadd.f32 %v8230, %v8518
  %v8520 = vpop.f32.mrb[0].mxu0
  %8521 = vmatprep.mubr.bf16.mxu0 0
  %8522 = vmatmul.mubr.bf16.gmra.mrb[0].mxu0 %v7758
  %v8523 = vpop.f32.mrb[0].mxu0
  %v8524 = vadd.f32 %v8235, %v8523
  %v8525 = vpop.f32.mrb[0].mxu0
  %v8526 = vpop.f32.mrb[0].mxu0
  %v8527 = vadd.f32 %v8238, %v8526
  %v8528 = vpop.f32.mrb[0].mxu0
  %8529 = vdwg.mxu0
  %v8530 = vadd.f32 %v7599, %v8276
  %v8531 = vadd.f32 %v7600, %v8279
  %v8532 = vadd.f32 %v7601, %v8284
  %v8533 = vadd.f32 %v7602, %v8287
  %v8534 = vadd.f32 %v7603, %v8292
  %v8535 = vadd.f32 %v7604, %v8295
  %v8536 = vadd.f32 %v7605, %v8300
  %v8537 = vadd.f32 %v7606, %v8303
  %v8538 = vadd.f32 %v7607, %v8308
  %v8539 = vadd.f32 %v7608, %v8311
  %v8540 = vadd.f32 %v7609, %v8316
  %v8541 = vadd.f32 %v7610, %v8319
  %v8542 = vadd.f32 %v7611, %v8324
  %v8543 = vadd.f32 %v7612, %v8327
  %v8544 = vadd.f32 %v7613, %v8332
  %v8545 = vadd.f32 %v7614, %v8335
  %v8546 = vadd.f32 %v7615, %v8340
  %v8547 = vadd.f32 %v7616, %v8343
  %v8548 = vadd.f32 %v7617, %v8348
  %v8549 = vadd.f32 %v7618, %v8351
  %v8550 = vadd.f32 %v7619, %v8356
  %v8551 = vadd.f32 %v7620, %v8359
  %v8552 = vadd.f32 %v7621, %v8364
  %v8553 = vadd.f32 %v7622, %v8367
  %v8554 = vadd.f32 %v7623, %v8372
  %v8555 = vadd.f32 %v7624, %v8375
  %v8556 = vadd.f32 %v7625, %v8380
  %v8557 = vadd.f32 %v7626, %v8383
  %v8558 = vadd.f32 %v7627, %v8388
  %v8559 = vadd.f32 %v7628, %v8391
  %v8560 = vadd.f32 %v7629, %v8396
  %v8561 = vadd.f32 %v7630, %v8399
  %v8562 = vadd.f32 %v7631, %v8404
  %v8563 = vadd.f32 %v7632, %v8407
  %v8564 = vadd.f32 %v7633, %v8412
  %v8565 = vadd.f32 %v7634, %v8415
  %v8566 = vadd.f32 %v7635, %v8420
  %v8567 = vadd.f32 %v7636, %v8423
  %v8568 = vadd.f32 %v7637, %v8428
  %v8569 = vadd.f32 %v7638, %v8431
  %v8570 = vadd.f32 %v7639, %v8436
  %v8571 = vadd.f32 %v7640, %v8439
  %v8572 = vadd.f32 %v7641, %v8444
  %v8573 = vadd.f32 %v7642, %v8447
  %v8574 = vadd.f32 %v7643, %v8452
  %v8575 = vadd.f32 %v7644, %v8455
  %v8576 = vadd.f32 %v7645, %v8460
  %v8577 = vadd.f32 %v7646, %v8463
  %v8578 = vadd.f32 %v7647, %v8468
  %v8579 = vadd.f32 %v7648, %v8471
  %v8580 = vadd.f32 %v7649, %v8476
  %v8581 = vadd.f32 %v7650, %v8479
  %v8582 = vadd.f32 %v7651, %v8484
  %v8583 = vadd.f32 %v7652, %v8487
  %v8584 = vadd.f32 %v7653, %v8492
  %v8585 = vadd.f32 %v7654, %v8495
  %v8586 = vadd.f32 %v7655, %v8500
  %v8587 = vadd.f32 %v7656, %v8503
  %v8588 = vadd.f32 %v7657, %v8508
  %v8589 = vadd.f32 %v7658, %v8511
  %v8590 = vadd.f32 %v7659, %v8516
  %v8591 = vadd.f32 %v7660, %v8519
  %v8592 = vadd.f32 %v7661, %v8524
  %v8593 = vadd.f32 %v7662, %v8527
  %8594 = vst.msk [vmem:[#allocation3] sm:$0xff] %vm2606, %v8530
  %8595 = vst.msk [vmem:[#allocation3 + $0x8] sm:$0xff] %vm2606, %v8531
  %8596 = vst.msk [vmem:[#allocation3 + $0x10] sm:$0xff] %vm2606, %v8532
  %8597 = vst.msk [vmem:[#allocation3 + $0x18] sm:$0xff] %vm2606, %v8533
  %8598 = vst.msk [vmem:[#allocation3 + $0x20] sm:$0xff] %vm2606, %v8534
  %8599 = vst.msk [vmem:[#allocation3 + $0x28] sm:$0xff] %vm2606, %v8535
  %8600 = vst.msk [vmem:[#allocation3 + $0x30] sm:$0xff] %vm2606, %v8536
  %8601 = vst.msk [vmem:[#allocation3 + $0x38] sm:$0xff] %vm2606, %v8537
  %8602 = vst.msk [vmem:[#allocation3 + $0x40] sm:$0xff] %vm2606, %v8538
  %8603 = vst.msk [vmem:[#allocation3 + $0x48] sm:$0xff] %vm2606, %v8539
  %8604 = vst.msk [vmem:[#allocation3 + $0x50] sm:$0xff] %vm2606, %v8540
  %8605 = vst.msk [vmem:[#allocation3 + $0x58] sm:$0xff] %vm2606, %v8541
  %8606 = vst.msk [vmem:[#allocation3 + $0x60] sm:$0xff] %vm2606, %v8542
  %8607 = vst.msk [vmem:[#allocation3 + $0x68] sm:$0xff] %vm2606, %v8543
  %8608 = vst.msk [vmem:[#allocation3 + $0x70] sm:$0xff] %vm2606, %v8544
  %8609 = vst.msk [vmem:[#allocation3 + $0x78] sm:$0xff] %vm2606, %v8545
  %8610 = vst.msk [vmem:[#allocation3 + $0x80] sm:$0xff] %vm2606, %v8546
  %8611 = vst.msk [vmem:[#allocation3 + $0x88] sm:$0xff] %vm2606, %v8547
  %8612 = vst.msk [vmem:[#allocation3 + $0x90] sm:$0xff] %vm2606, %v8548
  %8613 = vst.msk [vmem:[#allocation3 + $0x98] sm:$0xff] %vm2606, %v8549
  %8614 = vst.msk [vmem:[#allocation3 + $0xa0] sm:$0xff] %vm2606, %v8550
  %8615 = vst.msk [vmem:[#allocation3 + $0xa8] sm:$0xff] %vm2606, %v8551
  %8616 = vst.msk [vmem:[#allocation3 + $0xb0] sm:$0xff] %vm2606, %v8552
  %8617 = vst.msk [vmem:[#allocation3 + $0xb8] sm:$0xff] %vm2606, %v8553
  %8618 = vst.msk [vmem:[#allocation3 + $0xc0] sm:$0xff] %vm2606, %v8554
  %8619 = vst.msk [vmem:[#allocation3 + $0xc8] sm:$0xff] %vm2606, %v8555
  %8620 = vst.msk [vmem:[#allocation3 + $0xd0] sm:$0xff] %vm2606, %v8556
  %8621 = vst.msk [vmem:[#allocation3 + $0xd8] sm:$0xff] %vm2606, %v8557
  %8622 = vst.msk [vmem:[#allocation3 + $0xe0] sm:$0xff] %vm2606, %v8558
  %8623 = vst.msk [vmem:[#allocation3 + $0xe8] sm:$0xff] %vm2606, %v8559
  %8624 = vst.msk [vmem:[#allocation3 + $0xf0] sm:$0xff] %vm2606, %v8560
  %8625 = vst.msk [vmem:[#allocation3 + $0xf8] sm:$0xff] %vm2606, %v8561
  %8626 = vst.msk [vmem:[#allocation3 + $0x100] sm:$0xff] %vm2606, %v8562
  %8627 = vst.msk [vmem:[#allocation3 + $0x108] sm:$0xff] %vm2606, %v8563
  %8628 = vst.msk [vmem:[#allocation3 + $0x110] sm:$0xff] %vm2606, %v8564
  %8629 = vst.msk [vmem:[#allocation3 + $0x118] sm:$0xff] %vm2606, %v8565
  %8630 = vst.msk [vmem:[#allocation3 + $0x120] sm:$0xff] %vm2606, %v8566
  %8631 = vst.msk [vmem:[#allocation3 + $0x128] sm:$0xff] %vm2606, %v8567
  %8632 = vst.msk [vmem:[#allocation3 + $0x130] sm:$0xff] %vm2606, %v8568
  %8633 = vst.msk [vmem:[#allocation3 + $0x138] sm:$0xff] %vm2606, %v8569
  %8634 = vst.msk [vmem:[#allocation3 + $0x140] sm:$0xff] %vm2606, %v8570
  %8635 = vst.msk [vmem:[#allocation3 + $0x148] sm:$0xff] %vm2606, %v8571
  %8636 = vst.msk [vmem:[#allocation3 + $0x150] sm:$0xff] %vm2606, %v8572
  %8637 = vst.msk [vmem:[#allocation3 + $0x158] sm:$0xff] %vm2606, %v8573
  %8638 = vst.msk [vmem:[#allocation3 + $0x160] sm:$0xff] %vm2606, %v8574
  %8639 = vst.msk [vmem:[#allocation3 + $0x168] sm:$0xff] %vm2606, %v8575
  %8640 = vst.msk [vmem:[#allocation3 + $0x170] sm:$0xff] %vm2606, %v8576
  %8641 = vst.msk [vmem:[#allocation3 + $0x178] sm:$0xff] %vm2606, %v8577
  %8642 = vst.msk [vmem:[#allocation3 + $0x180] sm:$0xff] %vm2606, %v8578
  %8643 = vst.msk [vmem:[#allocation3 + $0x188] sm:$0xff] %vm2606, %v8579
  %8644 = vst.msk [vmem:[#allocation3 + $0x190] sm:$0xff] %vm2606, %v8580
  %8645 = vst.msk [vmem:[#allocation3 + $0x198] sm:$0xff] %vm2606, %v8581
  %8646 = vst.msk [vmem:[#allocation3 + $0x1a0] sm:$0xff] %vm2606, %v8582
  %8647 = vst.msk [vmem:[#allocation3 + $0x1a8] sm:$0xff] %vm2606, %v8583
  %8648 = vst.msk [vmem:[#allocation3 + $0x1b0] sm:$0xff] %vm2606, %v8584
  %8649 = vst.msk [vmem:[#allocation3 + $0x1b8] sm:$0xff] %vm2606, %v8585
  %8650 = vst.msk [vmem:[#allocation3 + $0x1c0] sm:$0xff] %vm2606, %v8586
  %8651 = vst.msk [vmem:[#allocation3 + $0x1c8] sm:$0xff] %vm2606, %v8587
  %8652 = vst.msk [vmem:[#allocation3 + $0x1d0] sm:$0xff] %vm2606, %v8588
  %8653 = vst.msk [vmem:[#allocation3 + $0x1d8] sm:$0xff] %vm2606, %v8589
  %8654 = vst.msk [vmem:[#allocation3 + $0x1e0] sm:$0xff] %vm2606, %v8590
  %8655 = vst.msk [vmem:[#allocation3 + $0x1e8] sm:$0xff] %vm2606, %v8591
  %8656 = vst.msk [vmem:[#allocation3 + $0x1f0] sm:$0xff] %vm2606, %v8592
  %8657 = vst.msk [vmem:[#allocation3 + $0x1f8] sm:$0xff] %vm2606, %v8593
  %v8658 = vld [vmem:[#allocation3] sm:$0xff]
  %v8659 = vld [vmem:[#allocation3 + $0x8] sm:$0xff]
  %v8660 = vld [vmem:[#allocation3 + $0x10] sm:$0xff]
  %v8661 = vld [vmem:[#allocation3 + $0x18] sm:$0xff]
  %v8662 = vld [vmem:[#allocation3 + $0x20] sm:$0xff]
  %v8663 = vld [vmem:[#allocation3 + $0x28] sm:$0xff]
  %v8664 = vld [vmem:[#allocation3 + $0x30] sm:$0xff]
  %v8665 = vld [vmem:[#allocation3 + $0x38] sm:$0xff]
  %v8666 = vld [vmem:[#allocation3 + $0x40] sm:$0xff]
  %v8667 = vld [vmem:[#allocation3 + $0x48] sm:$0xff]
  %v8668 = vld [vmem:[#allocation3 + $0x50] sm:$0xff]
  %v8669 = vld [vmem:[#allocation3 + $0x58] sm:$0xff]
  %v8670 = vld [vmem:[#allocation3 + $0x60] sm:$0xff]
  %v8671 = vld [vmem:[#allocation3 + $0x68] sm:$0xff]
  %v8672 = vld [vmem:[#allocation3 + $0x70] sm:$0xff]
  %v8673 = vld [vmem:[#allocation3 + $0x78] sm:$0xff]
  %v8674 = vld [vmem:[#allocation3 + $0x80] sm:$0xff]
  %v8675 = vld [vmem:[#allocation3 + $0x88] sm:$0xff]
  %v8676 = vld [vmem:[#allocation3 + $0x90] sm:$0xff]
  %v8677 = vld [vmem:[#allocation3 + $0x98] sm:$0xff]
  %v8678 = vld [vmem:[#allocation3 + $0xa0] sm:$0xff]
  %v8679 = vld [vmem:[#allocation3 + $0xa8] sm:$0xff]
  %v8680 = vld [vmem:[#allocation3 + $0xb0] sm:$0xff]
  %v8681 = vld [vmem:[#allocation3 + $0xb8] sm:$0xff]
  %v8682 = vld [vmem:[#allocation3 + $0xc0] sm:$0xff]
  %v8683 = vld [vmem:[#allocation3 + $0xc8] sm:$0xff]
  %v8684 = vld [vmem:[#allocation3 + $0xd0] sm:$0xff]
  %v8685 = vld [vmem:[#allocation3 + $0xd8] sm:$0xff]
  %v8686 = vld [vmem:[#allocation3 + $0xe0] sm:$0xff]
  %v8687 = vld [vmem:[#allocation3 + $0xe8] sm:$0xff]
  %v8688 = vld [vmem:[#allocation3 + $0xf0] sm:$0xff]
  %v8689 = vld [vmem:[#allocation3 + $0xf8] sm:$0xff]
  %v8690 = vld [vmem:[#allocation3 + $0x100] sm:$0xff]
  %v8691 = vld [vmem:[#allocation3 + $0x108] sm:$0xff]
  %v8692 = vld [vmem:[#allocation3 + $0x110] sm:$0xff]
  %v8693 = vld [vmem:[#allocation3 + $0x118] sm:$0xff]
  %v8694 = vld [vmem:[#allocation3 + $0x120] sm:$0xff]
  %v8695 = vld [vmem:[#allocation3 + $0x128] sm:$0xff]
  %v8696 = vld [vmem:[#allocation3 + $0x130] sm:$0xff]
  %v8697 = vld [vmem:[#allocation3 + $0x138] sm:$0xff]
  %v8698 = vld [vmem:[#allocation3 + $0x140] sm:$0xff]
  %v8699 = vld [vmem:[#allocation3 + $0x148] sm:$0xff]
  %v8700 = vld [vmem:[#allocation3 + $0x150] sm:$0xff]
  %v8701 = vld [vmem:[#allocation3 + $0x158] sm:$0xff]
  %v8702 = vld [vmem:[#allocation3 + $0x160] sm:$0xff]
  %v8703 = vld [vmem:[#allocation3 + $0x168] sm:$0xff]
  %v8704 = vld [vmem:[#allocation3 + $0x170] sm:$0xff]
  %v8705 = vld [vmem:[#allocation3 + $0x178] sm:$0xff]
  %v8706 = vld [vmem:[#allocation3 + $0x180] sm:$0xff]
  %v8707 = vld [vmem:[#allocation3 + $0x188] sm:$0xff]
  %v8708 = vld [vmem:[#allocation3 + $0x190] sm:$0xff]
  %v8709 = vld [vmem:[#allocation3 + $0x198] sm:$0xff]
  %v8710 = vld [vmem:[#allocation3 + $0x1a0] sm:$0xff]
  %v8711 = vld [vmem:[#allocation3 + $0x1a8] sm:$0xff]
  %v8712 = vld [vmem:[#allocation3 + $0x1b0] sm:$0xff]
  %v8713 = vld [vmem:[#allocation3 + $0x1b8] sm:$0xff]
  %v8714 = vld [vmem:[#allocation3 + $0x1c0] sm:$0xff]
  %v8715 = vld [vmem:[#allocation3 + $0x1c8] sm:$0xff]
  %v8716 = vld [vmem:[#allocation3 + $0x1d0] sm:$0xff]
  %v8717 = vld [vmem:[#allocation3 + $0x1d8] sm:$0xff]
  %v8718 = vld [vmem:[#allocation3 + $0x1e0] sm:$0xff]
  %v8719 = vld [vmem:[#allocation3 + $0x1e8] sm:$0xff]
  %v8720 = vld [vmem:[#allocation3 + $0x1f0] sm:$0xff]
  %v8721 = vld [vmem:[#allocation3 + $0x1f8] sm:$0xff]
  %v8722 = vld [vmem:[%s3794] sm:$0xff]
  %v8723 = vld [vmem:[%s3794 + $0x8] sm:$0xff]
  %v8724 = vld [vmem:[%s3794 + $0x10] sm:$0xff]
  %v8725 = vld [vmem:[%s3794 + $0x18] sm:$0xff]
  %v8726 = vld [vmem:[%s3794 + $0x20] sm:$0xff]
  %v8727 = vld [vmem:[%s3794 + $0x28] sm:$0xff]
  %v8728 = vld [vmem:[%s3794 + $0x30] sm:$0xff]
  %v8729 = vld [vmem:[%s3794 + $0x38] sm:$0xff]
  %v8730 = vld [vmem:[%s3794 + $0x40] sm:$0xff]
  %v8731 = vld [vmem:[%s3794 + $0x48] sm:$0xff]
  %v8732 = vld [vmem:[%s3794 + $0x50] sm:$0xff]
  %v8733 = vld [vmem:[%s3794 + $0x58] sm:$0xff]
  %v8734 = vld [vmem:[%s3794 + $0x60] sm:$0xff]
  %v8735 = vld [vmem:[%s3794 + $0x68] sm:$0xff]
  %v8736 = vld [vmem:[%s3794 + $0x70] sm:$0xff]
  %v8737 = vld [vmem:[%s3794 + $0x78] sm:$0xff]
  %v8738 = vld [vmem:[%s3794 + $0x80] sm:$0xff]
  %v8739 = vld [vmem:[%s3794 + $0x88] sm:$0xff]
  %v8740 = vld [vmem:[%s3794 + $0x90] sm:$0xff]
  %v8741 = vld [vmem:[%s3794 + $0x98] sm:$0xff]
  %v8742 = vld [vmem:[%s3794 + $0xa0] sm:$0xff]
  %v8743 = vld [vmem:[%s3794 + $0xa8] sm:$0xff]
  %v8744 = vld [vmem:[%s3794 + $0xb0] sm:$0xff]
  %v8745 = vld [vmem:[%s3794 + $0xb8] sm:$0xff]
  %v8746 = vld [vmem:[%s3794 + $0xc0] sm:$0xff]
  %v8747 = vld [vmem:[%s3794 + $0xc8] sm:$0xff]
  %v8748 = vld [vmem:[%s3794 + $0xd0] sm:$0xff]
  %v8749 = vld [vmem:[%s3794 + $0xd8] sm:$0xff]
  %v8750 = vld [vmem:[%s3794 + $0xe0] sm:$0xff]
  %v8751 = vld [vmem:[%s3794 + $0xe8] sm:$0xff]
  %v8752 = vld [vmem:[%s3794 + $0xf0] sm:$0xff]
  %v8753 = vld [vmem:[%s3794 + $0xf8] sm:$0xff]
  %v8754 = vld [vmem:[%s3794 + $0x100] sm:$0xff]
  %v8755 = vld [vmem:[%s3794 + $0x108] sm:$0xff]
  %v8756 = vld [vmem:[%s3794 + $0x110] sm:$0xff]
  %v8757 = vld [vmem:[%s3794 + $0x118] sm:$0xff]
  %v8758 = vld [vmem:[%s3794 + $0x120] sm:$0xff]
  %v8759 = vld [vmem:[%s3794 + $0x128] sm:$0xff]
  %v8760 = vld [vmem:[%s3794 + $0x130] sm:$0xff]
  %v8761 = vld [vmem:[%s3794 + $0x138] sm:$0xff]
  %v8762 = vld [vmem:[%s3794 + $0x140] sm:$0xff]
  %v8763 = vld [vmem:[%s3794 + $0x148] sm:$0xff]
  %v8764 = vld [vmem:[%s3794 + $0x150] sm:$0xff]
  %v8765 = vld [vmem:[%s3794 + $0x158] sm:$0xff]
  %v8766 = vld [vmem:[%s3794 + $0x160] sm:$0xff]
  %v8767 = vld [vmem:[%s3794 + $0x168] sm:$0xff]
  %v8768 = vld [vmem:[%s3794 + $0x170] sm:$0xff]
  %v8769 = vld [vmem:[%s3794 + $0x178] sm:$0xff]
  %v8770 = vld [vmem:[%s3794 + $0x1b0] sm:$0xff]
  %v8771 = vld [vmem:[%s3794 + $0x1b8] sm:$0xff]
  %v8772 = vld [vmem:[%s3794 + $0x1c0] sm:$0xff]
  %v8773 = vld [vmem:[%s3794 + $0x1c8] sm:$0xff]
  %v8774 = vld [vmem:[%s3794 + $0x1d0] sm:$0xff]
  %v8775 = vld [vmem:[%s3794 + $0x1d8] sm:$0xff]
  %v8776 = vld [vmem:[%s3794 + $0x1e0] sm:$0xff]
  %v8777 = vld [vmem:[%s3794 + $0x1e8] sm:$0xff]
  %v8778 = vld [vmem:[%s3794 + $0x1f0] sm:$0xff]
  %v8779 = vld [vmem:[%s3794 + $0x1f8] sm:$0xff]
  %v8780 = vld [vmem:[%s3794 + $0x200] sm:$0xff]
  %v8781 = vld [vmem:[%s3794 + $0x208] sm:$0xff]
  %v8782 = vld [vmem:[%s3794 + $0x210] sm:$0xff]
  %v8783 = vld [vmem:[%s3794 + $0x218] sm:$0xff]
  %v8784 = vld [vmem:[%s3794 + $0x220] sm:$0xff]
  %v8785 = vld [vmem:[%s3794 + $0x228] sm:$0xff]
  %v8786 = vld [vmem:[%s3794 + $0x230] sm:$0xff]
  %v8787 = vld [vmem:[%s3794 + $0x238] sm:$0xff]
  %v8788 = vld [vmem:[%s3794 + $0x240] sm:$0xff]
  %v8789 = vld [vmem:[%s3794 + $0x248] sm:$0xff]
  %v8790 = vld [vmem:[%s3794 + $0x250] sm:$0xff]
  %v8791 = vld [vmem:[%s3794 + $0x258] sm:$0xff]
  %v8792 = vld [vmem:[%s3794 + $0x260] sm:$0xff]
  %v8793 = vld [vmem:[%s3794 + $0x268] sm:$0xff]
  %v8794 = vld [vmem:[%s3794 + $0x270] sm:$0xff]
  %v8795 = vld [vmem:[%s3794 + $0x278] sm:$0xff]
  %v8796 = vld [vmem:[%s3794 + $0x280] sm:$0xff]
  %v8797 = vld [vmem:[%s3794 + $0x288] sm:$0xff]
  %v8798 = vld [vmem:[%s3794 + $0x290] sm:$0xff]
  %v8799 = vld [vmem:[%s3794 + $0x298] sm:$0xff]
  %v8800 = vld [vmem:[%s3794 + $0x2a0] sm:$0xff]
  %v8801 = vld [vmem:[%s3794 + $0x2a8] sm:$0xff]
  %v8802 = vld [vmem:[%s3794 + $0x2b0] sm:$0xff]
  %v8803 = vld [vmem:[%s3794 + $0x2b8] sm:$0xff]
  %v8804 = vld [vmem:[%s3794 + $0x2c0] sm:$0xff]
  %v8805 = vld [vmem:[%s3794 + $0x2c8] sm:$0xff]
  %v8806 = vld [vmem:[%s3794 + $0x2d0] sm:$0xff]
  %v8807 = vld [vmem:[%s3794 + $0x2d8] sm:$0xff]
  %v8808 = vld [vmem:[%s3794 + $0x2e0] sm:$0xff]
  %v8809 = vld [vmem:[%s3794 + $0x2e8] sm:$0xff]
  %v8810 = vld [vmem:[%s3794 + $0x2f0] sm:$0xff]
  %v8811 = vld [vmem:[%s3794 + $0x2f8] sm:$0xff]
  %v8812 = vld [vmem:[%s3794 + $0x300] sm:$0xff]
  %v8813 = vld [vmem:[%s3794 + $0x308] sm:$0xff]
  %v8814 = vld [vmem:[%s3794 + $0x310] sm:$0xff]
  %v8815 = vld [vmem:[%s3794 + $0x318] sm:$0xff]
  %v8816 = vld [vmem:[%s3794 + $0x320] sm:$0xff]
  %v8817 = vld [vmem:[%s3794 + $0x328] sm:$0xff]
  %s8818 = scalar_lea.vmem %s7, 384
  %v8819 = vld [vmem:[%s8818] sm:$0xf]
  %v8820 = vld [vmem:[%s8818 + $0x4] sm:$0xf]
  %v8821 = vld [vmem:[%s8818 + $0x8] sm:$0xf]
  %v8822 = vld [vmem:[%s8818 + $0xc] sm:$0xf]
  %v8823 = vld [vmem:[%s8818 + $0x10] sm:$0xf]
  %v8824 = vld [vmem:[%s8818 + $0x14] sm:$0xf]
  %v8825 = vld [vmem:[%s8818 + $0x18] sm:$0xf]
  %v8826 = vld [vmem:[%s8818 + $0x1c] sm:$0xf]
  %v8827 = vld [vmem:[%s8818 + $0x20] sm:$0xf]
  %v8828 = vld [vmem:[%s8818 + $0x24] sm:$0xf]
  %v8829 = vld [vmem:[%s8818 + $0x28] sm:$0xf]
  %v8830 = vld [vmem:[%s8818 + $0x2c] sm:$0xf]
  %v8831 = vld [vmem:[%s8818 + $0x30] sm:$0xf]
  %v8832 = vld [vmem:[%s8818 + $0x34] sm:$0xf]
  %v8833 = vld [vmem:[%s8818 + $0x38] sm:$0xf]
  %v8834 = vld [vmem:[%s8818 + $0x3c] sm:$0xf]
  %v8835 = vld [vmem:[%s8818 + $0x40] sm:$0xf]
  %v8836 = vld [vmem:[%s8818 + $0x44] sm:$0xf]
  %v8837 = vld [vmem:[%s8818 + $0x48] sm:$0xf]
  %v8838 = vld [vmem:[%s8818 + $0x4c] sm:$0xf]
  %v8839 = vld [vmem:[%s8818 + $0x50] sm:$0xf]
  %v8840 = vld [vmem:[%s8818 + $0x54] sm:$0xf]
  %v8841 = vld [vmem:[%s8818 + $0x58] sm:$0xf]
  %v8842 = vld [vmem:[%s8818 + $0x5c] sm:$0xf]
  %v8843 = vld [vmem:[%s8818 + $0x60] sm:$0xf]
  %v8844 = vld [vmem:[%s8818 + $0x64] sm:$0xf]
  %v8845 = vld [vmem:[%s8818 + $0x68] sm:$0xf]
  %v8846 = vld [vmem:[%s8818 + $0x6c] sm:$0xf]
  %v8847 = vld [vmem:[%s8818 + $0x70] sm:$0xf]
  %v8848 = vld [vmem:[%s8818 + $0x74] sm:$0xf]
  %v8849 = vld [vmem:[%s8818 + $0x78] sm:$0xf]
  %v8850 = vld [vmem:[%s8818 + $0x7c] sm:$0xf]
  %v8851 = vld [vmem:[%s8818 + $0x80] sm:$0xf]
  %v8852 = vld [vmem:[%s8818 + $0x84] sm:$0xf]
  %v8853 = vld [vmem:[%s8818 + $0x88] sm:$0xf]
  %v8854 = vld [vmem:[%s8818 + $0x8c] sm:$0xf]
  %v8855 = vld [vmem:[%s8818 + $0x90] sm:$0xf]
  %v8856 = vld [vmem:[%s8818 + $0x94] sm:$0xf]
  %v8857 = vld [vmem:[%s8818 + $0x98] sm:$0xf]
  %v8858 = vld [vmem:[%s8818 + $0x9c] sm:$0xf]
  %v8859 = vld [vmem:[%s8818 + $0xa0] sm:$0xf]
  %v8860 = vld [vmem:[%s8818 + $0xa4] sm:$0xf]
  %v8861 = vld [vmem:[%s8818 + $0xa8] sm:$0xf]
  %v8862 = vld [vmem:[%s8818 + $0xac] sm:$0xf]
  %v8863 = vld [vmem:[%s8818 + $0xb0] sm:$0xf]
  %v8864 = vld [vmem:[%s8818 + $0xb4] sm:$0xf]
  %v8865 = vld [vmem:[%s8818 + $0xb8] sm:$0xf]
  %v8866 = vld [vmem:[%s8818 + $0xbc] sm:$0xf]
  %v8915 = vunpack.c.l.b16 %v8819
  %v8916 = vunpack.c.l.b16 %v8820
  %v8917 = vunpack.c.l.b16 %v8821
  %v8918 = vunpack.c.l.b16 %v8822
  %v8919 = vunpack.c.l.b16 %v8823
  %v8920 = vunpack.c.l.b16 %v8824
  %v8921 = vunpack.c.l.b16 %v8825
  %v8922 = vunpack.c.l.b16 %v8826
  %v8923 = vunpack.c.l.b16 %v8827
  %v8924 = vunpack.c.l.b16 %v8828
  %v8925 = vunpack.c.l.b16 %v8829
  %v8926 = vunpack.c.l.b16 %v8830
  %v8927 = vunpack.c.l.b16 %v8831
  %v8928 = vunpack.c.l.b16 %v8832
  %v8929 = vunpack.c.l.b16 %v8833
  %v8930 = vunpack.c.l.b16 %v8834
  %v8931 = vunpack.c.l.b16 %v8835
  %v8932 = vunpack.c.l.b16 %v8836
  %v8933 = vunpack.c.l.b16 %v8837
  %v8934 = vunpack.c.l.b16 %v8838
  %v8935 = vunpack.c.l.b16 %v8839
  %v8936 = vunpack.c.l.b16 %v8840
  %v8937 = vunpack.c.l.b16 %v8841
  %v8938 = vunpack.c.l.b16 %v8842
  %v8939 = vunpack.c.l.b16 %v8843
  %v8940 = vunpack.c.l.b16 %v8844
  %v8941 = vunpack.c.l.b16 %v8845
  %v8942 = vunpack.c.l.b16 %v8846
  %v8943 = vunpack.c.l.b16 %v8847
  %v8944 = vunpack.c.l.b16 %v8848
  %v8945 = vunpack.c.l.b16 %v8849
  %v8946 = vunpack.c.l.b16 %v8850
  %v8947 = vunpack.c.l.b16 %v8851
  %v8948 = vunpack.c.l.b16 %v8852
  %v8949 = vunpack.c.l.b16 %v8853
  %v8950 = vunpack.c.l.b16 %v8854
  %v8951 = vunpack.c.l.b16 %v8855
  %v8952 = vunpack.c.l.b16 %v8856
  %v8953 = vunpack.c.l.b16 %v8857
  %v8954 = vunpack.c.l.b16 %v8858
  %v8955 = vunpack.c.l.b16 %v8859
  %v8956 = vunpack.c.l.b16 %v8860
  %v8957 = vunpack.c.l.b16 %v8861
  %v8958 = vunpack.c.l.b16 %v8862
  %v8959 = vunpack.c.l.b16 %v8863
  %v8960 = vunpack.c.l.b16 %v8864
  %v8961 = vunpack.c.l.b16 %v8865
  %v8962 = vunpack.c.l.b16 %v8866
  %v8963 = vpack.c.b16 %v8916, %v8915
  %v8964 = vpack.c.b16 %v8918, %v8917
  %v8965 = vpack.c.b16 %v8920, %v8919
  %v8966 = vpack.c.b16 %v8922, %v8921
  %v8967 = vpack.c.b16 %v8924, %v8923
  %v8968 = vpack.c.b16 %v8926, %v8925
  %v8969 = vpack.c.b16 %v8928, %v8927
  %v8970 = vpack.c.b16 %v8930, %v8929
  %v8971 = vpack.c.b16 %v8932, %v8931
  %v8972 = vpack.c.b16 %v8934, %v8933
  %v8973 = vpack.c.b16 %v8936, %v8935
  %v8974 = vpack.c.b16 %v8938, %v8937
  %v8975 = vpack.c.b16 %v8940, %v8939
  %v8976 = vpack.c.b16 %v8942, %v8941
  %v8977 = vpack.c.b16 %v8944, %v8943
  %v8978 = vpack.c.b16 %v8946, %v8945
  %v8979 = vpack.c.b16 %v8948, %v8947
  %v8980 = vpack.c.b16 %v8950, %v8949
  %v8981 = vpack.c.b16 %v8952, %v8951
  %v8982 = vpack.c.b16 %v8954, %v8953
  %v8983 = vpack.c.b16 %v8956, %v8955
  %v8984 = vpack.c.b16 %v8958, %v8957
  %v8985 = vpack.c.b16 %v8960, %v8959
  %v8986 = vpack.c.b16 %v8962, %v8961
  %9011 = vmatprep.subr.bf16.mxu0 0
  %9012 = vmatpush1.bf16.msra.mxu0 %v8963
  %9013 = vmatprep.subr.bf16.mxu0 0
  %9014 = vmatpush1.bf16.msra.mxu0 %v8964
  %9015 = vmatprep.subr.bf16.mxu0 0
  %9016 = vmatpush1.bf16.msra.mxu0 %v8965
  %9017 = vmatprep.subr.bf16.mxu0 0
  %9018 = vmatpush1.bf16.msra.mxu0 %v8966
  %9019 = vmatprep.subr.bf16.mxu0 0
  %9020 = vmatpush1.bf16.msra.mxu0 %v8967
  %9021 = vmatprep.subr.bf16.mxu0 0
  %9022 = vmatpush1.bf16.msra.mxu0 %v8968
  %9023 = vmatprep.subr.bf16.mxu0 0
  %9024 = vmatpush1.bf16.msra.mxu0 %v8969
  %9025 = vmatprep.subr.bf16.mxu0 0
  %9026 = vmatpush1.bf16.msra.mxu0 %v8970
  %9027 = vmatprep.subr.bf16.mxu0 0
  %9028 = vmatpush1.bf16.msra.mxu0 %v8971
  %9029 = vmatprep.subr.bf16.mxu0 0
  %9030 = vmatpush1.bf16.msra.mxu0 %v8972
  %9031 = vmatprep.subr.bf16.mxu0 0
  %9032 = vmatpush1.bf16.msra.mxu0 %v8973
  %9033 = vmatprep.subr.bf16.mxu0 0
  %9034 = vmatpush1.bf16.msra.mxu0 %v8974
  %9035 = vmatprep.subr.bf16.mxu0 0
  %9036 = vmatpush1.bf16.msra.mxu0 %v8975
  %9037 = vmatprep.subr.bf16.mxu0 0
  %9038 = vmatpush1.bf16.msra.mxu0 %v8976
  %9039 = vmatprep.subr.bf16.mxu0 0
  %9040 = vmatpush1.bf16.msra.mxu0 %v8977
  %9041 = vmatprep.subr.bf16.mxu0 0
  %9042 = vmatpush1.bf16.msra.mxu0 %v8978
  %9043 = vmatprep.mubr.bf16.mxu0 %v8723
  %9044 = vmatmul.mubr.bf16.gmra.mrb[0].mxu0 %v8722
  %v9045 = vpop.f32.mrb[0].mxu0
  %v9046 = vadd.f32 0.0, %v9045
  %v9047 = vpop.f32.mrb[0].mxu0
  %v9048 = vpop.f32.mrb[0].mxu0
  %v9049 = vadd.f32 0.0, %v9048
  %v9050 = vpop.f32.mrb[0].mxu0
  %9051 = vmatprep.mubr.bf16.mxu0 %v8726
  %9052 = vmatmul.mubr.bf16.gmra.mrb[0].mxu0 %v8725
  %v9053 = vpop.f32.mrb[0].mxu0
  %v9054 = vadd.f32 0.0, %v9053
  %v9055 = vpop.f32.mrb[0].mxu0
  %v9056 = vpop.f32.mrb[0].mxu0
  %v9057 = vadd.f32 0.0, %v9056
  %v9058 = vpop.f32.mrb[0].mxu0
  %9059 = vmatprep.mubr.bf16.mxu0 %v8729
  %9060 = vmatmul.mubr.bf16.gmra.mrb[0].mxu0 %v8728
  %v9061 = vpop.f32.mrb[0].mxu0
  %v9062 = vadd.f32 0.0, %v9061
  %v9063 = vpop.f32.mrb[0].mxu0
  %v9064 = vpop.f32.mrb[0].mxu0
  %v9065 = vadd.f32 0.0, %v9064
  %v9066 = vpop.f32.mrb[0].mxu0
  %9067 = vmatprep.mubr.bf16.mxu0 %v8732
  %9068 = vmatmul.mubr.bf16.gmra.mrb[0].mxu0 %v8731
  %v9069 = vpop.f32.mrb[0].mxu0
  %v9070 = vadd.f32 0.0, %v9069
  %v9071 = vpop.f32.mrb[0].mxu0
  %v9072 = vpop.f32.mrb[0].mxu0
  %v9073 = vadd.f32 0.0, %v9072
  %v9074 = vpop.f32.mrb[0].mxu0
  %9075 = vmatprep.mubr.bf16.mxu0 %v8735
  %9076 = vmatmul.mubr.bf16.gmra.mrb[0].mxu0 %v8734
  %v9077 = vpop.f32.mrb[0].mxu0
  %v9078 = vadd.f32 0.0, %v9077
  %v9079 = vpop.f32.mrb[0].mxu0
  %v9080 = vpop.f32.mrb[0].mxu0
  %v9081 = vadd.f32 0.0, %v9080
  %v9082 = vpop.f32.mrb[0].mxu0
  %9083 = vmatprep.mubr.bf16.mxu0 %v8738
  %9084 = vmatmul.mubr.bf16.gmra.mrb[0].mxu0 %v8737
  %v9085 = vpop.f32.mrb[0].mxu0
  %v9086 = vadd.f32 0.0, %v9085
  %v9087 = vpop.f32.mrb[0].mxu0
  %v9088 = vpop.f32.mrb[0].mxu0
  %v9089 = vadd.f32 0.0, %v9088
  %v9090 = vpop.f32.mrb[0].mxu0
  %9091 = vmatprep.mubr.bf16.mxu0 %v8741
  %9092 = vmatmul.mubr.bf16.gmra.mrb[0].mxu0 %v8740
  %v9093 = vpop.f32.mrb[0].mxu0
  %v9094 = vadd.f32 0.0, %v9093
  %v9095 = vpop.f32.mrb[0].mxu0
  %v9096 = vpop.f32.mrb[0].mxu0
  %v9097 = vadd.f32 0.0, %v9096
  %v9098 = vpop.f32.mrb[0].mxu0
  %9099 = vmatprep.mubr.bf16.mxu0 %v8744
  %9100 = vmatmul.mubr.bf16.gmra.mrb[0].mxu0 %v8743
  %v9101 = vpop.f32.mrb[0].mxu0
  %v9102 = vadd.f32 0.0, %v9101
  %v9103 = vpop.f32.mrb[0].mxu0
  %v9104 = vpop.f32.mrb[0].mxu0
  %v9105 = vadd.f32 0.0, %v9104
  %v9106 = vpop.f32.mrb[0].mxu0
  %9107 = vmatprep.mubr.bf16.mxu0 %v8747
  %9108 = vmatmul.mubr.bf16.gmra.mrb[0].mxu0 %v8746
  %v9109 = vpop.f32.mrb[0].mxu0
  %v9110 = vadd.f32 0.0, %v9109
  %v9111 = vpop.f32.mrb[0].mxu0
  %v9112 = vpop.f32.mrb[0].mxu0
  %v9113 = vadd.f32 0.0, %v9112
  %v9114 = vpop.f32.mrb[0].mxu0
  %9115 = vmatprep.mubr.bf16.mxu0 %v8750
  %9116 = vmatmul.mubr.bf16.gmra.mrb[0].mxu0 %v8749
  %v9117 = vpop.f32.mrb[0].mxu0
  %v9118 = vadd.f32 0.0, %v9117
  %v9119 = vpop.f32.mrb[0].mxu0
  %v9120 = vpop.f32.mrb[0].mxu0
  %v9121 = vadd.f32 0.0, %v9120
  %v9122 = vpop.f32.mrb[0].mxu0
  %9123 = vmatprep.mubr.bf16.mxu0 %v8753
  %9124 = vmatmul.mubr.bf16.gmra.mrb[0].mxu0 %v8752
  %v9125 = vpop.f32.mrb[0].mxu0
  %v9126 = vadd.f32 0.0, %v9125
  %v9127 = vpop.f32.mrb[0].mxu0
  %v9128 = vpop.f32.mrb[0].mxu0
  %v9129 = vadd.f32 0.0, %v9128
  %v9130 = vpop.f32.mrb[0].mxu0
  %9131 = vmatprep.mubr.bf16.mxu0 %v8756
  %9132 = vmatmul.mubr.bf16.gmra.mrb[0].mxu0 %v8755
  %v9133 = vpop.f32.mrb[0].mxu0
  %v9134 = vadd.f32 0.0, %v9133
  %v9135 = vpop.f32.mrb[0].mxu0
  %v9136 = vpop.f32.mrb[0].mxu0
  %v9137 = vadd.f32 0.0, %v9136
  %v9138 = vpop.f32.mrb[0].mxu0
  %9139 = vmatprep.mubr.bf16.mxu0 %v8759
  %9140 = vmatmul.mubr.bf16.gmra.mrb[0].mxu0 %v8758
  %v9141 = vpop.f32.mrb[0].mxu0
  %v9142 = vadd.f32 0.0, %v9141
  %v9143 = vpop.f32.mrb[0].mxu0
  %v9144 = vpop.f32.mrb[0].mxu0
  %v9145 = vadd.f32 0.0, %v9144
  %v9146 = vpop.f32.mrb[0].mxu0
  %9147 = vmatprep.mubr.bf16.mxu0 %v8762
  %9148 = vmatmul.mubr.bf16.gmra.mrb[0].mxu0 %v8761
  %v9149 = vpop.f32.mrb[0].mxu0
  %v9150 = vadd.f32 0.0, %v9149
  %v9151 = vpop.f32.mrb[0].mxu0
  %v9152 = vpop.f32.mrb[0].mxu0
  %v9153 = vadd.f32 0.0, %v9152
  %v9154 = vpop.f32.mrb[0].mxu0
  %9155 = vmatprep.mubr.bf16.mxu0 %v8765
  %9156 = vmatmul.mubr.bf16.gmra.mrb[0].mxu0 %v8764
  %v9157 = vpop.f32.mrb[0].mxu0
  %v9158 = vadd.f32 0.0, %v9157
  %v9159 = vpop.f32.mrb[0].mxu0
  %v9160 = vpop.f32.mrb[0].mxu0
  %v9161 = vadd.f32 0.0, %v9160
  %v9162 = vpop.f32.mrb[0].mxu0
  %9163 = vmatprep.mubr.bf16.mxu0 %v8768
  %9164 = vmatmul.mubr.bf16.gmra.mrb[0].mxu0 %v8767
  %v9165 = vpop.f32.mrb[0].mxu0
  %v9166 = vadd.f32 0.0, %v9165
  %v9167 = vpop.f32.mrb[0].mxu0
  %v9168 = vpop.f32.mrb[0].mxu0
  %v9169 = vadd.f32 0.0, %v9168
  %v9170 = vpop.f32.mrb[0].mxu0
  %9171 = vmatprep.mubr.bf16.mxu0 %v8771
  %9172 = vmatmul.mubr.bf16.gmra.mrb[0].mxu0 %v8770
  %v9173 = vpop.f32.mrb[0].mxu0
  %v9174 = vadd.f32 0.0, %v9173
  %v9175 = vpop.f32.mrb[0].mxu0
  %v9176 = vpop.f32.mrb[0].mxu0
  %v9177 = vadd.f32 0.0, %v9176
  %v9178 = vpop.f32.mrb[0].mxu0
  %9179 = vmatprep.mubr.bf16.mxu0 %v8774
  %9180 = vmatmul.mubr.bf16.gmra.mrb[0].mxu0 %v8773
  %v9181 = vpop.f32.mrb[0].mxu0
  %v9182 = vadd.f32 0.0, %v9181
  %v9183 = vpop.f32.mrb[0].mxu0
  %v9184 = vpop.f32.mrb[0].mxu0
  %v9185 = vadd.f32 0.0, %v9184
  %v9186 = vpop.f32.mrb[0].mxu0
  %9187 = vmatprep.mubr.bf16.mxu0 %v8777
  %9188 = vmatmul.mubr.bf16.gmra.mrb[0].mxu0 %v8776
  %v9189 = vpop.f32.mrb[0].mxu0
  %v9190 = vadd.f32 0.0, %v9189
  %v9191 = vpop.f32.mrb[0].mxu0
  %v9192 = vpop.f32.mrb[0].mxu0
  %v9193 = vadd.f32 0.0, %v9192
  %v9194 = vpop.f32.mrb[0].mxu0
  %9195 = vmatprep.mubr.bf16.mxu0 %v8780
  %9196 = vmatmul.mubr.bf16.gmra.mrb[0].mxu0 %v8779
  %v9197 = vpop.f32.mrb[0].mxu0
  %v9198 = vadd.f32 0.0, %v9197
  %v9199 = vpop.f32.mrb[0].mxu0
  %v9200 = vpop.f32.mrb[0].mxu0
  %v9201 = vadd.f32 0.0, %v9200
  %v9202 = vpop.f32.mrb[0].mxu0
  %9203 = vmatprep.mubr.bf16.mxu0 %v8783
  %9204 = vmatmul.mubr.bf16.gmra.mrb[0].mxu0 %v8782
  %v9205 = vpop.f32.mrb[0].mxu0
  %v9206 = vadd.f32 0.0, %v9205
  %v9207 = vpop.f32.mrb[0].mxu0
  %v9208 = vpop.f32.mrb[0].mxu0
  %v9209 = vadd.f32 0.0, %v9208
  %v9210 = vpop.f32.mrb[0].mxu0
  %9211 = vmatprep.mubr.bf16.mxu0 %v8786
  %9212 = vmatmul.mubr.bf16.gmra.mrb[0].mxu0 %v8785
  %v9213 = vpop.f32.mrb[0].mxu0
  %v9214 = vadd.f32 0.0, %v9213
  %v9215 = vpop.f32.mrb[0].mxu0
  %v9216 = vpop.f32.mrb[0].mxu0
  %v9217 = vadd.f32 0.0, %v9216
  %v9218 = vpop.f32.mrb[0].mxu0
  %9219 = vmatprep.mubr.bf16.mxu0 %v8789
  %9220 = vmatmul.mubr.bf16.gmra.mrb[0].mxu0 %v8788
  %v9221 = vpop.f32.mrb[0].mxu0
  %v9222 = vadd.f32 0.0, %v9221
  %v9223 = vpop.f32.mrb[0].mxu0
  %v9224 = vpop.f32.mrb[0].mxu0
  %v9225 = vadd.f32 0.0, %v9224
  %v9226 = vpop.f32.mrb[0].mxu0
  %9227 = vmatprep.mubr.bf16.mxu0 %v8792
  %9228 = vmatmul.mubr.bf16.gmra.mrb[0].mxu0 %v8791
  %v9229 = vpop.f32.mrb[0].mxu0
  %v9230 = vadd.f32 0.0, %v9229
  %v9231 = vpop.f32.mrb[0].mxu0
  %v9232 = vpop.f32.mrb[0].mxu0
  %v9233 = vadd.f32 0.0, %v9232
  %v9234 = vpop.f32.mrb[0].mxu0
  %9235 = vmatprep.mubr.bf16.mxu0 %v8795
  %9236 = vmatmul.mubr.bf16.gmra.mrb[0].mxu0 %v8794
  %v9237 = vpop.f32.mrb[0].mxu0
  %v9238 = vadd.f32 0.0, %v9237
  %v9239 = vpop.f32.mrb[0].mxu0
  %v9240 = vpop.f32.mrb[0].mxu0
  %v9241 = vadd.f32 0.0, %v9240
  %v9242 = vpop.f32.mrb[0].mxu0
  %9243 = vmatprep.mubr.bf16.mxu0 %v8798
  %9244 = vmatmul.mubr.bf16.gmra.mrb[0].mxu0 %v8797
  %v9245 = vpop.f32.mrb[0].mxu0
  %v9246 = vadd.f32 0.0, %v9245
  %v9247 = vpop.f32.mrb[0].mxu0
  %v9248 = vpop.f32.mrb[0].mxu0
  %v9249 = vadd.f32 0.0, %v9248
  %v9250 = vpop.f32.mrb[0].mxu0
  %9251 = vmatprep.mubr.bf16.mxu0 %v8801
  %9252 = vmatmul.mubr.bf16.gmra.mrb[0].mxu0 %v8800
  %v9253 = vpop.f32.mrb[0].mxu0
  %v9254 = vadd.f32 0.0, %v9253
  %v9255 = vpop.f32.mrb[0].mxu0
  %v9256 = vpop.f32.mrb[0].mxu0
  %v9257 = vadd.f32 0.0, %v9256
  %v9258 = vpop.f32.mrb[0].mxu0
  %9259 = vmatprep.mubr.bf16.mxu0 %v8804
  %9260 = vmatmul.mubr.bf16.gmra.mrb[0].mxu0 %v8803
  %v9261 = vpop.f32.mrb[0].mxu0
  %v9262 = vadd.f32 0.0, %v9261
  %v9263 = vpop.f32.mrb[0].mxu0
  %v9264 = vpop.f32.mrb[0].mxu0
  %v9265 = vadd.f32 0.0, %v9264
  %v9266 = vpop.f32.mrb[0].mxu0
  %9267 = vmatprep.mubr.bf16.mxu0 %v8807
  %9268 = vmatmul.mubr.bf16.gmra.mrb[0].mxu0 %v8806
  %v9269 = vpop.f32.mrb[0].mxu0
  %v9270 = vadd.f32 0.0, %v9269
  %v9271 = vpop.f32.mrb[0].mxu0
  %v9272 = vpop.f32.mrb[0].mxu0
  %v9273 = vadd.f32 0.0, %v9272
  %v9274 = vpop.f32.mrb[0].mxu0
  %9275 = vmatprep.mubr.bf16.mxu0 %v8810
  %9276 = vmatmul.mubr.bf16.gmra.mrb[0].mxu0 %v8809
  %v9277 = vpop.f32.mrb[0].mxu0
  %v9278 = vadd.f32 0.0, %v9277
  %v9279 = vpop.f32.mrb[0].mxu0
  %v9280 = vpop.f32.mrb[0].mxu0
  %v9281 = vadd.f32 0.0, %v9280
  %v9282 = vpop.f32.mrb[0].mxu0
  %9283 = vmatprep.mubr.bf16.mxu0 %v8813
  %9284 = vmatmul.mubr.bf16.gmra.mrb[0].mxu0 %v8812
  %v9285 = vpop.f32.mrb[0].mxu0
  %v9286 = vadd.f32 0.0, %v9285
  %v9287 = vpop.f32.mrb[0].mxu0
  %v9288 = vpop.f32.mrb[0].mxu0
  %v9289 = vadd.f32 0.0, %v9288
  %v9290 = vpop.f32.mrb[0].mxu0
  %9291 = vmatprep.mubr.bf16.mxu0 %v8816
  %9292 = vmatmul.mubr.bf16.gmra.mrb[0].mxu0 %v8815
  %v9293 = vpop.f32.mrb[0].mxu0
  %v9294 = vadd.f32 0.0, %v9293
  %v9295 = vpop.f32.mrb[0].mxu0
  %v9296 = vpop.f32.mrb[0].mxu0
  %v9297 = vadd.f32 0.0, %v9296
  %v9298 = vpop.f32.mrb[0].mxu0
  %9299 = vdwg.mxu0
  %9300 = vmatprep.subr.bf16.mxu0 0
  %9301 = vmatpush1.bf16.msra.mxu0 %v8979
  %9302 = vmatprep.subr.bf16.mxu0 0
  %9303 = vmatpush1.bf16.msra.mxu0 %v8980
  %9304 = vmatprep.subr.bf16.mxu0 0
  %9305 = vmatpush1.bf16.msra.mxu0 %v8981
  %9306 = vmatprep.subr.bf16.mxu0 0
  %9307 = vmatpush1.bf16.msra.mxu0 %v8982
  %9308 = vmatprep.subr.bf16.mxu0 0
  %9309 = vmatpush1.bf16.msra.mxu0 %v8983
  %9310 = vmatprep.subr.bf16.mxu0 0
  %9311 = vmatpush1.bf16.msra.mxu0 %v8984
  %9312 = vmatprep.subr.bf16.mxu0 0
  %9313 = vmatpush1.bf16.msra.mxu0 %v8985
  %9314 = vmatprep.subr.bf16.mxu0 0
  %9315 = vmatpush1.bf16.msra.mxu0 %v8986
  %9316 = vmatprep.subr.bf16.mxu0 0
  %9317 = vmatpush1.bf16.msra.mxu0 0
  %9318 = vmatprep.subr.bf16.mxu0 0
  %9319 = vmatpush1.bf16.msra.mxu0 0
  %9320 = vmatprep.subr.bf16.mxu0 0
  %9321 = vmatpush1.bf16.msra.mxu0 0
  %9322 = vmatprep.subr.bf16.mxu0 0
  %9323 = vmatpush1.bf16.msra.mxu0 0
  %9324 = vmatprep.subr.bf16.mxu0 0
  %9325 = vmatpush1.bf16.msra.mxu0 0
  %9326 = vmatprep.subr.bf16.mxu0 0
  %9327 = vmatpush1.bf16.msra.mxu0 0
  %9328 = vmatprep.subr.bf16.mxu0 0
  %9329 = vmatpush1.bf16.msra.mxu0 0
  %9330 = vmatprep.subr.bf16.mxu0 0
  %9331 = vmatpush1.bf16.msra.mxu0 0
  %9332 = vmatprep.mubr.bf16.mxu0 0
  %9333 = vmatmul.mubr.bf16.gmra.mrb[0].mxu0 %v8724
  %v9334 = vpop.f32.mrb[0].mxu0
  %v9335 = vadd.f32 %v9046, %v9334
  %v9336 = vpop.f32.mrb[0].mxu0
  %v9337 = vpop.f32.mrb[0].mxu0
  %v9338 = vadd.f32 %v9049, %v9337
  %v9339 = vpop.f32.mrb[0].mxu0
  %9340 = vmatprep.mubr.bf16.mxu0 0
  %9341 = vmatmul.mubr.bf16.gmra.mrb[0].mxu0 %v8727
  %v9342 = vpop.f32.mrb[0].mxu0
  %v9343 = vadd.f32 %v9054, %v9342
  %v9344 = vpop.f32.mrb[0].mxu0
  %v9345 = vpop.f32.mrb[0].mxu0
  %v9346 = vadd.f32 %v9057, %v9345
  %v9347 = vpop.f32.mrb[0].mxu0
  %9348 = vmatprep.mubr.bf16.mxu0 0
  %9349 = vmatmul.mubr.bf16.gmra.mrb[0].mxu0 %v8730
  %v9350 = vpop.f32.mrb[0].mxu0
  %v9351 = vadd.f32 %v9062, %v9350
  %v9352 = vpop.f32.mrb[0].mxu0
  %v9353 = vpop.f32.mrb[0].mxu0
  %v9354 = vadd.f32 %v9065, %v9353
  %v9355 = vpop.f32.mrb[0].mxu0
  %9356 = vmatprep.mubr.bf16.mxu0 0
  %9357 = vmatmul.mubr.bf16.gmra.mrb[0].mxu0 %v8733
  %v9358 = vpop.f32.mrb[0].mxu0
  %v9359 = vadd.f32 %v9070, %v9358
  %v9360 = vpop.f32.mrb[0].mxu0
  %v9361 = vpop.f32.mrb[0].mxu0
  %v9362 = vadd.f32 %v9073, %v9361
  %v9363 = vpop.f32.mrb[0].mxu0
  %9364 = vmatprep.mubr.bf16.mxu0 0
  %9365 = vmatmul.mubr.bf16.gmra.mrb[0].mxu0 %v8736
  %v9366 = vpop.f32.mrb[0].mxu0
  %v9367 = vadd.f32 %v9078, %v9366
  %v9368 = vpop.f32.mrb[0].mxu0
  %v9369 = vpop.f32.mrb[0].mxu0
  %v9370 = vadd.f32 %v9081, %v9369
  %v9371 = vpop.f32.mrb[0].mxu0
  %9372 = vmatprep.mubr.bf16.mxu0 0
  %9373 = vmatmul.mubr.bf16.gmra.mrb[0].mxu0 %v8739
  %v9374 = vpop.f32.mrb[0].mxu0
  %v9375 = vadd.f32 %v9086, %v9374
  %v9376 = vpop.f32.mrb[0].mxu0
  %v9377 = vpop.f32.mrb[0].mxu0
  %v9378 = vadd.f32 %v9089, %v9377
  %v9379 = vpop.f32.mrb[0].mxu0
  %9380 = vmatprep.mubr.bf16.mxu0 0
  %9381 = vmatmul.mubr.bf16.gmra.mrb[0].mxu0 %v8742
  %v9382 = vpop.f32.mrb[0].mxu0
  %v9383 = vadd.f32 %v9094, %v9382
  %v9384 = vpop.f32.mrb[0].mxu0
  %v9385 = vpop.f32.mrb[0].mxu0
  %v9386 = vadd.f32 %v9097, %v9385
  %v9387 = vpop.f32.mrb[0].mxu0
  %9388 = vmatprep.mubr.bf16.mxu0 0
  %9389 = vmatmul.mubr.bf16.gmra.mrb[0].mxu0 %v8745
  %v9390 = vpop.f32.mrb[0].mxu0
  %v9391 = vadd.f32 %v9102, %v9390
  %v9392 = vpop.f32.mrb[0].mxu0
  %v9393 = vpop.f32.mrb[0].mxu0
  %v9394 = vadd.f32 %v9105, %v9393
  %v9395 = vpop.f32.mrb[0].mxu0
  %9396 = vmatprep.mubr.bf16.mxu0 0
  %9397 = vmatmul.mubr.bf16.gmra.mrb[0].mxu0 %v8748
  %v9398 = vpop.f32.mrb[0].mxu0
  %v9399 = vadd.f32 %v9110, %v9398
  %v9400 = vpop.f32.mrb[0].mxu0
  %v9401 = vpop.f32.mrb[0].mxu0
  %v9402 = vadd.f32 %v9113, %v9401
  %v9403 = vpop.f32.mrb[0].mxu0
  %9404 = vmatprep.mubr.bf16.mxu0 0
  %9405 = vmatmul.mubr.bf16.gmra.mrb[0].mxu0 %v8751
  %v9406 = vpop.f32.mrb[0].mxu0
  %v9407 = vadd.f32 %v9118, %v9406
  %v9408 = vpop.f32.mrb[0].mxu0
  %v9409 = vpop.f32.mrb[0].mxu0
  %v9410 = vadd.f32 %v9121, %v9409
  %v9411 = vpop.f32.mrb[0].mxu0
  %9412 = vmatprep.mubr.bf16.mxu0 0
  %9413 = vmatmul.mubr.bf16.gmra.mrb[0].mxu0 %v8754
  %v9414 = vpop.f32.mrb[0].mxu0
  %v9415 = vadd.f32 %v9126, %v9414
  %v9416 = vpop.f32.mrb[0].mxu0
  %v9417 = vpop.f32.mrb[0].mxu0
  %v9418 = vadd.f32 %v9129, %v9417
  %v9419 = vpop.f32.mrb[0].mxu0
  %9420 = vmatprep.mubr.bf16.mxu0 0
  %9421 = vmatmul.mubr.bf16.gmra.mrb[0].mxu0 %v8757
  %v9422 = vpop.f32.mrb[0].mxu0
  %v9423 = vadd.f32 %v9134, %v9422
  %v9424 = vpop.f32.mrb[0].mxu0
  %v9425 = vpop.f32.mrb[0].mxu0
  %v9426 = vadd.f32 %v9137, %v9425
  %v9427 = vpop.f32.mrb[0].mxu0
  %9428 = vmatprep.mubr.bf16.mxu0 0
  %9429 = vmatmul.mubr.bf16.gmra.mrb[0].mxu0 %v8760
  %v9430 = vpop.f32.mrb[0].mxu0
  %v9431 = vadd.f32 %v9142, %v9430
  %v9432 = vpop.f32.mrb[0].mxu0
  %v9433 = vpop.f32.mrb[0].mxu0
  %v9434 = vadd.f32 %v9145, %v9433
  %v9435 = vpop.f32.mrb[0].mxu0
  %9436 = vmatprep.mubr.bf16.mxu0 0
  %9437 = vmatmul.mubr.bf16.gmra.mrb[0].mxu0 %v8763
  %v9438 = vpop.f32.mrb[0].mxu0
  %v9439 = vadd.f32 %v9150, %v9438
  %v9440 = vpop.f32.mrb[0].mxu0
  %v9441 = vpop.f32.mrb[0].mxu0
  %v9442 = vadd.f32 %v9153, %v9441
  %v9443 = vpop.f32.mrb[0].mxu0
  %9444 = vmatprep.mubr.bf16.mxu0 0
  %9445 = vmatmul.mubr.bf16.gmra.mrb[0].mxu0 %v8766
  %v9446 = vpop.f32.mrb[0].mxu0
  %v9447 = vadd.f32 %v9158, %v9446
  %v9448 = vpop.f32.mrb[0].mxu0
  %v9449 = vpop.f32.mrb[0].mxu0
  %v9450 = vadd.f32 %v9161, %v9449
  %v9451 = vpop.f32.mrb[0].mxu0
  %9452 = vmatprep.mubr.bf16.mxu0 0
  %9453 = vmatmul.mubr.bf16.gmra.mrb[0].mxu0 %v8769
  %v9454 = vpop.f32.mrb[0].mxu0
  %v9455 = vadd.f32 %v9166, %v9454
  %v9456 = vpop.f32.mrb[0].mxu0
  %v9457 = vpop.f32.mrb[0].mxu0
  %v9458 = vadd.f32 %v9169, %v9457
  %v9459 = vpop.f32.mrb[0].mxu0
  %9460 = vmatprep.mubr.bf16.mxu0 0
  %9461 = vmatmul.mubr.bf16.gmra.mrb[0].mxu0 %v8772
  %v9462 = vpop.f32.mrb[0].mxu0
  %v9463 = vadd.f32 %v9174, %v9462
  %v9464 = vpop.f32.mrb[0].mxu0
  %v9465 = vpop.f32.mrb[0].mxu0
  %v9466 = vadd.f32 %v9177, %v9465
  %v9467 = vpop.f32.mrb[0].mxu0
  %9468 = vmatprep.mubr.bf16.mxu0 0
  %9469 = vmatmul.mubr.bf16.gmra.mrb[0].mxu0 %v8775
  %v9470 = vpop.f32.mrb[0].mxu0
  %v9471 = vadd.f32 %v9182, %v9470
  %v9472 = vpop.f32.mrb[0].mxu0
  %v9473 = vpop.f32.mrb[0].mxu0
  %v9474 = vadd.f32 %v9185, %v9473
  %v9475 = vpop.f32.mrb[0].mxu0
  %9476 = vmatprep.mubr.bf16.mxu0 0
  %9477 = vmatmul.mubr.bf16.gmra.mrb[0].mxu0 %v8778
  %v9478 = vpop.f32.mrb[0].mxu0
  %v9479 = vadd.f32 %v9190, %v9478
  %v9480 = vpop.f32.mrb[0].mxu0
  %v9481 = vpop.f32.mrb[0].mxu0
  %v9482 = vadd.f32 %v9193, %v9481
  %v9483 = vpop.f32.mrb[0].mxu0
  %9484 = vmatprep.mubr.bf16.mxu0 0
  %9485 = vmatmul.mubr.bf16.gmra.mrb[0].mxu0 %v8781
  %v9486 = vpop.f32.mrb[0].mxu0
  %v9487 = vadd.f32 %v9198, %v9486
  %v9488 = vpop.f32.mrb[0].mxu0
  %v9489 = vpop.f32.mrb[0].mxu0
  %v9490 = vadd.f32 %v9201, %v9489
  %v9491 = vpop.f32.mrb[0].mxu0
  %9492 = vmatprep.mubr.bf16.mxu0 0
  %9493 = vmatmul.mubr.bf16.gmra.mrb[0].mxu0 %v8784
  %v9494 = vpop.f32.mrb[0].mxu0
  %v9495 = vadd.f32 %v9206, %v9494
  %v9496 = vpop.f32.mrb[0].mxu0
  %v9497 = vpop.f32.mrb[0].mxu0
  %v9498 = vadd.f32 %v9209, %v9497
  %v9499 = vpop.f32.mrb[0].mxu0
  %9500 = vmatprep.mubr.bf16.mxu0 0
  %9501 = vmatmul.mubr.bf16.gmra.mrb[0].mxu0 %v8787
  %v9502 = vpop.f32.mrb[0].mxu0
  %v9503 = vadd.f32 %v9214, %v9502
  %v9504 = vpop.f32.mrb[0].mxu0
  %v9505 = vpop.f32.mrb[0].mxu0
  %v9506 = vadd.f32 %v9217, %v9505
  %v9507 = vpop.f32.mrb[0].mxu0
  %9508 = vmatprep.mubr.bf16.mxu0 0
  %9509 = vmatmul.mubr.bf16.gmra.mrb[0].mxu0 %v8790
  %v9510 = vpop.f32.mrb[0].mxu0
  %v9511 = vadd.f32 %v9222, %v9510
  %v9512 = vpop.f32.mrb[0].mxu0
  %v9513 = vpop.f32.mrb[0].mxu0
  %v9514 = vadd.f32 %v9225, %v9513
  %v9515 = vpop.f32.mrb[0].mxu0
  %9516 = vmatprep.mubr.bf16.mxu0 0
  %9517 = vmatmul.mubr.bf16.gmra.mrb[0].mxu0 %v8793
  %v9518 = vpop.f32.mrb[0].mxu0
  %v9519 = vadd.f32 %v9230, %v9518
  %v9520 = vpop.f32.mrb[0].mxu0
  %v9521 = vpop.f32.mrb[0].mxu0
  %v9522 = vadd.f32 %v9233, %v9521
  %v9523 = vpop.f32.mrb[0].mxu0
  %9524 = vmatprep.mubr.bf16.mxu0 0
  %9525 = vmatmul.mubr.bf16.gmra.mrb[0].mxu0 %v8796
  %v9526 = vpop.f32.mrb[0].mxu0
  %v9527 = vadd.f32 %v9238, %v9526
  %v9528 = vpop.f32.mrb[0].mxu0
  %v9529 = vpop.f32.mrb[0].mxu0
  %v9530 = vadd.f32 %v9241, %v9529
  %v9531 = vpop.f32.mrb[0].mxu0
  %9532 = vmatprep.mubr.bf16.mxu0 0
  %9533 = vmatmul.mubr.bf16.gmra.mrb[0].mxu0 %v8799
  %v9534 = vpop.f32.mrb[0].mxu0
  %v9535 = vadd.f32 %v9246, %v9534
  %v9536 = vpop.f32.mrb[0].mxu0
  %v9537 = vpop.f32.mrb[0].mxu0
  %v9538 = vadd.f32 %v9249, %v9537
  %v9539 = vpop.f32.mrb[0].mxu0
  %9540 = vmatprep.mubr.bf16.mxu0 0
  %9541 = vmatmul.mubr.bf16.gmra.mrb[0].mxu0 %v8802
  %v9542 = vpop.f32.mrb[0].mxu0
  %v9543 = vadd.f32 %v9254, %v9542
  %v9544 = vpop.f32.mrb[0].mxu0
  %v9545 = vpop.f32.mrb[0].mxu0
  %v9546 = vadd.f32 %v9257, %v9545
  %v9547 = vpop.f32.mrb[0].mxu0
  %9548 = vmatprep.mubr.bf16.mxu0 0
  %9549 = vmatmul.mubr.bf16.gmra.mrb[0].mxu0 %v8805
  %v9550 = vpop.f32.mrb[0].mxu0
  %v9551 = vadd.f32 %v9262, %v9550
  %v9552 = vpop.f32.mrb[0].mxu0
  %v9553 = vpop.f32.mrb[0].mxu0
  %v9554 = vadd.f32 %v9265, %v9553
  %v9555 = vpop.f32.mrb[0].mxu0
  %9556 = vmatprep.mubr.bf16.mxu0 0
  %9557 = vmatmul.mubr.bf16.gmra.mrb[0].mxu0 %v8808
  %v9558 = vpop.f32.mrb[0].mxu0
  %v9559 = vadd.f32 %v9270, %v9558
  %v9560 = vpop.f32.mrb[0].mxu0
  %v9561 = vpop.f32.mrb[0].mxu0
  %v9562 = vadd.f32 %v9273, %v9561
  %v9563 = vpop.f32.mrb[0].mxu0
  %9564 = vmatprep.mubr.bf16.mxu0 0
  %9565 = vmatmul.mubr.bf16.gmra.mrb[0].mxu0 %v8811
  %v9566 = vpop.f32.mrb[0].mxu0
  %v9567 = vadd.f32 %v9278, %v9566
  %v9568 = vpop.f32.mrb[0].mxu0
  %v9569 = vpop.f32.mrb[0].mxu0
  %v9570 = vadd.f32 %v9281, %v9569
  %v9571 = vpop.f32.mrb[0].mxu0
  %9572 = vmatprep.mubr.bf16.mxu0 0
  %9573 = vmatmul.mubr.bf16.gmra.mrb[0].mxu0 %v8814
  %v9574 = vpop.f32.mrb[0].mxu0
  %v9575 = vadd.f32 %v9286, %v9574
  %v9576 = vpop.f32.mrb[0].mxu0
  %v9577 = vpop.f32.mrb[0].mxu0
  %v9578 = vadd.f32 %v9289, %v9577
  %v9579 = vpop.f32.mrb[0].mxu0
  %9580 = vmatprep.mubr.bf16.mxu0 0
  %9581 = vmatmul.mubr.bf16.gmra.mrb[0].mxu0 %v8817
  %v9582 = vpop.f32.mrb[0].mxu0
  %v9583 = vadd.f32 %v9294, %v9582
  %v9584 = vpop.f32.mrb[0].mxu0
  %v9585 = vpop.f32.mrb[0].mxu0
  %v9586 = vadd.f32 %v9297, %v9585
  %v9587 = vpop.f32.mrb[0].mxu0
  %9588 = vdwg.mxu0
  %v9589 = vadd.f32 %v8658, %v9335
  %v9590 = vadd.f32 %v8659, %v9338
  %v9591 = vadd.f32 %v8660, %v9343
  %v9592 = vadd.f32 %v8661, %v9346
  %v9593 = vadd.f32 %v8662, %v9351
  %v9594 = vadd.f32 %v8663, %v9354
  %v9595 = vadd.f32 %v8664, %v9359
  %v9596 = vadd.f32 %v8665, %v9362
  %v9597 = vadd.f32 %v8666, %v9367
  %v9598 = vadd.f32 %v8667, %v9370
  %v9599 = vadd.f32 %v8668, %v9375
  %v9600 = vadd.f32 %v8669, %v9378
  %v9601 = vadd.f32 %v8670, %v9383
  %v9602 = vadd.f32 %v8671, %v9386
  %v9603 = vadd.f32 %v8672, %v9391
  %v9604 = vadd.f32 %v8673, %v9394
  %v9605 = vadd.f32 %v8674, %v9399
  %v9606 = vadd.f32 %v8675, %v9402
  %v9607 = vadd.f32 %v8676, %v9407
  %v9608 = vadd.f32 %v8677, %v9410
  %v9609 = vadd.f32 %v8678, %v9415
  %v9610 = vadd.f32 %v8679, %v9418
  %v9611 = vadd.f32 %v8680, %v9423
  %v9612 = vadd.f32 %v8681, %v9426
  %v9613 = vadd.f32 %v8682, %v9431
  %v9614 = vadd.f32 %v8683, %v9434
  %v9615 = vadd.f32 %v8684, %v9439
  %v9616 = vadd.f32 %v8685, %v9442
  %v9617 = vadd.f32 %v8686, %v9447
  %v9618 = vadd.f32 %v8687, %v9450
  %v9619 = vadd.f32 %v8688, %v9455
  %v9620 = vadd.f32 %v8689, %v9458
  %v9621 = vadd.f32 %v8690, %v9463
  %v9622 = vadd.f32 %v8691, %v9466
  %v9623 = vadd.f32 %v8692, %v9471
  %v9624 = vadd.f32 %v8693, %v9474
  %v9625 = vadd.f32 %v8694, %v9479
  %v9626 = vadd.f32 %v8695, %v9482
  %v9627 = vadd.f32 %v8696, %v9487
  %v9628 = vadd.f32 %v8697, %v9490
  %v9629 = vadd.f32 %v8698, %v9495
  %v9630 = vadd.f32 %v8699, %v9498
  %v9631 = vadd.f32 %v8700, %v9503
  %v9632 = vadd.f32 %v8701, %v9506
  %v9633 = vadd.f32 %v8702, %v9511
  %v9634 = vadd.f32 %v8703, %v9514
  %v9635 = vadd.f32 %v8704, %v9519
  %v9636 = vadd.f32 %v8705, %v9522
  %v9637 = vadd.f32 %v8706, %v9527
  %v9638 = vadd.f32 %v8707, %v9530
  %v9639 = vadd.f32 %v8708, %v9535
  %v9640 = vadd.f32 %v8709, %v9538
  %v9641 = vadd.f32 %v8710, %v9543
  %v9642 = vadd.f32 %v8711, %v9546
  %v9643 = vadd.f32 %v8712, %v9551
  %v9644 = vadd.f32 %v8713, %v9554
  %v9645 = vadd.f32 %v8714, %v9559
  %v9646 = vadd.f32 %v8715, %v9562
  %v9647 = vadd.f32 %v8716, %v9567
  %v9648 = vadd.f32 %v8717, %v9570
  %v9649 = vadd.f32 %v8718, %v9575
  %v9650 = vadd.f32 %v8719, %v9578
  %v9651 = vadd.f32 %v8720, %v9583
  %v9652 = vadd.f32 %v8721, %v9586
  %9653 = vst.msk [vmem:[#allocation3] sm:$0xff] %vm2606, %v9589
  %9654 = vst.msk [vmem:[#allocation3 + $0x8] sm:$0xff] %vm2606, %v9590
  %9655 = vst.msk [vmem:[#allocation3 + $0x10] sm:$0xff] %vm2606, %v9591
  %9656 = vst.msk [vmem:[#allocation3 + $0x18] sm:$0xff] %vm2606, %v9592
  %9657 = vst.msk [vmem:[#allocation3 + $0x20] sm:$0xff] %vm2606, %v9593
  %9658 = vst.msk [vmem:[#allocation3 + $0x28] sm:$0xff] %vm2606, %v9594
  %9659 = vst.msk [vmem:[#allocation3 + $0x30] sm:$0xff] %vm2606, %v9595
  %9660 = vst.msk [vmem:[#allocation3 + $0x38] sm:$0xff] %vm2606, %v9596
  %9661 = vst.msk [vmem:[#allocation3 + $0x40] sm:$0xff] %vm2606, %v9597
  %9662 = vst.msk [vmem:[#allocation3 + $0x48] sm:$0xff] %vm2606, %v9598
  %9663 = vst.msk [vmem:[#allocation3 + $0x50] sm:$0xff] %vm2606, %v9599
  %9664 = vst.msk [vmem:[#allocation3 + $0x58] sm:$0xff] %vm2606, %v9600
  %9665 = vst.msk [vmem:[#allocation3 + $0x60] sm:$0xff] %vm2606, %v9601
  %9666 = vst.msk [vmem:[#allocation3 + $0x68] sm:$0xff] %vm2606, %v9602
  %9667 = vst.msk [vmem:[#allocation3 + $0x70] sm:$0xff] %vm2606, %v9603
  %9668 = vst.msk [vmem:[#allocation3 + $0x78] sm:$0xff] %vm2606, %v9604
  %9669 = vst.msk [vmem:[#allocation3 + $0x80] sm:$0xff] %vm2606, %v9605
  %9670 = vst.msk [vmem:[#allocation3 + $0x88] sm:$0xff] %vm2606, %v9606
  %9671 = vst.msk [vmem:[#allocation3 + $0x90] sm:$0xff] %vm2606, %v9607
  %9672 = vst.msk [vmem:[#allocation3 + $0x98] sm:$0xff] %vm2606, %v9608
  %9673 = vst.msk [vmem:[#allocation3 + $0xa0] sm:$0xff] %vm2606, %v9609
  %9674 = vst.msk [vmem:[#allocation3 + $0xa8] sm:$0xff] %vm2606, %v9610
  %9675 = vst.msk [vmem:[#allocation3 + $0xb0] sm:$0xff] %vm2606, %v9611
  %9676 = vst.msk [vmem:[#allocation3 + $0xb8] sm:$0xff] %vm2606, %v9612
  %9677 = vst.msk [vmem:[#allocation3 + $0xc0] sm:$0xff] %vm2606, %v9613
  %9678 = vst.msk [vmem:[#allocation3 + $0xc8] sm:$0xff] %vm2606, %v9614
  %9679 = vst.msk [vmem:[#allocation3 + $0xd0] sm:$0xff] %vm2606, %v9615
  %9680 = vst.msk [vmem:[#allocation3 + $0xd8] sm:$0xff] %vm2606, %v9616
  %9681 = vst.msk [vmem:[#allocation3 + $0xe0] sm:$0xff] %vm2606, %v9617
  %9682 = vst.msk [vmem:[#allocation3 + $0xe8] sm:$0xff] %vm2606, %v9618
  %9683 = vst.msk [vmem:[#allocation3 + $0xf0] sm:$0xff] %vm2606, %v9619
  %9684 = vst.msk [vmem:[#allocation3 + $0xf8] sm:$0xff] %vm2606, %v9620
  %9685 = vst.msk [vmem:[#allocation3 + $0x100] sm:$0xff] %vm2606, %v9621
  %9686 = vst.msk [vmem:[#allocation3 + $0x108] sm:$0xff] %vm2606, %v9622
  %9687 = vst.msk [vmem:[#allocation3 + $0x110] sm:$0xff] %vm2606, %v9623
  %9688 = vst.msk [vmem:[#allocation3 + $0x118] sm:$0xff] %vm2606, %v9624
  %9689 = vst.msk [vmem:[#allocation3 + $0x120] sm:$0xff] %vm2606, %v9625
  %9690 = vst.msk [vmem:[#allocation3 + $0x128] sm:$0xff] %vm2606, %v9626
  %9691 = vst.msk [vmem:[#allocation3 + $0x130] sm:$0xff] %vm2606, %v9627
  %9692 = vst.msk [vmem:[#allocation3 + $0x138] sm:$0xff] %vm2606, %v9628
  %9693 = vst.msk [vmem:[#allocation3 + $0x140] sm:$0xff] %vm2606, %v9629
  %9694 = vst.msk [vmem:[#allocation3 + $0x148] sm:$0xff] %vm2606, %v9630
  %9695 = vst.msk [vmem:[#allocation3 + $0x150] sm:$0xff] %vm2606, %v9631
  %9696 = vst.msk [vmem:[#allocation3 + $0x158] sm:$0xff] %vm2606, %v9632
  %9697 = vst.msk [vmem:[#allocation3 + $0x160] sm:$0xff] %vm2606, %v9633
  %9698 = vst.msk [vmem:[#allocation3 + $0x168] sm:$0xff] %vm2606, %v9634
  %9699 = vst.msk [vmem:[#allocation3 + $0x170] sm:$0xff] %vm2606, %v9635
  %9700 = vst.msk [vmem:[#allocation3 + $0x178] sm:$0xff] %vm2606, %v9636
  %9701 = vst.msk [vmem:[#allocation3 + $0x180] sm:$0xff] %vm2606, %v9637
  %9702 = vst.msk [vmem:[#allocation3 + $0x188] sm:$0xff] %vm2606, %v9638
  %9703 = vst.msk [vmem:[#allocation3 + $0x190] sm:$0xff] %vm2606, %v9639
  %9704 = vst.msk [vmem:[#allocation3 + $0x198] sm:$0xff] %vm2606, %v9640
  %9705 = vst.msk [vmem:[#allocation3 + $0x1a0] sm:$0xff] %vm2606, %v9641
  %9706 = vst.msk [vmem:[#allocation3 + $0x1a8] sm:$0xff] %vm2606, %v9642
  %9707 = vst.msk [vmem:[#allocation3 + $0x1b0] sm:$0xff] %vm2606, %v9643
  %9708 = vst.msk [vmem:[#allocation3 + $0x1b8] sm:$0xff] %vm2606, %v9644
  %9709 = vst.msk [vmem:[#allocation3 + $0x1c0] sm:$0xff] %vm2606, %v9645
  %9710 = vst.msk [vmem:[#allocation3 + $0x1c8] sm:$0xff] %vm2606, %v9646
  %9711 = vst.msk [vmem:[#allocation3 + $0x1d0] sm:$0xff] %vm2606, %v9647
  %9712 = vst.msk [vmem:[#allocation3 + $0x1d8] sm:$0xff] %vm2606, %v9648
  %9713 = vst.msk [vmem:[#allocation3 + $0x1e0] sm:$0xff] %vm2606, %v9649
  %9714 = vst.msk [vmem:[#allocation3 + $0x1e8] sm:$0xff] %vm2606, %v9650
  %9715 = vst.msk [vmem:[#allocation3 + $0x1f0] sm:$0xff] %vm2606, %v9651
  %9716 = vst.msk [vmem:[#allocation3 + $0x1f8] sm:$0xff] %vm2606, %v9652
  %v9717 = vld [vmem:[#allocation3] sm:$0xff]
  %v9718 = vld [vmem:[#allocation3 + $0x8] sm:$0xff]
  %v9719 = vld [vmem:[#allocation3 + $0x10] sm:$0xff]
  %v9720 = vld [vmem:[#allocation3 + $0x18] sm:$0xff]
  %v9721 = vld [vmem:[#allocation3 + $0x20] sm:$0xff]
  %v9722 = vld [vmem:[#allocation3 + $0x28] sm:$0xff]
  %v9723 = vld [vmem:[#allocation3 + $0x30] sm:$0xff]
  %v9724 = vld [vmem:[#allocation3 + $0x38] sm:$0xff]
  %v9725 = vld [vmem:[#allocation3 + $0x40] sm:$0xff]
  %v9726 = vld [vmem:[#allocation3 + $0x48] sm:$0xff]
  %v9727 = vld [vmem:[#allocation3 + $0x50] sm:$0xff]
  %v9728 = vld [vmem:[#allocation3 + $0x58] sm:$0xff]
  %v9729 = vld [vmem:[#allocation3 + $0x60] sm:$0xff]
  %v9730 = vld [vmem:[#allocation3 + $0x68] sm:$0xff]
  %v9731 = vld [vmem:[#allocation3 + $0x70] sm:$0xff]
  %v9732 = vld [vmem:[#allocation3 + $0x78] sm:$0xff]
  %v9733 = vld [vmem:[#allocation3 + $0x80] sm:$0xff]
  %v9734 = vld [vmem:[#allocation3 + $0x88] sm:$0xff]
  %v9735 = vld [vmem:[#allocation3 + $0x90] sm:$0xff]
  %v9736 = vld [vmem:[#allocation3 + $0x98] sm:$0xff]
  %v9737 = vld [vmem:[#allocation3 + $0xa0] sm:$0xff]
  %v9738 = vld [vmem:[#allocation3 + $0xa8] sm:$0xff]
  %v9739 = vld [vmem:[#allocation3 + $0xb0] sm:$0xff]
  %v9740 = vld [vmem:[#allocation3 + $0xb8] sm:$0xff]
  %v9741 = vld [vmem:[#allocation3 + $0xc0] sm:$0xff]
  %v9742 = vld [vmem:[#allocation3 + $0xc8] sm:$0xff]
  %v9743 = vld [vmem:[#allocation3 + $0xd0] sm:$0xff]
  %v9744 = vld [vmem:[#allocation3 + $0xd8] sm:$0xff]
  %v9745 = vld [vmem:[#allocation3 + $0xe0] sm:$0xff]
  %v9746 = vld [vmem:[#allocation3 + $0xe8] sm:$0xff]
  %v9747 = vld [vmem:[#allocation3 + $0xf0] sm:$0xff]
  %v9748 = vld [vmem:[#allocation3 + $0xf8] sm:$0xff]
  %v9749 = vld [vmem:[#allocation3 + $0x100] sm:$0xff]
  %v9750 = vld [vmem:[#allocation3 + $0x108] sm:$0xff]
  %v9751 = vld [vmem:[#allocation3 + $0x110] sm:$0xff]
  %v9752 = vld [vmem:[#allocation3 + $0x118] sm:$0xff]
  %v9753 = vld [vmem:[#allocation3 + $0x120] sm:$0xff]
  %v9754 = vld [vmem:[#allocation3 + $0x128] sm:$0xff]
  %v9755 = vld [vmem:[#allocation3 + $0x130] sm:$0xff]
  %v9756 = vld [vmem:[#allocation3 + $0x138] sm:$0xff]
  %v9757 = vld [vmem:[#allocation3 + $0x140] sm:$0xff]
  %v9758 = vld [vmem:[#allocation3 + $0x148] sm:$0xff]
  %v9759 = vld [vmem:[#allocation3 + $0x150] sm:$0xff]
  %v9760 = vld [vmem:[#allocation3 + $0x158] sm:$0xff]
  %v9761 = vld [vmem:[#allocation3 + $0x160] sm:$0xff]
  %v9762 = vld [vmem:[#allocation3 + $0x168] sm:$0xff]
  %v9763 = vld [vmem:[#allocation3 + $0x170] sm:$0xff]
  %v9764 = vld [vmem:[#allocation3 + $0x178] sm:$0xff]
  %v9765 = vld [vmem:[#allocation3 + $0x180] sm:$0xff]
  %v9766 = vld [vmem:[#allocation3 + $0x188] sm:$0xff]
  %v9767 = vld [vmem:[#allocation3 + $0x190] sm:$0xff]
  %v9768 = vld [vmem:[#allocation3 + $0x198] sm:$0xff]
  %v9769 = vld [vmem:[#allocation3 + $0x1a0] sm:$0xff]
  %v9770 = vld [vmem:[#allocation3 + $0x1a8] sm:$0xff]
  %v9771 = vld [vmem:[#allocation3 + $0x1b0] sm:$0xff]
  %v9772 = vld [vmem:[#allocation3 + $0x1b8] sm:$0xff]
  %v9773 = vld [vmem:[#allocation3 + $0x1c0] sm:$0xff]
  %v9774 = vld [vmem:[#allocation3 + $0x1c8] sm:$0xff]
  %v9775 = vld [vmem:[#allocation3 + $0x1d0] sm:$0xff]
  %v9776 = vld [vmem:[#allocation3 + $0x1d8] sm:$0xff]
  %v9777 = vld [vmem:[#allocation3 + $0x1e0] sm:$0xff]
  %v9778 = vld [vmem:[#allocation3 + $0x1e8] sm:$0xff]
  %v9779 = vld [vmem:[#allocation3 + $0x1f0] sm:$0xff]
  %v9780 = vld [vmem:[#allocation3 + $0x1f8] sm:$0xff]
  %9845 = vrot.lane.b32.xlu0 %v9717, 12
  %v9846 = vpop.permute.xlu0 %9845
  %9847 = vrot.lane.b32.xlu0 %v9718, 12
  %v9848 = vpop.permute.xlu0 %9847
  %9849 = vrot.lane.b32.xlu0 %v9719, 12
  %v9850 = vpop.permute.xlu0 %9849
  %9851 = vrot.lane.b32.xlu0 %v9720, 12
  %v9852 = vpop.permute.xlu0 %9851
  %9853 = vrot.lane.b32.xlu0 %v9721, 12
  %v9854 = vpop.permute.xlu0 %9853
  %9855 = vrot.lane.b32.xlu0 %v9722, 12
  %v9856 = vpop.permute.xlu0 %9855
  %9857 = vrot.lane.b32.xlu0 %v9723, 12
  %v9858 = vpop.permute.xlu0 %9857
  %9859 = vrot.lane.b32.xlu0 %v9724, 12
  %v9860 = vpop.permute.xlu0 %9859
  %9861 = vrot.lane.b32.xlu0 %v9725, 12
  %v9862 = vpop.permute.xlu0 %9861
  %9863 = vrot.lane.b32.xlu0 %v9726, 12
  %v9864 = vpop.permute.xlu0 %9863
  %9865 = vrot.lane.b32.xlu0 %v9727, 12
  %v9866 = vpop.permute.xlu0 %9865
  %9867 = vrot.lane.b32.xlu0 %v9728, 12
  %v9868 = vpop.permute.xlu0 %9867
  %9869 = vrot.lane.b32.xlu0 %v9729, 12
  %v9870 = vpop.permute.xlu0 %9869
  %9871 = vrot.lane.b32.xlu0 %v9730, 12
  %v9872 = vpop.permute.xlu0 %9871
  %9873 = vrot.lane.b32.xlu0 %v9731, 12
  %v9874 = vpop.permute.xlu0 %9873
  %9875 = vrot.lane.b32.xlu0 %v9732, 12
  %v9876 = vpop.permute.xlu0 %9875
  %9877 = vrot.lane.b32.xlu0 %v9733, 12
  %v9878 = vpop.permute.xlu0 %9877
  %9879 = vrot.lane.b32.xlu0 %v9734, 12
  %v9880 = vpop.permute.xlu0 %9879
  %9881 = vrot.lane.b32.xlu0 %v9735, 12
  %v9882 = vpop.permute.xlu0 %9881
  %9883 = vrot.lane.b32.xlu0 %v9736, 12
  %v9884 = vpop.permute.xlu0 %9883
  %9885 = vrot.lane.b32.xlu0 %v9737, 12
  %v9886 = vpop.permute.xlu0 %9885
  %9887 = vrot.lane.b32.xlu0 %v9738, 12
  %v9888 = vpop.permute.xlu0 %9887
  %9889 = vrot.lane.b32.xlu0 %v9739, 12
  %v9890 = vpop.permute.xlu0 %9889
  %9891 = vrot.lane.b32.xlu0 %v9740, 12
  %v9892 = vpop.permute.xlu0 %9891
  %9893 = vrot.lane.b32.xlu0 %v9741, 12
  %v9894 = vpop.permute.xlu0 %9893
  %9895 = vrot.lane.b32.xlu0 %v9742, 12
  %v9896 = vpop.permute.xlu0 %9895
  %9897 = vrot.lane.b32.xlu0 %v9743, 12
  %v9898 = vpop.permute.xlu0 %9897
  %9899 = vrot.lane.b32.xlu0 %v9744, 12
  %v9900 = vpop.permute.xlu0 %9899
  %9901 = vrot.lane.b32.xlu0 %v9745, 12
  %v9902 = vpop.permute.xlu0 %9901
  %9903 = vrot.lane.b32.xlu0 %v9746, 12
  %v9904 = vpop.permute.xlu0 %9903
  %9905 = vrot.lane.b32.xlu0 %v9747, 12
  %v9906 = vpop.permute.xlu0 %9905
  %9907 = vrot.lane.b32.xlu0 %v9748, 12
  %v9908 = vpop.permute.xlu0 %9907
  %9909 = vrot.lane.b32.xlu0 %v9749, 12
  %v9910 = vpop.permute.xlu0 %9909
  %9911 = vrot.lane.b32.xlu0 %v9750, 12
  %v9912 = vpop.permute.xlu0 %9911
  %9913 = vrot.lane.b32.xlu0 %v9751, 12
  %v9914 = vpop.permute.xlu0 %9913
  %9915 = vrot.lane.b32.xlu0 %v9752, 12
  %v9916 = vpop.permute.xlu0 %9915
  %9917 = vrot.lane.b32.xlu0 %v9753, 12
  %v9918 = vpop.permute.xlu0 %9917
  %9919 = vrot.lane.b32.xlu0 %v9754, 12
  %v9920 = vpop.permute.xlu0 %9919
  %9921 = vrot.lane.b32.xlu0 %v9755, 12
  %v9922 = vpop.permute.xlu0 %9921
  %9923 = vrot.lane.b32.xlu0 %v9756, 12
  %v9924 = vpop.permute.xlu0 %9923
  %9925 = vrot.lane.b32.xlu0 %v9757, 12
  %v9926 = vpop.permute.xlu0 %9925
  %9927 = vrot.lane.b32.xlu0 %v9758, 12
  %v9928 = vpop.permute.xlu0 %9927
  %9929 = vrot.lane.b32.xlu0 %v9759, 12
  %v9930 = vpop.permute.xlu0 %9929
  %9931 = vrot.lane.b32.xlu0 %v9760, 12
  %v9932 = vpop.permute.xlu0 %9931
  %9933 = vrot.lane.b32.xlu0 %v9761, 12
  %v9934 = vpop.permute.xlu0 %9933
  %9935 = vrot.lane.b32.xlu0 %v9762, 12
  %v9936 = vpop.permute.xlu0 %9935
  %9937 = vrot.lane.b32.xlu0 %v9763, 12
  %v9938 = vpop.permute.xlu0 %9937
  %9939 = vrot.lane.b32.xlu0 %v9764, 12
  %v9940 = vpop.permute.xlu0 %9939
  %9941 = vrot.lane.b32.xlu0 %v9765, 12
  %v9942 = vpop.permute.xlu0 %9941
  %9943 = vrot.lane.b32.xlu0 %v9766, 12
  %v9944 = vpop.permute.xlu0 %9943
  %9945 = vrot.lane.b32.xlu0 %v9767, 12
  %v9946 = vpop.permute.xlu0 %9945
  %9947 = vrot.lane.b32.xlu0 %v9768, 12
  %v9948 = vpop.permute.xlu0 %9947
  %9949 = vrot.lane.b32.xlu0 %v9769, 12
  %v9950 = vpop.permute.xlu0 %9949
  %9951 = vrot.lane.b32.xlu0 %v9770, 12
  %v9952 = vpop.permute.xlu0 %9951
  %9953 = vrot.lane.b32.xlu0 %v9771, 12
  %v9954 = vpop.permute.xlu0 %9953
  %9955 = vrot.lane.b32.xlu0 %v9772, 12
  %v9956 = vpop.permute.xlu0 %9955
  %9957 = vrot.lane.b32.xlu0 %v9773, 12
  %v9958 = vpop.permute.xlu0 %9957
  %9959 = vrot.lane.b32.xlu0 %v9774, 12
  %v9960 = vpop.permute.xlu0 %9959
  %9961 = vrot.lane.b32.xlu0 %v9775, 12
  %v9962 = vpop.permute.xlu0 %9961
  %9963 = vrot.lane.b32.xlu0 %v9776, 12
  %v9964 = vpop.permute.xlu0 %9963
  %9965 = vrot.lane.b32.xlu0 %v9777, 12
  %v9966 = vpop.permute.xlu0 %9965
  %9967 = vrot.lane.b32.xlu0 %v9778, 12
  %v9968 = vpop.permute.xlu0 %9967
  %9969 = vrot.lane.b32.xlu0 %v9779, 12
  %v9970 = vpop.permute.xlu0 %9969
  %9971 = vrot.lane.b32.xlu0 %v9780, 12
  %v9972 = vpop.permute.xlu0 %9971
  %vm10037 = vcmask 162912
  %10038 = vst.msk [vmem:[%s9] sm:$0xff] %vm10037, %v9846
  %10039 = vst.msk [vmem:[%s9 + $0x8] sm:$0xff] %vm10037, %v9848
  %10040 = vst.msk [vmem:[%s9 + $0x10] sm:$0xff] %vm10037, %v9850
  %10041 = vst.msk [vmem:[%s9 + $0x18] sm:$0xff] %vm10037, %v9852
  %10042 = vst.msk [vmem:[%s9 + $0x20] sm:$0xff] %vm10037, %v9854
  %10043 = vst.msk [vmem:[%s9 + $0x28] sm:$0xff] %vm10037, %v9856
  %10044 = vst.msk [vmem:[%s9 + $0x30] sm:$0xff] %vm10037, %v9858
  %10045 = vst.msk [vmem:[%s9 + $0x38] sm:$0xff] %vm10037, %v9860
  %10046 = vst.msk [vmem:[%s9 + $0x40] sm:$0xff] %vm10037, %v9862
  %10047 = vst.msk [vmem:[%s9 + $0x48] sm:$0xff] %vm10037, %v9864
  %10048 = vst.msk [vmem:[%s9 + $0x50] sm:$0xff] %vm10037, %v9866
  %10049 = vst.msk [vmem:[%s9 + $0x58] sm:$0xff] %vm10037, %v9868
  %10050 = vst.msk [vmem:[%s9 + $0x60] sm:$0xff] %vm10037, %v9870
  %10051 = vst.msk [vmem:[%s9 + $0x68] sm:$0xff] %vm10037, %v9872
  %10052 = vst.msk [vmem:[%s9 + $0x70] sm:$0xff] %vm10037, %v9874
  %10053 = vst.msk [vmem:[%s9 + $0x78] sm:$0xff] %vm10037, %v9876
  %10054 = vst.msk [vmem:[%s9 + $0x80] sm:$0xff] %vm10037, %v9878
  %10055 = vst.msk [vmem:[%s9 + $0x88] sm:$0xff] %vm10037, %v9880
  %10056 = vst.msk [vmem:[%s9 + $0x90] sm:$0xff] %vm10037, %v9882
  %10057 = vst.msk [vmem:[%s9 + $0x98] sm:$0xff] %vm10037, %v9884
  %10058 = vst.msk [vmem:[%s9 + $0xa0] sm:$0xff] %vm10037, %v9886
  %10059 = vst.msk [vmem:[%s9 + $0xa8] sm:$0xff] %vm10037, %v9888
  %10060 = vst.msk [vmem:[%s9 + $0xb0] sm:$0xff] %vm10037, %v9890
  %10061 = vst.msk [vmem:[%s9 + $0xb8] sm:$0xff] %vm10037, %v9892
  %10062 = vst.msk [vmem:[%s9 + $0xc0] sm:$0xff] %vm10037, %v9894
  %10063 = vst.msk [vmem:[%s9 + $0xc8] sm:$0xff] %vm10037, %v9896
  %10064 = vst.msk [vmem:[%s9 + $0xd0] sm:$0xff] %vm10037, %v9898
  %10065 = vst.msk [vmem:[%s9 + $0xd8] sm:$0xff] %vm10037, %v9900
  %10066 = vst.msk [vmem:[%s9 + $0xe0] sm:$0xff] %vm10037, %v9902
  %10067 = vst.msk [vmem:[%s9 + $0xe8] sm:$0xff] %vm10037, %v9904
  %10068 = vst.msk [vmem:[%s9 + $0xf0] sm:$0xff] %vm10037, %v9906
  %10069 = vst.msk [vmem:[%s9 + $0xf8] sm:$0xff] %vm10037, %v9908
  %10070 = vst.msk [vmem:[%s9 + $0x100] sm:$0xff] %vm10037, %v9910
  %10071 = vst.msk [vmem:[%s9 + $0x108] sm:$0xff] %vm10037, %v9912
  %10072 = vst.msk [vmem:[%s9 + $0x110] sm:$0xff] %vm10037, %v9914
  %10073 = vst.msk [vmem:[%s9 + $0x118] sm:$0xff] %vm10037, %v9916
  %10074 = vst.msk [vmem:[%s9 + $0x120] sm:$0xff] %vm10037, %v9918
  %10075 = vst.msk [vmem:[%s9 + $0x128] sm:$0xff] %vm10037, %v9920
  %10076 = vst.msk [vmem:[%s9 + $0x130] sm:$0xff] %vm10037, %v9922
  %10077 = vst.msk [vmem:[%s9 + $0x138] sm:$0xff] %vm10037, %v9924
  %10078 = vst.msk [vmem:[%s9 + $0x140] sm:$0xff] %vm10037, %v9926
  %10079 = vst.msk [vmem:[%s9 + $0x148] sm:$0xff] %vm10037, %v9928
  %10080 = vst.msk [vmem:[%s9 + $0x150] sm:$0xff] %vm10037, %v9930
  %10081 = vst.msk [vmem:[%s9 + $0x158] sm:$0xff] %vm10037, %v9932
  %10082 = vst.msk [vmem:[%s9 + $0x160] sm:$0xff] %vm10037, %v9934
  %10083 = vst.msk [vmem:[%s9 + $0x168] sm:$0xff] %vm10037, %v9936
  %10084 = vst.msk [vmem:[%s9 + $0x170] sm:$0xff] %vm10037, %v9938
  %10085 = vst.msk [vmem:[%s9 + $0x178] sm:$0xff] %vm10037, %v9940
  %10086 = vst.msk [vmem:[%s9 + $0x180] sm:$0xff] %vm10037, %v9942
  %10087 = vst.msk [vmem:[%s9 + $0x188] sm:$0xff] %vm10037, %v9944
  %10088 = vst.msk [vmem:[%s9 + $0x190] sm:$0xff] %vm10037, %v9946
  %10089 = vst.msk [vmem:[%s9 + $0x198] sm:$0xff] %vm10037, %v9948
  %10090 = vst.msk [vmem:[%s9 + $0x1a0] sm:$0xff] %vm10037, %v9950
  %10091 = vst.msk [vmem:[%s9 + $0x1a8] sm:$0xff] %vm10037, %v9952
  %10092 = vst.msk [vmem:[%s9 + $0x1b0] sm:$0xff] %vm10037, %v9954
  %10093 = vst.msk [vmem:[%s9 + $0x1b8] sm:$0xff] %vm10037, %v9956
  %10094 = vst.msk [vmem:[%s9 + $0x1c0] sm:$0xff] %vm10037, %v9958
  %10095 = vst.msk [vmem:[%s9 + $0x1c8] sm:$0xff] %vm10037, %v9960
  %10096 = vst.msk [vmem:[%s9 + $0x1d0] sm:$0xff] %vm10037, %v9962
  %10097 = vst.msk [vmem:[%s9 + $0x1d8] sm:$0xff] %vm10037, %v9964
  %10098 = vst.msk [vmem:[%s9 + $0x1e0] sm:$0xff] %vm10037, %v9966
  %10099 = vst.msk [vmem:[%s9 + $0x1e8] sm:$0xff] %vm10037, %v9968
  %10100 = vst.msk [vmem:[%s9 + $0x1f0] sm:$0xff] %vm10037, %v9970
  %10101 = vst.msk [vmem:[%s9 + $0x1f8] sm:$0xff] %vm10037, %v9972
  // Predicated region
  $region38: #{dense_block_forward.1} parent=0 // pred_check
    _
  $region39: #{dense_block_forward.1} parent=0 // pred_check_branch
    %10103 = sbr.rel (0) target = $region41
  $region40: #{dense_block_forward.1} parent=0 // pred_region
    _
  $region41: #{dense_block_forward.1} parent=0 // pred_fallthru
    _
  // Predicated region
  $region42: #{dense_block_forward.1} parent=0 // pred_check
    _
  $region43: #{dense_block_forward.1} parent=0 // pred_check_branch
    %10105 = sbr.rel (0) target = $region45
  $region44: #{dense_block_forward.1} parent=0 // pred_region
    _
  $region45: #{dense_block_forward.1} parent=0 // pred_fallthru
    _

</llo_original>
